<compile_context>
chip_gen: v7x
topology: tpu7x:2x2x1
jax: 0.10.0
libtpu: 0.0.40
codegen_flags: <defaults>
</compile_context>

<pallas_src>
import numpy as np
import jax
import jax.numpy as jnp
from jax.experimental import pallas as pl
from jax.experimental.pallas import tpu as pltpu


def _round_up(x, m):
    return (x + m - 1) // m * m


# ----------------------------------------------------------------------------
# One-time packing: constant 0/1 structure matrices + per-tap weights.
# ----------------------------------------------------------------------------
def _conv_select(h, w, k, stride, pad, rows_pad=None):
    """Stacked selection matrices implementing im2col (incl. zero padding).

    Returns S of shape (k*k*rows, h*w) with rows = Ho*Wo (optionally padded up)
    such that (S @ x)[t*rows + oy*Wo+ox, ci] = x[s*oy+ky-pad, s*ox+kx-pad, ci]
    (0 outside the image) for the (h*w, C) row-major feature map x and
    t = ky*k + kx.
    """
    ho = (h + 2 * pad - k) // stride + 1
    wo = (w + 2 * pad - k) // stride + 1
    rows = rows_pad if rows_pad is not None else ho * wo
    s = np.zeros((k * k, rows, h * w), np.float32)
    for ky in range(k):
        for kx in range(k):
            t = ky * k + kx
            for oy in range(ho):
                for ox in range(wo):
                    y = stride * oy + ky - pad
                    x = stride * ox + kx - pad
                    if 0 <= y < h and 0 <= x < w:
                        s[t, oy * wo + ox, y * w + x] = 1.0
    return s.reshape(k * k * rows, h * w), ho, wo, rows


def _phase_interleave_mats(h, w, rows):
    """Q[ph] of shape (4, (2h)*(2w), rows) scattering the 4 output phases of a
    stride-2 transposed conv back into row-major spatial order:
        out[(2u+ry)*2w + (2v+rx), :] = r_ph[(ry+u)*(w+1) + (rx+v), :].
    """
    q = np.zeros((4, 4 * h * w, rows), np.float32)
    for ry in range(2):
        for rx in range(2):
            ph = ry * 2 + rx
            for u in range(h):
                for v in range(w):
                    q[ph, (2 * u + ry) * (2 * w) + (2 * v + rx),
                      (ry + u) * (w + 1) + (rx + v)] = 1.0
    return q


# kernel tap used by output phase r at 2x2-patch offset d:  k_index = 3 - r - 2d
_PHASE_TAPS = np.array([[3, 2], [1, 0]], dtype=np.int32)       # [d, r]


def _pack_conv_w(w, cin_pad):
    """PyTorch Conv2d weight (Cout, Cin, k, k) -> (k*k, cin_pad, Cout) bf16."""
    cout, cin, k, _ = w.shape
    wt = jnp.transpose(w, (2, 3, 1, 0)).reshape(k * k, cin, cout)
    if cin_pad > cin:
        wt = jnp.pad(wt, ((0, 0), (0, cin_pad - cin), (0, 0)))
    return wt.astype(jnp.bfloat16)


def _pack_convT_w(w):
    """PyTorch ConvTranspose2d weight (Cin, Cout, 4, 4) -> (4, 4, Cin, Cout)
    bf16, indexed [phase ry*2+rx, patch offset dy*2+dx, ci, co] following the
    sub-pixel decomposition  k_index = 3 - r - 2*d."""
    cin, cout = w.shape[:2]
    wt = w[:, :, _PHASE_TAPS, :][:, :, :, :, _PHASE_TAPS]   # (ci,co,dy,ry,dx,rx)
    wt = jnp.transpose(wt, (3, 5, 2, 4, 0, 1))              # (ry,rx,dy,dx,ci,co)
    return wt.reshape(4, 4, cin, cout).astype(jnp.bfloat16)


def pack_generator(params, h=16, w=16, cin_pad=8):
    """Precompute every constant operand of the fused kernel.  Called ONCE."""
    bf = jnp.bfloat16
    s1, h1, w1, _ = _conv_select(h, w, 4, 2, 1)              # 16x16 -> 8x8
    s2, h2, w2, _ = _conv_select(h1, w1, 4, 2, 1)            # 8x8   -> 4x4
    r3rows = _round_up((h2 + 1) * (w2 + 1), 8)               # 25 -> 32
    s3 = _conv_select(h2, w2, 2, 1, 1, rows_pad=r3rows)[0]   # ConvT3 2x2 patches
    h3, w3 = 2 * h2, 2 * w2
    r4rows = _round_up((h3 + 1) * (w3 + 1), 8)               # 81 -> 88
    s4 = _conv_select(h3, w3, 2, 1, 1, rows_pad=r4rows)[0]   # ConvT4 2x2 patches
    return {
        "s1": jnp.asarray(s1, dtype=bf), "s2": jnp.asarray(s2, dtype=bf),
        "s3": jnp.asarray(s3, dtype=bf), "s4": jnp.asarray(s4, dtype=bf),
        "p3": jnp.asarray(_phase_interleave_mats(h2, w2, r3rows), dtype=bf),
        "q4": jnp.asarray(_phase_interleave_mats(h3, w3, r4rows), dtype=bf),
        "w1": _pack_conv_w(params["w1"], cin_pad),
        "w2": _pack_conv_w(params["w2"], params["w2"].shape[1]),
        "w3": _pack_convT_w(params["w3"]),
        "w4": _pack_convT_w(params["w4"]),
        "b1": params["b1"].reshape(1, -1).astype(jnp.float32),
        "b2": params["b2"].reshape(1, -1).astype(jnp.float32),
        "b3": params["b3"].reshape(1, -1).astype(jnp.float32),
        "b4": params["b4"].reshape(1, -1).astype(jnp.float32),
    }


# ----------------------------------------------------------------------------
# The fused Pallas kernel: the whole generator, one image per grid step.
# ----------------------------------------------------------------------------
def _generator_kernel(x_ref, s1_ref, w1_ref, b1_ref, s2_ref, w2_ref, b2_ref,
                      s3_ref, w3_ref, b3_ref, p3_ref, s4_ref, w4_ref, b4_ref,
                      q4_ref, o_ref):
    f32, bf16 = jnp.float32, jnp.bfloat16

    def conv(act, s_ref, w_ref, b_ref):
        """Conv2d(k4,s2,p1) + bias.  act (Si, Ci) bf16 -> (So, Co) f32.
        One MXU matmul with the stacked 0/1 selection matrix gathers every
        tap's rows (zero rows = padding); per-tap matmuls accumulate in f32."""
        n_taps = w_ref.shape[0]
        rows = s_ref.shape[0] // n_taps
        cols = jnp.dot(s_ref[...], act, preferred_element_type=f32)
        acc = b_ref[...]
        for t in range(n_taps):
            c_t = cols[t * rows:(t + 1) * rows, :].astype(bf16)
            acc = acc + jnp.dot(c_t, w_ref[t], preferred_element_type=f32)
        return acc

    def conv_transpose(act, s_ref, w_ref, b_ref, q_ref, activation):
        """ConvTranspose2d(k4,s2,p1) + bias + activation via the sub-pixel
        decomposition: 2x2 patches of the non-dilated input, one 2x2 sub-kernel
        per output phase, and a 0/1 matmul interleaving the 4 phases back into
        row-major spatial order.  act (Si, Ci) bf16 -> (So, Co) f32."""
        n_phases, n_taps, _, co = w_ref.shape
        rows = s_ref.shape[0] // n_taps
        cols = jnp.dot(s_ref[...], act, preferred_element_type=f32)
        out = jnp.zeros((q_ref.shape[1], co), f32)
        for ph in range(n_phases):
            acc = b_ref[...]
            for t in range(n_taps):
                c_t = cols[t * rows:(t + 1) * rows, :].astype(bf16)
                acc = acc + jnp.dot(c_t, w_ref[ph, t],
                                    preferred_element_type=f32)
            r_ph = activation(acc).astype(bf16)
            out = out + jnp.dot(q_ref[ph], r_ph, preferred_element_type=f32)
        return out

    relu = lambda v: jnp.maximum(v, 0.0)

    x = x_ref[0]                                                   # (H*W, 8)
    h1 = relu(conv(x, s1_ref, w1_ref, b1_ref))                     # (64, 64)
    h2 = relu(conv(h1.astype(bf16), s2_ref, w2_ref, b2_ref))       # (16, 128)
    h3 = conv_transpose(h2.astype(bf16), s3_ref, w3_ref, b3_ref,
                        p3_ref, relu)                              # (64, 64)
    y = conv_transpose(h3.astype(bf16), s4_ref, w4_ref, b4_ref,
                       q4_ref, jnp.tanh)                           # (256, 3)
    o_ref[0] = y


def generator_forward(packed, x):
    """x: (N, 3, H, W) NCHW (PyTorch convention) -> (N, 3, H, W)."""
    n, c, h, w = x.shape
    cin_pad = packed["w1"].shape[1]
    cout = packed["w4"].shape[3]
    so = packed["q4"].shape[1]                        # output spatial = H*W

    # Tiny layout glue: NCHW -> row-major (H*W, C), channel pad 3->8, bf16.
    xr = jnp.transpose(x, (0, 2, 3, 1)).reshape(n, h * w, c)
    xr = jnp.pad(xr, ((0, 0), (0, 0), (0, cin_pad - c))).astype(jnp.bfloat16)

    names = ("s1", "w1", "b1", "s2", "w2", "b2", "s3", "w3", "b3",
             "p3", "s4", "w4", "b4", "q4")
    consts = [packed[k] for k in names]

    def const_spec(a):
        return pl.BlockSpec(a.shape, lambda i, _nd=a.ndim: (0,) * _nd)

    cost = pl.CostEstimate(
        flops=26_000_000 * n,                                   # ~13 MMAC/image
        transcendentals=4 * packed["q4"].shape[2] * cout * n,   # tanh
        bytes_accessed=int(sum(a.size * a.dtype.itemsize for a in consts)
                           + xr.size * 2 + n * so * cout * 4),
    )

    out = pl.pallas_call(
        _generator_kernel,
        out_shape=jax.ShapeDtypeStruct((n, so, cout), jnp.float32),
        grid=(n,),
        in_specs=[pl.BlockSpec((1, h * w, cin_pad), lambda i: (i, 0, 0))]
                 + [const_spec(a) for a in consts],
        out_specs=pl.BlockSpec((1, so, cout), lambda i: (i, 0, 0)),
        compiler_params=pltpu.CompilerParams(
            dimension_semantics=("parallel",)),
        cost_estimate=cost,
    )(xr, *consts)

    return out.reshape(n, h, w, cout).transpose(0, 3, 1, 2)        # -> NCHW


# ----------------------------------------------------------------------------
# Generator parameters (PyTorch-style init)
# ----------------------------------------------------------------------------
def init_params(key):
    def u(k, shape, fan_in):
        bound = 1.0 / np.sqrt(float(fan_in))
        return jax.random.uniform(k, shape, jnp.float32, -bound, bound)

    ks = jax.random.split(key, 8)
    return {
        # Conv2d(3, 64, 4, 2, 1): weight (Cout, Cin, k, k), fan_in = Cin*k*k
        "w1": u(ks[0], (64, 3, 4, 4), 3 * 16), "b1": u(ks[1], (64,), 3 * 16),
        # Conv2d(64, 128, 4, 2, 1)
        "w2": u(ks[2], (128, 64, 4, 4), 64 * 16), "b2": u(ks[3], (128,), 64 * 16),
        # ConvTranspose2d(128, 64, 4, 2, 1): weight (Cin, Cout, k, k),
        # PyTorch fan_in = weight.size(1)*k*k = Cout*k*k
        "w3": u(ks[4], (128, 64, 4, 4), 64 * 16), "b3": u(ks[5], (64,), 64 * 16),
        # ConvTranspose2d(64, 3, 4, 2, 1)
        "w4": u(ks[6], (64, 3, 4, 4), 3 * 16), "b4": u(ks[7], (3,), 3 * 16),
    }


# ----------------------------------------------------------------------------
# Pure-XLA f32 reference (for in-script correctness validation)
# ----------------------------------------------------------------------------
def _reference_forward(params, x):
    dn = ("NCHW", "OIHW", "NCHW")

    def conv(x, w, b, stride, pad):
        y = jax.lax.conv_general_dilated(
            x, w, window_strides=(stride, stride),
            padding=[(pad, pad), (pad, pad)], dimension_numbers=dn)
        return y + b[None, :, None, None]

    def convT(x, w, b, stride, pad):
        k = w.shape[2]
        wf = jnp.flip(w, (2, 3)).transpose(1, 0, 2, 3)   # (Cout, Cin, k, k)
        y = jax.lax.conv_general_dilated(
            x, wf, window_strides=(1, 1),
            padding=[(k - 1 - pad,) * 2] * 2, lhs_dilation=(stride, stride),
            dimension_numbers=dn)
        return y + b[None, :, None, None]

    h = jax.nn.relu(conv(x, params["w1"], params["b1"], 2, 1))
    h = jax.nn.relu(conv(h, params["w2"], params["b2"], 2, 1))
    h = jax.nn.relu(convT(h, params["w3"], params["b3"], 2, 1))
    return jnp.tanh(convT(h, params["w4"], params["b4"], 2, 1))


if __name__ == "__main__":
    key = jax.random.PRNGKey(0)
    pkey, xkey = jax.random.split(key)
    params = init_params(pkey)
    packed = pack_generator(params, h=16, w=16)      # one-time packing

    # NCHW input, same convention as the PyTorch module.
    x = jax.random.normal(xkey, (2, 3, 16, 16), jnp.float32)

    y = jax.block_until_ready(jax.jit(generator_forward)(packed, x))

    assert y.shape == (2, 3, 16, 16), y.shape
    assert y.dtype == jnp.float32
    assert bool(jnp.all(jnp.abs(y) <= 1.0))          # tanh output range

    # Validate against a pure-XLA f32 reference (loose tol: bf16 MXU operands).
    y_ref = jax.block_until_ready(jax.jit(_reference_forward)(params, x))
    err = float(jnp.max(jnp.abs(y - y_ref)))
    assert err < 5e-2, f"max abs error vs reference: {err}"

    print("KERNEL_OK")
</pallas_src>

<mosaic_0001>
module attributes {stable_mosaic.version = 11 : i64} {
  func.func @_generator_kernel(%arg0: i32, %arg1: memref<1x256x8xbf16, #tpu.memory_space<vmem>>, %arg2: memref<1024x256xbf16, #tpu.memory_space<vmem>>, %arg3: memref<16x8x64xbf16, #tpu.memory_space<vmem>>, %arg4: memref<1x64xf32, #tpu.memory_space<vmem>>, %arg5: memref<256x64xbf16, #tpu.memory_space<vmem>>, %arg6: memref<16x64x128xbf16, #tpu.memory_space<vmem>>, %arg7: memref<1x128xf32, #tpu.memory_space<vmem>>, %arg8: memref<128x16xbf16, #tpu.memory_space<vmem>>, %arg9: memref<4x4x128x64xbf16, #tpu.memory_space<vmem>>, %arg10: memref<1x64xf32, #tpu.memory_space<vmem>>, %arg11: memref<4x64x32xbf16, #tpu.memory_space<vmem>>, %arg12: memref<352x64xbf16, #tpu.memory_space<vmem>>, %arg13: memref<4x4x64x3xbf16, #tpu.memory_space<vmem>>, %arg14: memref<1x3xf32, #tpu.memory_space<vmem>>, %arg15: memref<4x256x88xbf16, #tpu.memory_space<vmem>>, %arg16: memref<1x256x3xf32, #tpu.memory_space<vmem>>) attributes {dimension_semantics = [#tpu.dimension_semantics<parallel>], iteration_bounds = array<i64: 2>, scalar_prefetch = 0 : i64, scratch_operands = 0 : i64, tpu.core_type = #tpu.core_type<tc>, window_params = [{transform_indices = @transform_0, window_bounds = array<i64: 1, 256, 8>}, {pipeline_mode = #tpu.pipeline_mode<synchronous>, transform_indices = @transform_1, window_bounds = array<i64: 1024, 256>}, {pipeline_mode = #tpu.pipeline_mode<synchronous>, transform_indices = @transform_2, window_bounds = array<i64: 16, 8, 64>}, {pipeline_mode = #tpu.pipeline_mode<synchronous>, transform_indices = @transform_3, window_bounds = array<i64: 1, 64>}, {pipeline_mode = #tpu.pipeline_mode<synchronous>, transform_indices = @transform_4, window_bounds = array<i64: 256, 64>}, {pipeline_mode = #tpu.pipeline_mode<synchronous>, transform_indices = @transform_5, window_bounds = array<i64: 16, 64, 128>}, {pipeline_mode = #tpu.pipeline_mode<synchronous>, transform_indices = @transform_6, window_bounds = array<i64: 1, 128>}, {pipeline_mode = #tpu.pipeline_mode<synchronous>, transform_indices = @transform_7, window_bounds = array<i64: 128, 16>}, {pipeline_mode = #tpu.pipeline_mode<synchronous>, transform_indices = @transform_8, window_bounds = array<i64: 4, 4, 128, 64>}, {pipeline_mode = #tpu.pipeline_mode<synchronous>, transform_indices = @transform_9, window_bounds = array<i64: 1, 64>}, {pipeline_mode = #tpu.pipeline_mode<synchronous>, transform_indices = @transform_10, window_bounds = array<i64: 4, 64, 32>}, {pipeline_mode = #tpu.pipeline_mode<synchronous>, transform_indices = @transform_11, window_bounds = array<i64: 352, 64>}, {pipeline_mode = #tpu.pipeline_mode<synchronous>, transform_indices = @transform_12, window_bounds = array<i64: 4, 4, 64, 3>}, {pipeline_mode = #tpu.pipeline_mode<synchronous>, transform_indices = @transform_13, window_bounds = array<i64: 1, 3>}, {pipeline_mode = #tpu.pipeline_mode<synchronous>, transform_indices = @transform_14, window_bounds = array<i64: 4, 256, 88>}, {transform_indices = @transform_15, window_bounds = array<i64: 1, 256, 3>}]} {
    %c0 = arith.constant 0 : index
    %c0_0 = arith.constant 0 : index
    %c0_1 = arith.constant 0 : index
    %0 = vector.load %arg1[%c0, %c0_0, %c0_1] : memref<1x256x8xbf16, #tpu.memory_space<vmem>>, vector<1x256x8xbf16>
    %1 = vector.shape_cast %0 : vector<1x256x8xbf16> to vector<256x8xbf16>
    %c0_2 = arith.constant 0 : index
    %c0_3 = arith.constant 0 : index
    %2 = vector.load %arg2[%c0_2, %c0_3] : memref<1024x256xbf16, #tpu.memory_space<vmem>>, vector<1024x256xbf16>
    %cst = arith.constant dense<0.000000e+00> : vector<1024x8xf32>
    %3 = tpu.matmul %2, %1, %cst {dimension_numbers = #tpu.dot_dimension_numbers<[1], [0], [0], [1], [0, 0, 1, 1], [], []>} : vector<1024x256xbf16>, vector<256x8xbf16>, vector<1024x8xf32> -> vector<1024x8xf32>
    %c0_4 = arith.constant 0 : index
    %c0_5 = arith.constant 0 : index
    %4 = vector.load %arg4[%c0_4, %c0_5] : memref<1x64xf32, #tpu.memory_space<vmem>>, vector<1x64xf32>
    %5 = vector.extract_strided_slice %3 {offsets = [0, 0], sizes = [64, 8], strides = [1, 1]} : vector<1024x8xf32> to vector<64x8xf32>
    %6 = arith.truncf %5 : vector<64x8xf32> to vector<64x8xbf16>
    %c0_6 = arith.constant 0 : index
    %c0_7 = arith.constant 0 : index
    %c0_8 = arith.constant 0 : index
    %7 = vector.load %arg3[%c0_6, %c0_7, %c0_8] : memref<16x8x64xbf16, #tpu.memory_space<vmem>>, vector<1x8x64xbf16>
    %8 = vector.shape_cast %7 : vector<1x8x64xbf16> to vector<8x64xbf16>
    %cst_9 = arith.constant dense<0.000000e+00> : vector<64x64xf32>
    %9 = tpu.matmul %6, %8, %cst_9 {dimension_numbers = #tpu.dot_dimension_numbers<[1], [0], [0], [1], [0, 0, 1, 1], [], []>} : vector<64x8xbf16>, vector<8x64xbf16>, vector<64x64xf32> -> vector<64x64xf32>
    %10 = vector.broadcast %4 : vector<1x64xf32> to vector<64x64xf32>
    %11 = arith.addf %10, %9 : vector<64x64xf32>
    %12 = vector.extract_strided_slice %3 {offsets = [64, 0], sizes = [64, 8], strides = [1, 1]} : vector<1024x8xf32> to vector<64x8xf32>
    %13 = arith.truncf %12 : vector<64x8xf32> to vector<64x8xbf16>
    %c1 = arith.constant 1 : index
    %c0_10 = arith.constant 0 : index
    %c0_11 = arith.constant 0 : index
    %14 = vector.load %arg3[%c1, %c0_10, %c0_11] : memref<16x8x64xbf16, #tpu.memory_space<vmem>>, vector<1x8x64xbf16>
    %15 = vector.shape_cast %14 : vector<1x8x64xbf16> to vector<8x64xbf16>
    %cst_12 = arith.constant dense<0.000000e+00> : vector<64x64xf32>
    %16 = tpu.matmul %13, %15, %cst_12 {dimension_numbers = #tpu.dot_dimension_numbers<[1], [0], [0], [1], [0, 0, 1, 1], [], []>} : vector<64x8xbf16>, vector<8x64xbf16>, vector<64x64xf32> -> vector<64x64xf32>
    %17 = arith.addf %11, %16 : vector<64x64xf32>
    %18 = vector.extract_strided_slice %3 {offsets = [128, 0], sizes = [64, 8], strides = [1, 1]} : vector<1024x8xf32> to vector<64x8xf32>
    %19 = arith.truncf %18 : vector<64x8xf32> to vector<64x8xbf16>
    %c2 = arith.constant 2 : index
    %c0_13 = arith.constant 0 : index
    %c0_14 = arith.constant 0 : index
    %20 = vector.load %arg3[%c2, %c0_13, %c0_14] : memref<16x8x64xbf16, #tpu.memory_space<vmem>>, vector<1x8x64xbf16>
    %21 = vector.shape_cast %20 : vector<1x8x64xbf16> to vector<8x64xbf16>
    %cst_15 = arith.constant dense<0.000000e+00> : vector<64x64xf32>
    %22 = tpu.matmul %19, %21, %cst_15 {dimension_numbers = #tpu.dot_dimension_numbers<[1], [0], [0], [1], [0, 0, 1, 1], [], []>} : vector<64x8xbf16>, vector<8x64xbf16>, vector<64x64xf32> -> vector<64x64xf32>
    %23 = arith.addf %17, %22 : vector<64x64xf32>
    %24 = vector.extract_strided_slice %3 {offsets = [192, 0], sizes = [64, 8], strides = [1, 1]} : vector<1024x8xf32> to vector<64x8xf32>
    %25 = arith.truncf %24 : vector<64x8xf32> to vector<64x8xbf16>
    %c3 = arith.constant 3 : index
    %c0_16 = arith.constant 0 : index
    %c0_17 = arith.constant 0 : index
    %26 = vector.load %arg3[%c3, %c0_16, %c0_17] : memref<16x8x64xbf16, #tpu.memory_space<vmem>>, vector<1x8x64xbf16>
    %27 = vector.shape_cast %26 : vector<1x8x64xbf16> to vector<8x64xbf16>
    %cst_18 = arith.constant dense<0.000000e+00> : vector<64x64xf32>
    %28 = tpu.matmul %25, %27, %cst_18 {dimension_numbers = #tpu.dot_dimension_numbers<[1], [0], [0], [1], [0, 0, 1, 1], [], []>} : vector<64x8xbf16>, vector<8x64xbf16>, vector<64x64xf32> -> vector<64x64xf32>
    %29 = arith.addf %23, %28 : vector<64x64xf32>
    %30 = vector.extract_strided_slice %3 {offsets = [256, 0], sizes = [64, 8], strides = [1, 1]} : vector<1024x8xf32> to vector<64x8xf32>
    %31 = arith.truncf %30 : vector<64x8xf32> to vector<64x8xbf16>
    %c4 = arith.constant 4 : index
    %c0_19 = arith.constant 0 : index
    %c0_20 = arith.constant 0 : index
    %32 = vector.load %arg3[%c4, %c0_19, %c0_20] : memref<16x8x64xbf16, #tpu.memory_space<vmem>>, vector<1x8x64xbf16>
    %33 = vector.shape_cast %32 : vector<1x8x64xbf16> to vector<8x64xbf16>
    %cst_21 = arith.constant dense<0.000000e+00> : vector<64x64xf32>
    %34 = tpu.matmul %31, %33, %cst_21 {dimension_numbers = #tpu.dot_dimension_numbers<[1], [0], [0], [1], [0, 0, 1, 1], [], []>} : vector<64x8xbf16>, vector<8x64xbf16>, vector<64x64xf32> -> vector<64x64xf32>
    %35 = arith.addf %29, %34 : vector<64x64xf32>
    %36 = vector.extract_strided_slice %3 {offsets = [320, 0], sizes = [64, 8], strides = [1, 1]} : vector<1024x8xf32> to vector<64x8xf32>
    %37 = arith.truncf %36 : vector<64x8xf32> to vector<64x8xbf16>
    %c5 = arith.constant 5 : index
    %c0_22 = arith.constant 0 : index
    %c0_23 = arith.constant 0 : index
    %38 = vector.load %arg3[%c5, %c0_22, %c0_23] : memref<16x8x64xbf16, #tpu.memory_space<vmem>>, vector<1x8x64xbf16>
    %39 = vector.shape_cast %38 : vector<1x8x64xbf16> to vector<8x64xbf16>
    %cst_24 = arith.constant dense<0.000000e+00> : vector<64x64xf32>
    %40 = tpu.matmul %37, %39, %cst_24 {dimension_numbers = #tpu.dot_dimension_numbers<[1], [0], [0], [1], [0, 0, 1, 1], [], []>} : vector<64x8xbf16>, vector<8x64xbf16>, vector<64x64xf32> -> vector<64x64xf32>
    %41 = arith.addf %35, %40 : vector<64x64xf32>
    %42 = vector.extract_strided_slice %3 {offsets = [384, 0], sizes = [64, 8], strides = [1, 1]} : vector<1024x8xf32> to vector<64x8xf32>
    %43 = arith.truncf %42 : vector<64x8xf32> to vector<64x8xbf16>
    %c6 = arith.constant 6 : index
    %c0_25 = arith.constant 0 : index
    %c0_26 = arith.constant 0 : index
    %44 = vector.load %arg3[%c6, %c0_25, %c0_26] : memref<16x8x64xbf16, #tpu.memory_space<vmem>>, vector<1x8x64xbf16>
    %45 = vector.shape_cast %44 : vector<1x8x64xbf16> to vector<8x64xbf16>
    %cst_27 = arith.constant dense<0.000000e+00> : vector<64x64xf32>
    %46 = tpu.matmul %43, %45, %cst_27 {dimension_numbers = #tpu.dot_dimension_numbers<[1], [0], [0], [1], [0, 0, 1, 1], [], []>} : vector<64x8xbf16>, vector<8x64xbf16>, vector<64x64xf32> -> vector<64x64xf32>
    %47 = arith.addf %41, %46 : vector<64x64xf32>
    %48 = vector.extract_strided_slice %3 {offsets = [448, 0], sizes = [64, 8], strides = [1, 1]} : vector<1024x8xf32> to vector<64x8xf32>
    %49 = arith.truncf %48 : vector<64x8xf32> to vector<64x8xbf16>
    %c7 = arith.constant 7 : index
    %c0_28 = arith.constant 0 : index
    %c0_29 = arith.constant 0 : index
    %50 = vector.load %arg3[%c7, %c0_28, %c0_29] : memref<16x8x64xbf16, #tpu.memory_space<vmem>>, vector<1x8x64xbf16>
    %51 = vector.shape_cast %50 : vector<1x8x64xbf16> to vector<8x64xbf16>
    %cst_30 = arith.constant dense<0.000000e+00> : vector<64x64xf32>
    %52 = tpu.matmul %49, %51, %cst_30 {dimension_numbers = #tpu.dot_dimension_numbers<[1], [0], [0], [1], [0, 0, 1, 1], [], []>} : vector<64x8xbf16>, vector<8x64xbf16>, vector<64x64xf32> -> vector<64x64xf32>
    %53 = arith.addf %47, %52 : vector<64x64xf32>
    %54 = vector.extract_strided_slice %3 {offsets = [512, 0], sizes = [64, 8], strides = [1, 1]} : vector<1024x8xf32> to vector<64x8xf32>
    %55 = arith.truncf %54 : vector<64x8xf32> to vector<64x8xbf16>
    %c8 = arith.constant 8 : index
    %c0_31 = arith.constant 0 : index
    %c0_32 = arith.constant 0 : index
    %56 = vector.load %arg3[%c8, %c0_31, %c0_32] : memref<16x8x64xbf16, #tpu.memory_space<vmem>>, vector<1x8x64xbf16>
    %57 = vector.shape_cast %56 : vector<1x8x64xbf16> to vector<8x64xbf16>
    %cst_33 = arith.constant dense<0.000000e+00> : vector<64x64xf32>
    %58 = tpu.matmul %55, %57, %cst_33 {dimension_numbers = #tpu.dot_dimension_numbers<[1], [0], [0], [1], [0, 0, 1, 1], [], []>} : vector<64x8xbf16>, vector<8x64xbf16>, vector<64x64xf32> -> vector<64x64xf32>
    %59 = arith.addf %53, %58 : vector<64x64xf32>
    %60 = vector.extract_strided_slice %3 {offsets = [576, 0], sizes = [64, 8], strides = [1, 1]} : vector<1024x8xf32> to vector<64x8xf32>
    %61 = arith.truncf %60 : vector<64x8xf32> to vector<64x8xbf16>
    %c9 = arith.constant 9 : index
    %c0_34 = arith.constant 0 : index
    %c0_35 = arith.constant 0 : index
    %62 = vector.load %arg3[%c9, %c0_34, %c0_35] : memref<16x8x64xbf16, #tpu.memory_space<vmem>>, vector<1x8x64xbf16>
    %63 = vector.shape_cast %62 : vector<1x8x64xbf16> to vector<8x64xbf16>
    %cst_36 = arith.constant dense<0.000000e+00> : vector<64x64xf32>
    %64 = tpu.matmul %61, %63, %cst_36 {dimension_numbers = #tpu.dot_dimension_numbers<[1], [0], [0], [1], [0, 0, 1, 1], [], []>} : vector<64x8xbf16>, vector<8x64xbf16>, vector<64x64xf32> -> vector<64x64xf32>
    %65 = arith.addf %59, %64 : vector<64x64xf32>
    %66 = vector.extract_strided_slice %3 {offsets = [640, 0], sizes = [64, 8], strides = [1, 1]} : vector<1024x8xf32> to vector<64x8xf32>
    %67 = arith.truncf %66 : vector<64x8xf32> to vector<64x8xbf16>
    %c10 = arith.constant 10 : index
    %c0_37 = arith.constant 0 : index
    %c0_38 = arith.constant 0 : index
    %68 = vector.load %arg3[%c10, %c0_37, %c0_38] : memref<16x8x64xbf16, #tpu.memory_space<vmem>>, vector<1x8x64xbf16>
    %69 = vector.shape_cast %68 : vector<1x8x64xbf16> to vector<8x64xbf16>
    %cst_39 = arith.constant dense<0.000000e+00> : vector<64x64xf32>
    %70 = tpu.matmul %67, %69, %cst_39 {dimension_numbers = #tpu.dot_dimension_numbers<[1], [0], [0], [1], [0, 0, 1, 1], [], []>} : vector<64x8xbf16>, vector<8x64xbf16>, vector<64x64xf32> -> vector<64x64xf32>
    %71 = arith.addf %65, %70 : vector<64x64xf32>
    %72 = vector.extract_strided_slice %3 {offsets = [704, 0], sizes = [64, 8], strides = [1, 1]} : vector<1024x8xf32> to vector<64x8xf32>
    %73 = arith.truncf %72 : vector<64x8xf32> to vector<64x8xbf16>
    %c11 = arith.constant 11 : index
    %c0_40 = arith.constant 0 : index
    %c0_41 = arith.constant 0 : index
    %74 = vector.load %arg3[%c11, %c0_40, %c0_41] : memref<16x8x64xbf16, #tpu.memory_space<vmem>>, vector<1x8x64xbf16>
    %75 = vector.shape_cast %74 : vector<1x8x64xbf16> to vector<8x64xbf16>
    %cst_42 = arith.constant dense<0.000000e+00> : vector<64x64xf32>
    %76 = tpu.matmul %73, %75, %cst_42 {dimension_numbers = #tpu.dot_dimension_numbers<[1], [0], [0], [1], [0, 0, 1, 1], [], []>} : vector<64x8xbf16>, vector<8x64xbf16>, vector<64x64xf32> -> vector<64x64xf32>
    %77 = arith.addf %71, %76 : vector<64x64xf32>
    %78 = vector.extract_strided_slice %3 {offsets = [768, 0], sizes = [64, 8], strides = [1, 1]} : vector<1024x8xf32> to vector<64x8xf32>
    %79 = arith.truncf %78 : vector<64x8xf32> to vector<64x8xbf16>
    %c12 = arith.constant 12 : index
    %c0_43 = arith.constant 0 : index
    %c0_44 = arith.constant 0 : index
    %80 = vector.load %arg3[%c12, %c0_43, %c0_44] : memref<16x8x64xbf16, #tpu.memory_space<vmem>>, vector<1x8x64xbf16>
    %81 = vector.shape_cast %80 : vector<1x8x64xbf16> to vector<8x64xbf16>
    %cst_45 = arith.constant dense<0.000000e+00> : vector<64x64xf32>
    %82 = tpu.matmul %79, %81, %cst_45 {dimension_numbers = #tpu.dot_dimension_numbers<[1], [0], [0], [1], [0, 0, 1, 1], [], []>} : vector<64x8xbf16>, vector<8x64xbf16>, vector<64x64xf32> -> vector<64x64xf32>
    %83 = arith.addf %77, %82 : vector<64x64xf32>
    %84 = vector.extract_strided_slice %3 {offsets = [832, 0], sizes = [64, 8], strides = [1, 1]} : vector<1024x8xf32> to vector<64x8xf32>
    %85 = arith.truncf %84 : vector<64x8xf32> to vector<64x8xbf16>
    %c13 = arith.constant 13 : index
    %c0_46 = arith.constant 0 : index
    %c0_47 = arith.constant 0 : index
    %86 = vector.load %arg3[%c13, %c0_46, %c0_47] : memref<16x8x64xbf16, #tpu.memory_space<vmem>>, vector<1x8x64xbf16>
    %87 = vector.shape_cast %86 : vector<1x8x64xbf16> to vector<8x64xbf16>
    %cst_48 = arith.constant dense<0.000000e+00> : vector<64x64xf32>
    %88 = tpu.matmul %85, %87, %cst_48 {dimension_numbers = #tpu.dot_dimension_numbers<[1], [0], [0], [1], [0, 0, 1, 1], [], []>} : vector<64x8xbf16>, vector<8x64xbf16>, vector<64x64xf32> -> vector<64x64xf32>
    %89 = arith.addf %83, %88 : vector<64x64xf32>
    %90 = vector.extract_strided_slice %3 {offsets = [896, 0], sizes = [64, 8], strides = [1, 1]} : vector<1024x8xf32> to vector<64x8xf32>
    %91 = arith.truncf %90 : vector<64x8xf32> to vector<64x8xbf16>
    %c14 = arith.constant 14 : index
    %c0_49 = arith.constant 0 : index
    %c0_50 = arith.constant 0 : index
    %92 = vector.load %arg3[%c14, %c0_49, %c0_50] : memref<16x8x64xbf16, #tpu.memory_space<vmem>>, vector<1x8x64xbf16>
    %93 = vector.shape_cast %92 : vector<1x8x64xbf16> to vector<8x64xbf16>
    %cst_51 = arith.constant dense<0.000000e+00> : vector<64x64xf32>
    %94 = tpu.matmul %91, %93, %cst_51 {dimension_numbers = #tpu.dot_dimension_numbers<[1], [0], [0], [1], [0, 0, 1, 1], [], []>} : vector<64x8xbf16>, vector<8x64xbf16>, vector<64x64xf32> -> vector<64x64xf32>
    %95 = arith.addf %89, %94 : vector<64x64xf32>
    %96 = vector.extract_strided_slice %3 {offsets = [960, 0], sizes = [64, 8], strides = [1, 1]} : vector<1024x8xf32> to vector<64x8xf32>
    %97 = arith.truncf %96 : vector<64x8xf32> to vector<64x8xbf16>
    %c15 = arith.constant 15 : index
    %c0_52 = arith.constant 0 : index
    %c0_53 = arith.constant 0 : index
    %98 = vector.load %arg3[%c15, %c0_52, %c0_53] : memref<16x8x64xbf16, #tpu.memory_space<vmem>>, vector<1x8x64xbf16>
    %99 = vector.shape_cast %98 : vector<1x8x64xbf16> to vector<8x64xbf16>
    %cst_54 = arith.constant dense<0.000000e+00> : vector<64x64xf32>
    %100 = tpu.matmul %97, %99, %cst_54 {dimension_numbers = #tpu.dot_dimension_numbers<[1], [0], [0], [1], [0, 0, 1, 1], [], []>} : vector<64x8xbf16>, vector<8x64xbf16>, vector<64x64xf32> -> vector<64x64xf32>
    %101 = arith.addf %95, %100 : vector<64x64xf32>
    %cst_55 = arith.constant 0.000000e+00 : f32
    %102 = vector.broadcast %cst_55 : f32 to vector<64x64xf32>
    %103 = arith.maximumf %101, %102 : vector<64x64xf32>
    %104 = arith.truncf %103 : vector<64x64xf32> to vector<64x64xbf16>
    %c0_56 = arith.constant 0 : index
    %c0_57 = arith.constant 0 : index
    %105 = vector.load %arg5[%c0_56, %c0_57] : memref<256x64xbf16, #tpu.memory_space<vmem>>, vector<256x64xbf16>
    %cst_58 = arith.constant dense<0.000000e+00> : vector<256x64xf32>
    %106 = tpu.matmul %105, %104, %cst_58 {dimension_numbers = #tpu.dot_dimension_numbers<[1], [0], [0], [1], [0, 0, 1, 1], [], []>} : vector<256x64xbf16>, vector<64x64xbf16>, vector<256x64xf32> -> vector<256x64xf32>
    %c0_59 = arith.constant 0 : index
    %c0_60 = arith.constant 0 : index
    %107 = vector.load %arg7[%c0_59, %c0_60] : memref<1x128xf32, #tpu.memory_space<vmem>>, vector<1x128xf32>
    %108 = vector.extract_strided_slice %106 {offsets = [0, 0], sizes = [16, 64], strides = [1, 1]} : vector<256x64xf32> to vector<16x64xf32>
    %109 = arith.truncf %108 : vector<16x64xf32> to vector<16x64xbf16>
    %c0_61 = arith.constant 0 : index
    %c0_62 = arith.constant 0 : index
    %c0_63 = arith.constant 0 : index
    %110 = vector.load %arg6[%c0_61, %c0_62, %c0_63] : memref<16x64x128xbf16, #tpu.memory_space<vmem>>, vector<1x64x128xbf16>
    %111 = vector.shape_cast %110 : vector<1x64x128xbf16> to vector<64x128xbf16>
    %cst_64 = arith.constant dense<0.000000e+00> : vector<16x128xf32>
    %112 = tpu.matmul %109, %111, %cst_64 {dimension_numbers = #tpu.dot_dimension_numbers<[1], [0], [0], [1], [0, 0, 1, 1], [], []>} : vector<16x64xbf16>, vector<64x128xbf16>, vector<16x128xf32> -> vector<16x128xf32>
    %113 = vector.broadcast %107 : vector<1x128xf32> to vector<16x128xf32>
    %114 = arith.addf %113, %112 : vector<16x128xf32>
    %115 = vector.extract_strided_slice %106 {offsets = [16, 0], sizes = [16, 64], strides = [1, 1]} : vector<256x64xf32> to vector<16x64xf32>
    %116 = arith.truncf %115 : vector<16x64xf32> to vector<16x64xbf16>
    %c1_65 = arith.constant 1 : index
    %c0_66 = arith.constant 0 : index
    %c0_67 = arith.constant 0 : index
    %117 = vector.load %arg6[%c1_65, %c0_66, %c0_67] : memref<16x64x128xbf16, #tpu.memory_space<vmem>>, vector<1x64x128xbf16>
    %118 = vector.shape_cast %117 : vector<1x64x128xbf16> to vector<64x128xbf16>
    %cst_68 = arith.constant dense<0.000000e+00> : vector<16x128xf32>
    %119 = tpu.matmul %116, %118, %cst_68 {dimension_numbers = #tpu.dot_dimension_numbers<[1], [0], [0], [1], [0, 0, 1, 1], [], []>} : vector<16x64xbf16>, vector<64x128xbf16>, vector<16x128xf32> -> vector<16x128xf32>
    %120 = arith.addf %114, %119 : vector<16x128xf32>
    %121 = vector.extract_strided_slice %106 {offsets = [32, 0], sizes = [16, 64], strides = [1, 1]} : vector<256x64xf32> to vector<16x64xf32>
    %122 = arith.truncf %121 : vector<16x64xf32> to vector<16x64xbf16>
    %c2_69 = arith.constant 2 : index
    %c0_70 = arith.constant 0 : index
    %c0_71 = arith.constant 0 : index
    %123 = vector.load %arg6[%c2_69, %c0_70, %c0_71] : memref<16x64x128xbf16, #tpu.memory_space<vmem>>, vector<1x64x128xbf16>
    %124 = vector.shape_cast %123 : vector<1x64x128xbf16> to vector<64x128xbf16>
    %cst_72 = arith.constant dense<0.000000e+00> : vector<16x128xf32>
    %125 = tpu.matmul %122, %124, %cst_72 {dimension_numbers = #tpu.dot_dimension_numbers<[1], [0], [0], [1], [0, 0, 1, 1], [], []>} : vector<16x64xbf16>, vector<64x128xbf16>, vector<16x128xf32> -> vector<16x128xf32>
    %126 = arith.addf %120, %125 : vector<16x128xf32>
    %127 = vector.extract_strided_slice %106 {offsets = [48, 0], sizes = [16, 64], strides = [1, 1]} : vector<256x64xf32> to vector<16x64xf32>
    %128 = arith.truncf %127 : vector<16x64xf32> to vector<16x64xbf16>
    %c3_73 = arith.constant 3 : index
    %c0_74 = arith.constant 0 : index
    %c0_75 = arith.constant 0 : index
    %129 = vector.load %arg6[%c3_73, %c0_74, %c0_75] : memref<16x64x128xbf16, #tpu.memory_space<vmem>>, vector<1x64x128xbf16>
    %130 = vector.shape_cast %129 : vector<1x64x128xbf16> to vector<64x128xbf16>
    %cst_76 = arith.constant dense<0.000000e+00> : vector<16x128xf32>
    %131 = tpu.matmul %128, %130, %cst_76 {dimension_numbers = #tpu.dot_dimension_numbers<[1], [0], [0], [1], [0, 0, 1, 1], [], []>} : vector<16x64xbf16>, vector<64x128xbf16>, vector<16x128xf32> -> vector<16x128xf32>
    %132 = arith.addf %126, %131 : vector<16x128xf32>
    %133 = vector.extract_strided_slice %106 {offsets = [64, 0], sizes = [16, 64], strides = [1, 1]} : vector<256x64xf32> to vector<16x64xf32>
    %134 = arith.truncf %133 : vector<16x64xf32> to vector<16x64xbf16>
    %c4_77 = arith.constant 4 : index
    %c0_78 = arith.constant 0 : index
    %c0_79 = arith.constant 0 : index
    %135 = vector.load %arg6[%c4_77, %c0_78, %c0_79] : memref<16x64x128xbf16, #tpu.memory_space<vmem>>, vector<1x64x128xbf16>
    %136 = vector.shape_cast %135 : vector<1x64x128xbf16> to vector<64x128xbf16>
    %cst_80 = arith.constant dense<0.000000e+00> : vector<16x128xf32>
    %137 = tpu.matmul %134, %136, %cst_80 {dimension_numbers = #tpu.dot_dimension_numbers<[1], [0], [0], [1], [0, 0, 1, 1], [], []>} : vector<16x64xbf16>, vector<64x128xbf16>, vector<16x128xf32> -> vector<16x128xf32>
    %138 = arith.addf %132, %137 : vector<16x128xf32>
    %139 = vector.extract_strided_slice %106 {offsets = [80, 0], sizes = [16, 64], strides = [1, 1]} : vector<256x64xf32> to vector<16x64xf32>
    %140 = arith.truncf %139 : vector<16x64xf32> to vector<16x64xbf16>
    %c5_81 = arith.constant 5 : index
    %c0_82 = arith.constant 0 : index
    %c0_83 = arith.constant 0 : index
    %141 = vector.load %arg6[%c5_81, %c0_82, %c0_83] : memref<16x64x128xbf16, #tpu.memory_space<vmem>>, vector<1x64x128xbf16>
    %142 = vector.shape_cast %141 : vector<1x64x128xbf16> to vector<64x128xbf16>
    %cst_84 = arith.constant dense<0.000000e+00> : vector<16x128xf32>
    %143 = tpu.matmul %140, %142, %cst_84 {dimension_numbers = #tpu.dot_dimension_numbers<[1], [0], [0], [1], [0, 0, 1, 1], [], []>} : vector<16x64xbf16>, vector<64x128xbf16>, vector<16x128xf32> -> vector<16x128xf32>
    %144 = arith.addf %138, %143 : vector<16x128xf32>
    %145 = vector.extract_strided_slice %106 {offsets = [96, 0], sizes = [16, 64], strides = [1, 1]} : vector<256x64xf32> to vector<16x64xf32>
    %146 = arith.truncf %145 : vector<16x64xf32> to vector<16x64xbf16>
    %c6_85 = arith.constant 6 : index
    %c0_86 = arith.constant 0 : index
    %c0_87 = arith.constant 0 : index
    %147 = vector.load %arg6[%c6_85, %c0_86, %c0_87] : memref<16x64x128xbf16, #tpu.memory_space<vmem>>, vector<1x64x128xbf16>
    %148 = vector.shape_cast %147 : vector<1x64x128xbf16> to vector<64x128xbf16>
    %cst_88 = arith.constant dense<0.000000e+00> : vector<16x128xf32>
    %149 = tpu.matmul %146, %148, %cst_88 {dimension_numbers = #tpu.dot_dimension_numbers<[1], [0], [0], [1], [0, 0, 1, 1], [], []>} : vector<16x64xbf16>, vector<64x128xbf16>, vector<16x128xf32> -> vector<16x128xf32>
    %150 = arith.addf %144, %149 : vector<16x128xf32>
    %151 = vector.extract_strided_slice %106 {offsets = [112, 0], sizes = [16, 64], strides = [1, 1]} : vector<256x64xf32> to vector<16x64xf32>
    %152 = arith.truncf %151 : vector<16x64xf32> to vector<16x64xbf16>
    %c7_89 = arith.constant 7 : index
    %c0_90 = arith.constant 0 : index
    %c0_91 = arith.constant 0 : index
    %153 = vector.load %arg6[%c7_89, %c0_90, %c0_91] : memref<16x64x128xbf16, #tpu.memory_space<vmem>>, vector<1x64x128xbf16>
    %154 = vector.shape_cast %153 : vector<1x64x128xbf16> to vector<64x128xbf16>
    %cst_92 = arith.constant dense<0.000000e+00> : vector<16x128xf32>
    %155 = tpu.matmul %152, %154, %cst_92 {dimension_numbers = #tpu.dot_dimension_numbers<[1], [0], [0], [1], [0, 0, 1, 1], [], []>} : vector<16x64xbf16>, vector<64x128xbf16>, vector<16x128xf32> -> vector<16x128xf32>
    %156 = arith.addf %150, %155 : vector<16x128xf32>
    %157 = vector.extract_strided_slice %106 {offsets = [128, 0], sizes = [16, 64], strides = [1, 1]} : vector<256x64xf32> to vector<16x64xf32>
    %158 = arith.truncf %157 : vector<16x64xf32> to vector<16x64xbf16>
    %c8_93 = arith.constant 8 : index
    %c0_94 = arith.constant 0 : index
    %c0_95 = arith.constant 0 : index
    %159 = vector.load %arg6[%c8_93, %c0_94, %c0_95] : memref<16x64x128xbf16, #tpu.memory_space<vmem>>, vector<1x64x128xbf16>
    %160 = vector.shape_cast %159 : vector<1x64x128xbf16> to vector<64x128xbf16>
    %cst_96 = arith.constant dense<0.000000e+00> : vector<16x128xf32>
    %161 = tpu.matmul %158, %160, %cst_96 {dimension_numbers = #tpu.dot_dimension_numbers<[1], [0], [0], [1], [0, 0, 1, 1], [], []>} : vector<16x64xbf16>, vector<64x128xbf16>, vector<16x128xf32> -> vector<16x128xf32>
    %162 = arith.addf %156, %161 : vector<16x128xf32>
    %163 = vector.extract_strided_slice %106 {offsets = [144, 0], sizes = [16, 64], strides = [1, 1]} : vector<256x64xf32> to vector<16x64xf32>
    %164 = arith.truncf %163 : vector<16x64xf32> to vector<16x64xbf16>
    %c9_97 = arith.constant 9 : index
    %c0_98 = arith.constant 0 : index
    %c0_99 = arith.constant 0 : index
    %165 = vector.load %arg6[%c9_97, %c0_98, %c0_99] : memref<16x64x128xbf16, #tpu.memory_space<vmem>>, vector<1x64x128xbf16>
    %166 = vector.shape_cast %165 : vector<1x64x128xbf16> to vector<64x128xbf16>
    %cst_100 = arith.constant dense<0.000000e+00> : vector<16x128xf32>
    %167 = tpu.matmul %164, %166, %cst_100 {dimension_numbers = #tpu.dot_dimension_numbers<[1], [0], [0], [1], [0, 0, 1, 1], [], []>} : vector<16x64xbf16>, vector<64x128xbf16>, vector<16x128xf32> -> vector<16x128xf32>
    %168 = arith.addf %162, %167 : vector<16x128xf32>
    %169 = vector.extract_strided_slice %106 {offsets = [160, 0], sizes = [16, 64], strides = [1, 1]} : vector<256x64xf32> to vector<16x64xf32>
    %170 = arith.truncf %169 : vector<16x64xf32> to vector<16x64xbf16>
    %c10_101 = arith.constant 10 : index
    %c0_102 = arith.constant 0 : index
    %c0_103 = arith.constant 0 : index
    %171 = vector.load %arg6[%c10_101, %c0_102, %c0_103] : memref<16x64x128xbf16, #tpu.memory_space<vmem>>, vector<1x64x128xbf16>
    %172 = vector.shape_cast %171 : vector<1x64x128xbf16> to vector<64x128xbf16>
    %cst_104 = arith.constant dense<0.000000e+00> : vector<16x128xf32>
    %173 = tpu.matmul %170, %172, %cst_104 {dimension_numbers = #tpu.dot_dimension_numbers<[1], [0], [0], [1], [0, 0, 1, 1], [], []>} : vector<16x64xbf16>, vector<64x128xbf16>, vector<16x128xf32> -> vector<16x128xf32>
    %174 = arith.addf %168, %173 : vector<16x128xf32>
    %175 = vector.extract_strided_slice %106 {offsets = [176, 0], sizes = [16, 64], strides = [1, 1]} : vector<256x64xf32> to vector<16x64xf32>
    %176 = arith.truncf %175 : vector<16x64xf32> to vector<16x64xbf16>
    %c11_105 = arith.constant 11 : index
    %c0_106 = arith.constant 0 : index
    %c0_107 = arith.constant 0 : index
    %177 = vector.load %arg6[%c11_105, %c0_106, %c0_107] : memref<16x64x128xbf16, #tpu.memory_space<vmem>>, vector<1x64x128xbf16>
    %178 = vector.shape_cast %177 : vector<1x64x128xbf16> to vector<64x128xbf16>
    %cst_108 = arith.constant dense<0.000000e+00> : vector<16x128xf32>
    %179 = tpu.matmul %176, %178, %cst_108 {dimension_numbers = #tpu.dot_dimension_numbers<[1], [0], [0], [1], [0, 0, 1, 1], [], []>} : vector<16x64xbf16>, vector<64x128xbf16>, vector<16x128xf32> -> vector<16x128xf32>
    %180 = arith.addf %174, %179 : vector<16x128xf32>
    %181 = vector.extract_strided_slice %106 {offsets = [192, 0], sizes = [16, 64], strides = [1, 1]} : vector<256x64xf32> to vector<16x64xf32>
    %182 = arith.truncf %181 : vector<16x64xf32> to vector<16x64xbf16>
    %c12_109 = arith.constant 12 : index
    %c0_110 = arith.constant 0 : index
    %c0_111 = arith.constant 0 : index
    %183 = vector.load %arg6[%c12_109, %c0_110, %c0_111] : memref<16x64x128xbf16, #tpu.memory_space<vmem>>, vector<1x64x128xbf16>
    %184 = vector.shape_cast %183 : vector<1x64x128xbf16> to vector<64x128xbf16>
    %cst_112 = arith.constant dense<0.000000e+00> : vector<16x128xf32>
    %185 = tpu.matmul %182, %184, %cst_112 {dimension_numbers = #tpu.dot_dimension_numbers<[1], [0], [0], [1], [0, 0, 1, 1], [], []>} : vector<16x64xbf16>, vector<64x128xbf16>, vector<16x128xf32> -> vector<16x128xf32>
    %186 = arith.addf %180, %185 : vector<16x128xf32>
    %187 = vector.extract_strided_slice %106 {offsets = [208, 0], sizes = [16, 64], strides = [1, 1]} : vector<256x64xf32> to vector<16x64xf32>
    %188 = arith.truncf %187 : vector<16x64xf32> to vector<16x64xbf16>
    %c13_113 = arith.constant 13 : index
    %c0_114 = arith.constant 0 : index
    %c0_115 = arith.constant 0 : index
    %189 = vector.load %arg6[%c13_113, %c0_114, %c0_115] : memref<16x64x128xbf16, #tpu.memory_space<vmem>>, vector<1x64x128xbf16>
    %190 = vector.shape_cast %189 : vector<1x64x128xbf16> to vector<64x128xbf16>
    %cst_116 = arith.constant dense<0.000000e+00> : vector<16x128xf32>
    %191 = tpu.matmul %188, %190, %cst_116 {dimension_numbers = #tpu.dot_dimension_numbers<[1], [0], [0], [1], [0, 0, 1, 1], [], []>} : vector<16x64xbf16>, vector<64x128xbf16>, vector<16x128xf32> -> vector<16x128xf32>
    %192 = arith.addf %186, %191 : vector<16x128xf32>
    %193 = vector.extract_strided_slice %106 {offsets = [224, 0], sizes = [16, 64], strides = [1, 1]} : vector<256x64xf32> to vector<16x64xf32>
    %194 = arith.truncf %193 : vector<16x64xf32> to vector<16x64xbf16>
    %c14_117 = arith.constant 14 : index
    %c0_118 = arith.constant 0 : index
    %c0_119 = arith.constant 0 : index
    %195 = vector.load %arg6[%c14_117, %c0_118, %c0_119] : memref<16x64x128xbf16, #tpu.memory_space<vmem>>, vector<1x64x128xbf16>
    %196 = vector.shape_cast %195 : vector<1x64x128xbf16> to vector<64x128xbf16>
    %cst_120 = arith.constant dense<0.000000e+00> : vector<16x128xf32>
    %197 = tpu.matmul %194, %196, %cst_120 {dimension_numbers = #tpu.dot_dimension_numbers<[1], [0], [0], [1], [0, 0, 1, 1], [], []>} : vector<16x64xbf16>, vector<64x128xbf16>, vector<16x128xf32> -> vector<16x128xf32>
    %198 = arith.addf %192, %197 : vector<16x128xf32>
    %199 = vector.extract_strided_slice %106 {offsets = [240, 0], sizes = [16, 64], strides = [1, 1]} : vector<256x64xf32> to vector<16x64xf32>
    %200 = arith.truncf %199 : vector<16x64xf32> to vector<16x64xbf16>
    %c15_121 = arith.constant 15 : index
    %c0_122 = arith.constant 0 : index
    %c0_123 = arith.constant 0 : index
    %201 = vector.load %arg6[%c15_121, %c0_122, %c0_123] : memref<16x64x128xbf16, #tpu.memory_space<vmem>>, vector<1x64x128xbf16>
    %202 = vector.shape_cast %201 : vector<1x64x128xbf16> to vector<64x128xbf16>
    %cst_124 = arith.constant dense<0.000000e+00> : vector<16x128xf32>
    %203 = tpu.matmul %200, %202, %cst_124 {dimension_numbers = #tpu.dot_dimension_numbers<[1], [0], [0], [1], [0, 0, 1, 1], [], []>} : vector<16x64xbf16>, vector<64x128xbf16>, vector<16x128xf32> -> vector<16x128xf32>
    %204 = arith.addf %198, %203 : vector<16x128xf32>
    %cst_125 = arith.constant 0.000000e+00 : f32
    %205 = vector.broadcast %cst_125 : f32 to vector<16x128xf32>
    %206 = arith.maximumf %204, %205 : vector<16x128xf32>
    %207 = arith.truncf %206 : vector<16x128xf32> to vector<16x128xbf16>
    %c0_126 = arith.constant 0 : index
    %c0_127 = arith.constant 0 : index
    %208 = vector.load %arg8[%c0_126, %c0_127] : memref<128x16xbf16, #tpu.memory_space<vmem>>, vector<128x16xbf16>
    %cst_128 = arith.constant dense<0.000000e+00> : vector<128x128xf32>
    %209 = tpu.matmul %208, %207, %cst_128 {dimension_numbers = #tpu.dot_dimension_numbers<[1], [0], [0], [1], [0, 0, 1, 1], [], []>} : vector<128x16xbf16>, vector<16x128xbf16>, vector<128x128xf32> -> vector<128x128xf32>
    %cst_129 = arith.constant 0.000000e+00 : f32
    %210 = vector.broadcast %cst_129 : f32 to vector<64x64xf32>
    %c0_130 = arith.constant 0 : index
    %c0_131 = arith.constant 0 : index
    %211 = vector.load %arg10[%c0_130, %c0_131] : memref<1x64xf32, #tpu.memory_space<vmem>>, vector<1x64xf32>
    %212 = vector.extract_strided_slice %209 {offsets = [0, 0], sizes = [32, 128], strides = [1, 1]} : vector<128x128xf32> to vector<32x128xf32>
    %213 = arith.truncf %212 : vector<32x128xf32> to vector<32x128xbf16>
    %c0_132 = arith.constant 0 : index
    %c0_133 = arith.constant 0 : index
    %c0_134 = arith.constant 0 : index
    %c0_135 = arith.constant 0 : index
    %214 = vector.load %arg9[%c0_132, %c0_133, %c0_134, %c0_135] : memref<4x4x128x64xbf16, #tpu.memory_space<vmem>>, vector<1x1x128x64xbf16>
    %215 = vector.shape_cast %214 : vector<1x1x128x64xbf16> to vector<128x64xbf16>
    %cst_136 = arith.constant dense<0.000000e+00> : vector<32x64xf32>
    %216 = tpu.matmul %213, %215, %cst_136 {dimension_numbers = #tpu.dot_dimension_numbers<[1], [0], [0], [1], [0, 0, 1, 1], [], []>} : vector<32x128xbf16>, vector<128x64xbf16>, vector<32x64xf32> -> vector<32x64xf32>
    %217 = vector.broadcast %211 : vector<1x64xf32> to vector<32x64xf32>
    %218 = arith.addf %217, %216 : vector<32x64xf32>
    %219 = vector.extract_strided_slice %209 {offsets = [32, 0], sizes = [32, 128], strides = [1, 1]} : vector<128x128xf32> to vector<32x128xf32>
    %220 = arith.truncf %219 : vector<32x128xf32> to vector<32x128xbf16>
    %c0_137 = arith.constant 0 : index
    %c1_138 = arith.constant 1 : index
    %c0_139 = arith.constant 0 : index
    %c0_140 = arith.constant 0 : index
    %221 = vector.load %arg9[%c0_137, %c1_138, %c0_139, %c0_140] : memref<4x4x128x64xbf16, #tpu.memory_space<vmem>>, vector<1x1x128x64xbf16>
    %222 = vector.shape_cast %221 : vector<1x1x128x64xbf16> to vector<128x64xbf16>
    %cst_141 = arith.constant dense<0.000000e+00> : vector<32x64xf32>
    %223 = tpu.matmul %220, %222, %cst_141 {dimension_numbers = #tpu.dot_dimension_numbers<[1], [0], [0], [1], [0, 0, 1, 1], [], []>} : vector<32x128xbf16>, vector<128x64xbf16>, vector<32x64xf32> -> vector<32x64xf32>
    %224 = arith.addf %218, %223 : vector<32x64xf32>
    %225 = vector.extract_strided_slice %209 {offsets = [64, 0], sizes = [32, 128], strides = [1, 1]} : vector<128x128xf32> to vector<32x128xf32>
    %226 = arith.truncf %225 : vector<32x128xf32> to vector<32x128xbf16>
    %c0_142 = arith.constant 0 : index
    %c2_143 = arith.constant 2 : index
    %c0_144 = arith.constant 0 : index
    %c0_145 = arith.constant 0 : index
    %227 = vector.load %arg9[%c0_142, %c2_143, %c0_144, %c0_145] : memref<4x4x128x64xbf16, #tpu.memory_space<vmem>>, vector<1x1x128x64xbf16>
    %228 = vector.shape_cast %227 : vector<1x1x128x64xbf16> to vector<128x64xbf16>
    %cst_146 = arith.constant dense<0.000000e+00> : vector<32x64xf32>
    %229 = tpu.matmul %226, %228, %cst_146 {dimension_numbers = #tpu.dot_dimension_numbers<[1], [0], [0], [1], [0, 0, 1, 1], [], []>} : vector<32x128xbf16>, vector<128x64xbf16>, vector<32x64xf32> -> vector<32x64xf32>
    %230 = arith.addf %224, %229 : vector<32x64xf32>
    %231 = vector.extract_strided_slice %209 {offsets = [96, 0], sizes = [32, 128], strides = [1, 1]} : vector<128x128xf32> to vector<32x128xf32>
    %232 = arith.truncf %231 : vector<32x128xf32> to vector<32x128xbf16>
    %c0_147 = arith.constant 0 : index
    %c3_148 = arith.constant 3 : index
    %c0_149 = arith.constant 0 : index
    %c0_150 = arith.constant 0 : index
    %233 = vector.load %arg9[%c0_147, %c3_148, %c0_149, %c0_150] : memref<4x4x128x64xbf16, #tpu.memory_space<vmem>>, vector<1x1x128x64xbf16>
    %234 = vector.shape_cast %233 : vector<1x1x128x64xbf16> to vector<128x64xbf16>
    %cst_151 = arith.constant dense<0.000000e+00> : vector<32x64xf32>
    %235 = tpu.matmul %232, %234, %cst_151 {dimension_numbers = #tpu.dot_dimension_numbers<[1], [0], [0], [1], [0, 0, 1, 1], [], []>} : vector<32x128xbf16>, vector<128x64xbf16>, vector<32x64xf32> -> vector<32x64xf32>
    %236 = arith.addf %230, %235 : vector<32x64xf32>
    %cst_152 = arith.constant 0.000000e+00 : f32
    %237 = vector.broadcast %cst_152 : f32 to vector<32x64xf32>
    %238 = arith.maximumf %236, %237 : vector<32x64xf32>
    %239 = arith.truncf %238 : vector<32x64xf32> to vector<32x64xbf16>
    %c0_153 = arith.constant 0 : index
    %c0_154 = arith.constant 0 : index
    %c0_155 = arith.constant 0 : index
    %240 = vector.load %arg11[%c0_153, %c0_154, %c0_155] : memref<4x64x32xbf16, #tpu.memory_space<vmem>>, vector<1x64x32xbf16>
    %241 = vector.shape_cast %240 : vector<1x64x32xbf16> to vector<64x32xbf16>
    %cst_156 = arith.constant dense<0.000000e+00> : vector<64x64xf32>
    %242 = tpu.matmul %241, %239, %cst_156 {dimension_numbers = #tpu.dot_dimension_numbers<[1], [0], [0], [1], [0, 0, 1, 1], [], []>} : vector<64x32xbf16>, vector<32x64xbf16>, vector<64x64xf32> -> vector<64x64xf32>
    %243 = arith.addf %210, %242 : vector<64x64xf32>
    %c0_157 = arith.constant 0 : index
    %c0_158 = arith.constant 0 : index
    %244 = vector.load %arg10[%c0_157, %c0_158] : memref<1x64xf32, #tpu.memory_space<vmem>>, vector<1x64xf32>
    %245 = vector.extract_strided_slice %209 {offsets = [0, 0], sizes = [32, 128], strides = [1, 1]} : vector<128x128xf32> to vector<32x128xf32>
    %246 = arith.truncf %245 : vector<32x128xf32> to vector<32x128xbf16>
    %c1_159 = arith.constant 1 : index
    %c0_160 = arith.constant 0 : index
    %c0_161 = arith.constant 0 : index
    %c0_162 = arith.constant 0 : index
    %247 = vector.load %arg9[%c1_159, %c0_160, %c0_161, %c0_162] : memref<4x4x128x64xbf16, #tpu.memory_space<vmem>>, vector<1x1x128x64xbf16>
    %248 = vector.shape_cast %247 : vector<1x1x128x64xbf16> to vector<128x64xbf16>
    %cst_163 = arith.constant dense<0.000000e+00> : vector<32x64xf32>
    %249 = tpu.matmul %246, %248, %cst_163 {dimension_numbers = #tpu.dot_dimension_numbers<[1], [0], [0], [1], [0, 0, 1, 1], [], []>} : vector<32x128xbf16>, vector<128x64xbf16>, vector<32x64xf32> -> vector<32x64xf32>
    %250 = vector.broadcast %244 : vector<1x64xf32> to vector<32x64xf32>
    %251 = arith.addf %250, %249 : vector<32x64xf32>
    %252 = vector.extract_strided_slice %209 {offsets = [32, 0], sizes = [32, 128], strides = [1, 1]} : vector<128x128xf32> to vector<32x128xf32>
    %253 = arith.truncf %252 : vector<32x128xf32> to vector<32x128xbf16>
    %c1_164 = arith.constant 1 : index
    %c1_165 = arith.constant 1 : index
    %c0_166 = arith.constant 0 : index
    %c0_167 = arith.constant 0 : index
    %254 = vector.load %arg9[%c1_164, %c1_165, %c0_166, %c0_167] : memref<4x4x128x64xbf16, #tpu.memory_space<vmem>>, vector<1x1x128x64xbf16>
    %255 = vector.shape_cast %254 : vector<1x1x128x64xbf16> to vector<128x64xbf16>
    %cst_168 = arith.constant dense<0.000000e+00> : vector<32x64xf32>
    %256 = tpu.matmul %253, %255, %cst_168 {dimension_numbers = #tpu.dot_dimension_numbers<[1], [0], [0], [1], [0, 0, 1, 1], [], []>} : vector<32x128xbf16>, vector<128x64xbf16>, vector<32x64xf32> -> vector<32x64xf32>
    %257 = arith.addf %251, %256 : vector<32x64xf32>
    %258 = vector.extract_strided_slice %209 {offsets = [64, 0], sizes = [32, 128], strides = [1, 1]} : vector<128x128xf32> to vector<32x128xf32>
    %259 = arith.truncf %258 : vector<32x128xf32> to vector<32x128xbf16>
    %c1_169 = arith.constant 1 : index
    %c2_170 = arith.constant 2 : index
    %c0_171 = arith.constant 0 : index
    %c0_172 = arith.constant 0 : index
    %260 = vector.load %arg9[%c1_169, %c2_170, %c0_171, %c0_172] : memref<4x4x128x64xbf16, #tpu.memory_space<vmem>>, vector<1x1x128x64xbf16>
    %261 = vector.shape_cast %260 : vector<1x1x128x64xbf16> to vector<128x64xbf16>
    %cst_173 = arith.constant dense<0.000000e+00> : vector<32x64xf32>
    %262 = tpu.matmul %259, %261, %cst_173 {dimension_numbers = #tpu.dot_dimension_numbers<[1], [0], [0], [1], [0, 0, 1, 1], [], []>} : vector<32x128xbf16>, vector<128x64xbf16>, vector<32x64xf32> -> vector<32x64xf32>
    %263 = arith.addf %257, %262 : vector<32x64xf32>
    %264 = vector.extract_strided_slice %209 {offsets = [96, 0], sizes = [32, 128], strides = [1, 1]} : vector<128x128xf32> to vector<32x128xf32>
    %265 = arith.truncf %264 : vector<32x128xf32> to vector<32x128xbf16>
    %c1_174 = arith.constant 1 : index
    %c3_175 = arith.constant 3 : index
    %c0_176 = arith.constant 0 : index
    %c0_177 = arith.constant 0 : index
    %266 = vector.load %arg9[%c1_174, %c3_175, %c0_176, %c0_177] : memref<4x4x128x64xbf16, #tpu.memory_space<vmem>>, vector<1x1x128x64xbf16>
    %267 = vector.shape_cast %266 : vector<1x1x128x64xbf16> to vector<128x64xbf16>
    %cst_178 = arith.constant dense<0.000000e+00> : vector<32x64xf32>
    %268 = tpu.matmul %265, %267, %cst_178 {dimension_numbers = #tpu.dot_dimension_numbers<[1], [0], [0], [1], [0, 0, 1, 1], [], []>} : vector<32x128xbf16>, vector<128x64xbf16>, vector<32x64xf32> -> vector<32x64xf32>
    %269 = arith.addf %263, %268 : vector<32x64xf32>
    %cst_179 = arith.constant 0.000000e+00 : f32
    %270 = vector.broadcast %cst_179 : f32 to vector<32x64xf32>
    %271 = arith.maximumf %269, %270 : vector<32x64xf32>
    %272 = arith.truncf %271 : vector<32x64xf32> to vector<32x64xbf16>
    %c1_180 = arith.constant 1 : index
    %c0_181 = arith.constant 0 : index
    %c0_182 = arith.constant 0 : index
    %273 = vector.load %arg11[%c1_180, %c0_181, %c0_182] : memref<4x64x32xbf16, #tpu.memory_space<vmem>>, vector<1x64x32xbf16>
    %274 = vector.shape_cast %273 : vector<1x64x32xbf16> to vector<64x32xbf16>
    %cst_183 = arith.constant dense<0.000000e+00> : vector<64x64xf32>
    %275 = tpu.matmul %274, %272, %cst_183 {dimension_numbers = #tpu.dot_dimension_numbers<[1], [0], [0], [1], [0, 0, 1, 1], [], []>} : vector<64x32xbf16>, vector<32x64xbf16>, vector<64x64xf32> -> vector<64x64xf32>
    %276 = arith.addf %243, %275 : vector<64x64xf32>
    %c0_184 = arith.constant 0 : index
    %c0_185 = arith.constant 0 : index
    %277 = vector.load %arg10[%c0_184, %c0_185] : memref<1x64xf32, #tpu.memory_space<vmem>>, vector<1x64xf32>
    %278 = vector.extract_strided_slice %209 {offsets = [0, 0], sizes = [32, 128], strides = [1, 1]} : vector<128x128xf32> to vector<32x128xf32>
    %279 = arith.truncf %278 : vector<32x128xf32> to vector<32x128xbf16>
    %c2_186 = arith.constant 2 : index
    %c0_187 = arith.constant 0 : index
    %c0_188 = arith.constant 0 : index
    %c0_189 = arith.constant 0 : index
    %280 = vector.load %arg9[%c2_186, %c0_187, %c0_188, %c0_189] : memref<4x4x128x64xbf16, #tpu.memory_space<vmem>>, vector<1x1x128x64xbf16>
    %281 = vector.shape_cast %280 : vector<1x1x128x64xbf16> to vector<128x64xbf16>
    %cst_190 = arith.constant dense<0.000000e+00> : vector<32x64xf32>
    %282 = tpu.matmul %279, %281, %cst_190 {dimension_numbers = #tpu.dot_dimension_numbers<[1], [0], [0], [1], [0, 0, 1, 1], [], []>} : vector<32x128xbf16>, vector<128x64xbf16>, vector<32x64xf32> -> vector<32x64xf32>
    %283 = vector.broadcast %277 : vector<1x64xf32> to vector<32x64xf32>
    %284 = arith.addf %283, %282 : vector<32x64xf32>
    %285 = vector.extract_strided_slice %209 {offsets = [32, 0], sizes = [32, 128], strides = [1, 1]} : vector<128x128xf32> to vector<32x128xf32>
    %286 = arith.truncf %285 : vector<32x128xf32> to vector<32x128xbf16>
    %c2_191 = arith.constant 2 : index
    %c1_192 = arith.constant 1 : index
    %c0_193 = arith.constant 0 : index
    %c0_194 = arith.constant 0 : index
    %287 = vector.load %arg9[%c2_191, %c1_192, %c0_193, %c0_194] : memref<4x4x128x64xbf16, #tpu.memory_space<vmem>>, vector<1x1x128x64xbf16>
    %288 = vector.shape_cast %287 : vector<1x1x128x64xbf16> to vector<128x64xbf16>
    %cst_195 = arith.constant dense<0.000000e+00> : vector<32x64xf32>
    %289 = tpu.matmul %286, %288, %cst_195 {dimension_numbers = #tpu.dot_dimension_numbers<[1], [0], [0], [1], [0, 0, 1, 1], [], []>} : vector<32x128xbf16>, vector<128x64xbf16>, vector<32x64xf32> -> vector<32x64xf32>
    %290 = arith.addf %284, %289 : vector<32x64xf32>
    %291 = vector.extract_strided_slice %209 {offsets = [64, 0], sizes = [32, 128], strides = [1, 1]} : vector<128x128xf32> to vector<32x128xf32>
    %292 = arith.truncf %291 : vector<32x128xf32> to vector<32x128xbf16>
    %c2_196 = arith.constant 2 : index
    %c2_197 = arith.constant 2 : index
    %c0_198 = arith.constant 0 : index
    %c0_199 = arith.constant 0 : index
    %293 = vector.load %arg9[%c2_196, %c2_197, %c0_198, %c0_199] : memref<4x4x128x64xbf16, #tpu.memory_space<vmem>>, vector<1x1x128x64xbf16>
    %294 = vector.shape_cast %293 : vector<1x1x128x64xbf16> to vector<128x64xbf16>
    %cst_200 = arith.constant dense<0.000000e+00> : vector<32x64xf32>
    %295 = tpu.matmul %292, %294, %cst_200 {dimension_numbers = #tpu.dot_dimension_numbers<[1], [0], [0], [1], [0, 0, 1, 1], [], []>} : vector<32x128xbf16>, vector<128x64xbf16>, vector<32x64xf32> -> vector<32x64xf32>
    %296 = arith.addf %290, %295 : vector<32x64xf32>
    %297 = vector.extract_strided_slice %209 {offsets = [96, 0], sizes = [32, 128], strides = [1, 1]} : vector<128x128xf32> to vector<32x128xf32>
    %298 = arith.truncf %297 : vector<32x128xf32> to vector<32x128xbf16>
    %c2_201 = arith.constant 2 : index
    %c3_202 = arith.constant 3 : index
    %c0_203 = arith.constant 0 : index
    %c0_204 = arith.constant 0 : index
    %299 = vector.load %arg9[%c2_201, %c3_202, %c0_203, %c0_204] : memref<4x4x128x64xbf16, #tpu.memory_space<vmem>>, vector<1x1x128x64xbf16>
    %300 = vector.shape_cast %299 : vector<1x1x128x64xbf16> to vector<128x64xbf16>
    %cst_205 = arith.constant dense<0.000000e+00> : vector<32x64xf32>
    %301 = tpu.matmul %298, %300, %cst_205 {dimension_numbers = #tpu.dot_dimension_numbers<[1], [0], [0], [1], [0, 0, 1, 1], [], []>} : vector<32x128xbf16>, vector<128x64xbf16>, vector<32x64xf32> -> vector<32x64xf32>
    %302 = arith.addf %296, %301 : vector<32x64xf32>
    %cst_206 = arith.constant 0.000000e+00 : f32
    %303 = vector.broadcast %cst_206 : f32 to vector<32x64xf32>
    %304 = arith.maximumf %302, %303 : vector<32x64xf32>
    %305 = arith.truncf %304 : vector<32x64xf32> to vector<32x64xbf16>
    %c2_207 = arith.constant 2 : index
    %c0_208 = arith.constant 0 : index
    %c0_209 = arith.constant 0 : index
    %306 = vector.load %arg11[%c2_207, %c0_208, %c0_209] : memref<4x64x32xbf16, #tpu.memory_space<vmem>>, vector<1x64x32xbf16>
    %307 = vector.shape_cast %306 : vector<1x64x32xbf16> to vector<64x32xbf16>
    %cst_210 = arith.constant dense<0.000000e+00> : vector<64x64xf32>
    %308 = tpu.matmul %307, %305, %cst_210 {dimension_numbers = #tpu.dot_dimension_numbers<[1], [0], [0], [1], [0, 0, 1, 1], [], []>} : vector<64x32xbf16>, vector<32x64xbf16>, vector<64x64xf32> -> vector<64x64xf32>
    %309 = arith.addf %276, %308 : vector<64x64xf32>
    %c0_211 = arith.constant 0 : index
    %c0_212 = arith.constant 0 : index
    %310 = vector.load %arg10[%c0_211, %c0_212] : memref<1x64xf32, #tpu.memory_space<vmem>>, vector<1x64xf32>
    %311 = vector.extract_strided_slice %209 {offsets = [0, 0], sizes = [32, 128], strides = [1, 1]} : vector<128x128xf32> to vector<32x128xf32>
    %312 = arith.truncf %311 : vector<32x128xf32> to vector<32x128xbf16>
    %c3_213 = arith.constant 3 : index
    %c0_214 = arith.constant 0 : index
    %c0_215 = arith.constant 0 : index
    %c0_216 = arith.constant 0 : index
    %313 = vector.load %arg9[%c3_213, %c0_214, %c0_215, %c0_216] : memref<4x4x128x64xbf16, #tpu.memory_space<vmem>>, vector<1x1x128x64xbf16>
    %314 = vector.shape_cast %313 : vector<1x1x128x64xbf16> to vector<128x64xbf16>
    %cst_217 = arith.constant dense<0.000000e+00> : vector<32x64xf32>
    %315 = tpu.matmul %312, %314, %cst_217 {dimension_numbers = #tpu.dot_dimension_numbers<[1], [0], [0], [1], [0, 0, 1, 1], [], []>} : vector<32x128xbf16>, vector<128x64xbf16>, vector<32x64xf32> -> vector<32x64xf32>
    %316 = vector.broadcast %310 : vector<1x64xf32> to vector<32x64xf32>
    %317 = arith.addf %316, %315 : vector<32x64xf32>
    %318 = vector.extract_strided_slice %209 {offsets = [32, 0], sizes = [32, 128], strides = [1, 1]} : vector<128x128xf32> to vector<32x128xf32>
    %319 = arith.truncf %318 : vector<32x128xf32> to vector<32x128xbf16>
    %c3_218 = arith.constant 3 : index
    %c1_219 = arith.constant 1 : index
    %c0_220 = arith.constant 0 : index
    %c0_221 = arith.constant 0 : index
    %320 = vector.load %arg9[%c3_218, %c1_219, %c0_220, %c0_221] : memref<4x4x128x64xbf16, #tpu.memory_space<vmem>>, vector<1x1x128x64xbf16>
    %321 = vector.shape_cast %320 : vector<1x1x128x64xbf16> to vector<128x64xbf16>
    %cst_222 = arith.constant dense<0.000000e+00> : vector<32x64xf32>
    %322 = tpu.matmul %319, %321, %cst_222 {dimension_numbers = #tpu.dot_dimension_numbers<[1], [0], [0], [1], [0, 0, 1, 1], [], []>} : vector<32x128xbf16>, vector<128x64xbf16>, vector<32x64xf32> -> vector<32x64xf32>
    %323 = arith.addf %317, %322 : vector<32x64xf32>
    %324 = vector.extract_strided_slice %209 {offsets = [64, 0], sizes = [32, 128], strides = [1, 1]} : vector<128x128xf32> to vector<32x128xf32>
    %325 = arith.truncf %324 : vector<32x128xf32> to vector<32x128xbf16>
    %c3_223 = arith.constant 3 : index
    %c2_224 = arith.constant 2 : index
    %c0_225 = arith.constant 0 : index
    %c0_226 = arith.constant 0 : index
    %326 = vector.load %arg9[%c3_223, %c2_224, %c0_225, %c0_226] : memref<4x4x128x64xbf16, #tpu.memory_space<vmem>>, vector<1x1x128x64xbf16>
    %327 = vector.shape_cast %326 : vector<1x1x128x64xbf16> to vector<128x64xbf16>
    %cst_227 = arith.constant dense<0.000000e+00> : vector<32x64xf32>
    %328 = tpu.matmul %325, %327, %cst_227 {dimension_numbers = #tpu.dot_dimension_numbers<[1], [0], [0], [1], [0, 0, 1, 1], [], []>} : vector<32x128xbf16>, vector<128x64xbf16>, vector<32x64xf32> -> vector<32x64xf32>
    %329 = arith.addf %323, %328 : vector<32x64xf32>
    %330 = vector.extract_strided_slice %209 {offsets = [96, 0], sizes = [32, 128], strides = [1, 1]} : vector<128x128xf32> to vector<32x128xf32>
    %331 = arith.truncf %330 : vector<32x128xf32> to vector<32x128xbf16>
    %c3_228 = arith.constant 3 : index
    %c3_229 = arith.constant 3 : index
    %c0_230 = arith.constant 0 : index
    %c0_231 = arith.constant 0 : index
    %332 = vector.load %arg9[%c3_228, %c3_229, %c0_230, %c0_231] : memref<4x4x128x64xbf16, #tpu.memory_space<vmem>>, vector<1x1x128x64xbf16>
    %333 = vector.shape_cast %332 : vector<1x1x128x64xbf16> to vector<128x64xbf16>
    %cst_232 = arith.constant dense<0.000000e+00> : vector<32x64xf32>
    %334 = tpu.matmul %331, %333, %cst_232 {dimension_numbers = #tpu.dot_dimension_numbers<[1], [0], [0], [1], [0, 0, 1, 1], [], []>} : vector<32x128xbf16>, vector<128x64xbf16>, vector<32x64xf32> -> vector<32x64xf32>
    %335 = arith.addf %329, %334 : vector<32x64xf32>
    %cst_233 = arith.constant 0.000000e+00 : f32
    %336 = vector.broadcast %cst_233 : f32 to vector<32x64xf32>
    %337 = arith.maximumf %335, %336 : vector<32x64xf32>
    %338 = arith.truncf %337 : vector<32x64xf32> to vector<32x64xbf16>
    %c3_234 = arith.constant 3 : index
    %c0_235 = arith.constant 0 : index
    %c0_236 = arith.constant 0 : index
    %339 = vector.load %arg11[%c3_234, %c0_235, %c0_236] : memref<4x64x32xbf16, #tpu.memory_space<vmem>>, vector<1x64x32xbf16>
    %340 = vector.shape_cast %339 : vector<1x64x32xbf16> to vector<64x32xbf16>
    %cst_237 = arith.constant dense<0.000000e+00> : vector<64x64xf32>
    %341 = tpu.matmul %340, %338, %cst_237 {dimension_numbers = #tpu.dot_dimension_numbers<[1], [0], [0], [1], [0, 0, 1, 1], [], []>} : vector<64x32xbf16>, vector<32x64xbf16>, vector<64x64xf32> -> vector<64x64xf32>
    %342 = arith.addf %309, %341 : vector<64x64xf32>
    %343 = arith.truncf %342 : vector<64x64xf32> to vector<64x64xbf16>
    %c0_238 = arith.constant 0 : index
    %c0_239 = arith.constant 0 : index
    %344 = vector.load %arg12[%c0_238, %c0_239] : memref<352x64xbf16, #tpu.memory_space<vmem>>, vector<352x64xbf16>
    %cst_240 = arith.constant dense<0.000000e+00> : vector<352x64xf32>
    %345 = tpu.matmul %344, %343, %cst_240 {dimension_numbers = #tpu.dot_dimension_numbers<[1], [0], [0], [1], [0, 0, 1, 1], [], []>} : vector<352x64xbf16>, vector<64x64xbf16>, vector<352x64xf32> -> vector<352x64xf32>
    %cst_241 = arith.constant 0.000000e+00 : f32
    %346 = vector.broadcast %cst_241 : f32 to vector<256x3xf32>
    %c0_242 = arith.constant 0 : index
    %c0_243 = arith.constant 0 : index
    %347 = vector.load %arg14[%c0_242, %c0_243] : memref<1x3xf32, #tpu.memory_space<vmem>>, vector<1x3xf32>
    %348 = vector.extract_strided_slice %345 {offsets = [0, 0], sizes = [88, 64], strides = [1, 1]} : vector<352x64xf32> to vector<88x64xf32>
    %349 = arith.truncf %348 : vector<88x64xf32> to vector<88x64xbf16>
    %c0_244 = arith.constant 0 : index
    %c0_245 = arith.constant 0 : index
    %c0_246 = arith.constant 0 : index
    %c0_247 = arith.constant 0 : index
    %350 = vector.load %arg13[%c0_244, %c0_245, %c0_246, %c0_247] : memref<4x4x64x3xbf16, #tpu.memory_space<vmem>>, vector<1x1x64x3xbf16>
    %351 = vector.shape_cast %350 : vector<1x1x64x3xbf16> to vector<64x3xbf16>
    %cst_248 = arith.constant dense<0.000000e+00> : vector<88x3xf32>
    %352 = tpu.matmul %349, %351, %cst_248 {dimension_numbers = #tpu.dot_dimension_numbers<[1], [0], [0], [1], [0, 0, 1, 1], [], []>} : vector<88x64xbf16>, vector<64x3xbf16>, vector<88x3xf32> -> vector<88x3xf32>
    %353 = vector.broadcast %347 : vector<1x3xf32> to vector<88x3xf32>
    %354 = arith.addf %353, %352 : vector<88x3xf32>
    %355 = vector.extract_strided_slice %345 {offsets = [88, 0], sizes = [88, 64], strides = [1, 1]} : vector<352x64xf32> to vector<88x64xf32>
    %356 = arith.truncf %355 : vector<88x64xf32> to vector<88x64xbf16>
    %c0_249 = arith.constant 0 : index
    %c1_250 = arith.constant 1 : index
    %c0_251 = arith.constant 0 : index
    %c0_252 = arith.constant 0 : index
    %357 = vector.load %arg13[%c0_249, %c1_250, %c0_251, %c0_252] : memref<4x4x64x3xbf16, #tpu.memory_space<vmem>>, vector<1x1x64x3xbf16>
    %358 = vector.shape_cast %357 : vector<1x1x64x3xbf16> to vector<64x3xbf16>
    %cst_253 = arith.constant dense<0.000000e+00> : vector<88x3xf32>
    %359 = tpu.matmul %356, %358, %cst_253 {dimension_numbers = #tpu.dot_dimension_numbers<[1], [0], [0], [1], [0, 0, 1, 1], [], []>} : vector<88x64xbf16>, vector<64x3xbf16>, vector<88x3xf32> -> vector<88x3xf32>
    %360 = arith.addf %354, %359 : vector<88x3xf32>
    %361 = vector.extract_strided_slice %345 {offsets = [176, 0], sizes = [88, 64], strides = [1, 1]} : vector<352x64xf32> to vector<88x64xf32>
    %362 = arith.truncf %361 : vector<88x64xf32> to vector<88x64xbf16>
    %c0_254 = arith.constant 0 : index
    %c2_255 = arith.constant 2 : index
    %c0_256 = arith.constant 0 : index
    %c0_257 = arith.constant 0 : index
    %363 = vector.load %arg13[%c0_254, %c2_255, %c0_256, %c0_257] : memref<4x4x64x3xbf16, #tpu.memory_space<vmem>>, vector<1x1x64x3xbf16>
    %364 = vector.shape_cast %363 : vector<1x1x64x3xbf16> to vector<64x3xbf16>
    %cst_258 = arith.constant dense<0.000000e+00> : vector<88x3xf32>
    %365 = tpu.matmul %362, %364, %cst_258 {dimension_numbers = #tpu.dot_dimension_numbers<[1], [0], [0], [1], [0, 0, 1, 1], [], []>} : vector<88x64xbf16>, vector<64x3xbf16>, vector<88x3xf32> -> vector<88x3xf32>
    %366 = arith.addf %360, %365 : vector<88x3xf32>
    %367 = vector.extract_strided_slice %345 {offsets = [264, 0], sizes = [88, 64], strides = [1, 1]} : vector<352x64xf32> to vector<88x64xf32>
    %368 = arith.truncf %367 : vector<88x64xf32> to vector<88x64xbf16>
    %c0_259 = arith.constant 0 : index
    %c3_260 = arith.constant 3 : index
    %c0_261 = arith.constant 0 : index
    %c0_262 = arith.constant 0 : index
    %369 = vector.load %arg13[%c0_259, %c3_260, %c0_261, %c0_262] : memref<4x4x64x3xbf16, #tpu.memory_space<vmem>>, vector<1x1x64x3xbf16>
    %370 = vector.shape_cast %369 : vector<1x1x64x3xbf16> to vector<64x3xbf16>
    %cst_263 = arith.constant dense<0.000000e+00> : vector<88x3xf32>
    %371 = tpu.matmul %368, %370, %cst_263 {dimension_numbers = #tpu.dot_dimension_numbers<[1], [0], [0], [1], [0, 0, 1, 1], [], []>} : vector<88x64xbf16>, vector<64x3xbf16>, vector<88x3xf32> -> vector<88x3xf32>
    %372 = arith.addf %366, %371 : vector<88x3xf32>
    %373 = math.tanh %372 : vector<88x3xf32>
    %374 = arith.truncf %373 : vector<88x3xf32> to vector<88x3xbf16>
    %c0_264 = arith.constant 0 : index
    %c0_265 = arith.constant 0 : index
    %c0_266 = arith.constant 0 : index
    %375 = vector.load %arg15[%c0_264, %c0_265, %c0_266] : memref<4x256x88xbf16, #tpu.memory_space<vmem>>, vector<1x256x88xbf16>
    %376 = vector.shape_cast %375 : vector<1x256x88xbf16> to vector<256x88xbf16>
    %cst_267 = arith.constant dense<0.000000e+00> : vector<256x3xf32>
    %377 = tpu.matmul %376, %374, %cst_267 {dimension_numbers = #tpu.dot_dimension_numbers<[1], [0], [0], [1], [0, 0, 1, 1], [], []>} : vector<256x88xbf16>, vector<88x3xbf16>, vector<256x3xf32> -> vector<256x3xf32>
    %378 = arith.addf %346, %377 : vector<256x3xf32>
    %c0_268 = arith.constant 0 : index
    %c0_269 = arith.constant 0 : index
    %379 = vector.load %arg14[%c0_268, %c0_269] : memref<1x3xf32, #tpu.memory_space<vmem>>, vector<1x3xf32>
    %380 = vector.extract_strided_slice %345 {offsets = [0, 0], sizes = [88, 64], strides = [1, 1]} : vector<352x64xf32> to vector<88x64xf32>
    %381 = arith.truncf %380 : vector<88x64xf32> to vector<88x64xbf16>
    %c1_270 = arith.constant 1 : index
    %c0_271 = arith.constant 0 : index
    %c0_272 = arith.constant 0 : index
    %c0_273 = arith.constant 0 : index
    %382 = vector.load %arg13[%c1_270, %c0_271, %c0_272, %c0_273] : memref<4x4x64x3xbf16, #tpu.memory_space<vmem>>, vector<1x1x64x3xbf16>
    %383 = vector.shape_cast %382 : vector<1x1x64x3xbf16> to vector<64x3xbf16>
    %cst_274 = arith.constant dense<0.000000e+00> : vector<88x3xf32>
    %384 = tpu.matmul %381, %383, %cst_274 {dimension_numbers = #tpu.dot_dimension_numbers<[1], [0], [0], [1], [0, 0, 1, 1], [], []>} : vector<88x64xbf16>, vector<64x3xbf16>, vector<88x3xf32> -> vector<88x3xf32>
    %385 = vector.broadcast %379 : vector<1x3xf32> to vector<88x3xf32>
    %386 = arith.addf %385, %384 : vector<88x3xf32>
    %387 = vector.extract_strided_slice %345 {offsets = [88, 0], sizes = [88, 64], strides = [1, 1]} : vector<352x64xf32> to vector<88x64xf32>
    %388 = arith.truncf %387 : vector<88x64xf32> to vector<88x64xbf16>
    %c1_275 = arith.constant 1 : index
    %c1_276 = arith.constant 1 : index
    %c0_277 = arith.constant 0 : index
    %c0_278 = arith.constant 0 : index
    %389 = vector.load %arg13[%c1_275, %c1_276, %c0_277, %c0_278] : memref<4x4x64x3xbf16, #tpu.memory_space<vmem>>, vector<1x1x64x3xbf16>
    %390 = vector.shape_cast %389 : vector<1x1x64x3xbf16> to vector<64x3xbf16>
    %cst_279 = arith.constant dense<0.000000e+00> : vector<88x3xf32>
    %391 = tpu.matmul %388, %390, %cst_279 {dimension_numbers = #tpu.dot_dimension_numbers<[1], [0], [0], [1], [0, 0, 1, 1], [], []>} : vector<88x64xbf16>, vector<64x3xbf16>, vector<88x3xf32> -> vector<88x3xf32>
    %392 = arith.addf %386, %391 : vector<88x3xf32>
    %393 = vector.extract_strided_slice %345 {offsets = [176, 0], sizes = [88, 64], strides = [1, 1]} : vector<352x64xf32> to vector<88x64xf32>
    %394 = arith.truncf %393 : vector<88x64xf32> to vector<88x64xbf16>
    %c1_280 = arith.constant 1 : index
    %c2_281 = arith.constant 2 : index
    %c0_282 = arith.constant 0 : index
    %c0_283 = arith.constant 0 : index
    %395 = vector.load %arg13[%c1_280, %c2_281, %c0_282, %c0_283] : memref<4x4x64x3xbf16, #tpu.memory_space<vmem>>, vector<1x1x64x3xbf16>
    %396 = vector.shape_cast %395 : vector<1x1x64x3xbf16> to vector<64x3xbf16>
    %cst_284 = arith.constant dense<0.000000e+00> : vector<88x3xf32>
    %397 = tpu.matmul %394, %396, %cst_284 {dimension_numbers = #tpu.dot_dimension_numbers<[1], [0], [0], [1], [0, 0, 1, 1], [], []>} : vector<88x64xbf16>, vector<64x3xbf16>, vector<88x3xf32> -> vector<88x3xf32>
    %398 = arith.addf %392, %397 : vector<88x3xf32>
    %399 = vector.extract_strided_slice %345 {offsets = [264, 0], sizes = [88, 64], strides = [1, 1]} : vector<352x64xf32> to vector<88x64xf32>
    %400 = arith.truncf %399 : vector<88x64xf32> to vector<88x64xbf16>
    %c1_285 = arith.constant 1 : index
    %c3_286 = arith.constant 3 : index
    %c0_287 = arith.constant 0 : index
    %c0_288 = arith.constant 0 : index
    %401 = vector.load %arg13[%c1_285, %c3_286, %c0_287, %c0_288] : memref<4x4x64x3xbf16, #tpu.memory_space<vmem>>, vector<1x1x64x3xbf16>
    %402 = vector.shape_cast %401 : vector<1x1x64x3xbf16> to vector<64x3xbf16>
    %cst_289 = arith.constant dense<0.000000e+00> : vector<88x3xf32>
    %403 = tpu.matmul %400, %402, %cst_289 {dimension_numbers = #tpu.dot_dimension_numbers<[1], [0], [0], [1], [0, 0, 1, 1], [], []>} : vector<88x64xbf16>, vector<64x3xbf16>, vector<88x3xf32> -> vector<88x3xf32>
    %404 = arith.addf %398, %403 : vector<88x3xf32>
    %405 = math.tanh %404 : vector<88x3xf32>
    %406 = arith.truncf %405 : vector<88x3xf32> to vector<88x3xbf16>
    %c1_290 = arith.constant 1 : index
    %c0_291 = arith.constant 0 : index
    %c0_292 = arith.constant 0 : index
    %407 = vector.load %arg15[%c1_290, %c0_291, %c0_292] : memref<4x256x88xbf16, #tpu.memory_space<vmem>>, vector<1x256x88xbf16>
    %408 = vector.shape_cast %407 : vector<1x256x88xbf16> to vector<256x88xbf16>
    %cst_293 = arith.constant dense<0.000000e+00> : vector<256x3xf32>
    %409 = tpu.matmul %408, %406, %cst_293 {dimension_numbers = #tpu.dot_dimension_numbers<[1], [0], [0], [1], [0, 0, 1, 1], [], []>} : vector<256x88xbf16>, vector<88x3xbf16>, vector<256x3xf32> -> vector<256x3xf32>
    %410 = arith.addf %378, %409 : vector<256x3xf32>
    %c0_294 = arith.constant 0 : index
    %c0_295 = arith.constant 0 : index
    %411 = vector.load %arg14[%c0_294, %c0_295] : memref<1x3xf32, #tpu.memory_space<vmem>>, vector<1x3xf32>
    %412 = vector.extract_strided_slice %345 {offsets = [0, 0], sizes = [88, 64], strides = [1, 1]} : vector<352x64xf32> to vector<88x64xf32>
    %413 = arith.truncf %412 : vector<88x64xf32> to vector<88x64xbf16>
    %c2_296 = arith.constant 2 : index
    %c0_297 = arith.constant 0 : index
    %c0_298 = arith.constant 0 : index
    %c0_299 = arith.constant 0 : index
    %414 = vector.load %arg13[%c2_296, %c0_297, %c0_298, %c0_299] : memref<4x4x64x3xbf16, #tpu.memory_space<vmem>>, vector<1x1x64x3xbf16>
    %415 = vector.shape_cast %414 : vector<1x1x64x3xbf16> to vector<64x3xbf16>
    %cst_300 = arith.constant dense<0.000000e+00> : vector<88x3xf32>
    %416 = tpu.matmul %413, %415, %cst_300 {dimension_numbers = #tpu.dot_dimension_numbers<[1], [0], [0], [1], [0, 0, 1, 1], [], []>} : vector<88x64xbf16>, vector<64x3xbf16>, vector<88x3xf32> -> vector<88x3xf32>
    %417 = vector.broadcast %411 : vector<1x3xf32> to vector<88x3xf32>
    %418 = arith.addf %417, %416 : vector<88x3xf32>
    %419 = vector.extract_strided_slice %345 {offsets = [88, 0], sizes = [88, 64], strides = [1, 1]} : vector<352x64xf32> to vector<88x64xf32>
    %420 = arith.truncf %419 : vector<88x64xf32> to vector<88x64xbf16>
    %c2_301 = arith.constant 2 : index
    %c1_302 = arith.constant 1 : index
    %c0_303 = arith.constant 0 : index
    %c0_304 = arith.constant 0 : index
    %421 = vector.load %arg13[%c2_301, %c1_302, %c0_303, %c0_304] : memref<4x4x64x3xbf16, #tpu.memory_space<vmem>>, vector<1x1x64x3xbf16>
    %422 = vector.shape_cast %421 : vector<1x1x64x3xbf16> to vector<64x3xbf16>
    %cst_305 = arith.constant dense<0.000000e+00> : vector<88x3xf32>
    %423 = tpu.matmul %420, %422, %cst_305 {dimension_numbers = #tpu.dot_dimension_numbers<[1], [0], [0], [1], [0, 0, 1, 1], [], []>} : vector<88x64xbf16>, vector<64x3xbf16>, vector<88x3xf32> -> vector<88x3xf32>
    %424 = arith.addf %418, %423 : vector<88x3xf32>
    %425 = vector.extract_strided_slice %345 {offsets = [176, 0], sizes = [88, 64], strides = [1, 1]} : vector<352x64xf32> to vector<88x64xf32>
    %426 = arith.truncf %425 : vector<88x64xf32> to vector<88x64xbf16>
    %c2_306 = arith.constant 2 : index
    %c2_307 = arith.constant 2 : index
    %c0_308 = arith.constant 0 : index
    %c0_309 = arith.constant 0 : index
    %427 = vector.load %arg13[%c2_306, %c2_307, %c0_308, %c0_309] : memref<4x4x64x3xbf16, #tpu.memory_space<vmem>>, vector<1x1x64x3xbf16>
    %428 = vector.shape_cast %427 : vector<1x1x64x3xbf16> to vector<64x3xbf16>
    %cst_310 = arith.constant dense<0.000000e+00> : vector<88x3xf32>
    %429 = tpu.matmul %426, %428, %cst_310 {dimension_numbers = #tpu.dot_dimension_numbers<[1], [0], [0], [1], [0, 0, 1, 1], [], []>} : vector<88x64xbf16>, vector<64x3xbf16>, vector<88x3xf32> -> vector<88x3xf32>
    %430 = arith.addf %424, %429 : vector<88x3xf32>
    %431 = vector.extract_strided_slice %345 {offsets = [264, 0], sizes = [88, 64], strides = [1, 1]} : vector<352x64xf32> to vector<88x64xf32>
    %432 = arith.truncf %431 : vector<88x64xf32> to vector<88x64xbf16>
    %c2_311 = arith.constant 2 : index
    %c3_312 = arith.constant 3 : index
    %c0_313 = arith.constant 0 : index
    %c0_314 = arith.constant 0 : index
    %433 = vector.load %arg13[%c2_311, %c3_312, %c0_313, %c0_314] : memref<4x4x64x3xbf16, #tpu.memory_space<vmem>>, vector<1x1x64x3xbf16>
    %434 = vector.shape_cast %433 : vector<1x1x64x3xbf16> to vector<64x3xbf16>
    %cst_315 = arith.constant dense<0.000000e+00> : vector<88x3xf32>
    %435 = tpu.matmul %432, %434, %cst_315 {dimension_numbers = #tpu.dot_dimension_numbers<[1], [0], [0], [1], [0, 0, 1, 1], [], []>} : vector<88x64xbf16>, vector<64x3xbf16>, vector<88x3xf32> -> vector<88x3xf32>
    %436 = arith.addf %430, %435 : vector<88x3xf32>
    %437 = math.tanh %436 : vector<88x3xf32>
    %438 = arith.truncf %437 : vector<88x3xf32> to vector<88x3xbf16>
    %c2_316 = arith.constant 2 : index
    %c0_317 = arith.constant 0 : index
    %c0_318 = arith.constant 0 : index
    %439 = vector.load %arg15[%c2_316, %c0_317, %c0_318] : memref<4x256x88xbf16, #tpu.memory_space<vmem>>, vector<1x256x88xbf16>
    %440 = vector.shape_cast %439 : vector<1x256x88xbf16> to vector<256x88xbf16>
    %cst_319 = arith.constant dense<0.000000e+00> : vector<256x3xf32>
    %441 = tpu.matmul %440, %438, %cst_319 {dimension_numbers = #tpu.dot_dimension_numbers<[1], [0], [0], [1], [0, 0, 1, 1], [], []>} : vector<256x88xbf16>, vector<88x3xbf16>, vector<256x3xf32> -> vector<256x3xf32>
    %442 = arith.addf %410, %441 : vector<256x3xf32>
    %c0_320 = arith.constant 0 : index
    %c0_321 = arith.constant 0 : index
    %443 = vector.load %arg14[%c0_320, %c0_321] : memref<1x3xf32, #tpu.memory_space<vmem>>, vector<1x3xf32>
    %444 = vector.extract_strided_slice %345 {offsets = [0, 0], sizes = [88, 64], strides = [1, 1]} : vector<352x64xf32> to vector<88x64xf32>
    %445 = arith.truncf %444 : vector<88x64xf32> to vector<88x64xbf16>
    %c3_322 = arith.constant 3 : index
    %c0_323 = arith.constant 0 : index
    %c0_324 = arith.constant 0 : index
    %c0_325 = arith.constant 0 : index
    %446 = vector.load %arg13[%c3_322, %c0_323, %c0_324, %c0_325] : memref<4x4x64x3xbf16, #tpu.memory_space<vmem>>, vector<1x1x64x3xbf16>
    %447 = vector.shape_cast %446 : vector<1x1x64x3xbf16> to vector<64x3xbf16>
    %cst_326 = arith.constant dense<0.000000e+00> : vector<88x3xf32>
    %448 = tpu.matmul %445, %447, %cst_326 {dimension_numbers = #tpu.dot_dimension_numbers<[1], [0], [0], [1], [0, 0, 1, 1], [], []>} : vector<88x64xbf16>, vector<64x3xbf16>, vector<88x3xf32> -> vector<88x3xf32>
    %449 = vector.broadcast %443 : vector<1x3xf32> to vector<88x3xf32>
    %450 = arith.addf %449, %448 : vector<88x3xf32>
    %451 = vector.extract_strided_slice %345 {offsets = [88, 0], sizes = [88, 64], strides = [1, 1]} : vector<352x64xf32> to vector<88x64xf32>
    %452 = arith.truncf %451 : vector<88x64xf32> to vector<88x64xbf16>
    %c3_327 = arith.constant 3 : index
    %c1_328 = arith.constant 1 : index
    %c0_329 = arith.constant 0 : index
    %c0_330 = arith.constant 0 : index
    %453 = vector.load %arg13[%c3_327, %c1_328, %c0_329, %c0_330] : memref<4x4x64x3xbf16, #tpu.memory_space<vmem>>, vector<1x1x64x3xbf16>
    %454 = vector.shape_cast %453 : vector<1x1x64x3xbf16> to vector<64x3xbf16>
    %cst_331 = arith.constant dense<0.000000e+00> : vector<88x3xf32>
    %455 = tpu.matmul %452, %454, %cst_331 {dimension_numbers = #tpu.dot_dimension_numbers<[1], [0], [0], [1], [0, 0, 1, 1], [], []>} : vector<88x64xbf16>, vector<64x3xbf16>, vector<88x3xf32> -> vector<88x3xf32>
    %456 = arith.addf %450, %455 : vector<88x3xf32>
    %457 = vector.extract_strided_slice %345 {offsets = [176, 0], sizes = [88, 64], strides = [1, 1]} : vector<352x64xf32> to vector<88x64xf32>
    %458 = arith.truncf %457 : vector<88x64xf32> to vector<88x64xbf16>
    %c3_332 = arith.constant 3 : index
    %c2_333 = arith.constant 2 : index
    %c0_334 = arith.constant 0 : index
    %c0_335 = arith.constant 0 : index
    %459 = vector.load %arg13[%c3_332, %c2_333, %c0_334, %c0_335] : memref<4x4x64x3xbf16, #tpu.memory_space<vmem>>, vector<1x1x64x3xbf16>
    %460 = vector.shape_cast %459 : vector<1x1x64x3xbf16> to vector<64x3xbf16>
    %cst_336 = arith.constant dense<0.000000e+00> : vector<88x3xf32>
    %461 = tpu.matmul %458, %460, %cst_336 {dimension_numbers = #tpu.dot_dimension_numbers<[1], [0], [0], [1], [0, 0, 1, 1], [], []>} : vector<88x64xbf16>, vector<64x3xbf16>, vector<88x3xf32> -> vector<88x3xf32>
    %462 = arith.addf %456, %461 : vector<88x3xf32>
    %463 = vector.extract_strided_slice %345 {offsets = [264, 0], sizes = [88, 64], strides = [1, 1]} : vector<352x64xf32> to vector<88x64xf32>
    %464 = arith.truncf %463 : vector<88x64xf32> to vector<88x64xbf16>
    %c3_337 = arith.constant 3 : index
    %c3_338 = arith.constant 3 : index
    %c0_339 = arith.constant 0 : index
    %c0_340 = arith.constant 0 : index
    %465 = vector.load %arg13[%c3_337, %c3_338, %c0_339, %c0_340] : memref<4x4x64x3xbf16, #tpu.memory_space<vmem>>, vector<1x1x64x3xbf16>
    %466 = vector.shape_cast %465 : vector<1x1x64x3xbf16> to vector<64x3xbf16>
    %cst_341 = arith.constant dense<0.000000e+00> : vector<88x3xf32>
    %467 = tpu.matmul %464, %466, %cst_341 {dimension_numbers = #tpu.dot_dimension_numbers<[1], [0], [0], [1], [0, 0, 1, 1], [], []>} : vector<88x64xbf16>, vector<64x3xbf16>, vector<88x3xf32> -> vector<88x3xf32>
    %468 = arith.addf %462, %467 : vector<88x3xf32>
    %469 = math.tanh %468 : vector<88x3xf32>
    %470 = arith.truncf %469 : vector<88x3xf32> to vector<88x3xbf16>
    %c3_342 = arith.constant 3 : index
    %c0_343 = arith.constant 0 : index
    %c0_344 = arith.constant 0 : index
    %471 = vector.load %arg15[%c3_342, %c0_343, %c0_344] : memref<4x256x88xbf16, #tpu.memory_space<vmem>>, vector<1x256x88xbf16>
    %472 = vector.shape_cast %471 : vector<1x256x88xbf16> to vector<256x88xbf16>
    %cst_345 = arith.constant dense<0.000000e+00> : vector<256x3xf32>
    %473 = tpu.matmul %472, %470, %cst_345 {dimension_numbers = #tpu.dot_dimension_numbers<[1], [0], [0], [1], [0, 0, 1, 1], [], []>} : vector<256x88xbf16>, vector<88x3xbf16>, vector<256x3xf32> -> vector<256x3xf32>
    %474 = arith.addf %442, %473 : vector<256x3xf32>
    %c0_346 = arith.constant 0 : index
    %c0_347 = arith.constant 0 : index
    %c0_348 = arith.constant 0 : index
    %475 = vector.load %arg16[%c0_346, %c0_347, %c0_348] : memref<1x256x3xf32, #tpu.memory_space<vmem>>, vector<1x256x3xf32>
    %476 = vector.shape_cast %475 : vector<1x256x3xf32> to vector<256x3xf32>
    %477 = vector.shape_cast %474 : vector<256x3xf32> to vector<1x256x3xf32>
    tpu.vector_store %arg16[%c0_346, %c0_347, %c0_348], %477 {strides = array<i32>} : memref<1x256x3xf32, #tpu.memory_space<vmem>>, vector<1x256x3xf32>,
    return
  }
  func.func @transform_0(%arg0: i32) -> (i32, i32, i32) {
    %c0_i32 = arith.constant 0 : i32
    %c0_i32_0 = arith.constant 0 : i32
    %c0_i32_1 = arith.constant 0 : i32
    return %arg0, %c0_i32, %c0_i32_0 : i32, i32, i32
  }
  func.func @transform_1(%arg0: i32) -> (i32, i32) {
    %c0_i32 = arith.constant 0 : i32
    %c0_i32_0 = arith.constant 0 : i32
    %c0_i32_1 = arith.constant 0 : i32
    return %c0_i32, %c0_i32_0 : i32, i32
  }
  func.func @transform_2(%arg0: i32) -> (i32, i32, i32) {
    %c0_i32 = arith.constant 0 : i32
    %c0_i32_0 = arith.constant 0 : i32
    %c0_i32_1 = arith.constant 0 : i32
    %c0_i32_2 = arith.constant 0 : i32
    return %c0_i32, %c0_i32_0, %c0_i32_1 : i32, i32, i32
  }
  func.func @transform_3(%arg0: i32) -> (i32, i32) {
    %c0_i32 = arith.constant 0 : i32
    %c0_i32_0 = arith.constant 0 : i32
    %c0_i32_1 = arith.constant 0 : i32
    return %c0_i32, %c0_i32_0 : i32, i32
  }
  func.func @transform_4(%arg0: i32) -> (i32, i32) {
    %c0_i32 = arith.constant 0 : i32
    %c0_i32_0 = arith.constant 0 : i32
    %c0_i32_1 = arith.constant 0 : i32
    return %c0_i32, %c0_i32_0 : i32, i32
  }
  func.func @transform_5(%arg0: i32) -> (i32, i32, i32) {
    %c0_i32 = arith.constant 0 : i32
    %c0_i32_0 = arith.constant 0 : i32
    %c0_i32_1 = arith.constant 0 : i32
    %c0_i32_2 = arith.constant 0 : i32
    return %c0_i32, %c0_i32_0, %c0_i32_1 : i32, i32, i32
  }
  func.func @transform_6(%arg0: i32) -> (i32, i32) {
    %c0_i32 = arith.constant 0 : i32
    %c0_i32_0 = arith.constant 0 : i32
    %c0_i32_1 = arith.constant 0 : i32
    return %c0_i32, %c0_i32_0 : i32, i32
  }
  func.func @transform_7(%arg0: i32) -> (i32, i32) {
    %c0_i32 = arith.constant 0 : i32
    %c0_i32_0 = arith.constant 0 : i32
    %c0_i32_1 = arith.constant 0 : i32
    return %c0_i32, %c0_i32_0 : i32, i32
  }
  func.func @transform_8(%arg0: i32) -> (i32, i32, i32, i32) {
    %c0_i32 = arith.constant 0 : i32
    %c0_i32_0 = arith.constant 0 : i32
    %c0_i32_1 = arith.constant 0 : i32
    %c0_i32_2 = arith.constant 0 : i32
    %c0_i32_3 = arith.constant 0 : i32
    return %c0_i32, %c0_i32_0, %c0_i32_1, %c0_i32_2 : i32, i32, i32, i32
  }
  func.func @transform_9(%arg0: i32) -> (i32, i32) {
    %c0_i32 = arith.constant 0 : i32
    %c0_i32_0 = arith.constant 0 : i32
    %c0_i32_1 = arith.constant 0 : i32
    return %c0_i32, %c0_i32_0 : i32, i32
  }
  func.func @transform_10(%arg0: i32) -> (i32, i32, i32) {
    %c0_i32 = arith.constant 0 : i32
    %c0_i32_0 = arith.constant 0 : i32
    %c0_i32_1 = arith.constant 0 : i32
    %c0_i32_2 = arith.constant 0 : i32
    return %c0_i32, %c0_i32_0, %c0_i32_1 : i32, i32, i32
  }
  func.func @transform_11(%arg0: i32) -> (i32, i32) {
    %c0_i32 = arith.constant 0 : i32
    %c0_i32_0 = arith.constant 0 : i32
    %c0_i32_1 = arith.constant 0 : i32
    return %c0_i32, %c0_i32_0 : i32, i32
  }
  func.func @transform_12(%arg0: i32) -> (i32, i32, i32, i32) {
    %c0_i32 = arith.constant 0 : i32
    %c0_i32_0 = arith.constant 0 : i32
    %c0_i32_1 = arith.constant 0 : i32
    %c0_i32_2 = arith.constant 0 : i32
    %c0_i32_3 = arith.constant 0 : i32
    return %c0_i32, %c0_i32_0, %c0_i32_1, %c0_i32_2 : i32, i32, i32, i32
  }
  func.func @transform_13(%arg0: i32) -> (i32, i32) {
    %c0_i32 = arith.constant 0 : i32
    %c0_i32_0 = arith.constant 0 : i32
    %c0_i32_1 = arith.constant 0 : i32
    return %c0_i32, %c0_i32_0 : i32, i32
  }
  func.func @transform_14(%arg0: i32) -> (i32, i32, i32) {
    %c0_i32 = arith.constant 0 : i32
    %c0_i32_0 = arith.constant 0 : i32
    %c0_i32_1 = arith.constant 0 : i32
    %c0_i32_2 = arith.constant 0 : i32
    return %c0_i32, %c0_i32_0, %c0_i32_1 : i32, i32, i32
  }
  func.func @transform_15(%arg0: i32) -> (i32, i32, i32) {
    %c0_i32 = arith.constant 0 : i32
    %c0_i32_0 = arith.constant 0 : i32
    %c0_i32_1 = arith.constant 0 : i32
    return %arg0, %c0_i32, %c0_i32_0 : i32, i32, i32
  }
}

</mosaic_0001>

<llo_original>
// kernel: generator_forward.1
$region0: #{generator_forward.1}
  #allocation0 [shape = 'u32[]', space=smem, size = 0x4, offset = 0x4, fixed_abs, tag = 'smem constant byte address 0x4 - core index']
  #allocation1 [shape = 'u32[144,128]{1,0:T(1,128)}', space=vmem, size = 0x12000, scoped, tag = 'internal scratch']
  %s0 = inlined_call_operand.vmem [shape: bf16[2,256,8], index: 0, kind: input, shape index: {}]
  %s1 = inlined_call_operand.vmem [shape: bf16[1024,256], index: 1, kind: input, shape index: {}]
  %s2 = inlined_call_operand.vmem [shape: bf16[16,8,64], index: 2, kind: input, shape index: {}]
  %s3 = inlined_call_operand.vmem [shape: f32[1,64], index: 3, kind: input, shape index: {}]
  %s4 = inlined_call_operand.vmem [shape: bf16[256,64], index: 4, kind: input, shape index: {}]
  %s5 = inlined_call_operand.vmem [shape: bf16[16,64,128], index: 5, kind: input, shape index: {}]
  %s6 = inlined_call_operand.vmem [shape: f32[1,128], index: 6, kind: input, shape index: {}]
  %s7 = inlined_call_operand.vmem [shape: bf16[128,16], index: 7, kind: input, shape index: {}]
  %s8 = inlined_call_operand.vmem [shape: bf16[4,4,128,64], index: 8, kind: input, shape index: {}]
  %s9 = inlined_call_operand.vmem [shape: f32[1,64], index: 9, kind: input, shape index: {}]
  %s10 = inlined_call_operand.vmem [shape: bf16[4,64,32], index: 10, kind: input, shape index: {}]
  %s11 = inlined_call_operand.vmem [shape: bf16[352,64], index: 11, kind: input, shape index: {}]
  %s12 = inlined_call_operand.vmem [shape: bf16[4,4,64,3], index: 12, kind: input, shape index: {}]
  %s13 = inlined_call_operand.vmem [shape: f32[1,3], index: 13, kind: input, shape index: {}]
  %s14 = inlined_call_operand.vmem [shape: bf16[4,256,88], index: 14, kind: input, shape index: {}]
  %s15 = inlined_call_operand.vmem [shape: f32[2,256,3], index: 15, kind: output, shape index: {}]
  %s16 = sld [smem:[#allocation0]]
  $region93: #{generator_forward.1} parent=0
    _
  %s18 = ssub.s32 1, %s16
  %s19 = scalar_select 0, %s18, %s16
  loop: start=0, step=1, limit=4
  $region2: #{generator_forward.1} parent=0 // loop_pre_header
    _
  $region3: #{generator_forward.1} parent=0 // loop_header
    %s21 = sphi 0, %s25
    %p22 = scmp.ge.s32.totalorder %s21, 4
    %s31 = sphi 0, %s33
    %s34 = sphi 0, %s31
    %s35 = sphi 0, %s34
    %s51 = sphi 0, %s35
    %s55 = sphi 0, %s55
    %s57 = sphi 0, %s55
    %s58 = sphi 0, %s57
    %s72 = sphi 0, %s58
    %s76 = sphi 0, %s76
    %s78 = sphi 0, %s76
    %s79 = sphi 0, %s78
    %s93 = sphi 0, %s79
    %s97 = sphi 0, %s97
    %s99 = sphi 0, %s97
    %s100 = sphi 0, %s99
    %s114 = sphi 0, %s100
    %s118 = sphi 0, %s118
    %s120 = sphi 0, %s118
    %s121 = sphi 0, %s120
    %s135 = sphi 0, %s121
    %s139 = sphi 0, %s139
    %s141 = sphi 0, %s139
    %s142 = sphi 0, %s141
    %s156 = sphi 0, %s142
    %s160 = sphi 0, %s160
    %s162 = sphi 0, %s160
    %s163 = sphi 0, %s162
    %s177 = sphi 0, %s163
    %s181 = sphi 0, %s181
    %s183 = sphi 0, %s181
    %s184 = sphi 0, %s183
    %s198 = sphi 0, %s184
    %s202 = sphi 0, %s202
    %s204 = sphi 0, %s202
    %s205 = sphi 0, %s204
    %s219 = sphi 0, %s205
    %s223 = sphi 0, %s223
    %s225 = sphi 0, %s223
    %s226 = sphi 0, %s225
    %s240 = sphi 0, %s226
    %s244 = sphi 0, %s244
    %s246 = sphi 0, %s244
    %s247 = sphi 0, %s246
    %s261 = sphi 0, %s247
    %s265 = sphi 0, %s265
    %s267 = sphi 0, %s265
    %s268 = sphi 0, %s267
    %s282 = sphi 0, %s268
    %s286 = sphi 0, %s286
    %s288 = sphi 0, %s286
    %s289 = sphi 0, %s288
    %s303 = sphi 0, %s289
    %s307 = sphi 0, %s307
    %s309 = sphi 0, %s307
    %s310 = sphi 0, %s309
    %s324 = sphi 0, %s310
    %s328 = sphi 0, %s328
    %s330 = sphi 0, %s328
    %s331 = sphi 0, %s330
    %s345 = sphi 0, %s331
    %s351 = sphi 0, %s353
    %s354 = sphi 0, %s351
    %s355 = sphi 0, %s354
    %s371 = sphi 0, %s355
  $region4: #{generator_forward.1} parent=0 // loop_header_branch
    %24 = sbr.rel (%p22) target = $region8
  $region5: #{generator_forward.1} parent=0 // loop_body
    %s26 = ssub.s32 %s21, 1
    %s27 = ssub.s32 %s21, 2
    %s28 = sadd.s32 %s21, 1
    %s29 = ssub.s32 %s21, %s28
    %p30 = scmp.eq.s32.totalorder %s29, 0
    %s32 = sadd.s32 %s31, 1
    %s33 = scalar_select %p30, %s31, %s32
    %p36 = pneg %p30
    %p37 = scmp.eq.s32.totalorder %s21, 1
    %p38 = por %p36, %p37
    %p39 = scmp.ne.s32.totalorder %s31, %s34
    %p40 = scmp.eq.s32.totalorder %s21, 0
    %p41 = por %p39, %p40
    %p42 = scmp.ne.s32.totalorder %s31, %s34
    %p43 = scmp.eq.s32.totalorder %s26, 1
    %p44 = por %p42, %p43
    %p45 = scmp.ne.s32.totalorder %s34, %s35
    %p46 = scmp.eq.s32.totalorder %s26, 0
    %p47 = por %p45, %p46
    %p48 = scmp.ne.s32.totalorder %s34, %s35
    %p49 = scmp.eq.s32.totalorder %s27, 1
    %p50 = por %p48, %p49
    %p52 = scmp.ne.s32.totalorder %s35, %s51
    %p53 = scmp.eq.s32.totalorder %s27, 0
    %p54 = por %p52, %p53
    %s56 = sadd.s32 %s55, 1
    %p59 = scmp.eq.s32.totalorder %s21, 1
    %p60 = scmp.ne.s32.totalorder %s55, %s57
    %p61 = scmp.eq.s32.totalorder %s21, 0
    %p62 = por %p60, %p61
    %p63 = scmp.ne.s32.totalorder %s55, %s57
    %p64 = scmp.eq.s32.totalorder %s26, 1
    %p65 = por %p63, %p64
    %p66 = scmp.ne.s32.totalorder %s57, %s58
    %p67 = scmp.eq.s32.totalorder %s26, 0
    %p68 = por %p66, %p67
    %p69 = scmp.ne.s32.totalorder %s57, %s58
    %p70 = scmp.eq.s32.totalorder %s27, 1
    %p71 = por %p69, %p70
    %p73 = scmp.ne.s32.totalorder %s58, %s72
    %p74 = scmp.eq.s32.totalorder %s27, 0
    %p75 = por %p73, %p74
    %s77 = sadd.s32 %s76, 1
    %p80 = scmp.eq.s32.totalorder %s21, 1
    %p81 = scmp.ne.s32.totalorder %s76, %s78
    %p82 = scmp.eq.s32.totalorder %s21, 0
    %p83 = por %p81, %p82
    %p84 = scmp.ne.s32.totalorder %s76, %s78
    %p85 = scmp.eq.s32.totalorder %s26, 1
    %p86 = por %p84, %p85
    %p87 = scmp.ne.s32.totalorder %s78, %s79
    %p88 = scmp.eq.s32.totalorder %s26, 0
    %p89 = por %p87, %p88
    %p90 = scmp.ne.s32.totalorder %s78, %s79
    %p91 = scmp.eq.s32.totalorder %s27, 1
    %p92 = por %p90, %p91
    %p94 = scmp.ne.s32.totalorder %s79, %s93
    %p95 = scmp.eq.s32.totalorder %s27, 0
    %p96 = por %p94, %p95
    %s98 = sadd.s32 %s97, 1
    %p101 = scmp.eq.s32.totalorder %s21, 1
    %p102 = scmp.ne.s32.totalorder %s97, %s99
    %p103 = scmp.eq.s32.totalorder %s21, 0
    %p104 = por %p102, %p103
    %p105 = scmp.ne.s32.totalorder %s97, %s99
    %p106 = scmp.eq.s32.totalorder %s26, 1
    %p107 = por %p105, %p106
    %p108 = scmp.ne.s32.totalorder %s99, %s100
    %p109 = scmp.eq.s32.totalorder %s26, 0
    %p110 = por %p108, %p109
    %p111 = scmp.ne.s32.totalorder %s99, %s100
    %p112 = scmp.eq.s32.totalorder %s27, 1
    %p113 = por %p111, %p112
    %p115 = scmp.ne.s32.totalorder %s100, %s114
    %p116 = scmp.eq.s32.totalorder %s27, 0
    %p117 = por %p115, %p116
    %s119 = sadd.s32 %s118, 1
    %p122 = scmp.eq.s32.totalorder %s21, 1
    %p123 = scmp.ne.s32.totalorder %s118, %s120
    %p124 = scmp.eq.s32.totalorder %s21, 0
    %p125 = por %p123, %p124
    %p126 = scmp.ne.s32.totalorder %s118, %s120
    %p127 = scmp.eq.s32.totalorder %s26, 1
    %p128 = por %p126, %p127
    %p129 = scmp.ne.s32.totalorder %s120, %s121
    %p130 = scmp.eq.s32.totalorder %s26, 0
    %p131 = por %p129, %p130
    %p132 = scmp.ne.s32.totalorder %s120, %s121
    %p133 = scmp.eq.s32.totalorder %s27, 1
    %p134 = por %p132, %p133
    %p136 = scmp.ne.s32.totalorder %s121, %s135
    %p137 = scmp.eq.s32.totalorder %s27, 0
    %p138 = por %p136, %p137
    %s140 = sadd.s32 %s139, 1
    %p143 = scmp.eq.s32.totalorder %s21, 1
    %p144 = scmp.ne.s32.totalorder %s139, %s141
    %p145 = scmp.eq.s32.totalorder %s21, 0
    %p146 = por %p144, %p145
    %p147 = scmp.ne.s32.totalorder %s139, %s141
    %p148 = scmp.eq.s32.totalorder %s26, 1
    %p149 = por %p147, %p148
    %p150 = scmp.ne.s32.totalorder %s141, %s142
    %p151 = scmp.eq.s32.totalorder %s26, 0
    %p152 = por %p150, %p151
    %p153 = scmp.ne.s32.totalorder %s141, %s142
    %p154 = scmp.eq.s32.totalorder %s27, 1
    %p155 = por %p153, %p154
    %p157 = scmp.ne.s32.totalorder %s142, %s156
    %p158 = scmp.eq.s32.totalorder %s27, 0
    %p159 = por %p157, %p158
    %s161 = sadd.s32 %s160, 1
    %p164 = scmp.eq.s32.totalorder %s21, 1
    %p165 = scmp.ne.s32.totalorder %s160, %s162
    %p166 = scmp.eq.s32.totalorder %s21, 0
    %p167 = por %p165, %p166
    %p168 = scmp.ne.s32.totalorder %s160, %s162
    %p169 = scmp.eq.s32.totalorder %s26, 1
    %p170 = por %p168, %p169
    %p171 = scmp.ne.s32.totalorder %s162, %s163
    %p172 = scmp.eq.s32.totalorder %s26, 0
    %p173 = por %p171, %p172
    %p174 = scmp.ne.s32.totalorder %s162, %s163
    %p175 = scmp.eq.s32.totalorder %s27, 1
    %p176 = por %p174, %p175
    %p178 = scmp.ne.s32.totalorder %s163, %s177
    %p179 = scmp.eq.s32.totalorder %s27, 0
    %p180 = por %p178, %p179
    %s182 = sadd.s32 %s181, 1
    %p185 = scmp.eq.s32.totalorder %s21, 1
    %p186 = scmp.ne.s32.totalorder %s181, %s183
    %p187 = scmp.eq.s32.totalorder %s21, 0
    %p188 = por %p186, %p187
    %p189 = scmp.ne.s32.totalorder %s181, %s183
    %p190 = scmp.eq.s32.totalorder %s26, 1
    %p191 = por %p189, %p190
    %p192 = scmp.ne.s32.totalorder %s183, %s184
    %p193 = scmp.eq.s32.totalorder %s26, 0
    %p194 = por %p192, %p193
    %p195 = scmp.ne.s32.totalorder %s183, %s184
    %p196 = scmp.eq.s32.totalorder %s27, 1
    %p197 = por %p195, %p196
    %p199 = scmp.ne.s32.totalorder %s184, %s198
    %p200 = scmp.eq.s32.totalorder %s27, 0
    %p201 = por %p199, %p200
    %s203 = sadd.s32 %s202, 1
    %p206 = scmp.eq.s32.totalorder %s21, 1
    %p207 = scmp.ne.s32.totalorder %s202, %s204
    %p208 = scmp.eq.s32.totalorder %s21, 0
    %p209 = por %p207, %p208
    %p210 = scmp.ne.s32.totalorder %s202, %s204
    %p211 = scmp.eq.s32.totalorder %s26, 1
    %p212 = por %p210, %p211
    %p213 = scmp.ne.s32.totalorder %s204, %s205
    %p214 = scmp.eq.s32.totalorder %s26, 0
    %p215 = por %p213, %p214
    %p216 = scmp.ne.s32.totalorder %s204, %s205
    %p217 = scmp.eq.s32.totalorder %s27, 1
    %p218 = por %p216, %p217
    %p220 = scmp.ne.s32.totalorder %s205, %s219
    %p221 = scmp.eq.s32.totalorder %s27, 0
    %p222 = por %p220, %p221
    %s224 = sadd.s32 %s223, 1
    %p227 = scmp.eq.s32.totalorder %s21, 1
    %p228 = scmp.ne.s32.totalorder %s223, %s225
    %p229 = scmp.eq.s32.totalorder %s21, 0
    %p230 = por %p228, %p229
    %p231 = scmp.ne.s32.totalorder %s223, %s225
    %p232 = scmp.eq.s32.totalorder %s26, 1
    %p233 = por %p231, %p232
    %p234 = scmp.ne.s32.totalorder %s225, %s226
    %p235 = scmp.eq.s32.totalorder %s26, 0
    %p236 = por %p234, %p235
    %p237 = scmp.ne.s32.totalorder %s225, %s226
    %p238 = scmp.eq.s32.totalorder %s27, 1
    %p239 = por %p237, %p238
    %p241 = scmp.ne.s32.totalorder %s226, %s240
    %p242 = scmp.eq.s32.totalorder %s27, 0
    %p243 = por %p241, %p242
    %s245 = sadd.s32 %s244, 1
    %p248 = scmp.eq.s32.totalorder %s21, 1
    %p249 = scmp.ne.s32.totalorder %s244, %s246
    %p250 = scmp.eq.s32.totalorder %s21, 0
    %p251 = por %p249, %p250
    %p252 = scmp.ne.s32.totalorder %s244, %s246
    %p253 = scmp.eq.s32.totalorder %s26, 1
    %p254 = por %p252, %p253
    %p255 = scmp.ne.s32.totalorder %s246, %s247
    %p256 = scmp.eq.s32.totalorder %s26, 0
    %p257 = por %p255, %p256
    %p258 = scmp.ne.s32.totalorder %s246, %s247
    %p259 = scmp.eq.s32.totalorder %s27, 1
    %p260 = por %p258, %p259
    %p262 = scmp.ne.s32.totalorder %s247, %s261
    %p263 = scmp.eq.s32.totalorder %s27, 0
    %p264 = por %p262, %p263
    %s266 = sadd.s32 %s265, 1
    %p269 = scmp.eq.s32.totalorder %s21, 1
    %p270 = scmp.ne.s32.totalorder %s265, %s267
    %p271 = scmp.eq.s32.totalorder %s21, 0
    %p272 = por %p270, %p271
    %p273 = scmp.ne.s32.totalorder %s265, %s267
    %p274 = scmp.eq.s32.totalorder %s26, 1
    %p275 = por %p273, %p274
    %p276 = scmp.ne.s32.totalorder %s267, %s268
    %p277 = scmp.eq.s32.totalorder %s26, 0
    %p278 = por %p276, %p277
    %p279 = scmp.ne.s32.totalorder %s267, %s268
    %p280 = scmp.eq.s32.totalorder %s27, 1
    %p281 = por %p279, %p280
    %p283 = scmp.ne.s32.totalorder %s268, %s282
    %p284 = scmp.eq.s32.totalorder %s27, 0
    %p285 = por %p283, %p284
    %s287 = sadd.s32 %s286, 1
    %p290 = scmp.eq.s32.totalorder %s21, 1
    %p291 = scmp.ne.s32.totalorder %s286, %s288
    %p292 = scmp.eq.s32.totalorder %s21, 0
    %p293 = por %p291, %p292
    %p294 = scmp.ne.s32.totalorder %s286, %s288
    %p295 = scmp.eq.s32.totalorder %s26, 1
    %p296 = por %p294, %p295
    %p297 = scmp.ne.s32.totalorder %s288, %s289
    %p298 = scmp.eq.s32.totalorder %s26, 0
    %p299 = por %p297, %p298
    %p300 = scmp.ne.s32.totalorder %s288, %s289
    %p301 = scmp.eq.s32.totalorder %s27, 1
    %p302 = por %p300, %p301
    %p304 = scmp.ne.s32.totalorder %s289, %s303
    %p305 = scmp.eq.s32.totalorder %s27, 0
    %p306 = por %p304, %p305
    %s308 = sadd.s32 %s307, 1
    %p311 = scmp.eq.s32.totalorder %s21, 1
    %p312 = scmp.ne.s32.totalorder %s307, %s309
    %p313 = scmp.eq.s32.totalorder %s21, 0
    %p314 = por %p312, %p313
    %p315 = scmp.ne.s32.totalorder %s307, %s309
    %p316 = scmp.eq.s32.totalorder %s26, 1
    %p317 = por %p315, %p316
    %p318 = scmp.ne.s32.totalorder %s309, %s310
    %p319 = scmp.eq.s32.totalorder %s26, 0
    %p320 = por %p318, %p319
    %p321 = scmp.ne.s32.totalorder %s309, %s310
    %p322 = scmp.eq.s32.totalorder %s27, 1
    %p323 = por %p321, %p322
    %p325 = scmp.ne.s32.totalorder %s310, %s324
    %p326 = scmp.eq.s32.totalorder %s27, 0
    %p327 = por %p325, %p326
    %s329 = sadd.s32 %s328, 1
    %p332 = scmp.eq.s32.totalorder %s21, 1
    %p333 = scmp.ne.s32.totalorder %s328, %s330
    %p334 = scmp.eq.s32.totalorder %s21, 0
    %p335 = por %p333, %p334
    %p336 = scmp.ne.s32.totalorder %s328, %s330
    %p337 = scmp.eq.s32.totalorder %s26, 1
    %p338 = por %p336, %p337
    %p339 = scmp.ne.s32.totalorder %s330, %s331
    %p340 = scmp.eq.s32.totalorder %s26, 0
    %p341 = por %p339, %p340
    %p342 = scmp.ne.s32.totalorder %s330, %s331
    %p343 = scmp.eq.s32.totalorder %s27, 1
    %p344 = por %p342, %p343
    %p346 = scmp.ne.s32.totalorder %s331, %s345
    %p347 = scmp.eq.s32.totalorder %s27, 0
    %p348 = por %p346, %p347
    %s349 = ssub.s32 %s21, %s28
    %p350 = scmp.eq.s32.totalorder %s349, 0
    %s352 = sadd.s32 %s351, 1
    %s353 = scalar_select %p350, %s351, %s352
    %p356 = pneg %p350
    %p357 = scmp.eq.s32.totalorder %s21, 1
    %p358 = por %p356, %p357
    %p359 = scmp.ne.s32.totalorder %s351, %s354
    %p360 = scmp.eq.s32.totalorder %s21, 0
    %p361 = por %p359, %p360
    %p362 = scmp.ne.s32.totalorder %s351, %s354
    %p363 = scmp.eq.s32.totalorder %s26, 1
    %p364 = por %p362, %p363
    %p365 = scmp.ne.s32.totalorder %s354, %s355
    %p366 = scmp.eq.s32.totalorder %s26, 0
    %p367 = por %p365, %p366
    %p368 = scmp.ne.s32.totalorder %s354, %s355
    %p369 = scmp.eq.s32.totalorder %s27, 1
    %p370 = por %p368, %p369
    %p372 = scmp.ne.s32.totalorder %s355, %s371
    %p373 = scmp.eq.s32.totalorder %s27, 0
    %p374 = por %p372, %p373
    %p375 = scmp.le.s32.totalorder 1, %s21
    %p376 = scmp.lt.s32.totalorder %s21, 3
    %p377 = pnand %p375, %p376
    %p378 = pneg %p377
    // Predicated region
    $region9: #{generator_forward.1} parent=5 // pred_check
      _
    $region10: #{generator_forward.1} parent=5 // pred_check_branch
      %380 = sbr.rel (%p377) target = $region12
    $region11: #{generator_forward.1} parent=5 // pred_region
      %s381 = ssub.s32 %s21, 1
      // Predicated region
      $region13: #{generator_forward.1} parent=11 // pred_check
        %p382 = pneg %p68
      $region14: #{generator_forward.1} parent=11 // pred_check_branch
        %384 = sbr.rel (%p382) target = $region16
      $region15: #{generator_forward.1} parent=11 // pred_region
        _
      $region16: #{generator_forward.1} parent=11 // pred_fallthru
        _
      // Predicated region
      $region17: #{generator_forward.1} parent=11 // pred_check
        %p385 = pneg %p89
      $region18: #{generator_forward.1} parent=11 // pred_check_branch
        %387 = sbr.rel (%p385) target = $region20
      $region19: #{generator_forward.1} parent=11 // pred_region
        _
      $region20: #{generator_forward.1} parent=11 // pred_fallthru
        _
      // Predicated region
      $region21: #{generator_forward.1} parent=11 // pred_check
        %p388 = pneg %p110
      $region22: #{generator_forward.1} parent=11 // pred_check_branch
        %390 = sbr.rel (%p388) target = $region24
      $region23: #{generator_forward.1} parent=11 // pred_region
        _
      $region24: #{generator_forward.1} parent=11 // pred_fallthru
        _
      // Predicated region
      $region25: #{generator_forward.1} parent=11 // pred_check
        %p391 = pneg %p131
      $region26: #{generator_forward.1} parent=11 // pred_check_branch
        %393 = sbr.rel (%p391) target = $region28
      $region27: #{generator_forward.1} parent=11 // pred_region
        _
      $region28: #{generator_forward.1} parent=11 // pred_fallthru
        _
      // Predicated region
      $region29: #{generator_forward.1} parent=11 // pred_check
        %p394 = pneg %p152
      $region30: #{generator_forward.1} parent=11 // pred_check_branch
        %396 = sbr.rel (%p394) target = $region32
      $region31: #{generator_forward.1} parent=11 // pred_region
        _
      $region32: #{generator_forward.1} parent=11 // pred_fallthru
        _
      // Predicated region
      $region33: #{generator_forward.1} parent=11 // pred_check
        %p397 = pneg %p173
      $region34: #{generator_forward.1} parent=11 // pred_check_branch
        %399 = sbr.rel (%p397) target = $region36
      $region35: #{generator_forward.1} parent=11 // pred_region
        _
      $region36: #{generator_forward.1} parent=11 // pred_fallthru
        _
      // Predicated region
      $region37: #{generator_forward.1} parent=11 // pred_check
        %p400 = pneg %p194
      $region38: #{generator_forward.1} parent=11 // pred_check_branch
        %402 = sbr.rel (%p400) target = $region40
      $region39: #{generator_forward.1} parent=11 // pred_region
        _
      $region40: #{generator_forward.1} parent=11 // pred_fallthru
        _
      // Predicated region
      $region41: #{generator_forward.1} parent=11 // pred_check
        %p403 = pneg %p215
      $region42: #{generator_forward.1} parent=11 // pred_check_branch
        %405 = sbr.rel (%p403) target = $region44
      $region43: #{generator_forward.1} parent=11 // pred_region
        _
      $region44: #{generator_forward.1} parent=11 // pred_fallthru
        _
      // Predicated region
      $region45: #{generator_forward.1} parent=11 // pred_check
        %p406 = pneg %p236
      $region46: #{generator_forward.1} parent=11 // pred_check_branch
        %408 = sbr.rel (%p406) target = $region48
      $region47: #{generator_forward.1} parent=11 // pred_region
        _
      $region48: #{generator_forward.1} parent=11 // pred_fallthru
        _
      // Predicated region
      $region49: #{generator_forward.1} parent=11 // pred_check
        %p409 = pneg %p257
      $region50: #{generator_forward.1} parent=11 // pred_check_branch
        %411 = sbr.rel (%p409) target = $region52
      $region51: #{generator_forward.1} parent=11 // pred_region
        _
      $region52: #{generator_forward.1} parent=11 // pred_fallthru
        _
      // Predicated region
      $region53: #{generator_forward.1} parent=11 // pred_check
        %p412 = pneg %p278
      $region54: #{generator_forward.1} parent=11 // pred_check_branch
        %414 = sbr.rel (%p412) target = $region56
      $region55: #{generator_forward.1} parent=11 // pred_region
        _
      $region56: #{generator_forward.1} parent=11 // pred_fallthru
        _
      // Predicated region
      $region57: #{generator_forward.1} parent=11 // pred_check
        %p415 = pneg %p299
      $region58: #{generator_forward.1} parent=11 // pred_check_branch
        %417 = sbr.rel (%p415) target = $region60
      $region59: #{generator_forward.1} parent=11 // pred_region
        _
      $region60: #{generator_forward.1} parent=11 // pred_fallthru
        _
      // Predicated region
      $region61: #{generator_forward.1} parent=11 // pred_check
        %p418 = pneg %p320
      $region62: #{generator_forward.1} parent=11 // pred_check_branch
        %420 = sbr.rel (%p418) target = $region64
      $region63: #{generator_forward.1} parent=11 // pred_region
        _
      $region64: #{generator_forward.1} parent=11 // pred_fallthru
        _
      // Predicated region
      $region65: #{generator_forward.1} parent=11 // pred_check
        %p421 = pneg %p341
      $region66: #{generator_forward.1} parent=11 // pred_check_branch
        %423 = sbr.rel (%p421) target = $region68
      $region67: #{generator_forward.1} parent=11 // pred_region
        _
      $region68: #{generator_forward.1} parent=11 // pred_fallthru
        _
    $region12: #{generator_forward.1} parent=5 // pred_fallthru
      _
    %p424 = scmp.lt.s32.totalorder %s21, 2
    // Predicated region
    $region69: #{generator_forward.1} parent=5 // pred_check
      %p425 = pneg %p424
    $region70: #{generator_forward.1} parent=5 // pred_check_branch
      %427 = sbr.rel (%p425) target = $region72
    $region71: #{generator_forward.1} parent=5 // pred_region
      // Predicated region
      $region73: #{generator_forward.1} parent=71 // pred_check
        %p428 = pneg %p41
      $region74: #{generator_forward.1} parent=71 // pred_check_branch
        %430 = sbr.rel (%p428) target = $region76
      $region75: #{generator_forward.1} parent=71 // pred_region
        %p431 = scmp.lt.s32.totalorder %s21, 1
        %s432 = scalar_select %p431, %s21, 1
        %s433 = smul.addr %s432, 32
        %s434 = smul.addr %s433, 4
        %s435 = scalar_lea.vmem %s0, %s434
      $region76: #{generator_forward.1} parent=71 // pred_fallthru
        _
    $region72: #{generator_forward.1} parent=5 // pred_fallthru
      _
    %p436 = scmp.le.s32.totalorder 1, %s21
    %p437 = scmp.lt.s32.totalorder %s21, 3
    %p438 = pnand %p436, %p437
    %p439 = pneg %p438
    // Predicated region
    $region77: #{generator_forward.1} parent=5 // pred_check
      _
    $region78: #{generator_forward.1} parent=5 // pred_check_branch
      %441 = sbr.rel (%p438) target = $region80
    $region79: #{generator_forward.1} parent=5 // pred_region
      %s442 = ssub.s32 %s21, 1
      %p443 = scmp.lt.s32.totalorder %s26, 1
      %s444 = scalar_select %p443, %s26, 1
      %s445 = smul.addr %s444, 32
      %s446 = smul.addr %s445, 4
      %s447 = scalar_lea.vmem %s0, %s446
      %p448 = pneg %p47
      %p449 = pneg %p44
      %p450 = pneg %p68
      %p451 = pneg %p65
      %p452 = pneg %p89
      %p453 = pneg %p86
      %p454 = pneg %p110
      %p455 = pneg %p107
      %p456 = pneg %p131
      %p457 = pneg %p128
      %p458 = pneg %p152
      %p459 = pneg %p149
      %p460 = pneg %p173
      %p461 = pneg %p170
      %p462 = pneg %p194
      %p463 = pneg %p191
      %p464 = pneg %p215
      %p465 = pneg %p212
      %p466 = pneg %p236
      %p467 = pneg %p233
      %p468 = pneg %p257
      %p469 = pneg %p254
      %p470 = pneg %p278
      %p471 = pneg %p275
      %p472 = pneg %p299
      %p473 = pneg %p296
      %p474 = pneg %p320
      %p475 = pneg %p317
      %p476 = pneg %p341
      %p477 = pneg %p338
      %p478 = pneg %p367
      %p479 = pneg %p364
      %p480 = scmp.lt.s32.totalorder %s26, 1
      %s481 = scalar_select %p480, %s26, 1
      %s482 = smul.addr %s481, 32
      %s483 = smul.addr %s482, 8
      %s484 = scalar_lea.vmem %s15, %s483
      %p485 = scmp.lt.s32.totalorder %s26, 1
      %s486 = scalar_select %p485, %s26, 1
      %s487 = smul.addr %s486, 32
      %s488 = smul.addr %s487, 4
      %s489 = scalar_lea.vmem %s0, %s488
      %p490 = scmp.lt.s32.totalorder %s26, 1
      %s491 = scalar_select %p490, %s26, 1
      %s492 = smul.addr %s491, 32
      %s493 = smul.addr %s492, 8
      %s494 = scalar_lea.vmem %s15, %s493
      %v496 = vld [vmem:[%s489] sm:$0xf]
      %v497 = vld [vmem:[%s489 + $0x4] sm:$0xf]
      %v498 = vld [vmem:[%s489 + $0x8] sm:$0xf]
      %v499 = vld [vmem:[%s489 + $0xc] sm:$0xf]
      %v500 = vld [vmem:[%s489 + $0x10] sm:$0xf]
      %v501 = vld [vmem:[%s489 + $0x14] sm:$0xf]
      %v502 = vld [vmem:[%s489 + $0x18] sm:$0xf]
      %v503 = vld [vmem:[%s489 + $0x1c] sm:$0xf]
      %v504 = vld [vmem:[%s489 + $0x20] sm:$0xf]
      %v505 = vld [vmem:[%s489 + $0x24] sm:$0xf]
      %v506 = vld [vmem:[%s489 + $0x28] sm:$0xf]
      %v507 = vld [vmem:[%s489 + $0x2c] sm:$0xf]
      %v508 = vld [vmem:[%s489 + $0x30] sm:$0xf]
      %v509 = vld [vmem:[%s489 + $0x34] sm:$0xf]
      %v510 = vld [vmem:[%s489 + $0x38] sm:$0xf]
      %v511 = vld [vmem:[%s489 + $0x3c] sm:$0xf]
      %v512 = vld [vmem:[%s489 + $0x40] sm:$0xf]
      %v513 = vld [vmem:[%s489 + $0x44] sm:$0xf]
      %v514 = vld [vmem:[%s489 + $0x48] sm:$0xf]
      %v515 = vld [vmem:[%s489 + $0x4c] sm:$0xf]
      %v516 = vld [vmem:[%s489 + $0x50] sm:$0xf]
      %v517 = vld [vmem:[%s489 + $0x54] sm:$0xf]
      %v518 = vld [vmem:[%s489 + $0x58] sm:$0xf]
      %v519 = vld [vmem:[%s489 + $0x5c] sm:$0xf]
      %v520 = vld [vmem:[%s489 + $0x60] sm:$0xf]
      %v521 = vld [vmem:[%s489 + $0x64] sm:$0xf]
      %v522 = vld [vmem:[%s489 + $0x68] sm:$0xf]
      %v523 = vld [vmem:[%s489 + $0x6c] sm:$0xf]
      %v524 = vld [vmem:[%s489 + $0x70] sm:$0xf]
      %v525 = vld [vmem:[%s489 + $0x74] sm:$0xf]
      %v526 = vld [vmem:[%s489 + $0x78] sm:$0xf]
      %v527 = vld [vmem:[%s489 + $0x7c] sm:$0xf]
      %v528 = vld [vmem:[%s1] sm:$0xff]
      %v529 = vld [vmem:[%s1 + $0x8] sm:$0xff]
      %v530 = vld [vmem:[%s1 + $0x10] sm:$0xff]
      %v531 = vld [vmem:[%s1 + $0x18] sm:$0xff]
      %v532 = vld [vmem:[%s1 + $0x20] sm:$0xff]
      %v533 = vld [vmem:[%s1 + $0x28] sm:$0xff]
      %v534 = vld [vmem:[%s1 + $0x30] sm:$0xff]
      %v535 = vld [vmem:[%s1 + $0x38] sm:$0xff]
      %v536 = vld [vmem:[%s1 + $0x40] sm:$0xff]
      %v537 = vld [vmem:[%s1 + $0x48] sm:$0xff]
      %v538 = vld [vmem:[%s1 + $0x50] sm:$0xff]
      %v539 = vld [vmem:[%s1 + $0x58] sm:$0xff]
      %v540 = vld [vmem:[%s1 + $0x60] sm:$0xff]
      %v541 = vld [vmem:[%s1 + $0x68] sm:$0xff]
      %v542 = vld [vmem:[%s1 + $0x70] sm:$0xff]
      %v543 = vld [vmem:[%s1 + $0x78] sm:$0xff]
      %v544 = vld [vmem:[%s1 + $0x80] sm:$0xff]
      %v545 = vld [vmem:[%s1 + $0x88] sm:$0xff]
      %v546 = vld [vmem:[%s1 + $0x90] sm:$0xff]
      %v547 = vld [vmem:[%s1 + $0x98] sm:$0xff]
      %v548 = vld [vmem:[%s1 + $0xa0] sm:$0xff]
      %v549 = vld [vmem:[%s1 + $0xa8] sm:$0xff]
      %v550 = vld [vmem:[%s1 + $0xb0] sm:$0xff]
      %v551 = vld [vmem:[%s1 + $0xb8] sm:$0xff]
      %v552 = vld [vmem:[%s1 + $0xc0] sm:$0xff]
      %v553 = vld [vmem:[%s1 + $0xc8] sm:$0xff]
      %v554 = vld [vmem:[%s1 + $0xd0] sm:$0xff]
      %v555 = vld [vmem:[%s1 + $0xd8] sm:$0xff]
      %v556 = vld [vmem:[%s1 + $0xe0] sm:$0xff]
      %v557 = vld [vmem:[%s1 + $0xe8] sm:$0xff]
      %v558 = vld [vmem:[%s1 + $0xf0] sm:$0xff]
      %v559 = vld [vmem:[%s1 + $0xf8] sm:$0xff]
      %v560 = vld [vmem:[%s1 + $0x100] sm:$0xff]
      %v561 = vld [vmem:[%s1 + $0x108] sm:$0xff]
      %v562 = vld [vmem:[%s1 + $0x110] sm:$0xff]
      %v563 = vld [vmem:[%s1 + $0x118] sm:$0xff]
      %v564 = vld [vmem:[%s1 + $0x120] sm:$0xff]
      %v565 = vld [vmem:[%s1 + $0x128] sm:$0xff]
      %v566 = vld [vmem:[%s1 + $0x130] sm:$0xff]
      %v567 = vld [vmem:[%s1 + $0x138] sm:$0xff]
      %v568 = vld [vmem:[%s1 + $0x140] sm:$0xff]
      %v569 = vld [vmem:[%s1 + $0x148] sm:$0xff]
      %v570 = vld [vmem:[%s1 + $0x150] sm:$0xff]
      %v571 = vld [vmem:[%s1 + $0x158] sm:$0xff]
      %v572 = vld [vmem:[%s1 + $0x160] sm:$0xff]
      %v573 = vld [vmem:[%s1 + $0x168] sm:$0xff]
      %v574 = vld [vmem:[%s1 + $0x170] sm:$0xff]
      %v575 = vld [vmem:[%s1 + $0x178] sm:$0xff]
      %v576 = vld [vmem:[%s1 + $0x180] sm:$0xff]
      %v577 = vld [vmem:[%s1 + $0x188] sm:$0xff]
      %v578 = vld [vmem:[%s1 + $0x190] sm:$0xff]
      %v579 = vld [vmem:[%s1 + $0x198] sm:$0xff]
      %v580 = vld [vmem:[%s1 + $0x1a0] sm:$0xff]
      %v581 = vld [vmem:[%s1 + $0x1a8] sm:$0xff]
      %v582 = vld [vmem:[%s1 + $0x1b0] sm:$0xff]
      %v583 = vld [vmem:[%s1 + $0x1b8] sm:$0xff]
      %v584 = vld [vmem:[%s1 + $0x1c0] sm:$0xff]
      %v585 = vld [vmem:[%s1 + $0x1c8] sm:$0xff]
      %v586 = vld [vmem:[%s1 + $0x1d0] sm:$0xff]
      %v587 = vld [vmem:[%s1 + $0x1d8] sm:$0xff]
      %v588 = vld [vmem:[%s1 + $0x1e0] sm:$0xff]
      %v589 = vld [vmem:[%s1 + $0x1e8] sm:$0xff]
      %v590 = vld [vmem:[%s1 + $0x1f0] sm:$0xff]
      %v591 = vld [vmem:[%s1 + $0x1f8] sm:$0xff]
      %v592 = vld [vmem:[%s1 + $0x200] sm:$0xff]
      %v593 = vld [vmem:[%s1 + $0x208] sm:$0xff]
      %v594 = vld [vmem:[%s1 + $0x210] sm:$0xff]
      %v595 = vld [vmem:[%s1 + $0x218] sm:$0xff]
      %v596 = vld [vmem:[%s1 + $0x220] sm:$0xff]
      %v597 = vld [vmem:[%s1 + $0x228] sm:$0xff]
      %v598 = vld [vmem:[%s1 + $0x230] sm:$0xff]
      %v599 = vld [vmem:[%s1 + $0x238] sm:$0xff]
      %v600 = vld [vmem:[%s1 + $0x240] sm:$0xff]
      %v601 = vld [vmem:[%s1 + $0x248] sm:$0xff]
      %v602 = vld [vmem:[%s1 + $0x250] sm:$0xff]
      %v603 = vld [vmem:[%s1 + $0x258] sm:$0xff]
      %v604 = vld [vmem:[%s1 + $0x260] sm:$0xff]
      %v605 = vld [vmem:[%s1 + $0x268] sm:$0xff]
      %v606 = vld [vmem:[%s1 + $0x270] sm:$0xff]
      %v607 = vld [vmem:[%s1 + $0x278] sm:$0xff]
      %v608 = vld [vmem:[%s1 + $0x280] sm:$0xff]
      %v609 = vld [vmem:[%s1 + $0x288] sm:$0xff]
      %v610 = vld [vmem:[%s1 + $0x290] sm:$0xff]
      %v611 = vld [vmem:[%s1 + $0x298] sm:$0xff]
      %v612 = vld [vmem:[%s1 + $0x2a0] sm:$0xff]
      %v613 = vld [vmem:[%s1 + $0x2a8] sm:$0xff]
      %v614 = vld [vmem:[%s1 + $0x2b0] sm:$0xff]
      %v615 = vld [vmem:[%s1 + $0x2b8] sm:$0xff]
      %v616 = vld [vmem:[%s1 + $0x2c0] sm:$0xff]
      %v617 = vld [vmem:[%s1 + $0x2c8] sm:$0xff]
      %v618 = vld [vmem:[%s1 + $0x2d0] sm:$0xff]
      %v619 = vld [vmem:[%s1 + $0x2d8] sm:$0xff]
      %v620 = vld [vmem:[%s1 + $0x2e0] sm:$0xff]
      %v621 = vld [vmem:[%s1 + $0x2e8] sm:$0xff]
      %v622 = vld [vmem:[%s1 + $0x2f0] sm:$0xff]
      %v623 = vld [vmem:[%s1 + $0x2f8] sm:$0xff]
      %v624 = vld [vmem:[%s1 + $0x300] sm:$0xff]
      %v625 = vld [vmem:[%s1 + $0x308] sm:$0xff]
      %v626 = vld [vmem:[%s1 + $0x310] sm:$0xff]
      %v627 = vld [vmem:[%s1 + $0x318] sm:$0xff]
      %v628 = vld [vmem:[%s1 + $0x320] sm:$0xff]
      %v629 = vld [vmem:[%s1 + $0x328] sm:$0xff]
      %v630 = vld [vmem:[%s1 + $0x330] sm:$0xff]
      %v631 = vld [vmem:[%s1 + $0x338] sm:$0xff]
      %v632 = vld [vmem:[%s1 + $0x340] sm:$0xff]
      %v633 = vld [vmem:[%s1 + $0x348] sm:$0xff]
      %v634 = vld [vmem:[%s1 + $0x350] sm:$0xff]
      %v635 = vld [vmem:[%s1 + $0x358] sm:$0xff]
      %v636 = vld [vmem:[%s1 + $0x360] sm:$0xff]
      %v637 = vld [vmem:[%s1 + $0x368] sm:$0xff]
      %v638 = vld [vmem:[%s1 + $0x370] sm:$0xff]
      %v639 = vld [vmem:[%s1 + $0x378] sm:$0xff]
      %v640 = vld [vmem:[%s1 + $0x380] sm:$0xff]
      %v641 = vld [vmem:[%s1 + $0x388] sm:$0xff]
      %v642 = vld [vmem:[%s1 + $0x390] sm:$0xff]
      %v643 = vld [vmem:[%s1 + $0x398] sm:$0xff]
      %v644 = vld [vmem:[%s1 + $0x3a0] sm:$0xff]
      %v645 = vld [vmem:[%s1 + $0x3a8] sm:$0xff]
      %v646 = vld [vmem:[%s1 + $0x3b0] sm:$0xff]
      %v647 = vld [vmem:[%s1 + $0x3b8] sm:$0xff]
      %v648 = vld [vmem:[%s1 + $0x3c0] sm:$0xff]
      %v649 = vld [vmem:[%s1 + $0x3c8] sm:$0xff]
      %v650 = vld [vmem:[%s1 + $0x3d0] sm:$0xff]
      %v651 = vld [vmem:[%s1 + $0x3d8] sm:$0xff]
      %v652 = vld [vmem:[%s1 + $0x3e0] sm:$0xff]
      %v653 = vld [vmem:[%s1 + $0x3e8] sm:$0xff]
      %v654 = vld [vmem:[%s1 + $0x3f0] sm:$0xff]
      %v655 = vld [vmem:[%s1 + $0x3f8] sm:$0xff]
      %v784 = vunpack.c.l.b16 %v528
      %v785 = vunpack.c.h.b16 %v528
      %v786 = vunpack.c.l.b16 %v529
      %v787 = vunpack.c.h.b16 %v529
      %v788 = vunpack.c.l.b16 %v530
      %v789 = vunpack.c.h.b16 %v530
      %v790 = vunpack.c.l.b16 %v531
      %v791 = vunpack.c.h.b16 %v531
      %v792 = vunpack.c.l.b16 %v532
      %v793 = vunpack.c.h.b16 %v532
      %v794 = vunpack.c.l.b16 %v533
      %v795 = vunpack.c.h.b16 %v533
      %v796 = vunpack.c.l.b16 %v534
      %v797 = vunpack.c.h.b16 %v534
      %v798 = vunpack.c.l.b16 %v535
      %v799 = vunpack.c.h.b16 %v535
      %v800 = vunpack.c.l.b16 %v536
      %v801 = vunpack.c.h.b16 %v536
      %v802 = vunpack.c.l.b16 %v537
      %v803 = vunpack.c.h.b16 %v537
      %v804 = vunpack.c.l.b16 %v538
      %v805 = vunpack.c.h.b16 %v538
      %v806 = vunpack.c.l.b16 %v539
      %v807 = vunpack.c.h.b16 %v539
      %v808 = vunpack.c.l.b16 %v540
      %v809 = vunpack.c.h.b16 %v540
      %v810 = vunpack.c.l.b16 %v541
      %v811 = vunpack.c.h.b16 %v541
      %v812 = vunpack.c.l.b16 %v542
      %v813 = vunpack.c.h.b16 %v542
      %v814 = vunpack.c.l.b16 %v543
      %v815 = vunpack.c.h.b16 %v543
      %v816 = vunpack.c.l.b16 %v544
      %v817 = vunpack.c.h.b16 %v544
      %v818 = vunpack.c.l.b16 %v545
      %v819 = vunpack.c.h.b16 %v545
      %v820 = vunpack.c.l.b16 %v546
      %v821 = vunpack.c.h.b16 %v546
      %v822 = vunpack.c.l.b16 %v547
      %v823 = vunpack.c.h.b16 %v547
      %v824 = vunpack.c.l.b16 %v548
      %v825 = vunpack.c.h.b16 %v548
      %v826 = vunpack.c.l.b16 %v549
      %v827 = vunpack.c.h.b16 %v549
      %v828 = vunpack.c.l.b16 %v550
      %v829 = vunpack.c.h.b16 %v550
      %v830 = vunpack.c.l.b16 %v551
      %v831 = vunpack.c.h.b16 %v551
      %v832 = vunpack.c.l.b16 %v552
      %v833 = vunpack.c.h.b16 %v552
      %v834 = vunpack.c.l.b16 %v553
      %v835 = vunpack.c.h.b16 %v553
      %v836 = vunpack.c.l.b16 %v554
      %v837 = vunpack.c.h.b16 %v554
      %v838 = vunpack.c.l.b16 %v555
      %v839 = vunpack.c.h.b16 %v555
      %v840 = vunpack.c.l.b16 %v556
      %v841 = vunpack.c.h.b16 %v556
      %v842 = vunpack.c.l.b16 %v557
      %v843 = vunpack.c.h.b16 %v557
      %v844 = vunpack.c.l.b16 %v558
      %v845 = vunpack.c.h.b16 %v558
      %v846 = vunpack.c.l.b16 %v559
      %v847 = vunpack.c.h.b16 %v559
      %v848 = vunpack.c.l.b16 %v560
      %v849 = vunpack.c.h.b16 %v560
      %v850 = vunpack.c.l.b16 %v561
      %v851 = vunpack.c.h.b16 %v561
      %v852 = vunpack.c.l.b16 %v562
      %v853 = vunpack.c.h.b16 %v562
      %v854 = vunpack.c.l.b16 %v563
      %v855 = vunpack.c.h.b16 %v563
      %v856 = vunpack.c.l.b16 %v564
      %v857 = vunpack.c.h.b16 %v564
      %v858 = vunpack.c.l.b16 %v565
      %v859 = vunpack.c.h.b16 %v565
      %v860 = vunpack.c.l.b16 %v566
      %v861 = vunpack.c.h.b16 %v566
      %v862 = vunpack.c.l.b16 %v567
      %v863 = vunpack.c.h.b16 %v567
      %v864 = vunpack.c.l.b16 %v568
      %v865 = vunpack.c.h.b16 %v568
      %v866 = vunpack.c.l.b16 %v569
      %v867 = vunpack.c.h.b16 %v569
      %v868 = vunpack.c.l.b16 %v570
      %v869 = vunpack.c.h.b16 %v570
      %v870 = vunpack.c.l.b16 %v571
      %v871 = vunpack.c.h.b16 %v571
      %v872 = vunpack.c.l.b16 %v572
      %v873 = vunpack.c.h.b16 %v572
      %v874 = vunpack.c.l.b16 %v573
      %v875 = vunpack.c.h.b16 %v573
      %v876 = vunpack.c.l.b16 %v574
      %v877 = vunpack.c.h.b16 %v574
      %v878 = vunpack.c.l.b16 %v575
      %v879 = vunpack.c.h.b16 %v575
      %v880 = vunpack.c.l.b16 %v576
      %v881 = vunpack.c.h.b16 %v576
      %v882 = vunpack.c.l.b16 %v577
      %v883 = vunpack.c.h.b16 %v577
      %v884 = vunpack.c.l.b16 %v578
      %v885 = vunpack.c.h.b16 %v578
      %v886 = vunpack.c.l.b16 %v579
      %v887 = vunpack.c.h.b16 %v579
      %v888 = vunpack.c.l.b16 %v580
      %v889 = vunpack.c.h.b16 %v580
      %v890 = vunpack.c.l.b16 %v581
      %v891 = vunpack.c.h.b16 %v581
      %v892 = vunpack.c.l.b16 %v582
      %v893 = vunpack.c.h.b16 %v582
      %v894 = vunpack.c.l.b16 %v583
      %v895 = vunpack.c.h.b16 %v583
      %v896 = vunpack.c.l.b16 %v584
      %v897 = vunpack.c.h.b16 %v584
      %v898 = vunpack.c.l.b16 %v585
      %v899 = vunpack.c.h.b16 %v585
      %v900 = vunpack.c.l.b16 %v586
      %v901 = vunpack.c.h.b16 %v586
      %v902 = vunpack.c.l.b16 %v587
      %v903 = vunpack.c.h.b16 %v587
      %v904 = vunpack.c.l.b16 %v588
      %v905 = vunpack.c.h.b16 %v588
      %v906 = vunpack.c.l.b16 %v589
      %v907 = vunpack.c.h.b16 %v589
      %v908 = vunpack.c.l.b16 %v590
      %v909 = vunpack.c.h.b16 %v590
      %v910 = vunpack.c.l.b16 %v591
      %v911 = vunpack.c.h.b16 %v591
      %v912 = vunpack.c.l.b16 %v592
      %v913 = vunpack.c.h.b16 %v592
      %v914 = vunpack.c.l.b16 %v593
      %v915 = vunpack.c.h.b16 %v593
      %v916 = vunpack.c.l.b16 %v594
      %v917 = vunpack.c.h.b16 %v594
      %v918 = vunpack.c.l.b16 %v595
      %v919 = vunpack.c.h.b16 %v595
      %v920 = vunpack.c.l.b16 %v596
      %v921 = vunpack.c.h.b16 %v596
      %v922 = vunpack.c.l.b16 %v597
      %v923 = vunpack.c.h.b16 %v597
      %v924 = vunpack.c.l.b16 %v598
      %v925 = vunpack.c.h.b16 %v598
      %v926 = vunpack.c.l.b16 %v599
      %v927 = vunpack.c.h.b16 %v599
      %v928 = vunpack.c.l.b16 %v600
      %v929 = vunpack.c.h.b16 %v600
      %v930 = vunpack.c.l.b16 %v601
      %v931 = vunpack.c.h.b16 %v601
      %v932 = vunpack.c.l.b16 %v602
      %v933 = vunpack.c.h.b16 %v602
      %v934 = vunpack.c.l.b16 %v603
      %v935 = vunpack.c.h.b16 %v603
      %v936 = vunpack.c.l.b16 %v604
      %v937 = vunpack.c.h.b16 %v604
      %v938 = vunpack.c.l.b16 %v605
      %v939 = vunpack.c.h.b16 %v605
      %v940 = vunpack.c.l.b16 %v606
      %v941 = vunpack.c.h.b16 %v606
      %v942 = vunpack.c.l.b16 %v607
      %v943 = vunpack.c.h.b16 %v607
      %v944 = vunpack.c.l.b16 %v608
      %v945 = vunpack.c.h.b16 %v608
      %v946 = vunpack.c.l.b16 %v609
      %v947 = vunpack.c.h.b16 %v609
      %v948 = vunpack.c.l.b16 %v610
      %v949 = vunpack.c.h.b16 %v610
      %v950 = vunpack.c.l.b16 %v611
      %v951 = vunpack.c.h.b16 %v611
      %v952 = vunpack.c.l.b16 %v612
      %v953 = vunpack.c.h.b16 %v612
      %v954 = vunpack.c.l.b16 %v613
      %v955 = vunpack.c.h.b16 %v613
      %v956 = vunpack.c.l.b16 %v614
      %v957 = vunpack.c.h.b16 %v614
      %v958 = vunpack.c.l.b16 %v615
      %v959 = vunpack.c.h.b16 %v615
      %v960 = vunpack.c.l.b16 %v616
      %v961 = vunpack.c.h.b16 %v616
      %v962 = vunpack.c.l.b16 %v617
      %v963 = vunpack.c.h.b16 %v617
      %v964 = vunpack.c.l.b16 %v618
      %v965 = vunpack.c.h.b16 %v618
      %v966 = vunpack.c.l.b16 %v619
      %v967 = vunpack.c.h.b16 %v619
      %v968 = vunpack.c.l.b16 %v620
      %v969 = vunpack.c.h.b16 %v620
      %v970 = vunpack.c.l.b16 %v621
      %v971 = vunpack.c.h.b16 %v621
      %v972 = vunpack.c.l.b16 %v622
      %v973 = vunpack.c.h.b16 %v622
      %v974 = vunpack.c.l.b16 %v623
      %v975 = vunpack.c.h.b16 %v623
      %v976 = vunpack.c.l.b16 %v624
      %v977 = vunpack.c.h.b16 %v624
      %v978 = vunpack.c.l.b16 %v625
      %v979 = vunpack.c.h.b16 %v625
      %v980 = vunpack.c.l.b16 %v626
      %v981 = vunpack.c.h.b16 %v626
      %v982 = vunpack.c.l.b16 %v627
      %v983 = vunpack.c.h.b16 %v627
      %v984 = vunpack.c.l.b16 %v628
      %v985 = vunpack.c.h.b16 %v628
      %v986 = vunpack.c.l.b16 %v629
      %v987 = vunpack.c.h.b16 %v629
      %v988 = vunpack.c.l.b16 %v630
      %v989 = vunpack.c.h.b16 %v630
      %v990 = vunpack.c.l.b16 %v631
      %v991 = vunpack.c.h.b16 %v631
      %v992 = vunpack.c.l.b16 %v632
      %v993 = vunpack.c.h.b16 %v632
      %v994 = vunpack.c.l.b16 %v633
      %v995 = vunpack.c.h.b16 %v633
      %v996 = vunpack.c.l.b16 %v634
      %v997 = vunpack.c.h.b16 %v634
      %v998 = vunpack.c.l.b16 %v635
      %v999 = vunpack.c.h.b16 %v635
      %v1000 = vunpack.c.l.b16 %v636
      %v1001 = vunpack.c.h.b16 %v636
      %v1002 = vunpack.c.l.b16 %v637
      %v1003 = vunpack.c.h.b16 %v637
      %v1004 = vunpack.c.l.b16 %v638
      %v1005 = vunpack.c.h.b16 %v638
      %v1006 = vunpack.c.l.b16 %v639
      %v1007 = vunpack.c.h.b16 %v639
      %v1008 = vunpack.c.l.b16 %v640
      %v1009 = vunpack.c.h.b16 %v640
      %v1010 = vunpack.c.l.b16 %v641
      %v1011 = vunpack.c.h.b16 %v641
      %v1012 = vunpack.c.l.b16 %v642
      %v1013 = vunpack.c.h.b16 %v642
      %v1014 = vunpack.c.l.b16 %v643
      %v1015 = vunpack.c.h.b16 %v643
      %v1016 = vunpack.c.l.b16 %v644
      %v1017 = vunpack.c.h.b16 %v644
      %v1018 = vunpack.c.l.b16 %v645
      %v1019 = vunpack.c.h.b16 %v645
      %v1020 = vunpack.c.l.b16 %v646
      %v1021 = vunpack.c.h.b16 %v646
      %v1022 = vunpack.c.l.b16 %v647
      %v1023 = vunpack.c.h.b16 %v647
      %v1024 = vunpack.c.l.b16 %v648
      %v1025 = vunpack.c.h.b16 %v648
      %v1026 = vunpack.c.l.b16 %v649
      %v1027 = vunpack.c.h.b16 %v649
      %v1028 = vunpack.c.l.b16 %v650
      %v1029 = vunpack.c.h.b16 %v650
      %v1030 = vunpack.c.l.b16 %v651
      %v1031 = vunpack.c.h.b16 %v651
      %v1032 = vunpack.c.l.b16 %v652
      %v1033 = vunpack.c.h.b16 %v652
      %v1034 = vunpack.c.l.b16 %v653
      %v1035 = vunpack.c.h.b16 %v653
      %v1036 = vunpack.c.l.b16 %v654
      %v1037 = vunpack.c.h.b16 %v654
      %v1038 = vunpack.c.l.b16 %v655
      %v1039 = vunpack.c.h.b16 %v655
      %v1040 = vpack.c.b16 %v786, %v784
      %v1041 = vpack.c.b16 %v787, %v785
      %v1042 = vpack.c.b16 %v790, %v788
      %v1043 = vpack.c.b16 %v791, %v789
      %v1044 = vpack.c.b16 %v794, %v792
      %v1045 = vpack.c.b16 %v795, %v793
      %v1046 = vpack.c.b16 %v798, %v796
      %v1047 = vpack.c.b16 %v799, %v797
      %v1048 = vpack.c.b16 %v802, %v800
      %v1049 = vpack.c.b16 %v803, %v801
      %v1050 = vpack.c.b16 %v806, %v804
      %v1051 = vpack.c.b16 %v807, %v805
      %v1052 = vpack.c.b16 %v810, %v808
      %v1053 = vpack.c.b16 %v811, %v809
      %v1054 = vpack.c.b16 %v814, %v812
      %v1055 = vpack.c.b16 %v815, %v813
      %v1056 = vpack.c.b16 %v818, %v816
      %v1057 = vpack.c.b16 %v819, %v817
      %v1058 = vpack.c.b16 %v822, %v820
      %v1059 = vpack.c.b16 %v823, %v821
      %v1060 = vpack.c.b16 %v826, %v824
      %v1061 = vpack.c.b16 %v827, %v825
      %v1062 = vpack.c.b16 %v830, %v828
      %v1063 = vpack.c.b16 %v831, %v829
      %v1064 = vpack.c.b16 %v834, %v832
      %v1065 = vpack.c.b16 %v835, %v833
      %v1066 = vpack.c.b16 %v838, %v836
      %v1067 = vpack.c.b16 %v839, %v837
      %v1068 = vpack.c.b16 %v842, %v840
      %v1069 = vpack.c.b16 %v843, %v841
      %v1070 = vpack.c.b16 %v846, %v844
      %v1071 = vpack.c.b16 %v847, %v845
      %v1072 = vpack.c.b16 %v850, %v848
      %v1073 = vpack.c.b16 %v851, %v849
      %v1074 = vpack.c.b16 %v854, %v852
      %v1075 = vpack.c.b16 %v855, %v853
      %v1076 = vpack.c.b16 %v858, %v856
      %v1077 = vpack.c.b16 %v859, %v857
      %v1078 = vpack.c.b16 %v862, %v860
      %v1079 = vpack.c.b16 %v863, %v861
      %v1080 = vpack.c.b16 %v866, %v864
      %v1081 = vpack.c.b16 %v867, %v865
      %v1082 = vpack.c.b16 %v870, %v868
      %v1083 = vpack.c.b16 %v871, %v869
      %v1084 = vpack.c.b16 %v874, %v872
      %v1085 = vpack.c.b16 %v875, %v873
      %v1086 = vpack.c.b16 %v878, %v876
      %v1087 = vpack.c.b16 %v879, %v877
      %v1088 = vpack.c.b16 %v882, %v880
      %v1089 = vpack.c.b16 %v883, %v881
      %v1090 = vpack.c.b16 %v886, %v884
      %v1091 = vpack.c.b16 %v887, %v885
      %v1092 = vpack.c.b16 %v890, %v888
      %v1093 = vpack.c.b16 %v891, %v889
      %v1094 = vpack.c.b16 %v894, %v892
      %v1095 = vpack.c.b16 %v895, %v893
      %v1096 = vpack.c.b16 %v898, %v896
      %v1097 = vpack.c.b16 %v899, %v897
      %v1098 = vpack.c.b16 %v902, %v900
      %v1099 = vpack.c.b16 %v903, %v901
      %v1100 = vpack.c.b16 %v906, %v904
      %v1101 = vpack.c.b16 %v907, %v905
      %v1102 = vpack.c.b16 %v910, %v908
      %v1103 = vpack.c.b16 %v911, %v909
      %v1104 = vpack.c.b16 %v914, %v912
      %v1105 = vpack.c.b16 %v915, %v913
      %v1106 = vpack.c.b16 %v918, %v916
      %v1107 = vpack.c.b16 %v919, %v917
      %v1108 = vpack.c.b16 %v922, %v920
      %v1109 = vpack.c.b16 %v923, %v921
      %v1110 = vpack.c.b16 %v926, %v924
      %v1111 = vpack.c.b16 %v927, %v925
      %v1112 = vpack.c.b16 %v930, %v928
      %v1113 = vpack.c.b16 %v931, %v929
      %v1114 = vpack.c.b16 %v934, %v932
      %v1115 = vpack.c.b16 %v935, %v933
      %v1116 = vpack.c.b16 %v938, %v936
      %v1117 = vpack.c.b16 %v939, %v937
      %v1118 = vpack.c.b16 %v942, %v940
      %v1119 = vpack.c.b16 %v943, %v941
      %v1120 = vpack.c.b16 %v946, %v944
      %v1121 = vpack.c.b16 %v947, %v945
      %v1122 = vpack.c.b16 %v950, %v948
      %v1123 = vpack.c.b16 %v951, %v949
      %v1124 = vpack.c.b16 %v954, %v952
      %v1125 = vpack.c.b16 %v955, %v953
      %v1126 = vpack.c.b16 %v958, %v956
      %v1127 = vpack.c.b16 %v959, %v957
      %v1128 = vpack.c.b16 %v962, %v960
      %v1129 = vpack.c.b16 %v963, %v961
      %v1130 = vpack.c.b16 %v966, %v964
      %v1131 = vpack.c.b16 %v967, %v965
      %v1132 = vpack.c.b16 %v970, %v968
      %v1133 = vpack.c.b16 %v971, %v969
      %v1134 = vpack.c.b16 %v974, %v972
      %v1135 = vpack.c.b16 %v975, %v973
      %v1136 = vpack.c.b16 %v978, %v976
      %v1137 = vpack.c.b16 %v979, %v977
      %v1138 = vpack.c.b16 %v982, %v980
      %v1139 = vpack.c.b16 %v983, %v981
      %v1140 = vpack.c.b16 %v986, %v984
      %v1141 = vpack.c.b16 %v987, %v985
      %v1142 = vpack.c.b16 %v990, %v988
      %v1143 = vpack.c.b16 %v991, %v989
      %v1144 = vpack.c.b16 %v994, %v992
      %v1145 = vpack.c.b16 %v995, %v993
      %v1146 = vpack.c.b16 %v998, %v996
      %v1147 = vpack.c.b16 %v999, %v997
      %v1148 = vpack.c.b16 %v1002, %v1000
      %v1149 = vpack.c.b16 %v1003, %v1001
      %v1150 = vpack.c.b16 %v1006, %v1004
      %v1151 = vpack.c.b16 %v1007, %v1005
      %v1152 = vpack.c.b16 %v1010, %v1008
      %v1153 = vpack.c.b16 %v1011, %v1009
      %v1154 = vpack.c.b16 %v1014, %v1012
      %v1155 = vpack.c.b16 %v1015, %v1013
      %v1156 = vpack.c.b16 %v1018, %v1016
      %v1157 = vpack.c.b16 %v1019, %v1017
      %v1158 = vpack.c.b16 %v1022, %v1020
      %v1159 = vpack.c.b16 %v1023, %v1021
      %v1160 = vpack.c.b16 %v1026, %v1024
      %v1161 = vpack.c.b16 %v1027, %v1025
      %v1162 = vpack.c.b16 %v1030, %v1028
      %v1163 = vpack.c.b16 %v1031, %v1029
      %v1164 = vpack.c.b16 %v1034, %v1032
      %v1165 = vpack.c.b16 %v1035, %v1033
      %v1166 = vpack.c.b16 %v1038, %v1036
      %v1167 = vpack.c.b16 %v1039, %v1037
      %v1328 = vunpack.c.l.b16 %v496
      %v1329 = vunpack.c.l.b16 %v497
      %v1330 = vunpack.c.l.b16 %v498
      %v1331 = vunpack.c.l.b16 %v499
      %v1332 = vunpack.c.l.b16 %v500
      %v1333 = vunpack.c.l.b16 %v501
      %v1334 = vunpack.c.l.b16 %v502
      %v1335 = vunpack.c.l.b16 %v503
      %v1336 = vunpack.c.l.b16 %v504
      %v1337 = vunpack.c.l.b16 %v505
      %v1338 = vunpack.c.l.b16 %v506
      %v1339 = vunpack.c.l.b16 %v507
      %v1340 = vunpack.c.l.b16 %v508
      %v1341 = vunpack.c.l.b16 %v509
      %v1342 = vunpack.c.l.b16 %v510
      %v1343 = vunpack.c.l.b16 %v511
      %v1344 = vunpack.c.l.b16 %v512
      %v1345 = vunpack.c.l.b16 %v513
      %v1346 = vunpack.c.l.b16 %v514
      %v1347 = vunpack.c.l.b16 %v515
      %v1348 = vunpack.c.l.b16 %v516
      %v1349 = vunpack.c.l.b16 %v517
      %v1350 = vunpack.c.l.b16 %v518
      %v1351 = vunpack.c.l.b16 %v519
      %v1352 = vunpack.c.l.b16 %v520
      %v1353 = vunpack.c.l.b16 %v521
      %v1354 = vunpack.c.l.b16 %v522
      %v1355 = vunpack.c.l.b16 %v523
      %v1356 = vunpack.c.l.b16 %v524
      %v1357 = vunpack.c.l.b16 %v525
      %v1358 = vunpack.c.l.b16 %v526
      %v1359 = vunpack.c.l.b16 %v527
      %v1360 = vpack.c.b16 %v1329, %v1328
      %v1361 = vpack.c.b16 %v1331, %v1330
      %v1362 = vpack.c.b16 %v1333, %v1332
      %v1363 = vpack.c.b16 %v1335, %v1334
      %v1364 = vpack.c.b16 %v1337, %v1336
      %v1365 = vpack.c.b16 %v1339, %v1338
      %v1366 = vpack.c.b16 %v1341, %v1340
      %v1367 = vpack.c.b16 %v1343, %v1342
      %v1368 = vpack.c.b16 %v1345, %v1344
      %v1369 = vpack.c.b16 %v1347, %v1346
      %v1370 = vpack.c.b16 %v1349, %v1348
      %v1371 = vpack.c.b16 %v1351, %v1350
      %v1372 = vpack.c.b16 %v1353, %v1352
      %v1373 = vpack.c.b16 %v1355, %v1354
      %v1374 = vpack.c.b16 %v1357, %v1356
      %v1375 = vpack.c.b16 %v1359, %v1358
      %1392 = vmatprep.subr.bf16.mxu0 0
      %1393 = vmatpush1.bf16.msra.mxu0 %v1360
      %1394 = vmatprep.subr.bf16.mxu0 0
      %1395 = vmatpush1.bf16.msra.mxu0 %v1361
      %1396 = vmatprep.subr.bf16.mxu0 0
      %1397 = vmatpush1.bf16.msra.mxu0 %v1362
      %1398 = vmatprep.subr.bf16.mxu0 0
      %1399 = vmatpush1.bf16.msra.mxu0 %v1363
      %1400 = vmatprep.subr.bf16.mxu0 0
      %1401 = vmatpush1.bf16.msra.mxu0 %v1364
      %1402 = vmatprep.subr.bf16.mxu0 0
      %1403 = vmatpush1.bf16.msra.mxu0 %v1365
      %1404 = vmatprep.subr.bf16.mxu0 0
      %1405 = vmatpush1.bf16.msra.mxu0 %v1366
      %1406 = vmatprep.subr.bf16.mxu0 0
      %1407 = vmatpush1.bf16.msra.mxu0 %v1367
      %1408 = vmatprep.subr.bf16.mxu0 0
      %1409 = vmatpush1.bf16.msra.mxu0 %v1368
      %1410 = vmatprep.subr.bf16.mxu0 0
      %1411 = vmatpush1.bf16.msra.mxu0 %v1369
      %1412 = vmatprep.subr.bf16.mxu0 0
      %1413 = vmatpush1.bf16.msra.mxu0 %v1370
      %1414 = vmatprep.subr.bf16.mxu0 0
      %1415 = vmatpush1.bf16.msra.mxu0 %v1371
      %1416 = vmatprep.subr.bf16.mxu0 0
      %1417 = vmatpush1.bf16.msra.mxu0 %v1372
      %1418 = vmatprep.subr.bf16.mxu0 0
      %1419 = vmatpush1.bf16.msra.mxu0 %v1373
      %1420 = vmatprep.subr.bf16.mxu0 0
      %1421 = vmatpush1.bf16.msra.mxu0 %v1374
      %1422 = vmatprep.subr.bf16.mxu0 0
      %1423 = vmatpush1.bf16.msra.mxu0 %v1375
      %1424 = vmatprep.mubr.bf16.mxu0 %v1041
      %1425 = vmatmul.mubr.bf16.gmra.mrb[0].mxu0 %v1040
      %v1426 = vpop.f32.mrb[0].mxu0
      %v1427 = vadd.f32 0.0, %v1426
      %v1428 = vpop.f32.mrb[0].mxu0
      %v1429 = vpop.f32.mrb[0].mxu0
      %v1430 = vadd.f32 0.0, %v1429
      %v1431 = vpop.f32.mrb[0].mxu0
      %1432 = vmatprep.mubr.bf16.mxu0 %v1043
      %1433 = vmatmul.mubr.bf16.gmra.mrb[0].mxu0 %v1042
      %v1434 = vpop.f32.mrb[0].mxu0
      %v1435 = vadd.f32 0.0, %v1434
      %v1436 = vpop.f32.mrb[0].mxu0
      %v1437 = vpop.f32.mrb[0].mxu0
      %v1438 = vadd.f32 0.0, %v1437
      %v1439 = vpop.f32.mrb[0].mxu0
      %1440 = vmatprep.mubr.bf16.mxu0 %v1045
      %1441 = vmatmul.mubr.bf16.gmra.mrb[0].mxu0 %v1044
      %v1442 = vpop.f32.mrb[0].mxu0
      %v1443 = vadd.f32 0.0, %v1442
      %v1444 = vpop.f32.mrb[0].mxu0
      %v1445 = vpop.f32.mrb[0].mxu0
      %v1446 = vadd.f32 0.0, %v1445
      %v1447 = vpop.f32.mrb[0].mxu0
      %1448 = vmatprep.mubr.bf16.mxu0 %v1047
      %1449 = vmatmul.mubr.bf16.gmra.mrb[0].mxu0 %v1046
      %v1450 = vpop.f32.mrb[0].mxu0
      %v1451 = vadd.f32 0.0, %v1450
      %v1452 = vpop.f32.mrb[0].mxu0
      %v1453 = vpop.f32.mrb[0].mxu0
      %v1454 = vadd.f32 0.0, %v1453
      %v1455 = vpop.f32.mrb[0].mxu0
      %1456 = vmatprep.mubr.bf16.mxu0 %v1049
      %1457 = vmatmul.mubr.bf16.gmra.mrb[0].mxu0 %v1048
      %v1458 = vpop.f32.mrb[0].mxu0
      %v1459 = vadd.f32 0.0, %v1458
      %v1460 = vpop.f32.mrb[0].mxu0
      %v1461 = vpop.f32.mrb[0].mxu0
      %v1462 = vadd.f32 0.0, %v1461
      %v1463 = vpop.f32.mrb[0].mxu0
      %1464 = vmatprep.mubr.bf16.mxu0 %v1051
      %1465 = vmatmul.mubr.bf16.gmra.mrb[0].mxu0 %v1050
      %v1466 = vpop.f32.mrb[0].mxu0
      %v1467 = vadd.f32 0.0, %v1466
      %v1468 = vpop.f32.mrb[0].mxu0
      %v1469 = vpop.f32.mrb[0].mxu0
      %v1470 = vadd.f32 0.0, %v1469
      %v1471 = vpop.f32.mrb[0].mxu0
      %1472 = vmatprep.mubr.bf16.mxu0 %v1053
      %1473 = vmatmul.mubr.bf16.gmra.mrb[0].mxu0 %v1052
      %v1474 = vpop.f32.mrb[0].mxu0
      %v1475 = vadd.f32 0.0, %v1474
      %v1476 = vpop.f32.mrb[0].mxu0
      %v1477 = vpop.f32.mrb[0].mxu0
      %v1478 = vadd.f32 0.0, %v1477
      %v1479 = vpop.f32.mrb[0].mxu0
      %1480 = vmatprep.mubr.bf16.mxu0 %v1055
      %1481 = vmatmul.mubr.bf16.gmra.mrb[0].mxu0 %v1054
      %v1482 = vpop.f32.mrb[0].mxu0
      %v1483 = vadd.f32 0.0, %v1482
      %v1484 = vpop.f32.mrb[0].mxu0
      %v1485 = vpop.f32.mrb[0].mxu0
      %v1486 = vadd.f32 0.0, %v1485
      %v1487 = vpop.f32.mrb[0].mxu0
      %1488 = vmatprep.mubr.bf16.mxu0 %v1057
      %1489 = vmatmul.mubr.bf16.gmra.mrb[0].mxu0 %v1056
      %v1490 = vpop.f32.mrb[0].mxu0
      %v1491 = vadd.f32 0.0, %v1490
      %v1492 = vpop.f32.mrb[0].mxu0
      %v1493 = vpop.f32.mrb[0].mxu0
      %v1494 = vadd.f32 0.0, %v1493
      %v1495 = vpop.f32.mrb[0].mxu0
      %1496 = vmatprep.mubr.bf16.mxu0 %v1059
      %1497 = vmatmul.mubr.bf16.gmra.mrb[0].mxu0 %v1058
      %v1498 = vpop.f32.mrb[0].mxu0
      %v1499 = vadd.f32 0.0, %v1498
      %v1500 = vpop.f32.mrb[0].mxu0
      %v1501 = vpop.f32.mrb[0].mxu0
      %v1502 = vadd.f32 0.0, %v1501
      %v1503 = vpop.f32.mrb[0].mxu0
      %1504 = vmatprep.mubr.bf16.mxu0 %v1061
      %1505 = vmatmul.mubr.bf16.gmra.mrb[0].mxu0 %v1060
      %v1506 = vpop.f32.mrb[0].mxu0
      %v1507 = vadd.f32 0.0, %v1506
      %v1508 = vpop.f32.mrb[0].mxu0
      %v1509 = vpop.f32.mrb[0].mxu0
      %v1510 = vadd.f32 0.0, %v1509
      %v1511 = vpop.f32.mrb[0].mxu0
      %1512 = vmatprep.mubr.bf16.mxu0 %v1063
      %1513 = vmatmul.mubr.bf16.gmra.mrb[0].mxu0 %v1062
      %v1514 = vpop.f32.mrb[0].mxu0
      %v1515 = vadd.f32 0.0, %v1514
      %v1516 = vpop.f32.mrb[0].mxu0
      %v1517 = vpop.f32.mrb[0].mxu0
      %v1518 = vadd.f32 0.0, %v1517
      %v1519 = vpop.f32.mrb[0].mxu0
      %1520 = vmatprep.mubr.bf16.mxu0 %v1065
      %1521 = vmatmul.mubr.bf16.gmra.mrb[0].mxu0 %v1064
      %v1522 = vpop.f32.mrb[0].mxu0
      %v1523 = vadd.f32 0.0, %v1522
      %v1524 = vpop.f32.mrb[0].mxu0
      %v1525 = vpop.f32.mrb[0].mxu0
      %v1526 = vadd.f32 0.0, %v1525
      %v1527 = vpop.f32.mrb[0].mxu0
      %1528 = vmatprep.mubr.bf16.mxu0 %v1067
      %1529 = vmatmul.mubr.bf16.gmra.mrb[0].mxu0 %v1066
      %v1530 = vpop.f32.mrb[0].mxu0
      %v1531 = vadd.f32 0.0, %v1530
      %v1532 = vpop.f32.mrb[0].mxu0
      %v1533 = vpop.f32.mrb[0].mxu0
      %v1534 = vadd.f32 0.0, %v1533
      %v1535 = vpop.f32.mrb[0].mxu0
      %1536 = vmatprep.mubr.bf16.mxu0 %v1069
      %1537 = vmatmul.mubr.bf16.gmra.mrb[0].mxu0 %v1068
      %v1538 = vpop.f32.mrb[0].mxu0
      %v1539 = vadd.f32 0.0, %v1538
      %v1540 = vpop.f32.mrb[0].mxu0
      %v1541 = vpop.f32.mrb[0].mxu0
      %v1542 = vadd.f32 0.0, %v1541
      %v1543 = vpop.f32.mrb[0].mxu0
      %1544 = vmatprep.mubr.bf16.mxu0 %v1071
      %1545 = vmatmul.mubr.bf16.gmra.mrb[0].mxu0 %v1070
      %v1546 = vpop.f32.mrb[0].mxu0
      %v1547 = vadd.f32 0.0, %v1546
      %v1548 = vpop.f32.mrb[0].mxu0
      %v1549 = vpop.f32.mrb[0].mxu0
      %v1550 = vadd.f32 0.0, %v1549
      %v1551 = vpop.f32.mrb[0].mxu0
      %1552 = vmatprep.mubr.bf16.mxu0 %v1073
      %1553 = vmatmul.mubr.bf16.gmra.mrb[0].mxu0 %v1072
      %v1554 = vpop.f32.mrb[0].mxu0
      %v1555 = vadd.f32 0.0, %v1554
      %v1556 = vpop.f32.mrb[0].mxu0
      %v1557 = vpop.f32.mrb[0].mxu0
      %v1558 = vadd.f32 0.0, %v1557
      %v1559 = vpop.f32.mrb[0].mxu0
      %1560 = vmatprep.mubr.bf16.mxu0 %v1075
      %1561 = vmatmul.mubr.bf16.gmra.mrb[0].mxu0 %v1074
      %v1562 = vpop.f32.mrb[0].mxu0
      %v1563 = vadd.f32 0.0, %v1562
      %v1564 = vpop.f32.mrb[0].mxu0
      %v1565 = vpop.f32.mrb[0].mxu0
      %v1566 = vadd.f32 0.0, %v1565
      %v1567 = vpop.f32.mrb[0].mxu0
      %1568 = vmatprep.mubr.bf16.mxu0 %v1077
      %1569 = vmatmul.mubr.bf16.gmra.mrb[0].mxu0 %v1076
      %v1570 = vpop.f32.mrb[0].mxu0
      %v1571 = vadd.f32 0.0, %v1570
      %v1572 = vpop.f32.mrb[0].mxu0
      %v1573 = vpop.f32.mrb[0].mxu0
      %v1574 = vadd.f32 0.0, %v1573
      %v1575 = vpop.f32.mrb[0].mxu0
      %1576 = vmatprep.mubr.bf16.mxu0 %v1079
      %1577 = vmatmul.mubr.bf16.gmra.mrb[0].mxu0 %v1078
      %v1578 = vpop.f32.mrb[0].mxu0
      %v1579 = vadd.f32 0.0, %v1578
      %v1580 = vpop.f32.mrb[0].mxu0
      %v1581 = vpop.f32.mrb[0].mxu0
      %v1582 = vadd.f32 0.0, %v1581
      %v1583 = vpop.f32.mrb[0].mxu0
      %1584 = vmatprep.mubr.bf16.mxu0 %v1081
      %1585 = vmatmul.mubr.bf16.gmra.mrb[0].mxu0 %v1080
      %v1586 = vpop.f32.mrb[0].mxu0
      %v1587 = vadd.f32 0.0, %v1586
      %v1588 = vpop.f32.mrb[0].mxu0
      %v1589 = vpop.f32.mrb[0].mxu0
      %v1590 = vadd.f32 0.0, %v1589
      %v1591 = vpop.f32.mrb[0].mxu0
      %1592 = vmatprep.mubr.bf16.mxu0 %v1083
      %1593 = vmatmul.mubr.bf16.gmra.mrb[0].mxu0 %v1082
      %v1594 = vpop.f32.mrb[0].mxu0
      %v1595 = vadd.f32 0.0, %v1594
      %v1596 = vpop.f32.mrb[0].mxu0
      %v1597 = vpop.f32.mrb[0].mxu0
      %v1598 = vadd.f32 0.0, %v1597
      %v1599 = vpop.f32.mrb[0].mxu0
      %1600 = vmatprep.mubr.bf16.mxu0 %v1085
      %1601 = vmatmul.mubr.bf16.gmra.mrb[0].mxu0 %v1084
      %v1602 = vpop.f32.mrb[0].mxu0
      %v1603 = vadd.f32 0.0, %v1602
      %v1604 = vpop.f32.mrb[0].mxu0
      %v1605 = vpop.f32.mrb[0].mxu0
      %v1606 = vadd.f32 0.0, %v1605
      %v1607 = vpop.f32.mrb[0].mxu0
      %1608 = vmatprep.mubr.bf16.mxu0 %v1087
      %1609 = vmatmul.mubr.bf16.gmra.mrb[0].mxu0 %v1086
      %v1610 = vpop.f32.mrb[0].mxu0
      %v1611 = vadd.f32 0.0, %v1610
      %v1612 = vpop.f32.mrb[0].mxu0
      %v1613 = vpop.f32.mrb[0].mxu0
      %v1614 = vadd.f32 0.0, %v1613
      %v1615 = vpop.f32.mrb[0].mxu0
      %1616 = vmatprep.mubr.bf16.mxu0 %v1089
      %1617 = vmatmul.mubr.bf16.gmra.mrb[0].mxu0 %v1088
      %v1618 = vpop.f32.mrb[0].mxu0
      %v1619 = vadd.f32 0.0, %v1618
      %v1620 = vpop.f32.mrb[0].mxu0
      %v1621 = vpop.f32.mrb[0].mxu0
      %v1622 = vadd.f32 0.0, %v1621
      %v1623 = vpop.f32.mrb[0].mxu0
      %1624 = vmatprep.mubr.bf16.mxu0 %v1091
      %1625 = vmatmul.mubr.bf16.gmra.mrb[0].mxu0 %v1090
      %v1626 = vpop.f32.mrb[0].mxu0
      %v1627 = vadd.f32 0.0, %v1626
      %v1628 = vpop.f32.mrb[0].mxu0
      %v1629 = vpop.f32.mrb[0].mxu0
      %v1630 = vadd.f32 0.0, %v1629
      %v1631 = vpop.f32.mrb[0].mxu0
      %1632 = vmatprep.mubr.bf16.mxu0 %v1093
      %1633 = vmatmul.mubr.bf16.gmra.mrb[0].mxu0 %v1092
      %v1634 = vpop.f32.mrb[0].mxu0
      %v1635 = vadd.f32 0.0, %v1634
      %v1636 = vpop.f32.mrb[0].mxu0
      %v1637 = vpop.f32.mrb[0].mxu0
      %v1638 = vadd.f32 0.0, %v1637
      %v1639 = vpop.f32.mrb[0].mxu0
      %1640 = vmatprep.mubr.bf16.mxu0 %v1095
      %1641 = vmatmul.mubr.bf16.gmra.mrb[0].mxu0 %v1094
      %v1642 = vpop.f32.mrb[0].mxu0
      %v1643 = vadd.f32 0.0, %v1642
      %v1644 = vpop.f32.mrb[0].mxu0
      %v1645 = vpop.f32.mrb[0].mxu0
      %v1646 = vadd.f32 0.0, %v1645
      %v1647 = vpop.f32.mrb[0].mxu0
      %1648 = vmatprep.mubr.bf16.mxu0 %v1097
      %1649 = vmatmul.mubr.bf16.gmra.mrb[0].mxu0 %v1096
      %v1650 = vpop.f32.mrb[0].mxu0
      %v1651 = vadd.f32 0.0, %v1650
      %v1652 = vpop.f32.mrb[0].mxu0
      %v1653 = vpop.f32.mrb[0].mxu0
      %v1654 = vadd.f32 0.0, %v1653
      %v1655 = vpop.f32.mrb[0].mxu0
      %1656 = vmatprep.mubr.bf16.mxu0 %v1099
      %1657 = vmatmul.mubr.bf16.gmra.mrb[0].mxu0 %v1098
      %v1658 = vpop.f32.mrb[0].mxu0
      %v1659 = vadd.f32 0.0, %v1658
      %v1660 = vpop.f32.mrb[0].mxu0
      %v1661 = vpop.f32.mrb[0].mxu0
      %v1662 = vadd.f32 0.0, %v1661
      %v1663 = vpop.f32.mrb[0].mxu0
      %1664 = vmatprep.mubr.bf16.mxu0 %v1101
      %1665 = vmatmul.mubr.bf16.gmra.mrb[0].mxu0 %v1100
      %v1666 = vpop.f32.mrb[0].mxu0
      %v1667 = vadd.f32 0.0, %v1666
      %v1668 = vpop.f32.mrb[0].mxu0
      %v1669 = vpop.f32.mrb[0].mxu0
      %v1670 = vadd.f32 0.0, %v1669
      %v1671 = vpop.f32.mrb[0].mxu0
      %1672 = vmatprep.mubr.bf16.mxu0 %v1103
      %1673 = vmatmul.mubr.bf16.gmra.mrb[0].mxu0 %v1102
      %v1674 = vpop.f32.mrb[0].mxu0
      %v1675 = vadd.f32 0.0, %v1674
      %v1676 = vpop.f32.mrb[0].mxu0
      %v1677 = vpop.f32.mrb[0].mxu0
      %v1678 = vadd.f32 0.0, %v1677
      %v1679 = vpop.f32.mrb[0].mxu0
      %1680 = vmatprep.mubr.bf16.mxu0 %v1105
      %1681 = vmatmul.mubr.bf16.gmra.mrb[0].mxu0 %v1104
      %v1682 = vpop.f32.mrb[0].mxu0
      %v1683 = vadd.f32 0.0, %v1682
      %v1684 = vpop.f32.mrb[0].mxu0
      %v1685 = vpop.f32.mrb[0].mxu0
      %v1686 = vadd.f32 0.0, %v1685
      %v1687 = vpop.f32.mrb[0].mxu0
      %1688 = vmatprep.mubr.bf16.mxu0 %v1107
      %1689 = vmatmul.mubr.bf16.gmra.mrb[0].mxu0 %v1106
      %v1690 = vpop.f32.mrb[0].mxu0
      %v1691 = vadd.f32 0.0, %v1690
      %v1692 = vpop.f32.mrb[0].mxu0
      %v1693 = vpop.f32.mrb[0].mxu0
      %v1694 = vadd.f32 0.0, %v1693
      %v1695 = vpop.f32.mrb[0].mxu0
      %1696 = vmatprep.mubr.bf16.mxu0 %v1109
      %1697 = vmatmul.mubr.bf16.gmra.mrb[0].mxu0 %v1108
      %v1698 = vpop.f32.mrb[0].mxu0
      %v1699 = vadd.f32 0.0, %v1698
      %v1700 = vpop.f32.mrb[0].mxu0
      %v1701 = vpop.f32.mrb[0].mxu0
      %v1702 = vadd.f32 0.0, %v1701
      %v1703 = vpop.f32.mrb[0].mxu0
      %1704 = vmatprep.mubr.bf16.mxu0 %v1111
      %1705 = vmatmul.mubr.bf16.gmra.mrb[0].mxu0 %v1110
      %v1706 = vpop.f32.mrb[0].mxu0
      %v1707 = vadd.f32 0.0, %v1706
      %v1708 = vpop.f32.mrb[0].mxu0
      %v1709 = vpop.f32.mrb[0].mxu0
      %v1710 = vadd.f32 0.0, %v1709
      %v1711 = vpop.f32.mrb[0].mxu0
      %1712 = vmatprep.mubr.bf16.mxu0 %v1113
      %1713 = vmatmul.mubr.bf16.gmra.mrb[0].mxu0 %v1112
      %v1714 = vpop.f32.mrb[0].mxu0
      %v1715 = vadd.f32 0.0, %v1714
      %v1716 = vpop.f32.mrb[0].mxu0
      %v1717 = vpop.f32.mrb[0].mxu0
      %v1718 = vadd.f32 0.0, %v1717
      %v1719 = vpop.f32.mrb[0].mxu0
      %1720 = vmatprep.mubr.bf16.mxu0 %v1115
      %1721 = vmatmul.mubr.bf16.gmra.mrb[0].mxu0 %v1114
      %v1722 = vpop.f32.mrb[0].mxu0
      %v1723 = vadd.f32 0.0, %v1722
      %v1724 = vpop.f32.mrb[0].mxu0
      %v1725 = vpop.f32.mrb[0].mxu0
      %v1726 = vadd.f32 0.0, %v1725
      %v1727 = vpop.f32.mrb[0].mxu0
      %1728 = vmatprep.mubr.bf16.mxu0 %v1117
      %1729 = vmatmul.mubr.bf16.gmra.mrb[0].mxu0 %v1116
      %v1730 = vpop.f32.mrb[0].mxu0
      %v1731 = vadd.f32 0.0, %v1730
      %v1732 = vpop.f32.mrb[0].mxu0
      %v1733 = vpop.f32.mrb[0].mxu0
      %v1734 = vadd.f32 0.0, %v1733
      %v1735 = vpop.f32.mrb[0].mxu0
      %1736 = vmatprep.mubr.bf16.mxu0 %v1119
      %1737 = vmatmul.mubr.bf16.gmra.mrb[0].mxu0 %v1118
      %v1738 = vpop.f32.mrb[0].mxu0
      %v1739 = vadd.f32 0.0, %v1738
      %v1740 = vpop.f32.mrb[0].mxu0
      %v1741 = vpop.f32.mrb[0].mxu0
      %v1742 = vadd.f32 0.0, %v1741
      %v1743 = vpop.f32.mrb[0].mxu0
      %1744 = vmatprep.mubr.bf16.mxu0 %v1121
      %1745 = vmatmul.mubr.bf16.gmra.mrb[0].mxu0 %v1120
      %v1746 = vpop.f32.mrb[0].mxu0
      %v1747 = vadd.f32 0.0, %v1746
      %v1748 = vpop.f32.mrb[0].mxu0
      %v1749 = vpop.f32.mrb[0].mxu0
      %v1750 = vadd.f32 0.0, %v1749
      %v1751 = vpop.f32.mrb[0].mxu0
      %1752 = vmatprep.mubr.bf16.mxu0 %v1123
      %1753 = vmatmul.mubr.bf16.gmra.mrb[0].mxu0 %v1122
      %v1754 = vpop.f32.mrb[0].mxu0
      %v1755 = vadd.f32 0.0, %v1754
      %v1756 = vpop.f32.mrb[0].mxu0
      %v1757 = vpop.f32.mrb[0].mxu0
      %v1758 = vadd.f32 0.0, %v1757
      %v1759 = vpop.f32.mrb[0].mxu0
      %1760 = vmatprep.mubr.bf16.mxu0 %v1125
      %1761 = vmatmul.mubr.bf16.gmra.mrb[0].mxu0 %v1124
      %v1762 = vpop.f32.mrb[0].mxu0
      %v1763 = vadd.f32 0.0, %v1762
      %v1764 = vpop.f32.mrb[0].mxu0
      %v1765 = vpop.f32.mrb[0].mxu0
      %v1766 = vadd.f32 0.0, %v1765
      %v1767 = vpop.f32.mrb[0].mxu0
      %1768 = vmatprep.mubr.bf16.mxu0 %v1127
      %1769 = vmatmul.mubr.bf16.gmra.mrb[0].mxu0 %v1126
      %v1770 = vpop.f32.mrb[0].mxu0
      %v1771 = vadd.f32 0.0, %v1770
      %v1772 = vpop.f32.mrb[0].mxu0
      %v1773 = vpop.f32.mrb[0].mxu0
      %v1774 = vadd.f32 0.0, %v1773
      %v1775 = vpop.f32.mrb[0].mxu0
      %1776 = vmatprep.mubr.bf16.mxu0 %v1129
      %1777 = vmatmul.mubr.bf16.gmra.mrb[0].mxu0 %v1128
      %v1778 = vpop.f32.mrb[0].mxu0
      %v1779 = vadd.f32 0.0, %v1778
      %v1780 = vpop.f32.mrb[0].mxu0
      %v1781 = vpop.f32.mrb[0].mxu0
      %v1782 = vadd.f32 0.0, %v1781
      %v1783 = vpop.f32.mrb[0].mxu0
      %1784 = vmatprep.mubr.bf16.mxu0 %v1131
      %1785 = vmatmul.mubr.bf16.gmra.mrb[0].mxu0 %v1130
      %v1786 = vpop.f32.mrb[0].mxu0
      %v1787 = vadd.f32 0.0, %v1786
      %v1788 = vpop.f32.mrb[0].mxu0
      %v1789 = vpop.f32.mrb[0].mxu0
      %v1790 = vadd.f32 0.0, %v1789
      %v1791 = vpop.f32.mrb[0].mxu0
      %1792 = vmatprep.mubr.bf16.mxu0 %v1133
      %1793 = vmatmul.mubr.bf16.gmra.mrb[0].mxu0 %v1132
      %v1794 = vpop.f32.mrb[0].mxu0
      %v1795 = vadd.f32 0.0, %v1794
      %v1796 = vpop.f32.mrb[0].mxu0
      %v1797 = vpop.f32.mrb[0].mxu0
      %v1798 = vadd.f32 0.0, %v1797
      %v1799 = vpop.f32.mrb[0].mxu0
      %1800 = vmatprep.mubr.bf16.mxu0 %v1135
      %1801 = vmatmul.mubr.bf16.gmra.mrb[0].mxu0 %v1134
      %v1802 = vpop.f32.mrb[0].mxu0
      %v1803 = vadd.f32 0.0, %v1802
      %v1804 = vpop.f32.mrb[0].mxu0
      %v1805 = vpop.f32.mrb[0].mxu0
      %v1806 = vadd.f32 0.0, %v1805
      %v1807 = vpop.f32.mrb[0].mxu0
      %1808 = vmatprep.mubr.bf16.mxu0 %v1137
      %1809 = vmatmul.mubr.bf16.gmra.mrb[0].mxu0 %v1136
      %v1810 = vpop.f32.mrb[0].mxu0
      %v1811 = vadd.f32 0.0, %v1810
      %v1812 = vpop.f32.mrb[0].mxu0
      %v1813 = vpop.f32.mrb[0].mxu0
      %v1814 = vadd.f32 0.0, %v1813
      %v1815 = vpop.f32.mrb[0].mxu0
      %1816 = vmatprep.mubr.bf16.mxu0 %v1139
      %1817 = vmatmul.mubr.bf16.gmra.mrb[0].mxu0 %v1138
      %v1818 = vpop.f32.mrb[0].mxu0
      %v1819 = vadd.f32 0.0, %v1818
      %v1820 = vpop.f32.mrb[0].mxu0
      %v1821 = vpop.f32.mrb[0].mxu0
      %v1822 = vadd.f32 0.0, %v1821
      %v1823 = vpop.f32.mrb[0].mxu0
      %1824 = vmatprep.mubr.bf16.mxu0 %v1141
      %1825 = vmatmul.mubr.bf16.gmra.mrb[0].mxu0 %v1140
      %v1826 = vpop.f32.mrb[0].mxu0
      %v1827 = vadd.f32 0.0, %v1826
      %v1828 = vpop.f32.mrb[0].mxu0
      %v1829 = vpop.f32.mrb[0].mxu0
      %v1830 = vadd.f32 0.0, %v1829
      %v1831 = vpop.f32.mrb[0].mxu0
      %1832 = vmatprep.mubr.bf16.mxu0 %v1143
      %1833 = vmatmul.mubr.bf16.gmra.mrb[0].mxu0 %v1142
      %v1834 = vpop.f32.mrb[0].mxu0
      %v1835 = vadd.f32 0.0, %v1834
      %v1836 = vpop.f32.mrb[0].mxu0
      %v1837 = vpop.f32.mrb[0].mxu0
      %v1838 = vadd.f32 0.0, %v1837
      %v1839 = vpop.f32.mrb[0].mxu0
      %1840 = vmatprep.mubr.bf16.mxu0 %v1145
      %1841 = vmatmul.mubr.bf16.gmra.mrb[0].mxu0 %v1144
      %v1842 = vpop.f32.mrb[0].mxu0
      %v1843 = vadd.f32 0.0, %v1842
      %v1844 = vpop.f32.mrb[0].mxu0
      %v1845 = vpop.f32.mrb[0].mxu0
      %v1846 = vadd.f32 0.0, %v1845
      %v1847 = vpop.f32.mrb[0].mxu0
      %1848 = vmatprep.mubr.bf16.mxu0 %v1147
      %1849 = vmatmul.mubr.bf16.gmra.mrb[0].mxu0 %v1146
      %v1850 = vpop.f32.mrb[0].mxu0
      %v1851 = vadd.f32 0.0, %v1850
      %v1852 = vpop.f32.mrb[0].mxu0
      %v1853 = vpop.f32.mrb[0].mxu0
      %v1854 = vadd.f32 0.0, %v1853
      %v1855 = vpop.f32.mrb[0].mxu0
      %1856 = vmatprep.mubr.bf16.mxu0 %v1149
      %1857 = vmatmul.mubr.bf16.gmra.mrb[0].mxu0 %v1148
      %v1858 = vpop.f32.mrb[0].mxu0
      %v1859 = vadd.f32 0.0, %v1858
      %v1860 = vpop.f32.mrb[0].mxu0
      %v1861 = vpop.f32.mrb[0].mxu0
      %v1862 = vadd.f32 0.0, %v1861
      %v1863 = vpop.f32.mrb[0].mxu0
      %1864 = vmatprep.mubr.bf16.mxu0 %v1151
      %1865 = vmatmul.mubr.bf16.gmra.mrb[0].mxu0 %v1150
      %v1866 = vpop.f32.mrb[0].mxu0
      %v1867 = vadd.f32 0.0, %v1866
      %v1868 = vpop.f32.mrb[0].mxu0
      %v1869 = vpop.f32.mrb[0].mxu0
      %v1870 = vadd.f32 0.0, %v1869
      %v1871 = vpop.f32.mrb[0].mxu0
      %1872 = vmatprep.mubr.bf16.mxu0 %v1153
      %1873 = vmatmul.mubr.bf16.gmra.mrb[0].mxu0 %v1152
      %v1874 = vpop.f32.mrb[0].mxu0
      %v1875 = vadd.f32 0.0, %v1874
      %v1876 = vpop.f32.mrb[0].mxu0
      %v1877 = vpop.f32.mrb[0].mxu0
      %v1878 = vadd.f32 0.0, %v1877
      %v1879 = vpop.f32.mrb[0].mxu0
      %1880 = vmatprep.mubr.bf16.mxu0 %v1155
      %1881 = vmatmul.mubr.bf16.gmra.mrb[0].mxu0 %v1154
      %v1882 = vpop.f32.mrb[0].mxu0
      %v1883 = vadd.f32 0.0, %v1882
      %v1884 = vpop.f32.mrb[0].mxu0
      %v1885 = vpop.f32.mrb[0].mxu0
      %v1886 = vadd.f32 0.0, %v1885
      %v1887 = vpop.f32.mrb[0].mxu0
      %1888 = vmatprep.mubr.bf16.mxu0 %v1157
      %1889 = vmatmul.mubr.bf16.gmra.mrb[0].mxu0 %v1156
      %v1890 = vpop.f32.mrb[0].mxu0
      %v1891 = vadd.f32 0.0, %v1890
      %v1892 = vpop.f32.mrb[0].mxu0
      %v1893 = vpop.f32.mrb[0].mxu0
      %v1894 = vadd.f32 0.0, %v1893
      %v1895 = vpop.f32.mrb[0].mxu0
      %1896 = vmatprep.mubr.bf16.mxu0 %v1159
      %1897 = vmatmul.mubr.bf16.gmra.mrb[0].mxu0 %v1158
      %v1898 = vpop.f32.mrb[0].mxu0
      %v1899 = vadd.f32 0.0, %v1898
      %v1900 = vpop.f32.mrb[0].mxu0
      %v1901 = vpop.f32.mrb[0].mxu0
      %v1902 = vadd.f32 0.0, %v1901
      %v1903 = vpop.f32.mrb[0].mxu0
      %1904 = vmatprep.mubr.bf16.mxu0 %v1161
      %1905 = vmatmul.mubr.bf16.gmra.mrb[0].mxu0 %v1160
      %v1906 = vpop.f32.mrb[0].mxu0
      %v1907 = vadd.f32 0.0, %v1906
      %v1908 = vpop.f32.mrb[0].mxu0
      %v1909 = vpop.f32.mrb[0].mxu0
      %v1910 = vadd.f32 0.0, %v1909
      %v1911 = vpop.f32.mrb[0].mxu0
      %1912 = vmatprep.mubr.bf16.mxu0 %v1163
      %1913 = vmatmul.mubr.bf16.gmra.mrb[0].mxu0 %v1162
      %v1914 = vpop.f32.mrb[0].mxu0
      %v1915 = vadd.f32 0.0, %v1914
      %v1916 = vpop.f32.mrb[0].mxu0
      %v1917 = vpop.f32.mrb[0].mxu0
      %v1918 = vadd.f32 0.0, %v1917
      %v1919 = vpop.f32.mrb[0].mxu0
      %1920 = vmatprep.mubr.bf16.mxu0 %v1165
      %1921 = vmatmul.mubr.bf16.gmra.mrb[0].mxu0 %v1164
      %v1922 = vpop.f32.mrb[0].mxu0
      %v1923 = vadd.f32 0.0, %v1922
      %v1924 = vpop.f32.mrb[0].mxu0
      %v1925 = vpop.f32.mrb[0].mxu0
      %v1926 = vadd.f32 0.0, %v1925
      %v1927 = vpop.f32.mrb[0].mxu0
      %1928 = vmatprep.mubr.bf16.mxu0 %v1167
      %1929 = vmatmul.mubr.bf16.gmra.mrb[0].mxu0 %v1166
      %v1930 = vpop.f32.mrb[0].mxu0
      %v1931 = vadd.f32 0.0, %v1930
      %v1932 = vpop.f32.mrb[0].mxu0
      %v1933 = vpop.f32.mrb[0].mxu0
      %v1934 = vadd.f32 0.0, %v1933
      %v1935 = vpop.f32.mrb[0].mxu0
      %1936 = vdwg.mxu0
      %v1937 = vld [vmem:[%s3] sm:$0x1]
      %v1938 = vpack.c.bf16 %v1430, %v1427
      %v1939 = vpack.c.bf16 %v1438, %v1435
      %v1940 = vpack.c.bf16 %v1446, %v1443
      %v1941 = vpack.c.bf16 %v1454, %v1451
      %v1942 = vld [vmem:[%s2] sm:$0xf]
      %vm1943 = vcmask 64512
      %v1945 = vsel %vm1943, %v1938, 0
      %v1948 = vsel %vm1943, %v1939, 0
      %v1951 = vsel %vm1943, %v1940, 0
      %v1954 = vsel %vm1943, %v1941, 0
      %vm1956 = vcmask 1043456
      %v1958 = vsel %vm1956, %v1942, 0
      %1960 = vmatprep.subr.bf16.mxu0 0
      %1961 = vmatpush1.bf16.msra.mxu0 %v1958
      %1962 = vmatprep.subr.bf16.mxu0 0
      %1963 = vmatpush1.bf16.msra.mxu0 0
      %1964 = vmatprep.subr.bf16.mxu0 0
      %1965 = vmatpush1.bf16.msra.mxu0 0
      %1966 = vmatprep.subr.bf16.mxu0 0
      %1967 = vmatpush1.bf16.msra.mxu0 0
      %1968 = vmatprep.subr.bf16.mxu0 0
      %1969 = vmatpush1.bf16.msra.mxu0 0
      %1970 = vmatprep.subr.bf16.mxu0 0
      %1971 = vmatpush1.bf16.msra.mxu0 0
      %1972 = vmatprep.subr.bf16.mxu0 0
      %1973 = vmatpush1.bf16.msra.mxu0 0
      %1974 = vmatprep.subr.bf16.mxu0 0
      %1975 = vmatpush1.bf16.msra.mxu0 0
      %1976 = vmatprep.subr.bf16.mxu0 0
      %1977 = vmatpush1.bf16.msra.mxu0 0
      %1978 = vmatprep.subr.bf16.mxu0 0
      %1979 = vmatpush1.bf16.msra.mxu0 0
      %1980 = vmatprep.subr.bf16.mxu0 0
      %1981 = vmatpush1.bf16.msra.mxu0 0
      %1982 = vmatprep.subr.bf16.mxu0 0
      %1983 = vmatpush1.bf16.msra.mxu0 0
      %1984 = vmatprep.subr.bf16.mxu0 0
      %1985 = vmatpush1.bf16.msra.mxu0 0
      %1986 = vmatprep.subr.bf16.mxu0 0
      %1987 = vmatpush1.bf16.msra.mxu0 0
      %1988 = vmatprep.subr.bf16.mxu0 0
      %1989 = vmatpush1.bf16.msra.mxu0 0
      %1990 = vmatprep.subr.bf16.mxu0 0
      %1991 = vmatpush1.bf16.msra.mxu0 0
      %1992 = vmatprep.mubr.bf16.mxu0 0
      %1993 = vmatmul.mubr.bf16.gmra.mrb[0].mxu0 %v1945
      %v1994 = vpop.f32.mrb[0].mxu0
      %v1995 = vadd.f32 0.0, %v1994
      %v1996 = vpop.f32.mrb[0].mxu0
      %v1997 = vpop.f32.mrb[0].mxu0
      %v1998 = vadd.f32 0.0, %v1997
      %v1999 = vpop.f32.mrb[0].mxu0
      %2000 = vmatprep.mubr.bf16.mxu0 0
      %2001 = vmatmul.mubr.bf16.gmra.mrb[0].mxu0 %v1948
      %v2002 = vpop.f32.mrb[0].mxu0
      %v2003 = vadd.f32 0.0, %v2002
      %v2004 = vpop.f32.mrb[0].mxu0
      %v2005 = vpop.f32.mrb[0].mxu0
      %v2006 = vadd.f32 0.0, %v2005
      %v2007 = vpop.f32.mrb[0].mxu0
      %2008 = vmatprep.mubr.bf16.mxu0 0
      %2009 = vmatmul.mubr.bf16.gmra.mrb[0].mxu0 %v1951
      %v2010 = vpop.f32.mrb[0].mxu0
      %v2011 = vadd.f32 0.0, %v2010
      %v2012 = vpop.f32.mrb[0].mxu0
      %v2013 = vpop.f32.mrb[0].mxu0
      %v2014 = vadd.f32 0.0, %v2013
      %v2015 = vpop.f32.mrb[0].mxu0
      %2016 = vmatprep.mubr.bf16.mxu0 0
      %2017 = vmatmul.mubr.bf16.gmra.mrb[0].mxu0 %v1954
      %v2018 = vpop.f32.mrb[0].mxu0
      %v2019 = vadd.f32 0.0, %v2018
      %v2020 = vpop.f32.mrb[0].mxu0
      %v2021 = vpop.f32.mrb[0].mxu0
      %v2022 = vadd.f32 0.0, %v2021
      %v2023 = vpop.f32.mrb[0].mxu0
      %2024 = vdwg.mxu0
      %v2026 = vlaneseq
      %v2027 = vshrl.u32 %v2026, 7
      %v2028 = vsub.s32 0, %v2027
      %v2029 = vrot.slane %v1937, %v2028
      %v2031 = vadd.f32 %v2029, %v1995
      %v2032 = vadd.f32 %v2029, %v1998
      %v2033 = vadd.f32 %v2029, %v2003
      %v2034 = vadd.f32 %v2029, %v2006
      %v2035 = vadd.f32 %v2029, %v2011
      %v2036 = vadd.f32 %v2029, %v2014
      %v2037 = vadd.f32 %v2029, %v2019
      %v2038 = vadd.f32 %v2029, %v2022
      %v2039 = vpack.c.bf16 %v1462, %v1459
      %v2040 = vpack.c.bf16 %v1470, %v1467
      %v2041 = vpack.c.bf16 %v1478, %v1475
      %v2042 = vpack.c.bf16 %v1486, %v1483
      %s2043 = scalar_lea.vmem %s2, 4
      %v2044 = vld [vmem:[%s2043] sm:$0xf]
      %v2046 = vsel %vm1943, %v2039, 0
      %v2049 = vsel %vm1943, %v2040, 0
      %v2052 = vsel %vm1943, %v2041, 0
      %v2055 = vsel %vm1943, %v2042, 0
      %v2058 = vsel %vm1956, %v2044, 0
      %2060 = vmatprep.subr.bf16.mxu0 0
      %2061 = vmatpush1.bf16.msra.mxu0 %v2058
      %2062 = vmatprep.subr.bf16.mxu0 0
      %2063 = vmatpush1.bf16.msra.mxu0 0
      %2064 = vmatprep.subr.bf16.mxu0 0
      %2065 = vmatpush1.bf16.msra.mxu0 0
      %2066 = vmatprep.subr.bf16.mxu0 0
      %2067 = vmatpush1.bf16.msra.mxu0 0
      %2068 = vmatprep.subr.bf16.mxu0 0
      %2069 = vmatpush1.bf16.msra.mxu0 0
      %2070 = vmatprep.subr.bf16.mxu0 0
      %2071 = vmatpush1.bf16.msra.mxu0 0
      %2072 = vmatprep.subr.bf16.mxu0 0
      %2073 = vmatpush1.bf16.msra.mxu0 0
      %2074 = vmatprep.subr.bf16.mxu0 0
      %2075 = vmatpush1.bf16.msra.mxu0 0
      %2076 = vmatprep.subr.bf16.mxu0 0
      %2077 = vmatpush1.bf16.msra.mxu0 0
      %2078 = vmatprep.subr.bf16.mxu0 0
      %2079 = vmatpush1.bf16.msra.mxu0 0
      %2080 = vmatprep.subr.bf16.mxu0 0
      %2081 = vmatpush1.bf16.msra.mxu0 0
      %2082 = vmatprep.subr.bf16.mxu0 0
      %2083 = vmatpush1.bf16.msra.mxu0 0
      %2084 = vmatprep.subr.bf16.mxu0 0
      %2085 = vmatpush1.bf16.msra.mxu0 0
      %2086 = vmatprep.subr.bf16.mxu0 0
      %2087 = vmatpush1.bf16.msra.mxu0 0
      %2088 = vmatprep.subr.bf16.mxu0 0
      %2089 = vmatpush1.bf16.msra.mxu0 0
      %2090 = vmatprep.subr.bf16.mxu0 0
      %2091 = vmatpush1.bf16.msra.mxu0 0
      %2092 = vmatprep.mubr.bf16.mxu0 0
      %2093 = vmatmul.mubr.bf16.gmra.mrb[0].mxu0 %v2046
      %v2094 = vpop.f32.mrb[0].mxu0
      %v2095 = vadd.f32 0.0, %v2094
      %v2096 = vpop.f32.mrb[0].mxu0
      %v2097 = vpop.f32.mrb[0].mxu0
      %v2098 = vadd.f32 0.0, %v2097
      %v2099 = vpop.f32.mrb[0].mxu0
      %2100 = vmatprep.mubr.bf16.mxu0 0
      %2101 = vmatmul.mubr.bf16.gmra.mrb[0].mxu0 %v2049
      %v2102 = vpop.f32.mrb[0].mxu0
      %v2103 = vadd.f32 0.0, %v2102
      %v2104 = vpop.f32.mrb[0].mxu0
      %v2105 = vpop.f32.mrb[0].mxu0
      %v2106 = vadd.f32 0.0, %v2105
      %v2107 = vpop.f32.mrb[0].mxu0
      %2108 = vmatprep.mubr.bf16.mxu0 0
      %2109 = vmatmul.mubr.bf16.gmra.mrb[0].mxu0 %v2052
      %v2110 = vpop.f32.mrb[0].mxu0
      %v2111 = vadd.f32 0.0, %v2110
      %v2112 = vpop.f32.mrb[0].mxu0
      %v2113 = vpop.f32.mrb[0].mxu0
      %v2114 = vadd.f32 0.0, %v2113
      %v2115 = vpop.f32.mrb[0].mxu0
      %2116 = vmatprep.mubr.bf16.mxu0 0
      %2117 = vmatmul.mubr.bf16.gmra.mrb[0].mxu0 %v2055
      %v2118 = vpop.f32.mrb[0].mxu0
      %v2119 = vadd.f32 0.0, %v2118
      %v2120 = vpop.f32.mrb[0].mxu0
      %v2121 = vpop.f32.mrb[0].mxu0
      %v2122 = vadd.f32 0.0, %v2121
      %v2123 = vpop.f32.mrb[0].mxu0
      %2124 = vdwg.mxu0
      %v2125 = vadd.f32 %v2031, %v2095
      %v2126 = vadd.f32 %v2032, %v2098
      %v2127 = vadd.f32 %v2033, %v2103
      %v2128 = vadd.f32 %v2034, %v2106
      %v2129 = vadd.f32 %v2035, %v2111
      %v2130 = vadd.f32 %v2036, %v2114
      %v2131 = vadd.f32 %v2037, %v2119
      %v2132 = vadd.f32 %v2038, %v2122
      %v2133 = vpack.c.bf16 %v1494, %v1491
      %v2134 = vpack.c.bf16 %v1502, %v1499
      %v2135 = vpack.c.bf16 %v1510, %v1507
      %v2136 = vpack.c.bf16 %v1518, %v1515
      %s2137 = scalar_lea.vmem %s2, 8
      %v2138 = vld [vmem:[%s2137] sm:$0xf]
      %v2140 = vsel %vm1943, %v2133, 0
      %v2143 = vsel %vm1943, %v2134, 0
      %v2146 = vsel %vm1943, %v2135, 0
      %v2149 = vsel %vm1943, %v2136, 0
      %v2152 = vsel %vm1956, %v2138, 0
      %2154 = vmatprep.subr.bf16.mxu0 0
      %2155 = vmatpush1.bf16.msra.mxu0 %v2152
      %2156 = vmatprep.subr.bf16.mxu0 0
      %2157 = vmatpush1.bf16.msra.mxu0 0
      %2158 = vmatprep.subr.bf16.mxu0 0
      %2159 = vmatpush1.bf16.msra.mxu0 0
      %2160 = vmatprep.subr.bf16.mxu0 0
      %2161 = vmatpush1.bf16.msra.mxu0 0
      %2162 = vmatprep.subr.bf16.mxu0 0
      %2163 = vmatpush1.bf16.msra.mxu0 0
      %2164 = vmatprep.subr.bf16.mxu0 0
      %2165 = vmatpush1.bf16.msra.mxu0 0
      %2166 = vmatprep.subr.bf16.mxu0 0
      %2167 = vmatpush1.bf16.msra.mxu0 0
      %2168 = vmatprep.subr.bf16.mxu0 0
      %2169 = vmatpush1.bf16.msra.mxu0 0
      %2170 = vmatprep.subr.bf16.mxu0 0
      %2171 = vmatpush1.bf16.msra.mxu0 0
      %2172 = vmatprep.subr.bf16.mxu0 0
      %2173 = vmatpush1.bf16.msra.mxu0 0
      %2174 = vmatprep.subr.bf16.mxu0 0
      %2175 = vmatpush1.bf16.msra.mxu0 0
      %2176 = vmatprep.subr.bf16.mxu0 0
      %2177 = vmatpush1.bf16.msra.mxu0 0
      %2178 = vmatprep.subr.bf16.mxu0 0
      %2179 = vmatpush1.bf16.msra.mxu0 0
      %2180 = vmatprep.subr.bf16.mxu0 0
      %2181 = vmatpush1.bf16.msra.mxu0 0
      %2182 = vmatprep.subr.bf16.mxu0 0
      %2183 = vmatpush1.bf16.msra.mxu0 0
      %2184 = vmatprep.subr.bf16.mxu0 0
      %2185 = vmatpush1.bf16.msra.mxu0 0
      %2186 = vmatprep.mubr.bf16.mxu0 0
      %2187 = vmatmul.mubr.bf16.gmra.mrb[0].mxu0 %v2140
      %v2188 = vpop.f32.mrb[0].mxu0
      %v2189 = vadd.f32 0.0, %v2188
      %v2190 = vpop.f32.mrb[0].mxu0
      %v2191 = vpop.f32.mrb[0].mxu0
      %v2192 = vadd.f32 0.0, %v2191
      %v2193 = vpop.f32.mrb[0].mxu0
      %2194 = vmatprep.mubr.bf16.mxu0 0
      %2195 = vmatmul.mubr.bf16.gmra.mrb[0].mxu0 %v2143
      %v2196 = vpop.f32.mrb[0].mxu0
      %v2197 = vadd.f32 0.0, %v2196
      %v2198 = vpop.f32.mrb[0].mxu0
      %v2199 = vpop.f32.mrb[0].mxu0
      %v2200 = vadd.f32 0.0, %v2199
      %v2201 = vpop.f32.mrb[0].mxu0
      %2202 = vmatprep.mubr.bf16.mxu0 0
      %2203 = vmatmul.mubr.bf16.gmra.mrb[0].mxu0 %v2146
      %v2204 = vpop.f32.mrb[0].mxu0
      %v2205 = vadd.f32 0.0, %v2204
      %v2206 = vpop.f32.mrb[0].mxu0
      %v2207 = vpop.f32.mrb[0].mxu0
      %v2208 = vadd.f32 0.0, %v2207
      %v2209 = vpop.f32.mrb[0].mxu0
      %2210 = vmatprep.mubr.bf16.mxu0 0
      %2211 = vmatmul.mubr.bf16.gmra.mrb[0].mxu0 %v2149
      %v2212 = vpop.f32.mrb[0].mxu0
      %v2213 = vadd.f32 0.0, %v2212
      %v2214 = vpop.f32.mrb[0].mxu0
      %v2215 = vpop.f32.mrb[0].mxu0
      %v2216 = vadd.f32 0.0, %v2215
      %v2217 = vpop.f32.mrb[0].mxu0
      %2218 = vdwg.mxu0
      %v2219 = vadd.f32 %v2125, %v2189
      %v2220 = vadd.f32 %v2126, %v2192
      %v2221 = vadd.f32 %v2127, %v2197
      %v2222 = vadd.f32 %v2128, %v2200
      %v2223 = vadd.f32 %v2129, %v2205
      %v2224 = vadd.f32 %v2130, %v2208
      %v2225 = vadd.f32 %v2131, %v2213
      %v2226 = vadd.f32 %v2132, %v2216
      %v2227 = vpack.c.bf16 %v1526, %v1523
      %v2228 = vpack.c.bf16 %v1534, %v1531
      %v2229 = vpack.c.bf16 %v1542, %v1539
      %v2230 = vpack.c.bf16 %v1550, %v1547
      %s2231 = scalar_lea.vmem %s2, 12
      %v2232 = vld [vmem:[%s2231] sm:$0xf]
      %v2234 = vsel %vm1943, %v2227, 0
      %v2237 = vsel %vm1943, %v2228, 0
      %v2240 = vsel %vm1943, %v2229, 0
      %v2243 = vsel %vm1943, %v2230, 0
      %v2246 = vsel %vm1956, %v2232, 0
      %2248 = vmatprep.subr.bf16.mxu0 0
      %2249 = vmatpush1.bf16.msra.mxu0 %v2246
      %2250 = vmatprep.subr.bf16.mxu0 0
      %2251 = vmatpush1.bf16.msra.mxu0 0
      %2252 = vmatprep.subr.bf16.mxu0 0
      %2253 = vmatpush1.bf16.msra.mxu0 0
      %2254 = vmatprep.subr.bf16.mxu0 0
      %2255 = vmatpush1.bf16.msra.mxu0 0
      %2256 = vmatprep.subr.bf16.mxu0 0
      %2257 = vmatpush1.bf16.msra.mxu0 0
      %2258 = vmatprep.subr.bf16.mxu0 0
      %2259 = vmatpush1.bf16.msra.mxu0 0
      %2260 = vmatprep.subr.bf16.mxu0 0
      %2261 = vmatpush1.bf16.msra.mxu0 0
      %2262 = vmatprep.subr.bf16.mxu0 0
      %2263 = vmatpush1.bf16.msra.mxu0 0
      %2264 = vmatprep.subr.bf16.mxu0 0
      %2265 = vmatpush1.bf16.msra.mxu0 0
      %2266 = vmatprep.subr.bf16.mxu0 0
      %2267 = vmatpush1.bf16.msra.mxu0 0
      %2268 = vmatprep.subr.bf16.mxu0 0
      %2269 = vmatpush1.bf16.msra.mxu0 0
      %2270 = vmatprep.subr.bf16.mxu0 0
      %2271 = vmatpush1.bf16.msra.mxu0 0
      %2272 = vmatprep.subr.bf16.mxu0 0
      %2273 = vmatpush1.bf16.msra.mxu0 0
      %2274 = vmatprep.subr.bf16.mxu0 0
      %2275 = vmatpush1.bf16.msra.mxu0 0
      %2276 = vmatprep.subr.bf16.mxu0 0
      %2277 = vmatpush1.bf16.msra.mxu0 0
      %2278 = vmatprep.subr.bf16.mxu0 0
      %2279 = vmatpush1.bf16.msra.mxu0 0
      %2280 = vmatprep.mubr.bf16.mxu0 0
      %2281 = vmatmul.mubr.bf16.gmra.mrb[0].mxu0 %v2234
      %v2282 = vpop.f32.mrb[0].mxu0
      %v2283 = vadd.f32 0.0, %v2282
      %v2284 = vpop.f32.mrb[0].mxu0
      %v2285 = vpop.f32.mrb[0].mxu0
      %v2286 = vadd.f32 0.0, %v2285
      %v2287 = vpop.f32.mrb[0].mxu0
      %2288 = vmatprep.mubr.bf16.mxu0 0
      %2289 = vmatmul.mubr.bf16.gmra.mrb[0].mxu0 %v2237
      %v2290 = vpop.f32.mrb[0].mxu0
      %v2291 = vadd.f32 0.0, %v2290
      %v2292 = vpop.f32.mrb[0].mxu0
      %v2293 = vpop.f32.mrb[0].mxu0
      %v2294 = vadd.f32 0.0, %v2293
      %v2295 = vpop.f32.mrb[0].mxu0
      %2296 = vmatprep.mubr.bf16.mxu0 0
      %2297 = vmatmul.mubr.bf16.gmra.mrb[0].mxu0 %v2240
      %v2298 = vpop.f32.mrb[0].mxu0
      %v2299 = vadd.f32 0.0, %v2298
      %v2300 = vpop.f32.mrb[0].mxu0
      %v2301 = vpop.f32.mrb[0].mxu0
      %v2302 = vadd.f32 0.0, %v2301
      %v2303 = vpop.f32.mrb[0].mxu0
      %2304 = vmatprep.mubr.bf16.mxu0 0
      %2305 = vmatmul.mubr.bf16.gmra.mrb[0].mxu0 %v2243
      %v2306 = vpop.f32.mrb[0].mxu0
      %v2307 = vadd.f32 0.0, %v2306
      %v2308 = vpop.f32.mrb[0].mxu0
      %v2309 = vpop.f32.mrb[0].mxu0
      %v2310 = vadd.f32 0.0, %v2309
      %v2311 = vpop.f32.mrb[0].mxu0
      %2312 = vdwg.mxu0
      %v2313 = vadd.f32 %v2219, %v2283
      %v2314 = vadd.f32 %v2220, %v2286
      %v2315 = vadd.f32 %v2221, %v2291
      %v2316 = vadd.f32 %v2222, %v2294
      %v2317 = vadd.f32 %v2223, %v2299
      %v2318 = vadd.f32 %v2224, %v2302
      %v2319 = vadd.f32 %v2225, %v2307
      %v2320 = vadd.f32 %v2226, %v2310
      %v2321 = vpack.c.bf16 %v1558, %v1555
      %v2322 = vpack.c.bf16 %v1566, %v1563
      %v2323 = vpack.c.bf16 %v1574, %v1571
      %v2324 = vpack.c.bf16 %v1582, %v1579
      %s2325 = scalar_lea.vmem %s2, 16
      %v2326 = vld [vmem:[%s2325] sm:$0xf]
      %v2328 = vsel %vm1943, %v2321, 0
      %v2331 = vsel %vm1943, %v2322, 0
      %v2334 = vsel %vm1943, %v2323, 0
      %v2337 = vsel %vm1943, %v2324, 0
      %v2340 = vsel %vm1956, %v2326, 0
      %2342 = vmatprep.subr.bf16.mxu0 0
      %2343 = vmatpush1.bf16.msra.mxu0 %v2340
      %2344 = vmatprep.subr.bf16.mxu0 0
      %2345 = vmatpush1.bf16.msra.mxu0 0
      %2346 = vmatprep.subr.bf16.mxu0 0
      %2347 = vmatpush1.bf16.msra.mxu0 0
      %2348 = vmatprep.subr.bf16.mxu0 0
      %2349 = vmatpush1.bf16.msra.mxu0 0
      %2350 = vmatprep.subr.bf16.mxu0 0
      %2351 = vmatpush1.bf16.msra.mxu0 0
      %2352 = vmatprep.subr.bf16.mxu0 0
      %2353 = vmatpush1.bf16.msra.mxu0 0
      %2354 = vmatprep.subr.bf16.mxu0 0
      %2355 = vmatpush1.bf16.msra.mxu0 0
      %2356 = vmatprep.subr.bf16.mxu0 0
      %2357 = vmatpush1.bf16.msra.mxu0 0
      %2358 = vmatprep.subr.bf16.mxu0 0
      %2359 = vmatpush1.bf16.msra.mxu0 0
      %2360 = vmatprep.subr.bf16.mxu0 0
      %2361 = vmatpush1.bf16.msra.mxu0 0
      %2362 = vmatprep.subr.bf16.mxu0 0
      %2363 = vmatpush1.bf16.msra.mxu0 0
      %2364 = vmatprep.subr.bf16.mxu0 0
      %2365 = vmatpush1.bf16.msra.mxu0 0
      %2366 = vmatprep.subr.bf16.mxu0 0
      %2367 = vmatpush1.bf16.msra.mxu0 0
      %2368 = vmatprep.subr.bf16.mxu0 0
      %2369 = vmatpush1.bf16.msra.mxu0 0
      %2370 = vmatprep.subr.bf16.mxu0 0
      %2371 = vmatpush1.bf16.msra.mxu0 0
      %2372 = vmatprep.subr.bf16.mxu0 0
      %2373 = vmatpush1.bf16.msra.mxu0 0
      %2374 = vmatprep.mubr.bf16.mxu0 0
      %2375 = vmatmul.mubr.bf16.gmra.mrb[0].mxu0 %v2328
      %v2376 = vpop.f32.mrb[0].mxu0
      %v2377 = vadd.f32 0.0, %v2376
      %v2378 = vpop.f32.mrb[0].mxu0
      %v2379 = vpop.f32.mrb[0].mxu0
      %v2380 = vadd.f32 0.0, %v2379
      %v2381 = vpop.f32.mrb[0].mxu0
      %2382 = vmatprep.mubr.bf16.mxu0 0
      %2383 = vmatmul.mubr.bf16.gmra.mrb[0].mxu0 %v2331
      %v2384 = vpop.f32.mrb[0].mxu0
      %v2385 = vadd.f32 0.0, %v2384
      %v2386 = vpop.f32.mrb[0].mxu0
      %v2387 = vpop.f32.mrb[0].mxu0
      %v2388 = vadd.f32 0.0, %v2387
      %v2389 = vpop.f32.mrb[0].mxu0
      %2390 = vmatprep.mubr.bf16.mxu0 0
      %2391 = vmatmul.mubr.bf16.gmra.mrb[0].mxu0 %v2334
      %v2392 = vpop.f32.mrb[0].mxu0
      %v2393 = vadd.f32 0.0, %v2392
      %v2394 = vpop.f32.mrb[0].mxu0
      %v2395 = vpop.f32.mrb[0].mxu0
      %v2396 = vadd.f32 0.0, %v2395
      %v2397 = vpop.f32.mrb[0].mxu0
      %2398 = vmatprep.mubr.bf16.mxu0 0
      %2399 = vmatmul.mubr.bf16.gmra.mrb[0].mxu0 %v2337
      %v2400 = vpop.f32.mrb[0].mxu0
      %v2401 = vadd.f32 0.0, %v2400
      %v2402 = vpop.f32.mrb[0].mxu0
      %v2403 = vpop.f32.mrb[0].mxu0
      %v2404 = vadd.f32 0.0, %v2403
      %v2405 = vpop.f32.mrb[0].mxu0
      %2406 = vdwg.mxu0
      %v2407 = vadd.f32 %v2313, %v2377
      %v2408 = vadd.f32 %v2314, %v2380
      %v2409 = vadd.f32 %v2315, %v2385
      %v2410 = vadd.f32 %v2316, %v2388
      %v2411 = vadd.f32 %v2317, %v2393
      %v2412 = vadd.f32 %v2318, %v2396
      %v2413 = vadd.f32 %v2319, %v2401
      %v2414 = vadd.f32 %v2320, %v2404
      %v2415 = vpack.c.bf16 %v1590, %v1587
      %v2416 = vpack.c.bf16 %v1598, %v1595
      %v2417 = vpack.c.bf16 %v1606, %v1603
      %v2418 = vpack.c.bf16 %v1614, %v1611
      %s2419 = scalar_lea.vmem %s2, 20
      %v2420 = vld [vmem:[%s2419] sm:$0xf]
      %v2422 = vsel %vm1943, %v2415, 0
      %v2425 = vsel %vm1943, %v2416, 0
      %v2428 = vsel %vm1943, %v2417, 0
      %v2431 = vsel %vm1943, %v2418, 0
      %v2434 = vsel %vm1956, %v2420, 0
      %2436 = vmatprep.subr.bf16.mxu0 0
      %2437 = vmatpush1.bf16.msra.mxu0 %v2434
      %2438 = vmatprep.subr.bf16.mxu0 0
      %2439 = vmatpush1.bf16.msra.mxu0 0
      %2440 = vmatprep.subr.bf16.mxu0 0
      %2441 = vmatpush1.bf16.msra.mxu0 0
      %2442 = vmatprep.subr.bf16.mxu0 0
      %2443 = vmatpush1.bf16.msra.mxu0 0
      %2444 = vmatprep.subr.bf16.mxu0 0
      %2445 = vmatpush1.bf16.msra.mxu0 0
      %2446 = vmatprep.subr.bf16.mxu0 0
      %2447 = vmatpush1.bf16.msra.mxu0 0
      %2448 = vmatprep.subr.bf16.mxu0 0
      %2449 = vmatpush1.bf16.msra.mxu0 0
      %2450 = vmatprep.subr.bf16.mxu0 0
      %2451 = vmatpush1.bf16.msra.mxu0 0
      %2452 = vmatprep.subr.bf16.mxu0 0
      %2453 = vmatpush1.bf16.msra.mxu0 0
      %2454 = vmatprep.subr.bf16.mxu0 0
      %2455 = vmatpush1.bf16.msra.mxu0 0
      %2456 = vmatprep.subr.bf16.mxu0 0
      %2457 = vmatpush1.bf16.msra.mxu0 0
      %2458 = vmatprep.subr.bf16.mxu0 0
      %2459 = vmatpush1.bf16.msra.mxu0 0
      %2460 = vmatprep.subr.bf16.mxu0 0
      %2461 = vmatpush1.bf16.msra.mxu0 0
      %2462 = vmatprep.subr.bf16.mxu0 0
      %2463 = vmatpush1.bf16.msra.mxu0 0
      %2464 = vmatprep.subr.bf16.mxu0 0
      %2465 = vmatpush1.bf16.msra.mxu0 0
      %2466 = vmatprep.subr.bf16.mxu0 0
      %2467 = vmatpush1.bf16.msra.mxu0 0
      %2468 = vmatprep.mubr.bf16.mxu0 0
      %2469 = vmatmul.mubr.bf16.gmra.mrb[0].mxu0 %v2422
      %v2470 = vpop.f32.mrb[0].mxu0
      %v2471 = vadd.f32 0.0, %v2470
      %v2472 = vpop.f32.mrb[0].mxu0
      %v2473 = vpop.f32.mrb[0].mxu0
      %v2474 = vadd.f32 0.0, %v2473
      %v2475 = vpop.f32.mrb[0].mxu0
      %2476 = vmatprep.mubr.bf16.mxu0 0
      %2477 = vmatmul.mubr.bf16.gmra.mrb[0].mxu0 %v2425
      %v2478 = vpop.f32.mrb[0].mxu0
      %v2479 = vadd.f32 0.0, %v2478
      %v2480 = vpop.f32.mrb[0].mxu0
      %v2481 = vpop.f32.mrb[0].mxu0
      %v2482 = vadd.f32 0.0, %v2481
      %v2483 = vpop.f32.mrb[0].mxu0
      %2484 = vmatprep.mubr.bf16.mxu0 0
      %2485 = vmatmul.mubr.bf16.gmra.mrb[0].mxu0 %v2428
      %v2486 = vpop.f32.mrb[0].mxu0
      %v2487 = vadd.f32 0.0, %v2486
      %v2488 = vpop.f32.mrb[0].mxu0
      %v2489 = vpop.f32.mrb[0].mxu0
      %v2490 = vadd.f32 0.0, %v2489
      %v2491 = vpop.f32.mrb[0].mxu0
      %2492 = vmatprep.mubr.bf16.mxu0 0
      %2493 = vmatmul.mubr.bf16.gmra.mrb[0].mxu0 %v2431
      %v2494 = vpop.f32.mrb[0].mxu0
      %v2495 = vadd.f32 0.0, %v2494
      %v2496 = vpop.f32.mrb[0].mxu0
      %v2497 = vpop.f32.mrb[0].mxu0
      %v2498 = vadd.f32 0.0, %v2497
      %v2499 = vpop.f32.mrb[0].mxu0
      %2500 = vdwg.mxu0
      %v2501 = vadd.f32 %v2407, %v2471
      %v2502 = vadd.f32 %v2408, %v2474
      %v2503 = vadd.f32 %v2409, %v2479
      %v2504 = vadd.f32 %v2410, %v2482
      %v2505 = vadd.f32 %v2411, %v2487
      %v2506 = vadd.f32 %v2412, %v2490
      %v2507 = vadd.f32 %v2413, %v2495
      %v2508 = vadd.f32 %v2414, %v2498
      %v2509 = vpack.c.bf16 %v1622, %v1619
      %v2510 = vpack.c.bf16 %v1630, %v1627
      %v2511 = vpack.c.bf16 %v1638, %v1635
      %v2512 = vpack.c.bf16 %v1646, %v1643
      %s2513 = scalar_lea.vmem %s2, 24
      %v2514 = vld [vmem:[%s2513] sm:$0xf]
      %v2516 = vsel %vm1943, %v2509, 0
      %v2519 = vsel %vm1943, %v2510, 0
      %v2522 = vsel %vm1943, %v2511, 0
      %v2525 = vsel %vm1943, %v2512, 0
      %v2528 = vsel %vm1956, %v2514, 0
      %2530 = vmatprep.subr.bf16.mxu0 0
      %2531 = vmatpush1.bf16.msra.mxu0 %v2528
      %2532 = vmatprep.subr.bf16.mxu0 0
      %2533 = vmatpush1.bf16.msra.mxu0 0
      %2534 = vmatprep.subr.bf16.mxu0 0
      %2535 = vmatpush1.bf16.msra.mxu0 0
      %2536 = vmatprep.subr.bf16.mxu0 0
      %2537 = vmatpush1.bf16.msra.mxu0 0
      %2538 = vmatprep.subr.bf16.mxu0 0
      %2539 = vmatpush1.bf16.msra.mxu0 0
      %2540 = vmatprep.subr.bf16.mxu0 0
      %2541 = vmatpush1.bf16.msra.mxu0 0
      %2542 = vmatprep.subr.bf16.mxu0 0
      %2543 = vmatpush1.bf16.msra.mxu0 0
      %2544 = vmatprep.subr.bf16.mxu0 0
      %2545 = vmatpush1.bf16.msra.mxu0 0
      %2546 = vmatprep.subr.bf16.mxu0 0
      %2547 = vmatpush1.bf16.msra.mxu0 0
      %2548 = vmatprep.subr.bf16.mxu0 0
      %2549 = vmatpush1.bf16.msra.mxu0 0
      %2550 = vmatprep.subr.bf16.mxu0 0
      %2551 = vmatpush1.bf16.msra.mxu0 0
      %2552 = vmatprep.subr.bf16.mxu0 0
      %2553 = vmatpush1.bf16.msra.mxu0 0
      %2554 = vmatprep.subr.bf16.mxu0 0
      %2555 = vmatpush1.bf16.msra.mxu0 0
      %2556 = vmatprep.subr.bf16.mxu0 0
      %2557 = vmatpush1.bf16.msra.mxu0 0
      %2558 = vmatprep.subr.bf16.mxu0 0
      %2559 = vmatpush1.bf16.msra.mxu0 0
      %2560 = vmatprep.subr.bf16.mxu0 0
      %2561 = vmatpush1.bf16.msra.mxu0 0
      %2562 = vmatprep.mubr.bf16.mxu0 0
      %2563 = vmatmul.mubr.bf16.gmra.mrb[0].mxu0 %v2516
      %v2564 = vpop.f32.mrb[0].mxu0
      %v2565 = vadd.f32 0.0, %v2564
      %v2566 = vpop.f32.mrb[0].mxu0
      %v2567 = vpop.f32.mrb[0].mxu0
      %v2568 = vadd.f32 0.0, %v2567
      %v2569 = vpop.f32.mrb[0].mxu0
      %2570 = vmatprep.mubr.bf16.mxu0 0
      %2571 = vmatmul.mubr.bf16.gmra.mrb[0].mxu0 %v2519
      %v2572 = vpop.f32.mrb[0].mxu0
      %v2573 = vadd.f32 0.0, %v2572
      %v2574 = vpop.f32.mrb[0].mxu0
      %v2575 = vpop.f32.mrb[0].mxu0
      %v2576 = vadd.f32 0.0, %v2575
      %v2577 = vpop.f32.mrb[0].mxu0
      %2578 = vmatprep.mubr.bf16.mxu0 0
      %2579 = vmatmul.mubr.bf16.gmra.mrb[0].mxu0 %v2522
      %v2580 = vpop.f32.mrb[0].mxu0
      %v2581 = vadd.f32 0.0, %v2580
      %v2582 = vpop.f32.mrb[0].mxu0
      %v2583 = vpop.f32.mrb[0].mxu0
      %v2584 = vadd.f32 0.0, %v2583
      %v2585 = vpop.f32.mrb[0].mxu0
      %2586 = vmatprep.mubr.bf16.mxu0 0
      %2587 = vmatmul.mubr.bf16.gmra.mrb[0].mxu0 %v2525
      %v2588 = vpop.f32.mrb[0].mxu0
      %v2589 = vadd.f32 0.0, %v2588
      %v2590 = vpop.f32.mrb[0].mxu0
      %v2591 = vpop.f32.mrb[0].mxu0
      %v2592 = vadd.f32 0.0, %v2591
      %v2593 = vpop.f32.mrb[0].mxu0
      %2594 = vdwg.mxu0
      %v2595 = vadd.f32 %v2501, %v2565
      %v2596 = vadd.f32 %v2502, %v2568
      %v2597 = vadd.f32 %v2503, %v2573
      %v2598 = vadd.f32 %v2504, %v2576
      %v2599 = vadd.f32 %v2505, %v2581
      %v2600 = vadd.f32 %v2506, %v2584
      %v2601 = vadd.f32 %v2507, %v2589
      %v2602 = vadd.f32 %v2508, %v2592
      %v2603 = vpack.c.bf16 %v1654, %v1651
      %v2604 = vpack.c.bf16 %v1662, %v1659
      %v2605 = vpack.c.bf16 %v1670, %v1667
      %v2606 = vpack.c.bf16 %v1678, %v1675
      %s2607 = scalar_lea.vmem %s2, 28
      %v2608 = vld [vmem:[%s2607] sm:$0xf]
      %v2610 = vsel %vm1943, %v2603, 0
      %v2613 = vsel %vm1943, %v2604, 0
      %v2616 = vsel %vm1943, %v2605, 0
      %v2619 = vsel %vm1943, %v2606, 0
      %v2622 = vsel %vm1956, %v2608, 0
      %2624 = vmatprep.subr.bf16.mxu0 0
      %2625 = vmatpush1.bf16.msra.mxu0 %v2622
      %2626 = vmatprep.subr.bf16.mxu0 0
      %2627 = vmatpush1.bf16.msra.mxu0 0
      %2628 = vmatprep.subr.bf16.mxu0 0
      %2629 = vmatpush1.bf16.msra.mxu0 0
      %2630 = vmatprep.subr.bf16.mxu0 0
      %2631 = vmatpush1.bf16.msra.mxu0 0
      %2632 = vmatprep.subr.bf16.mxu0 0
      %2633 = vmatpush1.bf16.msra.mxu0 0
      %2634 = vmatprep.subr.bf16.mxu0 0
      %2635 = vmatpush1.bf16.msra.mxu0 0
      %2636 = vmatprep.subr.bf16.mxu0 0
      %2637 = vmatpush1.bf16.msra.mxu0 0
      %2638 = vmatprep.subr.bf16.mxu0 0
      %2639 = vmatpush1.bf16.msra.mxu0 0
      %2640 = vmatprep.subr.bf16.mxu0 0
      %2641 = vmatpush1.bf16.msra.mxu0 0
      %2642 = vmatprep.subr.bf16.mxu0 0
      %2643 = vmatpush1.bf16.msra.mxu0 0
      %2644 = vmatprep.subr.bf16.mxu0 0
      %2645 = vmatpush1.bf16.msra.mxu0 0
      %2646 = vmatprep.subr.bf16.mxu0 0
      %2647 = vmatpush1.bf16.msra.mxu0 0
      %2648 = vmatprep.subr.bf16.mxu0 0
      %2649 = vmatpush1.bf16.msra.mxu0 0
      %2650 = vmatprep.subr.bf16.mxu0 0
      %2651 = vmatpush1.bf16.msra.mxu0 0
      %2652 = vmatprep.subr.bf16.mxu0 0
      %2653 = vmatpush1.bf16.msra.mxu0 0
      %2654 = vmatprep.subr.bf16.mxu0 0
      %2655 = vmatpush1.bf16.msra.mxu0 0
      %2656 = vmatprep.mubr.bf16.mxu0 0
      %2657 = vmatmul.mubr.bf16.gmra.mrb[0].mxu0 %v2610
      %v2658 = vpop.f32.mrb[0].mxu0
      %v2659 = vadd.f32 0.0, %v2658
      %v2660 = vpop.f32.mrb[0].mxu0
      %v2661 = vpop.f32.mrb[0].mxu0
      %v2662 = vadd.f32 0.0, %v2661
      %v2663 = vpop.f32.mrb[0].mxu0
      %2664 = vmatprep.mubr.bf16.mxu0 0
      %2665 = vmatmul.mubr.bf16.gmra.mrb[0].mxu0 %v2613
      %v2666 = vpop.f32.mrb[0].mxu0
      %v2667 = vadd.f32 0.0, %v2666
      %v2668 = vpop.f32.mrb[0].mxu0
      %v2669 = vpop.f32.mrb[0].mxu0
      %v2670 = vadd.f32 0.0, %v2669
      %v2671 = vpop.f32.mrb[0].mxu0
      %2672 = vmatprep.mubr.bf16.mxu0 0
      %2673 = vmatmul.mubr.bf16.gmra.mrb[0].mxu0 %v2616
      %v2674 = vpop.f32.mrb[0].mxu0
      %v2675 = vadd.f32 0.0, %v2674
      %v2676 = vpop.f32.mrb[0].mxu0
      %v2677 = vpop.f32.mrb[0].mxu0
      %v2678 = vadd.f32 0.0, %v2677
      %v2679 = vpop.f32.mrb[0].mxu0
      %2680 = vmatprep.mubr.bf16.mxu0 0
      %2681 = vmatmul.mubr.bf16.gmra.mrb[0].mxu0 %v2619
      %v2682 = vpop.f32.mrb[0].mxu0
      %v2683 = vadd.f32 0.0, %v2682
      %v2684 = vpop.f32.mrb[0].mxu0
      %v2685 = vpop.f32.mrb[0].mxu0
      %v2686 = vadd.f32 0.0, %v2685
      %v2687 = vpop.f32.mrb[0].mxu0
      %2688 = vdwg.mxu0
      %v2689 = vadd.f32 %v2595, %v2659
      %v2690 = vadd.f32 %v2596, %v2662
      %v2691 = vadd.f32 %v2597, %v2667
      %v2692 = vadd.f32 %v2598, %v2670
      %v2693 = vadd.f32 %v2599, %v2675
      %v2694 = vadd.f32 %v2600, %v2678
      %v2695 = vadd.f32 %v2601, %v2683
      %v2696 = vadd.f32 %v2602, %v2686
      %v2697 = vpack.c.bf16 %v1686, %v1683
      %v2698 = vpack.c.bf16 %v1694, %v1691
      %v2699 = vpack.c.bf16 %v1702, %v1699
      %v2700 = vpack.c.bf16 %v1710, %v1707
      %s2701 = scalar_lea.vmem %s2, 32
      %v2702 = vld [vmem:[%s2701] sm:$0xf]
      %v2704 = vsel %vm1943, %v2697, 0
      %v2707 = vsel %vm1943, %v2698, 0
      %v2710 = vsel %vm1943, %v2699, 0
      %v2713 = vsel %vm1943, %v2700, 0
      %v2716 = vsel %vm1956, %v2702, 0
      %2718 = vmatprep.subr.bf16.mxu0 0
      %2719 = vmatpush1.bf16.msra.mxu0 %v2716
      %2720 = vmatprep.subr.bf16.mxu0 0
      %2721 = vmatpush1.bf16.msra.mxu0 0
      %2722 = vmatprep.subr.bf16.mxu0 0
      %2723 = vmatpush1.bf16.msra.mxu0 0
      %2724 = vmatprep.subr.bf16.mxu0 0
      %2725 = vmatpush1.bf16.msra.mxu0 0
      %2726 = vmatprep.subr.bf16.mxu0 0
      %2727 = vmatpush1.bf16.msra.mxu0 0
      %2728 = vmatprep.subr.bf16.mxu0 0
      %2729 = vmatpush1.bf16.msra.mxu0 0
      %2730 = vmatprep.subr.bf16.mxu0 0
      %2731 = vmatpush1.bf16.msra.mxu0 0
      %2732 = vmatprep.subr.bf16.mxu0 0
      %2733 = vmatpush1.bf16.msra.mxu0 0
      %2734 = vmatprep.subr.bf16.mxu0 0
      %2735 = vmatpush1.bf16.msra.mxu0 0
      %2736 = vmatprep.subr.bf16.mxu0 0
      %2737 = vmatpush1.bf16.msra.mxu0 0
      %2738 = vmatprep.subr.bf16.mxu0 0
      %2739 = vmatpush1.bf16.msra.mxu0 0
      %2740 = vmatprep.subr.bf16.mxu0 0
      %2741 = vmatpush1.bf16.msra.mxu0 0
      %2742 = vmatprep.subr.bf16.mxu0 0
      %2743 = vmatpush1.bf16.msra.mxu0 0
      %2744 = vmatprep.subr.bf16.mxu0 0
      %2745 = vmatpush1.bf16.msra.mxu0 0
      %2746 = vmatprep.subr.bf16.mxu0 0
      %2747 = vmatpush1.bf16.msra.mxu0 0
      %2748 = vmatprep.subr.bf16.mxu0 0
      %2749 = vmatpush1.bf16.msra.mxu0 0
      %2750 = vmatprep.mubr.bf16.mxu0 0
      %2751 = vmatmul.mubr.bf16.gmra.mrb[0].mxu0 %v2704
      %v2752 = vpop.f32.mrb[0].mxu0
      %v2753 = vadd.f32 0.0, %v2752
      %v2754 = vpop.f32.mrb[0].mxu0
      %v2755 = vpop.f32.mrb[0].mxu0
      %v2756 = vadd.f32 0.0, %v2755
      %v2757 = vpop.f32.mrb[0].mxu0
      %2758 = vmatprep.mubr.bf16.mxu0 0
      %2759 = vmatmul.mubr.bf16.gmra.mrb[0].mxu0 %v2707
      %v2760 = vpop.f32.mrb[0].mxu0
      %v2761 = vadd.f32 0.0, %v2760
      %v2762 = vpop.f32.mrb[0].mxu0
      %v2763 = vpop.f32.mrb[0].mxu0
      %v2764 = vadd.f32 0.0, %v2763
      %v2765 = vpop.f32.mrb[0].mxu0
      %2766 = vmatprep.mubr.bf16.mxu0 0
      %2767 = vmatmul.mubr.bf16.gmra.mrb[0].mxu0 %v2710
      %v2768 = vpop.f32.mrb[0].mxu0
      %v2769 = vadd.f32 0.0, %v2768
      %v2770 = vpop.f32.mrb[0].mxu0
      %v2771 = vpop.f32.mrb[0].mxu0
      %v2772 = vadd.f32 0.0, %v2771
      %v2773 = vpop.f32.mrb[0].mxu0
      %2774 = vmatprep.mubr.bf16.mxu0 0
      %2775 = vmatmul.mubr.bf16.gmra.mrb[0].mxu0 %v2713
      %v2776 = vpop.f32.mrb[0].mxu0
      %v2777 = vadd.f32 0.0, %v2776
      %v2778 = vpop.f32.mrb[0].mxu0
      %v2779 = vpop.f32.mrb[0].mxu0
      %v2780 = vadd.f32 0.0, %v2779
      %v2781 = vpop.f32.mrb[0].mxu0
      %2782 = vdwg.mxu0
      %v2783 = vadd.f32 %v2689, %v2753
      %v2784 = vadd.f32 %v2690, %v2756
      %v2785 = vadd.f32 %v2691, %v2761
      %v2786 = vadd.f32 %v2692, %v2764
      %v2787 = vadd.f32 %v2693, %v2769
      %v2788 = vadd.f32 %v2694, %v2772
      %v2789 = vadd.f32 %v2695, %v2777
      %v2790 = vadd.f32 %v2696, %v2780
      %v2791 = vpack.c.bf16 %v1718, %v1715
      %v2792 = vpack.c.bf16 %v1726, %v1723
      %v2793 = vpack.c.bf16 %v1734, %v1731
      %v2794 = vpack.c.bf16 %v1742, %v1739
      %s2795 = scalar_lea.vmem %s2, 36
      %v2796 = vld [vmem:[%s2795] sm:$0xf]
      %v2798 = vsel %vm1943, %v2791, 0
      %v2801 = vsel %vm1943, %v2792, 0
      %v2804 = vsel %vm1943, %v2793, 0
      %v2807 = vsel %vm1943, %v2794, 0
      %v2810 = vsel %vm1956, %v2796, 0
      %2812 = vmatprep.subr.bf16.mxu0 0
      %2813 = vmatpush1.bf16.msra.mxu0 %v2810
      %2814 = vmatprep.subr.bf16.mxu0 0
      %2815 = vmatpush1.bf16.msra.mxu0 0
      %2816 = vmatprep.subr.bf16.mxu0 0
      %2817 = vmatpush1.bf16.msra.mxu0 0
      %2818 = vmatprep.subr.bf16.mxu0 0
      %2819 = vmatpush1.bf16.msra.mxu0 0
      %2820 = vmatprep.subr.bf16.mxu0 0
      %2821 = vmatpush1.bf16.msra.mxu0 0
      %2822 = vmatprep.subr.bf16.mxu0 0
      %2823 = vmatpush1.bf16.msra.mxu0 0
      %2824 = vmatprep.subr.bf16.mxu0 0
      %2825 = vmatpush1.bf16.msra.mxu0 0
      %2826 = vmatprep.subr.bf16.mxu0 0
      %2827 = vmatpush1.bf16.msra.mxu0 0
      %2828 = vmatprep.subr.bf16.mxu0 0
      %2829 = vmatpush1.bf16.msra.mxu0 0
      %2830 = vmatprep.subr.bf16.mxu0 0
      %2831 = vmatpush1.bf16.msra.mxu0 0
      %2832 = vmatprep.subr.bf16.mxu0 0
      %2833 = vmatpush1.bf16.msra.mxu0 0
      %2834 = vmatprep.subr.bf16.mxu0 0
      %2835 = vmatpush1.bf16.msra.mxu0 0
      %2836 = vmatprep.subr.bf16.mxu0 0
      %2837 = vmatpush1.bf16.msra.mxu0 0
      %2838 = vmatprep.subr.bf16.mxu0 0
      %2839 = vmatpush1.bf16.msra.mxu0 0
      %2840 = vmatprep.subr.bf16.mxu0 0
      %2841 = vmatpush1.bf16.msra.mxu0 0
      %2842 = vmatprep.subr.bf16.mxu0 0
      %2843 = vmatpush1.bf16.msra.mxu0 0
      %2844 = vmatprep.mubr.bf16.mxu0 0
      %2845 = vmatmul.mubr.bf16.gmra.mrb[0].mxu0 %v2798
      %v2846 = vpop.f32.mrb[0].mxu0
      %v2847 = vadd.f32 0.0, %v2846
      %v2848 = vpop.f32.mrb[0].mxu0
      %v2849 = vpop.f32.mrb[0].mxu0
      %v2850 = vadd.f32 0.0, %v2849
      %v2851 = vpop.f32.mrb[0].mxu0
      %2852 = vmatprep.mubr.bf16.mxu0 0
      %2853 = vmatmul.mubr.bf16.gmra.mrb[0].mxu0 %v2801
      %v2854 = vpop.f32.mrb[0].mxu0
      %v2855 = vadd.f32 0.0, %v2854
      %v2856 = vpop.f32.mrb[0].mxu0
      %v2857 = vpop.f32.mrb[0].mxu0
      %v2858 = vadd.f32 0.0, %v2857
      %v2859 = vpop.f32.mrb[0].mxu0
      %2860 = vmatprep.mubr.bf16.mxu0 0
      %2861 = vmatmul.mubr.bf16.gmra.mrb[0].mxu0 %v2804
      %v2862 = vpop.f32.mrb[0].mxu0
      %v2863 = vadd.f32 0.0, %v2862
      %v2864 = vpop.f32.mrb[0].mxu0
      %v2865 = vpop.f32.mrb[0].mxu0
      %v2866 = vadd.f32 0.0, %v2865
      %v2867 = vpop.f32.mrb[0].mxu0
      %2868 = vmatprep.mubr.bf16.mxu0 0
      %2869 = vmatmul.mubr.bf16.gmra.mrb[0].mxu0 %v2807
      %v2870 = vpop.f32.mrb[0].mxu0
      %v2871 = vadd.f32 0.0, %v2870
      %v2872 = vpop.f32.mrb[0].mxu0
      %v2873 = vpop.f32.mrb[0].mxu0
      %v2874 = vadd.f32 0.0, %v2873
      %v2875 = vpop.f32.mrb[0].mxu0
      %2876 = vdwg.mxu0
      %v2877 = vadd.f32 %v2783, %v2847
      %v2878 = vadd.f32 %v2784, %v2850
      %v2879 = vadd.f32 %v2785, %v2855
      %v2880 = vadd.f32 %v2786, %v2858
      %v2881 = vadd.f32 %v2787, %v2863
      %v2882 = vadd.f32 %v2788, %v2866
      %v2883 = vadd.f32 %v2789, %v2871
      %v2884 = vadd.f32 %v2790, %v2874
      %v2885 = vpack.c.bf16 %v1750, %v1747
      %v2886 = vpack.c.bf16 %v1758, %v1755
      %v2887 = vpack.c.bf16 %v1766, %v1763
      %v2888 = vpack.c.bf16 %v1774, %v1771
      %s2889 = scalar_lea.vmem %s2, 40
      %v2890 = vld [vmem:[%s2889] sm:$0xf]
      %v2892 = vsel %vm1943, %v2885, 0
      %v2895 = vsel %vm1943, %v2886, 0
      %v2898 = vsel %vm1943, %v2887, 0
      %v2901 = vsel %vm1943, %v2888, 0
      %v2904 = vsel %vm1956, %v2890, 0
      %2906 = vmatprep.subr.bf16.mxu0 0
      %2907 = vmatpush1.bf16.msra.mxu0 %v2904
      %2908 = vmatprep.subr.bf16.mxu0 0
      %2909 = vmatpush1.bf16.msra.mxu0 0
      %2910 = vmatprep.subr.bf16.mxu0 0
      %2911 = vmatpush1.bf16.msra.mxu0 0
      %2912 = vmatprep.subr.bf16.mxu0 0
      %2913 = vmatpush1.bf16.msra.mxu0 0
      %2914 = vmatprep.subr.bf16.mxu0 0
      %2915 = vmatpush1.bf16.msra.mxu0 0
      %2916 = vmatprep.subr.bf16.mxu0 0
      %2917 = vmatpush1.bf16.msra.mxu0 0
      %2918 = vmatprep.subr.bf16.mxu0 0
      %2919 = vmatpush1.bf16.msra.mxu0 0
      %2920 = vmatprep.subr.bf16.mxu0 0
      %2921 = vmatpush1.bf16.msra.mxu0 0
      %2922 = vmatprep.subr.bf16.mxu0 0
      %2923 = vmatpush1.bf16.msra.mxu0 0
      %2924 = vmatprep.subr.bf16.mxu0 0
      %2925 = vmatpush1.bf16.msra.mxu0 0
      %2926 = vmatprep.subr.bf16.mxu0 0
      %2927 = vmatpush1.bf16.msra.mxu0 0
      %2928 = vmatprep.subr.bf16.mxu0 0
      %2929 = vmatpush1.bf16.msra.mxu0 0
      %2930 = vmatprep.subr.bf16.mxu0 0
      %2931 = vmatpush1.bf16.msra.mxu0 0
      %2932 = vmatprep.subr.bf16.mxu0 0
      %2933 = vmatpush1.bf16.msra.mxu0 0
      %2934 = vmatprep.subr.bf16.mxu0 0
      %2935 = vmatpush1.bf16.msra.mxu0 0
      %2936 = vmatprep.subr.bf16.mxu0 0
      %2937 = vmatpush1.bf16.msra.mxu0 0
      %2938 = vmatprep.mubr.bf16.mxu0 0
      %2939 = vmatmul.mubr.bf16.gmra.mrb[0].mxu0 %v2892
      %v2940 = vpop.f32.mrb[0].mxu0
      %v2941 = vadd.f32 0.0, %v2940
      %v2942 = vpop.f32.mrb[0].mxu0
      %v2943 = vpop.f32.mrb[0].mxu0
      %v2944 = vadd.f32 0.0, %v2943
      %v2945 = vpop.f32.mrb[0].mxu0
      %2946 = vmatprep.mubr.bf16.mxu0 0
      %2947 = vmatmul.mubr.bf16.gmra.mrb[0].mxu0 %v2895
      %v2948 = vpop.f32.mrb[0].mxu0
      %v2949 = vadd.f32 0.0, %v2948
      %v2950 = vpop.f32.mrb[0].mxu0
      %v2951 = vpop.f32.mrb[0].mxu0
      %v2952 = vadd.f32 0.0, %v2951
      %v2953 = vpop.f32.mrb[0].mxu0
      %2954 = vmatprep.mubr.bf16.mxu0 0
      %2955 = vmatmul.mubr.bf16.gmra.mrb[0].mxu0 %v2898
      %v2956 = vpop.f32.mrb[0].mxu0
      %v2957 = vadd.f32 0.0, %v2956
      %v2958 = vpop.f32.mrb[0].mxu0
      %v2959 = vpop.f32.mrb[0].mxu0
      %v2960 = vadd.f32 0.0, %v2959
      %v2961 = vpop.f32.mrb[0].mxu0
      %2962 = vmatprep.mubr.bf16.mxu0 0
      %2963 = vmatmul.mubr.bf16.gmra.mrb[0].mxu0 %v2901
      %v2964 = vpop.f32.mrb[0].mxu0
      %v2965 = vadd.f32 0.0, %v2964
      %v2966 = vpop.f32.mrb[0].mxu0
      %v2967 = vpop.f32.mrb[0].mxu0
      %v2968 = vadd.f32 0.0, %v2967
      %v2969 = vpop.f32.mrb[0].mxu0
      %2970 = vdwg.mxu0
      %v2971 = vadd.f32 %v2877, %v2941
      %v2972 = vadd.f32 %v2878, %v2944
      %v2973 = vadd.f32 %v2879, %v2949
      %v2974 = vadd.f32 %v2880, %v2952
      %v2975 = vadd.f32 %v2881, %v2957
      %v2976 = vadd.f32 %v2882, %v2960
      %v2977 = vadd.f32 %v2883, %v2965
      %v2978 = vadd.f32 %v2884, %v2968
      %v2979 = vpack.c.bf16 %v1782, %v1779
      %v2980 = vpack.c.bf16 %v1790, %v1787
      %v2981 = vpack.c.bf16 %v1798, %v1795
      %v2982 = vpack.c.bf16 %v1806, %v1803
      %s2983 = scalar_lea.vmem %s2, 44
      %v2984 = vld [vmem:[%s2983] sm:$0xf]
      %v2986 = vsel %vm1943, %v2979, 0
      %v2989 = vsel %vm1943, %v2980, 0
      %v2992 = vsel %vm1943, %v2981, 0
      %v2995 = vsel %vm1943, %v2982, 0
      %v2998 = vsel %vm1956, %v2984, 0
      %3000 = vmatprep.subr.bf16.mxu0 0
      %3001 = vmatpush1.bf16.msra.mxu0 %v2998
      %3002 = vmatprep.subr.bf16.mxu0 0
      %3003 = vmatpush1.bf16.msra.mxu0 0
      %3004 = vmatprep.subr.bf16.mxu0 0
      %3005 = vmatpush1.bf16.msra.mxu0 0
      %3006 = vmatprep.subr.bf16.mxu0 0
      %3007 = vmatpush1.bf16.msra.mxu0 0
      %3008 = vmatprep.subr.bf16.mxu0 0
      %3009 = vmatpush1.bf16.msra.mxu0 0
      %3010 = vmatprep.subr.bf16.mxu0 0
      %3011 = vmatpush1.bf16.msra.mxu0 0
      %3012 = vmatprep.subr.bf16.mxu0 0
      %3013 = vmatpush1.bf16.msra.mxu0 0
      %3014 = vmatprep.subr.bf16.mxu0 0
      %3015 = vmatpush1.bf16.msra.mxu0 0
      %3016 = vmatprep.subr.bf16.mxu0 0
      %3017 = vmatpush1.bf16.msra.mxu0 0
      %3018 = vmatprep.subr.bf16.mxu0 0
      %3019 = vmatpush1.bf16.msra.mxu0 0
      %3020 = vmatprep.subr.bf16.mxu0 0
      %3021 = vmatpush1.bf16.msra.mxu0 0
      %3022 = vmatprep.subr.bf16.mxu0 0
      %3023 = vmatpush1.bf16.msra.mxu0 0
      %3024 = vmatprep.subr.bf16.mxu0 0
      %3025 = vmatpush1.bf16.msra.mxu0 0
      %3026 = vmatprep.subr.bf16.mxu0 0
      %3027 = vmatpush1.bf16.msra.mxu0 0
      %3028 = vmatprep.subr.bf16.mxu0 0
      %3029 = vmatpush1.bf16.msra.mxu0 0
      %3030 = vmatprep.subr.bf16.mxu0 0
      %3031 = vmatpush1.bf16.msra.mxu0 0
      %3032 = vmatprep.mubr.bf16.mxu0 0
      %3033 = vmatmul.mubr.bf16.gmra.mrb[0].mxu0 %v2986
      %v3034 = vpop.f32.mrb[0].mxu0
      %v3035 = vadd.f32 0.0, %v3034
      %v3036 = vpop.f32.mrb[0].mxu0
      %v3037 = vpop.f32.mrb[0].mxu0
      %v3038 = vadd.f32 0.0, %v3037
      %v3039 = vpop.f32.mrb[0].mxu0
      %3040 = vmatprep.mubr.bf16.mxu0 0
      %3041 = vmatmul.mubr.bf16.gmra.mrb[0].mxu0 %v2989
      %v3042 = vpop.f32.mrb[0].mxu0
      %v3043 = vadd.f32 0.0, %v3042
      %v3044 = vpop.f32.mrb[0].mxu0
      %v3045 = vpop.f32.mrb[0].mxu0
      %v3046 = vadd.f32 0.0, %v3045
      %v3047 = vpop.f32.mrb[0].mxu0
      %3048 = vmatprep.mubr.bf16.mxu0 0
      %3049 = vmatmul.mubr.bf16.gmra.mrb[0].mxu0 %v2992
      %v3050 = vpop.f32.mrb[0].mxu0
      %v3051 = vadd.f32 0.0, %v3050
      %v3052 = vpop.f32.mrb[0].mxu0
      %v3053 = vpop.f32.mrb[0].mxu0
      %v3054 = vadd.f32 0.0, %v3053
      %v3055 = vpop.f32.mrb[0].mxu0
      %3056 = vmatprep.mubr.bf16.mxu0 0
      %3057 = vmatmul.mubr.bf16.gmra.mrb[0].mxu0 %v2995
      %v3058 = vpop.f32.mrb[0].mxu0
      %v3059 = vadd.f32 0.0, %v3058
      %v3060 = vpop.f32.mrb[0].mxu0
      %v3061 = vpop.f32.mrb[0].mxu0
      %v3062 = vadd.f32 0.0, %v3061
      %v3063 = vpop.f32.mrb[0].mxu0
      %3064 = vdwg.mxu0
      %v3065 = vadd.f32 %v2971, %v3035
      %v3066 = vadd.f32 %v2972, %v3038
      %v3067 = vadd.f32 %v2973, %v3043
      %v3068 = vadd.f32 %v2974, %v3046
      %v3069 = vadd.f32 %v2975, %v3051
      %v3070 = vadd.f32 %v2976, %v3054
      %v3071 = vadd.f32 %v2977, %v3059
      %v3072 = vadd.f32 %v2978, %v3062
      %v3073 = vpack.c.bf16 %v1814, %v1811
      %v3074 = vpack.c.bf16 %v1822, %v1819
      %v3075 = vpack.c.bf16 %v1830, %v1827
      %v3076 = vpack.c.bf16 %v1838, %v1835
      %s3077 = scalar_lea.vmem %s2, 48
      %v3078 = vld [vmem:[%s3077] sm:$0xf]
      %v3080 = vsel %vm1943, %v3073, 0
      %v3083 = vsel %vm1943, %v3074, 0
      %v3086 = vsel %vm1943, %v3075, 0
      %v3089 = vsel %vm1943, %v3076, 0
      %v3092 = vsel %vm1956, %v3078, 0
      %3094 = vmatprep.subr.bf16.mxu0 0
      %3095 = vmatpush1.bf16.msra.mxu0 %v3092
      %3096 = vmatprep.subr.bf16.mxu0 0
      %3097 = vmatpush1.bf16.msra.mxu0 0
      %3098 = vmatprep.subr.bf16.mxu0 0
      %3099 = vmatpush1.bf16.msra.mxu0 0
      %3100 = vmatprep.subr.bf16.mxu0 0
      %3101 = vmatpush1.bf16.msra.mxu0 0
      %3102 = vmatprep.subr.bf16.mxu0 0
      %3103 = vmatpush1.bf16.msra.mxu0 0
      %3104 = vmatprep.subr.bf16.mxu0 0
      %3105 = vmatpush1.bf16.msra.mxu0 0
      %3106 = vmatprep.subr.bf16.mxu0 0
      %3107 = vmatpush1.bf16.msra.mxu0 0
      %3108 = vmatprep.subr.bf16.mxu0 0
      %3109 = vmatpush1.bf16.msra.mxu0 0
      %3110 = vmatprep.subr.bf16.mxu0 0
      %3111 = vmatpush1.bf16.msra.mxu0 0
      %3112 = vmatprep.subr.bf16.mxu0 0
      %3113 = vmatpush1.bf16.msra.mxu0 0
      %3114 = vmatprep.subr.bf16.mxu0 0
      %3115 = vmatpush1.bf16.msra.mxu0 0
      %3116 = vmatprep.subr.bf16.mxu0 0
      %3117 = vmatpush1.bf16.msra.mxu0 0
      %3118 = vmatprep.subr.bf16.mxu0 0
      %3119 = vmatpush1.bf16.msra.mxu0 0
      %3120 = vmatprep.subr.bf16.mxu0 0
      %3121 = vmatpush1.bf16.msra.mxu0 0
      %3122 = vmatprep.subr.bf16.mxu0 0
      %3123 = vmatpush1.bf16.msra.mxu0 0
      %3124 = vmatprep.subr.bf16.mxu0 0
      %3125 = vmatpush1.bf16.msra.mxu0 0
      %3126 = vmatprep.mubr.bf16.mxu0 0
      %3127 = vmatmul.mubr.bf16.gmra.mrb[0].mxu0 %v3080
      %v3128 = vpop.f32.mrb[0].mxu0
      %v3129 = vadd.f32 0.0, %v3128
      %v3130 = vpop.f32.mrb[0].mxu0
      %v3131 = vpop.f32.mrb[0].mxu0
      %v3132 = vadd.f32 0.0, %v3131
      %v3133 = vpop.f32.mrb[0].mxu0
      %3134 = vmatprep.mubr.bf16.mxu0 0
      %3135 = vmatmul.mubr.bf16.gmra.mrb[0].mxu0 %v3083
      %v3136 = vpop.f32.mrb[0].mxu0
      %v3137 = vadd.f32 0.0, %v3136
      %v3138 = vpop.f32.mrb[0].mxu0
      %v3139 = vpop.f32.mrb[0].mxu0
      %v3140 = vadd.f32 0.0, %v3139
      %v3141 = vpop.f32.mrb[0].mxu0
      %3142 = vmatprep.mubr.bf16.mxu0 0
      %3143 = vmatmul.mubr.bf16.gmra.mrb[0].mxu0 %v3086
      %v3144 = vpop.f32.mrb[0].mxu0
      %v3145 = vadd.f32 0.0, %v3144
      %v3146 = vpop.f32.mrb[0].mxu0
      %v3147 = vpop.f32.mrb[0].mxu0
      %v3148 = vadd.f32 0.0, %v3147
      %v3149 = vpop.f32.mrb[0].mxu0
      %3150 = vmatprep.mubr.bf16.mxu0 0
      %3151 = vmatmul.mubr.bf16.gmra.mrb[0].mxu0 %v3089
      %v3152 = vpop.f32.mrb[0].mxu0
      %v3153 = vadd.f32 0.0, %v3152
      %v3154 = vpop.f32.mrb[0].mxu0
      %v3155 = vpop.f32.mrb[0].mxu0
      %v3156 = vadd.f32 0.0, %v3155
      %v3157 = vpop.f32.mrb[0].mxu0
      %3158 = vdwg.mxu0
      %v3159 = vadd.f32 %v3065, %v3129
      %v3160 = vadd.f32 %v3066, %v3132
      %v3161 = vadd.f32 %v3067, %v3137
      %v3162 = vadd.f32 %v3068, %v3140
      %v3163 = vadd.f32 %v3069, %v3145
      %v3164 = vadd.f32 %v3070, %v3148
      %v3165 = vadd.f32 %v3071, %v3153
      %v3166 = vadd.f32 %v3072, %v3156
      %v3167 = vpack.c.bf16 %v1846, %v1843
      %v3168 = vpack.c.bf16 %v1854, %v1851
      %v3169 = vpack.c.bf16 %v1862, %v1859
      %v3170 = vpack.c.bf16 %v1870, %v1867
      %s3171 = scalar_lea.vmem %s2, 52
      %v3172 = vld [vmem:[%s3171] sm:$0xf]
      %v3174 = vsel %vm1943, %v3167, 0
      %v3177 = vsel %vm1943, %v3168, 0
      %v3180 = vsel %vm1943, %v3169, 0
      %v3183 = vsel %vm1943, %v3170, 0
      %v3186 = vsel %vm1956, %v3172, 0
      %3188 = vmatprep.subr.bf16.mxu0 0
      %3189 = vmatpush1.bf16.msra.mxu0 %v3186
      %3190 = vmatprep.subr.bf16.mxu0 0
      %3191 = vmatpush1.bf16.msra.mxu0 0
      %3192 = vmatprep.subr.bf16.mxu0 0
      %3193 = vmatpush1.bf16.msra.mxu0 0
      %3194 = vmatprep.subr.bf16.mxu0 0
      %3195 = vmatpush1.bf16.msra.mxu0 0
      %3196 = vmatprep.subr.bf16.mxu0 0
      %3197 = vmatpush1.bf16.msra.mxu0 0
      %3198 = vmatprep.subr.bf16.mxu0 0
      %3199 = vmatpush1.bf16.msra.mxu0 0
      %3200 = vmatprep.subr.bf16.mxu0 0
      %3201 = vmatpush1.bf16.msra.mxu0 0
      %3202 = vmatprep.subr.bf16.mxu0 0
      %3203 = vmatpush1.bf16.msra.mxu0 0
      %3204 = vmatprep.subr.bf16.mxu0 0
      %3205 = vmatpush1.bf16.msra.mxu0 0
      %3206 = vmatprep.subr.bf16.mxu0 0
      %3207 = vmatpush1.bf16.msra.mxu0 0
      %3208 = vmatprep.subr.bf16.mxu0 0
      %3209 = vmatpush1.bf16.msra.mxu0 0
      %3210 = vmatprep.subr.bf16.mxu0 0
      %3211 = vmatpush1.bf16.msra.mxu0 0
      %3212 = vmatprep.subr.bf16.mxu0 0
      %3213 = vmatpush1.bf16.msra.mxu0 0
      %3214 = vmatprep.subr.bf16.mxu0 0
      %3215 = vmatpush1.bf16.msra.mxu0 0
      %3216 = vmatprep.subr.bf16.mxu0 0
      %3217 = vmatpush1.bf16.msra.mxu0 0
      %3218 = vmatprep.subr.bf16.mxu0 0
      %3219 = vmatpush1.bf16.msra.mxu0 0
      %3220 = vmatprep.mubr.bf16.mxu0 0
      %3221 = vmatmul.mubr.bf16.gmra.mrb[0].mxu0 %v3174
      %v3222 = vpop.f32.mrb[0].mxu0
      %v3223 = vadd.f32 0.0, %v3222
      %v3224 = vpop.f32.mrb[0].mxu0
      %v3225 = vpop.f32.mrb[0].mxu0
      %v3226 = vadd.f32 0.0, %v3225
      %v3227 = vpop.f32.mrb[0].mxu0
      %3228 = vmatprep.mubr.bf16.mxu0 0
      %3229 = vmatmul.mubr.bf16.gmra.mrb[0].mxu0 %v3177
      %v3230 = vpop.f32.mrb[0].mxu0
      %v3231 = vadd.f32 0.0, %v3230
      %v3232 = vpop.f32.mrb[0].mxu0
      %v3233 = vpop.f32.mrb[0].mxu0
      %v3234 = vadd.f32 0.0, %v3233
      %v3235 = vpop.f32.mrb[0].mxu0
      %3236 = vmatprep.mubr.bf16.mxu0 0
      %3237 = vmatmul.mubr.bf16.gmra.mrb[0].mxu0 %v3180
      %v3238 = vpop.f32.mrb[0].mxu0
      %v3239 = vadd.f32 0.0, %v3238
      %v3240 = vpop.f32.mrb[0].mxu0
      %v3241 = vpop.f32.mrb[0].mxu0
      %v3242 = vadd.f32 0.0, %v3241
      %v3243 = vpop.f32.mrb[0].mxu0
      %3244 = vmatprep.mubr.bf16.mxu0 0
      %3245 = vmatmul.mubr.bf16.gmra.mrb[0].mxu0 %v3183
      %v3246 = vpop.f32.mrb[0].mxu0
      %v3247 = vadd.f32 0.0, %v3246
      %v3248 = vpop.f32.mrb[0].mxu0
      %v3249 = vpop.f32.mrb[0].mxu0
      %v3250 = vadd.f32 0.0, %v3249
      %v3251 = vpop.f32.mrb[0].mxu0
      %3252 = vdwg.mxu0
      %v3253 = vadd.f32 %v3159, %v3223
      %v3254 = vadd.f32 %v3160, %v3226
      %v3255 = vadd.f32 %v3161, %v3231
      %v3256 = vadd.f32 %v3162, %v3234
      %v3257 = vadd.f32 %v3163, %v3239
      %v3258 = vadd.f32 %v3164, %v3242
      %v3259 = vadd.f32 %v3165, %v3247
      %v3260 = vadd.f32 %v3166, %v3250
      %v3261 = vpack.c.bf16 %v1878, %v1875
      %v3262 = vpack.c.bf16 %v1886, %v1883
      %v3263 = vpack.c.bf16 %v1894, %v1891
      %v3264 = vpack.c.bf16 %v1902, %v1899
      %s3265 = scalar_lea.vmem %s2, 56
      %v3266 = vld [vmem:[%s3265] sm:$0xf]
      %v3268 = vsel %vm1943, %v3261, 0
      %v3271 = vsel %vm1943, %v3262, 0
      %v3274 = vsel %vm1943, %v3263, 0
      %v3277 = vsel %vm1943, %v3264, 0
      %v3280 = vsel %vm1956, %v3266, 0
      %3282 = vmatprep.subr.bf16.mxu0 0
      %3283 = vmatpush1.bf16.msra.mxu0 %v3280
      %3284 = vmatprep.subr.bf16.mxu0 0
      %3285 = vmatpush1.bf16.msra.mxu0 0
      %3286 = vmatprep.subr.bf16.mxu0 0
      %3287 = vmatpush1.bf16.msra.mxu0 0
      %3288 = vmatprep.subr.bf16.mxu0 0
      %3289 = vmatpush1.bf16.msra.mxu0 0
      %3290 = vmatprep.subr.bf16.mxu0 0
      %3291 = vmatpush1.bf16.msra.mxu0 0
      %3292 = vmatprep.subr.bf16.mxu0 0
      %3293 = vmatpush1.bf16.msra.mxu0 0
      %3294 = vmatprep.subr.bf16.mxu0 0
      %3295 = vmatpush1.bf16.msra.mxu0 0
      %3296 = vmatprep.subr.bf16.mxu0 0
      %3297 = vmatpush1.bf16.msra.mxu0 0
      %3298 = vmatprep.subr.bf16.mxu0 0
      %3299 = vmatpush1.bf16.msra.mxu0 0
      %3300 = vmatprep.subr.bf16.mxu0 0
      %3301 = vmatpush1.bf16.msra.mxu0 0
      %3302 = vmatprep.subr.bf16.mxu0 0
      %3303 = vmatpush1.bf16.msra.mxu0 0
      %3304 = vmatprep.subr.bf16.mxu0 0
      %3305 = vmatpush1.bf16.msra.mxu0 0
      %3306 = vmatprep.subr.bf16.mxu0 0
      %3307 = vmatpush1.bf16.msra.mxu0 0
      %3308 = vmatprep.subr.bf16.mxu0 0
      %3309 = vmatpush1.bf16.msra.mxu0 0
      %3310 = vmatprep.subr.bf16.mxu0 0
      %3311 = vmatpush1.bf16.msra.mxu0 0
      %3312 = vmatprep.subr.bf16.mxu0 0
      %3313 = vmatpush1.bf16.msra.mxu0 0
      %3314 = vmatprep.mubr.bf16.mxu0 0
      %3315 = vmatmul.mubr.bf16.gmra.mrb[0].mxu0 %v3268
      %v3316 = vpop.f32.mrb[0].mxu0
      %v3317 = vadd.f32 0.0, %v3316
      %v3318 = vpop.f32.mrb[0].mxu0
      %v3319 = vpop.f32.mrb[0].mxu0
      %v3320 = vadd.f32 0.0, %v3319
      %v3321 = vpop.f32.mrb[0].mxu0
      %3322 = vmatprep.mubr.bf16.mxu0 0
      %3323 = vmatmul.mubr.bf16.gmra.mrb[0].mxu0 %v3271
      %v3324 = vpop.f32.mrb[0].mxu0
      %v3325 = vadd.f32 0.0, %v3324
      %v3326 = vpop.f32.mrb[0].mxu0
      %v3327 = vpop.f32.mrb[0].mxu0
      %v3328 = vadd.f32 0.0, %v3327
      %v3329 = vpop.f32.mrb[0].mxu0
      %3330 = vmatprep.mubr.bf16.mxu0 0
      %3331 = vmatmul.mubr.bf16.gmra.mrb[0].mxu0 %v3274
      %v3332 = vpop.f32.mrb[0].mxu0
      %v3333 = vadd.f32 0.0, %v3332
      %v3334 = vpop.f32.mrb[0].mxu0
      %v3335 = vpop.f32.mrb[0].mxu0
      %v3336 = vadd.f32 0.0, %v3335
      %v3337 = vpop.f32.mrb[0].mxu0
      %3338 = vmatprep.mubr.bf16.mxu0 0
      %3339 = vmatmul.mubr.bf16.gmra.mrb[0].mxu0 %v3277
      %v3340 = vpop.f32.mrb[0].mxu0
      %v3341 = vadd.f32 0.0, %v3340
      %v3342 = vpop.f32.mrb[0].mxu0
      %v3343 = vpop.f32.mrb[0].mxu0
      %v3344 = vadd.f32 0.0, %v3343
      %v3345 = vpop.f32.mrb[0].mxu0
      %3346 = vdwg.mxu0
      %v3347 = vadd.f32 %v3253, %v3317
      %v3348 = vadd.f32 %v3254, %v3320
      %v3349 = vadd.f32 %v3255, %v3325
      %v3350 = vadd.f32 %v3256, %v3328
      %v3351 = vadd.f32 %v3257, %v3333
      %v3352 = vadd.f32 %v3258, %v3336
      %v3353 = vadd.f32 %v3259, %v3341
      %v3354 = vadd.f32 %v3260, %v3344
      %v3355 = vpack.c.bf16 %v1910, %v1907
      %v3356 = vpack.c.bf16 %v1918, %v1915
      %v3357 = vpack.c.bf16 %v1926, %v1923
      %v3358 = vpack.c.bf16 %v1934, %v1931
      %s3359 = scalar_lea.vmem %s2, 60
      %v3360 = vld [vmem:[%s3359] sm:$0xf]
      %v3362 = vsel %vm1943, %v3355, 0
      %v3365 = vsel %vm1943, %v3356, 0
      %v3368 = vsel %vm1943, %v3357, 0
      %v3371 = vsel %vm1943, %v3358, 0
      %v3374 = vsel %vm1956, %v3360, 0
      %3376 = vmatprep.subr.bf16.mxu0 0
      %3377 = vmatpush1.bf16.msra.mxu0 %v3374
      %3378 = vmatprep.subr.bf16.mxu0 0
      %3379 = vmatpush1.bf16.msra.mxu0 0
      %3380 = vmatprep.subr.bf16.mxu0 0
      %3381 = vmatpush1.bf16.msra.mxu0 0
      %3382 = vmatprep.subr.bf16.mxu0 0
      %3383 = vmatpush1.bf16.msra.mxu0 0
      %3384 = vmatprep.subr.bf16.mxu0 0
      %3385 = vmatpush1.bf16.msra.mxu0 0
      %3386 = vmatprep.subr.bf16.mxu0 0
      %3387 = vmatpush1.bf16.msra.mxu0 0
      %3388 = vmatprep.subr.bf16.mxu0 0
      %3389 = vmatpush1.bf16.msra.mxu0 0
      %3390 = vmatprep.subr.bf16.mxu0 0
      %3391 = vmatpush1.bf16.msra.mxu0 0
      %3392 = vmatprep.subr.bf16.mxu0 0
      %3393 = vmatpush1.bf16.msra.mxu0 0
      %3394 = vmatprep.subr.bf16.mxu0 0
      %3395 = vmatpush1.bf16.msra.mxu0 0
      %3396 = vmatprep.subr.bf16.mxu0 0
      %3397 = vmatpush1.bf16.msra.mxu0 0
      %3398 = vmatprep.subr.bf16.mxu0 0
      %3399 = vmatpush1.bf16.msra.mxu0 0
      %3400 = vmatprep.subr.bf16.mxu0 0
      %3401 = vmatpush1.bf16.msra.mxu0 0
      %3402 = vmatprep.subr.bf16.mxu0 0
      %3403 = vmatpush1.bf16.msra.mxu0 0
      %3404 = vmatprep.subr.bf16.mxu0 0
      %3405 = vmatpush1.bf16.msra.mxu0 0
      %3406 = vmatprep.subr.bf16.mxu0 0
      %3407 = vmatpush1.bf16.msra.mxu0 0
      %3408 = vmatprep.mubr.bf16.mxu0 0
      %3409 = vmatmul.mubr.bf16.gmra.mrb[0].mxu0 %v3362
      %v3410 = vpop.f32.mrb[0].mxu0
      %v3411 = vadd.f32 0.0, %v3410
      %v3412 = vpop.f32.mrb[0].mxu0
      %v3413 = vpop.f32.mrb[0].mxu0
      %v3414 = vadd.f32 0.0, %v3413
      %v3415 = vpop.f32.mrb[0].mxu0
      %3416 = vmatprep.mubr.bf16.mxu0 0
      %3417 = vmatmul.mubr.bf16.gmra.mrb[0].mxu0 %v3365
      %v3418 = vpop.f32.mrb[0].mxu0
      %v3419 = vadd.f32 0.0, %v3418
      %v3420 = vpop.f32.mrb[0].mxu0
      %v3421 = vpop.f32.mrb[0].mxu0
      %v3422 = vadd.f32 0.0, %v3421
      %v3423 = vpop.f32.mrb[0].mxu0
      %3424 = vmatprep.mubr.bf16.mxu0 0
      %3425 = vmatmul.mubr.bf16.gmra.mrb[0].mxu0 %v3368
      %v3426 = vpop.f32.mrb[0].mxu0
      %v3427 = vadd.f32 0.0, %v3426
      %v3428 = vpop.f32.mrb[0].mxu0
      %v3429 = vpop.f32.mrb[0].mxu0
      %v3430 = vadd.f32 0.0, %v3429
      %v3431 = vpop.f32.mrb[0].mxu0
      %3432 = vmatprep.mubr.bf16.mxu0 0
      %3433 = vmatmul.mubr.bf16.gmra.mrb[0].mxu0 %v3371
      %v3434 = vpop.f32.mrb[0].mxu0
      %v3435 = vadd.f32 0.0, %v3434
      %v3436 = vpop.f32.mrb[0].mxu0
      %v3437 = vpop.f32.mrb[0].mxu0
      %v3438 = vadd.f32 0.0, %v3437
      %v3439 = vpop.f32.mrb[0].mxu0
      %3440 = vdwg.mxu0
      %v3441 = vadd.f32 %v3347, %v3411
      %v3442 = vadd.f32 %v3348, %v3414
      %v3443 = vadd.f32 %v3349, %v3419
      %v3444 = vadd.f32 %v3350, %v3422
      %v3445 = vadd.f32 %v3351, %v3427
      %v3446 = vadd.f32 %v3352, %v3430
      %v3447 = vadd.f32 %v3353, %v3435
      %v3448 = vadd.f32 %v3354, %v3438
      %v3449 = vmax.f32 %v3441, 0.0
      %v3450 = vmax.f32 %v3442, 0.0
      %v3451 = vmax.f32 %v3443, 0.0
      %v3452 = vmax.f32 %v3444, 0.0
      %v3453 = vmax.f32 %v3445, 0.0
      %v3454 = vmax.f32 %v3446, 0.0
      %v3455 = vmax.f32 %v3447, 0.0
      %v3456 = vmax.f32 %v3448, 0.0
      %v3457 = vpack.c.bf16 %v3450, %v3449
      %v3458 = vpack.c.bf16 %v3452, %v3451
      %v3459 = vpack.c.bf16 %v3454, %v3453
      %v3460 = vpack.c.bf16 %v3456, %v3455
      %v3461 = vld [vmem:[%s4] sm:$0xf]
      %v3462 = vld [vmem:[%s4 + $0x4] sm:$0xf]
      %v3463 = vld [vmem:[%s4 + $0x8] sm:$0xf]
      %v3464 = vld [vmem:[%s4 + $0xc] sm:$0xf]
      %v3465 = vld [vmem:[%s4 + $0x10] sm:$0xf]
      %v3466 = vld [vmem:[%s4 + $0x14] sm:$0xf]
      %v3467 = vld [vmem:[%s4 + $0x18] sm:$0xf]
      %v3468 = vld [vmem:[%s4 + $0x1c] sm:$0xf]
      %v3469 = vld [vmem:[%s4 + $0x20] sm:$0xf]
      %v3470 = vld [vmem:[%s4 + $0x24] sm:$0xf]
      %v3471 = vld [vmem:[%s4 + $0x28] sm:$0xf]
      %v3472 = vld [vmem:[%s4 + $0x2c] sm:$0xf]
      %v3473 = vld [vmem:[%s4 + $0x30] sm:$0xf]
      %v3474 = vld [vmem:[%s4 + $0x34] sm:$0xf]
      %v3475 = vld [vmem:[%s4 + $0x38] sm:$0xf]
      %v3476 = vld [vmem:[%s4 + $0x3c] sm:$0xf]
      %v3477 = vld [vmem:[%s4 + $0x40] sm:$0xf]
      %v3478 = vld [vmem:[%s4 + $0x44] sm:$0xf]
      %v3479 = vld [vmem:[%s4 + $0x48] sm:$0xf]
      %v3480 = vld [vmem:[%s4 + $0x4c] sm:$0xf]
      %v3481 = vld [vmem:[%s4 + $0x50] sm:$0xf]
      %v3482 = vld [vmem:[%s4 + $0x54] sm:$0xf]
      %v3483 = vld [vmem:[%s4 + $0x58] sm:$0xf]
      %v3484 = vld [vmem:[%s4 + $0x5c] sm:$0xf]
      %v3485 = vld [vmem:[%s4 + $0x60] sm:$0xf]
      %v3486 = vld [vmem:[%s4 + $0x64] sm:$0xf]
      %v3487 = vld [vmem:[%s4 + $0x68] sm:$0xf]
      %v3488 = vld [vmem:[%s4 + $0x6c] sm:$0xf]
      %v3489 = vld [vmem:[%s4 + $0x70] sm:$0xf]
      %v3490 = vld [vmem:[%s4 + $0x74] sm:$0xf]
      %v3491 = vld [vmem:[%s4 + $0x78] sm:$0xf]
      %v3492 = vld [vmem:[%s4 + $0x7c] sm:$0xf]
      %v3525 = vunpack.c.l.b16 %v3461
      %v3526 = vunpack.c.l.b16 %v3462
      %v3527 = vunpack.c.l.b16 %v3463
      %v3528 = vunpack.c.l.b16 %v3464
      %v3529 = vunpack.c.l.b16 %v3465
      %v3530 = vunpack.c.l.b16 %v3466
      %v3531 = vunpack.c.l.b16 %v3467
      %v3532 = vunpack.c.l.b16 %v3468
      %v3533 = vunpack.c.l.b16 %v3469
      %v3534 = vunpack.c.l.b16 %v3470
      %v3535 = vunpack.c.l.b16 %v3471
      %v3536 = vunpack.c.l.b16 %v3472
      %v3537 = vunpack.c.l.b16 %v3473
      %v3538 = vunpack.c.l.b16 %v3474
      %v3539 = vunpack.c.l.b16 %v3475
      %v3540 = vunpack.c.l.b16 %v3476
      %v3541 = vunpack.c.l.b16 %v3477
      %v3542 = vunpack.c.l.b16 %v3478
      %v3543 = vunpack.c.l.b16 %v3479
      %v3544 = vunpack.c.l.b16 %v3480
      %v3545 = vunpack.c.l.b16 %v3481
      %v3546 = vunpack.c.l.b16 %v3482
      %v3547 = vunpack.c.l.b16 %v3483
      %v3548 = vunpack.c.l.b16 %v3484
      %v3549 = vunpack.c.l.b16 %v3485
      %v3550 = vunpack.c.l.b16 %v3486
      %v3551 = vunpack.c.l.b16 %v3487
      %v3552 = vunpack.c.l.b16 %v3488
      %v3553 = vunpack.c.l.b16 %v3489
      %v3554 = vunpack.c.l.b16 %v3490
      %v3555 = vunpack.c.l.b16 %v3491
      %v3556 = vunpack.c.l.b16 %v3492
      %v3557 = vpack.c.b16 %v3526, %v3525
      %v3558 = vpack.c.b16 %v3528, %v3527
      %v3559 = vpack.c.b16 %v3530, %v3529
      %v3560 = vpack.c.b16 %v3532, %v3531
      %v3561 = vpack.c.b16 %v3534, %v3533
      %v3562 = vpack.c.b16 %v3536, %v3535
      %v3563 = vpack.c.b16 %v3538, %v3537
      %v3564 = vpack.c.b16 %v3540, %v3539
      %v3565 = vpack.c.b16 %v3542, %v3541
      %v3566 = vpack.c.b16 %v3544, %v3543
      %v3567 = vpack.c.b16 %v3546, %v3545
      %v3568 = vpack.c.b16 %v3548, %v3547
      %v3569 = vpack.c.b16 %v3550, %v3549
      %v3570 = vpack.c.b16 %v3552, %v3551
      %v3571 = vpack.c.b16 %v3554, %v3553
      %v3572 = vpack.c.b16 %v3556, %v3555
      %vm3573 = vcmask 523264
      %v3575 = vsel %vm3573, %v3557, 0
      %v3578 = vsel %vm3573, %v3558, 0
      %v3581 = vsel %vm3573, %v3559, 0
      %v3584 = vsel %vm3573, %v3560, 0
      %v3587 = vsel %vm3573, %v3561, 0
      %v3590 = vsel %vm3573, %v3562, 0
      %v3593 = vsel %vm3573, %v3563, 0
      %v3596 = vsel %vm3573, %v3564, 0
      %v3599 = vsel %vm3573, %v3565, 0
      %v3602 = vsel %vm3573, %v3566, 0
      %v3605 = vsel %vm3573, %v3567, 0
      %v3608 = vsel %vm3573, %v3568, 0
      %v3611 = vsel %vm3573, %v3569, 0
      %v3614 = vsel %vm3573, %v3570, 0
      %v3617 = vsel %vm3573, %v3571, 0
      %v3620 = vsel %vm3573, %v3572, 0
      %3622 = vmatprep.subr.bf16.mxu0 0
      %3623 = vmatpush1.bf16.msra.mxu0 %v3457
      %3624 = vmatprep.subr.bf16.mxu0 0
      %3625 = vmatpush1.bf16.msra.mxu0 %v3458
      %3626 = vmatprep.subr.bf16.mxu0 0
      %3627 = vmatpush1.bf16.msra.mxu0 %v3459
      %3628 = vmatprep.subr.bf16.mxu0 0
      %3629 = vmatpush1.bf16.msra.mxu0 %v3460
      %3630 = vmatprep.subr.bf16.mxu0 0
      %3631 = vmatpush1.bf16.msra.mxu0 0
      %3632 = vmatprep.subr.bf16.mxu0 0
      %3633 = vmatpush1.bf16.msra.mxu0 0
      %3634 = vmatprep.subr.bf16.mxu0 0
      %3635 = vmatpush1.bf16.msra.mxu0 0
      %3636 = vmatprep.subr.bf16.mxu0 0
      %3637 = vmatpush1.bf16.msra.mxu0 0
      %3638 = vmatprep.subr.bf16.mxu0 0
      %3639 = vmatpush1.bf16.msra.mxu0 0
      %3640 = vmatprep.subr.bf16.mxu0 0
      %3641 = vmatpush1.bf16.msra.mxu0 0
      %3642 = vmatprep.subr.bf16.mxu0 0
      %3643 = vmatpush1.bf16.msra.mxu0 0
      %3644 = vmatprep.subr.bf16.mxu0 0
      %3645 = vmatpush1.bf16.msra.mxu0 0
      %3646 = vmatprep.subr.bf16.mxu0 0
      %3647 = vmatpush1.bf16.msra.mxu0 0
      %3648 = vmatprep.subr.bf16.mxu0 0
      %3649 = vmatpush1.bf16.msra.mxu0 0
      %3650 = vmatprep.subr.bf16.mxu0 0
      %3651 = vmatpush1.bf16.msra.mxu0 0
      %3652 = vmatprep.subr.bf16.mxu0 0
      %3653 = vmatpush1.bf16.msra.mxu0 0
      %3654 = vmatprep.mubr.bf16.mxu0 0
      %3655 = vmatmul.mubr.bf16.gmra.mrb[0].mxu0 %v3575
      %v3656 = vpop.f32.mrb[0].mxu0
      %v3657 = vadd.f32 0.0, %v3656
      %v3658 = vpop.f32.mrb[0].mxu0
      %v3659 = vpop.f32.mrb[0].mxu0
      %v3660 = vadd.f32 0.0, %v3659
      %v3661 = vpop.f32.mrb[0].mxu0
      %3662 = vmatprep.mubr.bf16.mxu0 0
      %3663 = vmatmul.mubr.bf16.gmra.mrb[0].mxu0 %v3578
      %v3664 = vpop.f32.mrb[0].mxu0
      %v3665 = vadd.f32 0.0, %v3664
      %v3666 = vpop.f32.mrb[0].mxu0
      %v3667 = vpop.f32.mrb[0].mxu0
      %v3668 = vadd.f32 0.0, %v3667
      %v3669 = vpop.f32.mrb[0].mxu0
      %3670 = vmatprep.mubr.bf16.mxu0 0
      %3671 = vmatmul.mubr.bf16.gmra.mrb[0].mxu0 %v3581
      %v3672 = vpop.f32.mrb[0].mxu0
      %v3673 = vadd.f32 0.0, %v3672
      %v3674 = vpop.f32.mrb[0].mxu0
      %v3675 = vpop.f32.mrb[0].mxu0
      %v3676 = vadd.f32 0.0, %v3675
      %v3677 = vpop.f32.mrb[0].mxu0
      %3678 = vmatprep.mubr.bf16.mxu0 0
      %3679 = vmatmul.mubr.bf16.gmra.mrb[0].mxu0 %v3584
      %v3680 = vpop.f32.mrb[0].mxu0
      %v3681 = vadd.f32 0.0, %v3680
      %v3682 = vpop.f32.mrb[0].mxu0
      %v3683 = vpop.f32.mrb[0].mxu0
      %v3684 = vadd.f32 0.0, %v3683
      %v3685 = vpop.f32.mrb[0].mxu0
      %3686 = vmatprep.mubr.bf16.mxu0 0
      %3687 = vmatmul.mubr.bf16.gmra.mrb[0].mxu0 %v3587
      %v3688 = vpop.f32.mrb[0].mxu0
      %v3689 = vadd.f32 0.0, %v3688
      %v3690 = vpop.f32.mrb[0].mxu0
      %v3691 = vpop.f32.mrb[0].mxu0
      %v3692 = vadd.f32 0.0, %v3691
      %v3693 = vpop.f32.mrb[0].mxu0
      %3694 = vmatprep.mubr.bf16.mxu0 0
      %3695 = vmatmul.mubr.bf16.gmra.mrb[0].mxu0 %v3590
      %v3696 = vpop.f32.mrb[0].mxu0
      %v3697 = vadd.f32 0.0, %v3696
      %v3698 = vpop.f32.mrb[0].mxu0
      %v3699 = vpop.f32.mrb[0].mxu0
      %v3700 = vadd.f32 0.0, %v3699
      %v3701 = vpop.f32.mrb[0].mxu0
      %3702 = vmatprep.mubr.bf16.mxu0 0
      %3703 = vmatmul.mubr.bf16.gmra.mrb[0].mxu0 %v3593
      %v3704 = vpop.f32.mrb[0].mxu0
      %v3705 = vadd.f32 0.0, %v3704
      %v3706 = vpop.f32.mrb[0].mxu0
      %v3707 = vpop.f32.mrb[0].mxu0
      %v3708 = vadd.f32 0.0, %v3707
      %v3709 = vpop.f32.mrb[0].mxu0
      %3710 = vmatprep.mubr.bf16.mxu0 0
      %3711 = vmatmul.mubr.bf16.gmra.mrb[0].mxu0 %v3596
      %v3712 = vpop.f32.mrb[0].mxu0
      %v3713 = vadd.f32 0.0, %v3712
      %v3714 = vpop.f32.mrb[0].mxu0
      %v3715 = vpop.f32.mrb[0].mxu0
      %v3716 = vadd.f32 0.0, %v3715
      %v3717 = vpop.f32.mrb[0].mxu0
      %3718 = vmatprep.mubr.bf16.mxu0 0
      %3719 = vmatmul.mubr.bf16.gmra.mrb[0].mxu0 %v3599
      %v3720 = vpop.f32.mrb[0].mxu0
      %v3721 = vadd.f32 0.0, %v3720
      %v3722 = vpop.f32.mrb[0].mxu0
      %v3723 = vpop.f32.mrb[0].mxu0
      %v3724 = vadd.f32 0.0, %v3723
      %v3725 = vpop.f32.mrb[0].mxu0
      %3726 = vmatprep.mubr.bf16.mxu0 0
      %3727 = vmatmul.mubr.bf16.gmra.mrb[0].mxu0 %v3602
      %v3728 = vpop.f32.mrb[0].mxu0
      %v3729 = vadd.f32 0.0, %v3728
      %v3730 = vpop.f32.mrb[0].mxu0
      %v3731 = vpop.f32.mrb[0].mxu0
      %v3732 = vadd.f32 0.0, %v3731
      %v3733 = vpop.f32.mrb[0].mxu0
      %3734 = vmatprep.mubr.bf16.mxu0 0
      %3735 = vmatmul.mubr.bf16.gmra.mrb[0].mxu0 %v3605
      %v3736 = vpop.f32.mrb[0].mxu0
      %v3737 = vadd.f32 0.0, %v3736
      %v3738 = vpop.f32.mrb[0].mxu0
      %v3739 = vpop.f32.mrb[0].mxu0
      %v3740 = vadd.f32 0.0, %v3739
      %v3741 = vpop.f32.mrb[0].mxu0
      %3742 = vmatprep.mubr.bf16.mxu0 0
      %3743 = vmatmul.mubr.bf16.gmra.mrb[0].mxu0 %v3608
      %v3744 = vpop.f32.mrb[0].mxu0
      %v3745 = vadd.f32 0.0, %v3744
      %v3746 = vpop.f32.mrb[0].mxu0
      %v3747 = vpop.f32.mrb[0].mxu0
      %v3748 = vadd.f32 0.0, %v3747
      %v3749 = vpop.f32.mrb[0].mxu0
      %3750 = vmatprep.mubr.bf16.mxu0 0
      %3751 = vmatmul.mubr.bf16.gmra.mrb[0].mxu0 %v3611
      %v3752 = vpop.f32.mrb[0].mxu0
      %v3753 = vadd.f32 0.0, %v3752
      %v3754 = vpop.f32.mrb[0].mxu0
      %v3755 = vpop.f32.mrb[0].mxu0
      %v3756 = vadd.f32 0.0, %v3755
      %v3757 = vpop.f32.mrb[0].mxu0
      %3758 = vmatprep.mubr.bf16.mxu0 0
      %3759 = vmatmul.mubr.bf16.gmra.mrb[0].mxu0 %v3614
      %v3760 = vpop.f32.mrb[0].mxu0
      %v3761 = vadd.f32 0.0, %v3760
      %v3762 = vpop.f32.mrb[0].mxu0
      %v3763 = vpop.f32.mrb[0].mxu0
      %v3764 = vadd.f32 0.0, %v3763
      %v3765 = vpop.f32.mrb[0].mxu0
      %3766 = vmatprep.mubr.bf16.mxu0 0
      %3767 = vmatmul.mubr.bf16.gmra.mrb[0].mxu0 %v3617
      %v3768 = vpop.f32.mrb[0].mxu0
      %v3769 = vadd.f32 0.0, %v3768
      %v3770 = vpop.f32.mrb[0].mxu0
      %v3771 = vpop.f32.mrb[0].mxu0
      %v3772 = vadd.f32 0.0, %v3771
      %v3773 = vpop.f32.mrb[0].mxu0
      %3774 = vmatprep.mubr.bf16.mxu0 0
      %3775 = vmatmul.mubr.bf16.gmra.mrb[0].mxu0 %v3620
      %v3776 = vpop.f32.mrb[0].mxu0
      %v3777 = vadd.f32 0.0, %v3776
      %v3778 = vpop.f32.mrb[0].mxu0
      %v3779 = vpop.f32.mrb[0].mxu0
      %v3780 = vadd.f32 0.0, %v3779
      %v3781 = vpop.f32.mrb[0].mxu0
      %3782 = vdwg.mxu0
      %v3783 = vld [vmem:[%s6] sm:$0x1]
      %v3784 = vpack.c.bf16 %v3660, %v3657
      %v3785 = vld [vmem:[%s5] sm:$0xf]
      %v3786 = vld [vmem:[%s5 + $0x4] sm:$0xf]
      %v3787 = vld [vmem:[%s5 + $0x8] sm:$0xf]
      %v3788 = vld [vmem:[%s5 + $0xc] sm:$0xf]
      %v3789 = vld [vmem:[%s5 + $0x10] sm:$0xf]
      %v3790 = vld [vmem:[%s5 + $0x14] sm:$0xf]
      %v3791 = vld [vmem:[%s5 + $0x18] sm:$0xf]
      %v3792 = vld [vmem:[%s5 + $0x1c] sm:$0xf]
      %v3801 = vunpack.c.l.b16 %v3785
      %v3802 = vunpack.c.l.b16 %v3786
      %v3803 = vunpack.c.l.b16 %v3787
      %v3804 = vunpack.c.l.b16 %v3788
      %v3805 = vunpack.c.l.b16 %v3789
      %v3806 = vunpack.c.l.b16 %v3790
      %v3807 = vunpack.c.l.b16 %v3791
      %v3808 = vunpack.c.l.b16 %v3792
      %v3809 = vpack.c.b16 %v3802, %v3801
      %v3810 = vpack.c.b16 %v3804, %v3803
      %v3811 = vpack.c.b16 %v3806, %v3805
      %v3812 = vpack.c.b16 %v3808, %v3807
      %v3818 = vsel %vm3573, %v3784, 0
      %3820 = vmatprep.subr.bf16.mxu0 0
      %3821 = vmatpush1.bf16.msra.mxu0 %v3809
      %3822 = vmatprep.subr.bf16.mxu0 0
      %3823 = vmatpush1.bf16.msra.mxu0 %v3810
      %3824 = vmatprep.subr.bf16.mxu0 0
      %3825 = vmatpush1.bf16.msra.mxu0 %v3811
      %3826 = vmatprep.subr.bf16.mxu0 0
      %3827 = vmatpush1.bf16.msra.mxu0 %v3812
      %3828 = vmatprep.subr.bf16.mxu0 0
      %3829 = vmatpush1.bf16.msra.mxu0 0
      %3830 = vmatprep.subr.bf16.mxu0 0
      %3831 = vmatpush1.bf16.msra.mxu0 0
      %3832 = vmatprep.subr.bf16.mxu0 0
      %3833 = vmatpush1.bf16.msra.mxu0 0
      %3834 = vmatprep.subr.bf16.mxu0 0
      %3835 = vmatpush1.bf16.msra.mxu0 0
      %3836 = vmatprep.subr.bf16.mxu0 0
      %3837 = vmatpush1.bf16.msra.mxu0 0
      %3838 = vmatprep.subr.bf16.mxu0 0
      %3839 = vmatpush1.bf16.msra.mxu0 0
      %3840 = vmatprep.subr.bf16.mxu0 0
      %3841 = vmatpush1.bf16.msra.mxu0 0
      %3842 = vmatprep.subr.bf16.mxu0 0
      %3843 = vmatpush1.bf16.msra.mxu0 0
      %3844 = vmatprep.subr.bf16.mxu0 0
      %3845 = vmatpush1.bf16.msra.mxu0 0
      %3846 = vmatprep.subr.bf16.mxu0 0
      %3847 = vmatpush1.bf16.msra.mxu0 0
      %3848 = vmatprep.subr.bf16.mxu0 0
      %3849 = vmatpush1.bf16.msra.mxu0 0
      %3850 = vmatprep.subr.bf16.mxu0 0
      %3851 = vmatpush1.bf16.msra.mxu0 0
      %3852 = vmatprep.mubr.bf16.mxu0 0
      %3853 = vmatmul.mubr.bf16.gmra.mrb[0].mxu0 %v3818
      %v3854 = vpop.f32.mrb[0].mxu0
      %v3855 = vadd.f32 0.0, %v3854
      %v3856 = vpop.f32.mrb[0].mxu0
      %v3857 = vpop.f32.mrb[0].mxu0
      %v3858 = vadd.f32 0.0, %v3857
      %v3859 = vpop.f32.mrb[0].mxu0
      %3860 = vdwg.mxu0
      %v3862 = vlaneseq
      %v3863 = vshrl.u32 %v3862, 7
      %v3864 = vsub.s32 0, %v3863
      %v3865 = vrot.slane %v3783, %v3864
      %v3867 = vadd.f32 %v3865, %v3855
      %v3868 = vadd.f32 %v3865, %v3858
      %v3869 = vpack.c.bf16 %v3668, %v3665
      %s3870 = scalar_lea.vmem %s5, 32
      %v3871 = vld [vmem:[%s3870] sm:$0xf]
      %v3872 = vld [vmem:[%s3870 + $0x4] sm:$0xf]
      %v3873 = vld [vmem:[%s3870 + $0x8] sm:$0xf]
      %v3874 = vld [vmem:[%s3870 + $0xc] sm:$0xf]
      %v3875 = vld [vmem:[%s3870 + $0x10] sm:$0xf]
      %v3876 = vld [vmem:[%s3870 + $0x14] sm:$0xf]
      %v3877 = vld [vmem:[%s3870 + $0x18] sm:$0xf]
      %v3878 = vld [vmem:[%s3870 + $0x1c] sm:$0xf]
      %v3887 = vunpack.c.l.b16 %v3871
      %v3888 = vunpack.c.l.b16 %v3872
      %v3889 = vunpack.c.l.b16 %v3873
      %v3890 = vunpack.c.l.b16 %v3874
      %v3891 = vunpack.c.l.b16 %v3875
      %v3892 = vunpack.c.l.b16 %v3876
      %v3893 = vunpack.c.l.b16 %v3877
      %v3894 = vunpack.c.l.b16 %v3878
      %v3895 = vpack.c.b16 %v3888, %v3887
      %v3896 = vpack.c.b16 %v3890, %v3889
      %v3897 = vpack.c.b16 %v3892, %v3891
      %v3898 = vpack.c.b16 %v3894, %v3893
      %v3904 = vsel %vm3573, %v3869, 0
      %3906 = vmatprep.subr.bf16.mxu0 0
      %3907 = vmatpush1.bf16.msra.mxu0 %v3895
      %3908 = vmatprep.subr.bf16.mxu0 0
      %3909 = vmatpush1.bf16.msra.mxu0 %v3896
      %3910 = vmatprep.subr.bf16.mxu0 0
      %3911 = vmatpush1.bf16.msra.mxu0 %v3897
      %3912 = vmatprep.subr.bf16.mxu0 0
      %3913 = vmatpush1.bf16.msra.mxu0 %v3898
      %3914 = vmatprep.subr.bf16.mxu0 0
      %3915 = vmatpush1.bf16.msra.mxu0 0
      %3916 = vmatprep.subr.bf16.mxu0 0
      %3917 = vmatpush1.bf16.msra.mxu0 0
      %3918 = vmatprep.subr.bf16.mxu0 0
      %3919 = vmatpush1.bf16.msra.mxu0 0
      %3920 = vmatprep.subr.bf16.mxu0 0
      %3921 = vmatpush1.bf16.msra.mxu0 0
      %3922 = vmatprep.subr.bf16.mxu0 0
      %3923 = vmatpush1.bf16.msra.mxu0 0
      %3924 = vmatprep.subr.bf16.mxu0 0
      %3925 = vmatpush1.bf16.msra.mxu0 0
      %3926 = vmatprep.subr.bf16.mxu0 0
      %3927 = vmatpush1.bf16.msra.mxu0 0
      %3928 = vmatprep.subr.bf16.mxu0 0
      %3929 = vmatpush1.bf16.msra.mxu0 0
      %3930 = vmatprep.subr.bf16.mxu0 0
      %3931 = vmatpush1.bf16.msra.mxu0 0
      %3932 = vmatprep.subr.bf16.mxu0 0
      %3933 = vmatpush1.bf16.msra.mxu0 0
      %3934 = vmatprep.subr.bf16.mxu0 0
      %3935 = vmatpush1.bf16.msra.mxu0 0
      %3936 = vmatprep.subr.bf16.mxu0 0
      %3937 = vmatpush1.bf16.msra.mxu0 0
      %3938 = vmatprep.mubr.bf16.mxu0 0
      %3939 = vmatmul.mubr.bf16.gmra.mrb[0].mxu0 %v3904
      %v3940 = vpop.f32.mrb[0].mxu0
      %v3941 = vadd.f32 0.0, %v3940
      %v3942 = vpop.f32.mrb[0].mxu0
      %v3943 = vpop.f32.mrb[0].mxu0
      %v3944 = vadd.f32 0.0, %v3943
      %v3945 = vpop.f32.mrb[0].mxu0
      %3946 = vdwg.mxu0
      %v3947 = vadd.f32 %v3867, %v3941
      %v3948 = vadd.f32 %v3868, %v3944
      %v3949 = vpack.c.bf16 %v3676, %v3673
      %s3950 = scalar_lea.vmem %s5, 64
      %v3951 = vld [vmem:[%s3950] sm:$0xf]
      %v3952 = vld [vmem:[%s3950 + $0x4] sm:$0xf]
      %v3953 = vld [vmem:[%s3950 + $0x8] sm:$0xf]
      %v3954 = vld [vmem:[%s3950 + $0xc] sm:$0xf]
      %v3955 = vld [vmem:[%s3950 + $0x10] sm:$0xf]
      %v3956 = vld [vmem:[%s3950 + $0x14] sm:$0xf]
      %v3957 = vld [vmem:[%s3950 + $0x18] sm:$0xf]
      %v3958 = vld [vmem:[%s3950 + $0x1c] sm:$0xf]
      %v3967 = vunpack.c.l.b16 %v3951
      %v3968 = vunpack.c.l.b16 %v3952
      %v3969 = vunpack.c.l.b16 %v3953
      %v3970 = vunpack.c.l.b16 %v3954
      %v3971 = vunpack.c.l.b16 %v3955
      %v3972 = vunpack.c.l.b16 %v3956
      %v3973 = vunpack.c.l.b16 %v3957
      %v3974 = vunpack.c.l.b16 %v3958
      %v3975 = vpack.c.b16 %v3968, %v3967
      %v3976 = vpack.c.b16 %v3970, %v3969
      %v3977 = vpack.c.b16 %v3972, %v3971
      %v3978 = vpack.c.b16 %v3974, %v3973
      %v3984 = vsel %vm3573, %v3949, 0
      %3986 = vmatprep.subr.bf16.mxu0 0
      %3987 = vmatpush1.bf16.msra.mxu0 %v3975
      %3988 = vmatprep.subr.bf16.mxu0 0
      %3989 = vmatpush1.bf16.msra.mxu0 %v3976
      %3990 = vmatprep.subr.bf16.mxu0 0
      %3991 = vmatpush1.bf16.msra.mxu0 %v3977
      %3992 = vmatprep.subr.bf16.mxu0 0
      %3993 = vmatpush1.bf16.msra.mxu0 %v3978
      %3994 = vmatprep.subr.bf16.mxu0 0
      %3995 = vmatpush1.bf16.msra.mxu0 0
      %3996 = vmatprep.subr.bf16.mxu0 0
      %3997 = vmatpush1.bf16.msra.mxu0 0
      %3998 = vmatprep.subr.bf16.mxu0 0
      %3999 = vmatpush1.bf16.msra.mxu0 0
      %4000 = vmatprep.subr.bf16.mxu0 0
      %4001 = vmatpush1.bf16.msra.mxu0 0
      %4002 = vmatprep.subr.bf16.mxu0 0
      %4003 = vmatpush1.bf16.msra.mxu0 0
      %4004 = vmatprep.subr.bf16.mxu0 0
      %4005 = vmatpush1.bf16.msra.mxu0 0
      %4006 = vmatprep.subr.bf16.mxu0 0
      %4007 = vmatpush1.bf16.msra.mxu0 0
      %4008 = vmatprep.subr.bf16.mxu0 0
      %4009 = vmatpush1.bf16.msra.mxu0 0
      %4010 = vmatprep.subr.bf16.mxu0 0
      %4011 = vmatpush1.bf16.msra.mxu0 0
      %4012 = vmatprep.subr.bf16.mxu0 0
      %4013 = vmatpush1.bf16.msra.mxu0 0
      %4014 = vmatprep.subr.bf16.mxu0 0
      %4015 = vmatpush1.bf16.msra.mxu0 0
      %4016 = vmatprep.subr.bf16.mxu0 0
      %4017 = vmatpush1.bf16.msra.mxu0 0
      %4018 = vmatprep.mubr.bf16.mxu0 0
      %4019 = vmatmul.mubr.bf16.gmra.mrb[0].mxu0 %v3984
      %v4020 = vpop.f32.mrb[0].mxu0
      %v4021 = vadd.f32 0.0, %v4020
      %v4022 = vpop.f32.mrb[0].mxu0
      %v4023 = vpop.f32.mrb[0].mxu0
      %v4024 = vadd.f32 0.0, %v4023
      %v4025 = vpop.f32.mrb[0].mxu0
      %4026 = vdwg.mxu0
      %v4027 = vadd.f32 %v3947, %v4021
      %v4028 = vadd.f32 %v3948, %v4024
      %v4029 = vpack.c.bf16 %v3684, %v3681
      %s4030 = scalar_lea.vmem %s5, 96
      %v4031 = vld [vmem:[%s4030] sm:$0xf]
      %v4032 = vld [vmem:[%s4030 + $0x4] sm:$0xf]
      %v4033 = vld [vmem:[%s4030 + $0x8] sm:$0xf]
      %v4034 = vld [vmem:[%s4030 + $0xc] sm:$0xf]
      %v4035 = vld [vmem:[%s4030 + $0x10] sm:$0xf]
      %v4036 = vld [vmem:[%s4030 + $0x14] sm:$0xf]
      %v4037 = vld [vmem:[%s4030 + $0x18] sm:$0xf]
      %v4038 = vld [vmem:[%s4030 + $0x1c] sm:$0xf]
      %v4047 = vunpack.c.l.b16 %v4031
      %v4048 = vunpack.c.l.b16 %v4032
      %v4049 = vunpack.c.l.b16 %v4033
      %v4050 = vunpack.c.l.b16 %v4034
      %v4051 = vunpack.c.l.b16 %v4035
      %v4052 = vunpack.c.l.b16 %v4036
      %v4053 = vunpack.c.l.b16 %v4037
      %v4054 = vunpack.c.l.b16 %v4038
      %v4055 = vpack.c.b16 %v4048, %v4047
      %v4056 = vpack.c.b16 %v4050, %v4049
      %v4057 = vpack.c.b16 %v4052, %v4051
      %v4058 = vpack.c.b16 %v4054, %v4053
      %v4064 = vsel %vm3573, %v4029, 0
      %4066 = vmatprep.subr.bf16.mxu0 0
      %4067 = vmatpush1.bf16.msra.mxu0 %v4055
      %4068 = vmatprep.subr.bf16.mxu0 0
      %4069 = vmatpush1.bf16.msra.mxu0 %v4056
      %4070 = vmatprep.subr.bf16.mxu0 0
      %4071 = vmatpush1.bf16.msra.mxu0 %v4057
      %4072 = vmatprep.subr.bf16.mxu0 0
      %4073 = vmatpush1.bf16.msra.mxu0 %v4058
      %4074 = vmatprep.subr.bf16.mxu0 0
      %4075 = vmatpush1.bf16.msra.mxu0 0
      %4076 = vmatprep.subr.bf16.mxu0 0
      %4077 = vmatpush1.bf16.msra.mxu0 0
      %4078 = vmatprep.subr.bf16.mxu0 0
      %4079 = vmatpush1.bf16.msra.mxu0 0
      %4080 = vmatprep.subr.bf16.mxu0 0
      %4081 = vmatpush1.bf16.msra.mxu0 0
      %4082 = vmatprep.subr.bf16.mxu0 0
      %4083 = vmatpush1.bf16.msra.mxu0 0
      %4084 = vmatprep.subr.bf16.mxu0 0
      %4085 = vmatpush1.bf16.msra.mxu0 0
      %4086 = vmatprep.subr.bf16.mxu0 0
      %4087 = vmatpush1.bf16.msra.mxu0 0
      %4088 = vmatprep.subr.bf16.mxu0 0
      %4089 = vmatpush1.bf16.msra.mxu0 0
      %4090 = vmatprep.subr.bf16.mxu0 0
      %4091 = vmatpush1.bf16.msra.mxu0 0
      %4092 = vmatprep.subr.bf16.mxu0 0
      %4093 = vmatpush1.bf16.msra.mxu0 0
      %4094 = vmatprep.subr.bf16.mxu0 0
      %4095 = vmatpush1.bf16.msra.mxu0 0
      %4096 = vmatprep.subr.bf16.mxu0 0
      %4097 = vmatpush1.bf16.msra.mxu0 0
      %4098 = vmatprep.mubr.bf16.mxu0 0
      %4099 = vmatmul.mubr.bf16.gmra.mrb[0].mxu0 %v4064
      %v4100 = vpop.f32.mrb[0].mxu0
      %v4101 = vadd.f32 0.0, %v4100
      %v4102 = vpop.f32.mrb[0].mxu0
      %v4103 = vpop.f32.mrb[0].mxu0
      %v4104 = vadd.f32 0.0, %v4103
      %v4105 = vpop.f32.mrb[0].mxu0
      %4106 = vdwg.mxu0
      %v4107 = vadd.f32 %v4027, %v4101
      %v4108 = vadd.f32 %v4028, %v4104
      %v4109 = vpack.c.bf16 %v3692, %v3689
      %s4110 = scalar_lea.vmem %s5, 128
      %v4111 = vld [vmem:[%s4110] sm:$0xf]
      %v4112 = vld [vmem:[%s4110 + $0x4] sm:$0xf]
      %v4113 = vld [vmem:[%s4110 + $0x8] sm:$0xf]
      %v4114 = vld [vmem:[%s4110 + $0xc] sm:$0xf]
      %v4115 = vld [vmem:[%s4110 + $0x10] sm:$0xf]
      %v4116 = vld [vmem:[%s4110 + $0x14] sm:$0xf]
      %v4117 = vld [vmem:[%s4110 + $0x18] sm:$0xf]
      %v4118 = vld [vmem:[%s4110 + $0x1c] sm:$0xf]
      %v4127 = vunpack.c.l.b16 %v4111
      %v4128 = vunpack.c.l.b16 %v4112
      %v4129 = vunpack.c.l.b16 %v4113
      %v4130 = vunpack.c.l.b16 %v4114
      %v4131 = vunpack.c.l.b16 %v4115
      %v4132 = vunpack.c.l.b16 %v4116
      %v4133 = vunpack.c.l.b16 %v4117
      %v4134 = vunpack.c.l.b16 %v4118
      %v4135 = vpack.c.b16 %v4128, %v4127
      %v4136 = vpack.c.b16 %v4130, %v4129
      %v4137 = vpack.c.b16 %v4132, %v4131
      %v4138 = vpack.c.b16 %v4134, %v4133
      %v4144 = vsel %vm3573, %v4109, 0
      %4146 = vmatprep.subr.bf16.mxu0 0
      %4147 = vmatpush1.bf16.msra.mxu0 %v4135
      %4148 = vmatprep.subr.bf16.mxu0 0
      %4149 = vmatpush1.bf16.msra.mxu0 %v4136
      %4150 = vmatprep.subr.bf16.mxu0 0
      %4151 = vmatpush1.bf16.msra.mxu0 %v4137
      %4152 = vmatprep.subr.bf16.mxu0 0
      %4153 = vmatpush1.bf16.msra.mxu0 %v4138
      %4154 = vmatprep.subr.bf16.mxu0 0
      %4155 = vmatpush1.bf16.msra.mxu0 0
      %4156 = vmatprep.subr.bf16.mxu0 0
      %4157 = vmatpush1.bf16.msra.mxu0 0
      %4158 = vmatprep.subr.bf16.mxu0 0
      %4159 = vmatpush1.bf16.msra.mxu0 0
      %4160 = vmatprep.subr.bf16.mxu0 0
      %4161 = vmatpush1.bf16.msra.mxu0 0
      %4162 = vmatprep.subr.bf16.mxu0 0
      %4163 = vmatpush1.bf16.msra.mxu0 0
      %4164 = vmatprep.subr.bf16.mxu0 0
      %4165 = vmatpush1.bf16.msra.mxu0 0
      %4166 = vmatprep.subr.bf16.mxu0 0
      %4167 = vmatpush1.bf16.msra.mxu0 0
      %4168 = vmatprep.subr.bf16.mxu0 0
      %4169 = vmatpush1.bf16.msra.mxu0 0
      %4170 = vmatprep.subr.bf16.mxu0 0
      %4171 = vmatpush1.bf16.msra.mxu0 0
      %4172 = vmatprep.subr.bf16.mxu0 0
      %4173 = vmatpush1.bf16.msra.mxu0 0
      %4174 = vmatprep.subr.bf16.mxu0 0
      %4175 = vmatpush1.bf16.msra.mxu0 0
      %4176 = vmatprep.subr.bf16.mxu0 0
      %4177 = vmatpush1.bf16.msra.mxu0 0
      %4178 = vmatprep.mubr.bf16.mxu0 0
      %4179 = vmatmul.mubr.bf16.gmra.mrb[0].mxu0 %v4144
      %v4180 = vpop.f32.mrb[0].mxu0
      %v4181 = vadd.f32 0.0, %v4180
      %v4182 = vpop.f32.mrb[0].mxu0
      %v4183 = vpop.f32.mrb[0].mxu0
      %v4184 = vadd.f32 0.0, %v4183
      %v4185 = vpop.f32.mrb[0].mxu0
      %4186 = vdwg.mxu0
      %v4187 = vadd.f32 %v4107, %v4181
      %v4188 = vadd.f32 %v4108, %v4184
      %v4189 = vpack.c.bf16 %v3700, %v3697
      %s4190 = scalar_lea.vmem %s5, 160
      %v4191 = vld [vmem:[%s4190] sm:$0xf]
      %v4192 = vld [vmem:[%s4190 + $0x4] sm:$0xf]
      %v4193 = vld [vmem:[%s4190 + $0x8] sm:$0xf]
      %v4194 = vld [vmem:[%s4190 + $0xc] sm:$0xf]
      %v4195 = vld [vmem:[%s4190 + $0x10] sm:$0xf]
      %v4196 = vld [vmem:[%s4190 + $0x14] sm:$0xf]
      %v4197 = vld [vmem:[%s4190 + $0x18] sm:$0xf]
      %v4198 = vld [vmem:[%s4190 + $0x1c] sm:$0xf]
      %v4207 = vunpack.c.l.b16 %v4191
      %v4208 = vunpack.c.l.b16 %v4192
      %v4209 = vunpack.c.l.b16 %v4193
      %v4210 = vunpack.c.l.b16 %v4194
      %v4211 = vunpack.c.l.b16 %v4195
      %v4212 = vunpack.c.l.b16 %v4196
      %v4213 = vunpack.c.l.b16 %v4197
      %v4214 = vunpack.c.l.b16 %v4198
      %v4215 = vpack.c.b16 %v4208, %v4207
      %v4216 = vpack.c.b16 %v4210, %v4209
      %v4217 = vpack.c.b16 %v4212, %v4211
      %v4218 = vpack.c.b16 %v4214, %v4213
      %v4224 = vsel %vm3573, %v4189, 0
      %4226 = vmatprep.subr.bf16.mxu0 0
      %4227 = vmatpush1.bf16.msra.mxu0 %v4215
      %4228 = vmatprep.subr.bf16.mxu0 0
      %4229 = vmatpush1.bf16.msra.mxu0 %v4216
      %4230 = vmatprep.subr.bf16.mxu0 0
      %4231 = vmatpush1.bf16.msra.mxu0 %v4217
      %4232 = vmatprep.subr.bf16.mxu0 0
      %4233 = vmatpush1.bf16.msra.mxu0 %v4218
      %4234 = vmatprep.subr.bf16.mxu0 0
      %4235 = vmatpush1.bf16.msra.mxu0 0
      %4236 = vmatprep.subr.bf16.mxu0 0
      %4237 = vmatpush1.bf16.msra.mxu0 0
      %4238 = vmatprep.subr.bf16.mxu0 0
      %4239 = vmatpush1.bf16.msra.mxu0 0
      %4240 = vmatprep.subr.bf16.mxu0 0
      %4241 = vmatpush1.bf16.msra.mxu0 0
      %4242 = vmatprep.subr.bf16.mxu0 0
      %4243 = vmatpush1.bf16.msra.mxu0 0
      %4244 = vmatprep.subr.bf16.mxu0 0
      %4245 = vmatpush1.bf16.msra.mxu0 0
      %4246 = vmatprep.subr.bf16.mxu0 0
      %4247 = vmatpush1.bf16.msra.mxu0 0
      %4248 = vmatprep.subr.bf16.mxu0 0
      %4249 = vmatpush1.bf16.msra.mxu0 0
      %4250 = vmatprep.subr.bf16.mxu0 0
      %4251 = vmatpush1.bf16.msra.mxu0 0
      %4252 = vmatprep.subr.bf16.mxu0 0
      %4253 = vmatpush1.bf16.msra.mxu0 0
      %4254 = vmatprep.subr.bf16.mxu0 0
      %4255 = vmatpush1.bf16.msra.mxu0 0
      %4256 = vmatprep.subr.bf16.mxu0 0
      %4257 = vmatpush1.bf16.msra.mxu0 0
      %4258 = vmatprep.mubr.bf16.mxu0 0
      %4259 = vmatmul.mubr.bf16.gmra.mrb[0].mxu0 %v4224
      %v4260 = vpop.f32.mrb[0].mxu0
      %v4261 = vadd.f32 0.0, %v4260
      %v4262 = vpop.f32.mrb[0].mxu0
      %v4263 = vpop.f32.mrb[0].mxu0
      %v4264 = vadd.f32 0.0, %v4263
      %v4265 = vpop.f32.mrb[0].mxu0
      %4266 = vdwg.mxu0
      %v4267 = vadd.f32 %v4187, %v4261
      %v4268 = vadd.f32 %v4188, %v4264
      %v4269 = vpack.c.bf16 %v3708, %v3705
      %s4270 = scalar_lea.vmem %s5, 192
      %v4271 = vld [vmem:[%s4270] sm:$0xf]
      %v4272 = vld [vmem:[%s4270 + $0x4] sm:$0xf]
      %v4273 = vld [vmem:[%s4270 + $0x8] sm:$0xf]
      %v4274 = vld [vmem:[%s4270 + $0xc] sm:$0xf]
      %v4275 = vld [vmem:[%s4270 + $0x10] sm:$0xf]
      %v4276 = vld [vmem:[%s4270 + $0x14] sm:$0xf]
      %v4277 = vld [vmem:[%s4270 + $0x18] sm:$0xf]
      %v4278 = vld [vmem:[%s4270 + $0x1c] sm:$0xf]
      %v4287 = vunpack.c.l.b16 %v4271
      %v4288 = vunpack.c.l.b16 %v4272
      %v4289 = vunpack.c.l.b16 %v4273
      %v4290 = vunpack.c.l.b16 %v4274
      %v4291 = vunpack.c.l.b16 %v4275
      %v4292 = vunpack.c.l.b16 %v4276
      %v4293 = vunpack.c.l.b16 %v4277
      %v4294 = vunpack.c.l.b16 %v4278
      %v4295 = vpack.c.b16 %v4288, %v4287
      %v4296 = vpack.c.b16 %v4290, %v4289
      %v4297 = vpack.c.b16 %v4292, %v4291
      %v4298 = vpack.c.b16 %v4294, %v4293
      %v4304 = vsel %vm3573, %v4269, 0
      %4306 = vmatprep.subr.bf16.mxu0 0
      %4307 = vmatpush1.bf16.msra.mxu0 %v4295
      %4308 = vmatprep.subr.bf16.mxu0 0
      %4309 = vmatpush1.bf16.msra.mxu0 %v4296
      %4310 = vmatprep.subr.bf16.mxu0 0
      %4311 = vmatpush1.bf16.msra.mxu0 %v4297
      %4312 = vmatprep.subr.bf16.mxu0 0
      %4313 = vmatpush1.bf16.msra.mxu0 %v4298
      %4314 = vmatprep.subr.bf16.mxu0 0
      %4315 = vmatpush1.bf16.msra.mxu0 0
      %4316 = vmatprep.subr.bf16.mxu0 0
      %4317 = vmatpush1.bf16.msra.mxu0 0
      %4318 = vmatprep.subr.bf16.mxu0 0
      %4319 = vmatpush1.bf16.msra.mxu0 0
      %4320 = vmatprep.subr.bf16.mxu0 0
      %4321 = vmatpush1.bf16.msra.mxu0 0
      %4322 = vmatprep.subr.bf16.mxu0 0
      %4323 = vmatpush1.bf16.msra.mxu0 0
      %4324 = vmatprep.subr.bf16.mxu0 0
      %4325 = vmatpush1.bf16.msra.mxu0 0
      %4326 = vmatprep.subr.bf16.mxu0 0
      %4327 = vmatpush1.bf16.msra.mxu0 0
      %4328 = vmatprep.subr.bf16.mxu0 0
      %4329 = vmatpush1.bf16.msra.mxu0 0
      %4330 = vmatprep.subr.bf16.mxu0 0
      %4331 = vmatpush1.bf16.msra.mxu0 0
      %4332 = vmatprep.subr.bf16.mxu0 0
      %4333 = vmatpush1.bf16.msra.mxu0 0
      %4334 = vmatprep.subr.bf16.mxu0 0
      %4335 = vmatpush1.bf16.msra.mxu0 0
      %4336 = vmatprep.subr.bf16.mxu0 0
      %4337 = vmatpush1.bf16.msra.mxu0 0
      %4338 = vmatprep.mubr.bf16.mxu0 0
      %4339 = vmatmul.mubr.bf16.gmra.mrb[0].mxu0 %v4304
      %v4340 = vpop.f32.mrb[0].mxu0
      %v4341 = vadd.f32 0.0, %v4340
      %v4342 = vpop.f32.mrb[0].mxu0
      %v4343 = vpop.f32.mrb[0].mxu0
      %v4344 = vadd.f32 0.0, %v4343
      %v4345 = vpop.f32.mrb[0].mxu0
      %4346 = vdwg.mxu0
      %v4347 = vadd.f32 %v4267, %v4341
      %v4348 = vadd.f32 %v4268, %v4344
      %v4349 = vpack.c.bf16 %v3716, %v3713
      %s4350 = scalar_lea.vmem %s5, 224
      %v4351 = vld [vmem:[%s4350] sm:$0xf]
      %v4352 = vld [vmem:[%s4350 + $0x4] sm:$0xf]
      %v4353 = vld [vmem:[%s4350 + $0x8] sm:$0xf]
      %v4354 = vld [vmem:[%s4350 + $0xc] sm:$0xf]
      %v4355 = vld [vmem:[%s4350 + $0x10] sm:$0xf]
      %v4356 = vld [vmem:[%s4350 + $0x14] sm:$0xf]
      %v4357 = vld [vmem:[%s4350 + $0x18] sm:$0xf]
      %v4358 = vld [vmem:[%s4350 + $0x1c] sm:$0xf]
      %v4367 = vunpack.c.l.b16 %v4351
      %v4368 = vunpack.c.l.b16 %v4352
      %v4369 = vunpack.c.l.b16 %v4353
      %v4370 = vunpack.c.l.b16 %v4354
      %v4371 = vunpack.c.l.b16 %v4355
      %v4372 = vunpack.c.l.b16 %v4356
      %v4373 = vunpack.c.l.b16 %v4357
      %v4374 = vunpack.c.l.b16 %v4358
      %v4375 = vpack.c.b16 %v4368, %v4367
      %v4376 = vpack.c.b16 %v4370, %v4369
      %v4377 = vpack.c.b16 %v4372, %v4371
      %v4378 = vpack.c.b16 %v4374, %v4373
      %v4384 = vsel %vm3573, %v4349, 0
      %4386 = vmatprep.subr.bf16.mxu0 0
      %4387 = vmatpush1.bf16.msra.mxu0 %v4375
      %4388 = vmatprep.subr.bf16.mxu0 0
      %4389 = vmatpush1.bf16.msra.mxu0 %v4376
      %4390 = vmatprep.subr.bf16.mxu0 0
      %4391 = vmatpush1.bf16.msra.mxu0 %v4377
      %4392 = vmatprep.subr.bf16.mxu0 0
      %4393 = vmatpush1.bf16.msra.mxu0 %v4378
      %4394 = vmatprep.subr.bf16.mxu0 0
      %4395 = vmatpush1.bf16.msra.mxu0 0
      %4396 = vmatprep.subr.bf16.mxu0 0
      %4397 = vmatpush1.bf16.msra.mxu0 0
      %4398 = vmatprep.subr.bf16.mxu0 0
      %4399 = vmatpush1.bf16.msra.mxu0 0
      %4400 = vmatprep.subr.bf16.mxu0 0
      %4401 = vmatpush1.bf16.msra.mxu0 0
      %4402 = vmatprep.subr.bf16.mxu0 0
      %4403 = vmatpush1.bf16.msra.mxu0 0
      %4404 = vmatprep.subr.bf16.mxu0 0
      %4405 = vmatpush1.bf16.msra.mxu0 0
      %4406 = vmatprep.subr.bf16.mxu0 0
      %4407 = vmatpush1.bf16.msra.mxu0 0
      %4408 = vmatprep.subr.bf16.mxu0 0
      %4409 = vmatpush1.bf16.msra.mxu0 0
      %4410 = vmatprep.subr.bf16.mxu0 0
      %4411 = vmatpush1.bf16.msra.mxu0 0
      %4412 = vmatprep.subr.bf16.mxu0 0
      %4413 = vmatpush1.bf16.msra.mxu0 0
      %4414 = vmatprep.subr.bf16.mxu0 0
      %4415 = vmatpush1.bf16.msra.mxu0 0
      %4416 = vmatprep.subr.bf16.mxu0 0
      %4417 = vmatpush1.bf16.msra.mxu0 0
      %4418 = vmatprep.mubr.bf16.mxu0 0
      %4419 = vmatmul.mubr.bf16.gmra.mrb[0].mxu0 %v4384
      %v4420 = vpop.f32.mrb[0].mxu0
      %v4421 = vadd.f32 0.0, %v4420
      %v4422 = vpop.f32.mrb[0].mxu0
      %v4423 = vpop.f32.mrb[0].mxu0
      %v4424 = vadd.f32 0.0, %v4423
      %v4425 = vpop.f32.mrb[0].mxu0
      %4426 = vdwg.mxu0
      %v4427 = vadd.f32 %v4347, %v4421
      %v4428 = vadd.f32 %v4348, %v4424
      %v4429 = vpack.c.bf16 %v3724, %v3721
      %s4430 = scalar_lea.vmem %s5, 256
      %v4431 = vld [vmem:[%s4430] sm:$0xf]
      %v4432 = vld [vmem:[%s4430 + $0x4] sm:$0xf]
      %v4433 = vld [vmem:[%s4430 + $0x8] sm:$0xf]
      %v4434 = vld [vmem:[%s4430 + $0xc] sm:$0xf]
      %v4435 = vld [vmem:[%s4430 + $0x10] sm:$0xf]
      %v4436 = vld [vmem:[%s4430 + $0x14] sm:$0xf]
      %v4437 = vld [vmem:[%s4430 + $0x18] sm:$0xf]
      %v4438 = vld [vmem:[%s4430 + $0x1c] sm:$0xf]
      %v4447 = vunpack.c.l.b16 %v4431
      %v4448 = vunpack.c.l.b16 %v4432
      %v4449 = vunpack.c.l.b16 %v4433
      %v4450 = vunpack.c.l.b16 %v4434
      %v4451 = vunpack.c.l.b16 %v4435
      %v4452 = vunpack.c.l.b16 %v4436
      %v4453 = vunpack.c.l.b16 %v4437
      %v4454 = vunpack.c.l.b16 %v4438
      %v4455 = vpack.c.b16 %v4448, %v4447
      %v4456 = vpack.c.b16 %v4450, %v4449
      %v4457 = vpack.c.b16 %v4452, %v4451
      %v4458 = vpack.c.b16 %v4454, %v4453
      %v4464 = vsel %vm3573, %v4429, 0
      %4466 = vmatprep.subr.bf16.mxu0 0
      %4467 = vmatpush1.bf16.msra.mxu0 %v4455
      %4468 = vmatprep.subr.bf16.mxu0 0
      %4469 = vmatpush1.bf16.msra.mxu0 %v4456
      %4470 = vmatprep.subr.bf16.mxu0 0
      %4471 = vmatpush1.bf16.msra.mxu0 %v4457
      %4472 = vmatprep.subr.bf16.mxu0 0
      %4473 = vmatpush1.bf16.msra.mxu0 %v4458
      %4474 = vmatprep.subr.bf16.mxu0 0
      %4475 = vmatpush1.bf16.msra.mxu0 0
      %4476 = vmatprep.subr.bf16.mxu0 0
      %4477 = vmatpush1.bf16.msra.mxu0 0
      %4478 = vmatprep.subr.bf16.mxu0 0
      %4479 = vmatpush1.bf16.msra.mxu0 0
      %4480 = vmatprep.subr.bf16.mxu0 0
      %4481 = vmatpush1.bf16.msra.mxu0 0
      %4482 = vmatprep.subr.bf16.mxu0 0
      %4483 = vmatpush1.bf16.msra.mxu0 0
      %4484 = vmatprep.subr.bf16.mxu0 0
      %4485 = vmatpush1.bf16.msra.mxu0 0
      %4486 = vmatprep.subr.bf16.mxu0 0
      %4487 = vmatpush1.bf16.msra.mxu0 0
      %4488 = vmatprep.subr.bf16.mxu0 0
      %4489 = vmatpush1.bf16.msra.mxu0 0
      %4490 = vmatprep.subr.bf16.mxu0 0
      %4491 = vmatpush1.bf16.msra.mxu0 0
      %4492 = vmatprep.subr.bf16.mxu0 0
      %4493 = vmatpush1.bf16.msra.mxu0 0
      %4494 = vmatprep.subr.bf16.mxu0 0
      %4495 = vmatpush1.bf16.msra.mxu0 0
      %4496 = vmatprep.subr.bf16.mxu0 0
      %4497 = vmatpush1.bf16.msra.mxu0 0
      %4498 = vmatprep.mubr.bf16.mxu0 0
      %4499 = vmatmul.mubr.bf16.gmra.mrb[0].mxu0 %v4464
      %v4500 = vpop.f32.mrb[0].mxu0
      %v4501 = vadd.f32 0.0, %v4500
      %v4502 = vpop.f32.mrb[0].mxu0
      %v4503 = vpop.f32.mrb[0].mxu0
      %v4504 = vadd.f32 0.0, %v4503
      %v4505 = vpop.f32.mrb[0].mxu0
      %4506 = vdwg.mxu0
      %v4507 = vadd.f32 %v4427, %v4501
      %v4508 = vadd.f32 %v4428, %v4504
      %v4509 = vpack.c.bf16 %v3732, %v3729
      %s4510 = scalar_lea.vmem %s5, 288
      %v4511 = vld [vmem:[%s4510] sm:$0xf]
      %v4512 = vld [vmem:[%s4510 + $0x4] sm:$0xf]
      %v4513 = vld [vmem:[%s4510 + $0x8] sm:$0xf]
      %v4514 = vld [vmem:[%s4510 + $0xc] sm:$0xf]
      %v4515 = vld [vmem:[%s4510 + $0x10] sm:$0xf]
      %v4516 = vld [vmem:[%s4510 + $0x14] sm:$0xf]
      %v4517 = vld [vmem:[%s4510 + $0x18] sm:$0xf]
      %v4518 = vld [vmem:[%s4510 + $0x1c] sm:$0xf]
      %v4527 = vunpack.c.l.b16 %v4511
      %v4528 = vunpack.c.l.b16 %v4512
      %v4529 = vunpack.c.l.b16 %v4513
      %v4530 = vunpack.c.l.b16 %v4514
      %v4531 = vunpack.c.l.b16 %v4515
      %v4532 = vunpack.c.l.b16 %v4516
      %v4533 = vunpack.c.l.b16 %v4517
      %v4534 = vunpack.c.l.b16 %v4518
      %v4535 = vpack.c.b16 %v4528, %v4527
      %v4536 = vpack.c.b16 %v4530, %v4529
      %v4537 = vpack.c.b16 %v4532, %v4531
      %v4538 = vpack.c.b16 %v4534, %v4533
      %v4544 = vsel %vm3573, %v4509, 0
      %4546 = vmatprep.subr.bf16.mxu0 0
      %4547 = vmatpush1.bf16.msra.mxu0 %v4535
      %4548 = vmatprep.subr.bf16.mxu0 0
      %4549 = vmatpush1.bf16.msra.mxu0 %v4536
      %4550 = vmatprep.subr.bf16.mxu0 0
      %4551 = vmatpush1.bf16.msra.mxu0 %v4537
      %4552 = vmatprep.subr.bf16.mxu0 0
      %4553 = vmatpush1.bf16.msra.mxu0 %v4538
      %4554 = vmatprep.subr.bf16.mxu0 0
      %4555 = vmatpush1.bf16.msra.mxu0 0
      %4556 = vmatprep.subr.bf16.mxu0 0
      %4557 = vmatpush1.bf16.msra.mxu0 0
      %4558 = vmatprep.subr.bf16.mxu0 0
      %4559 = vmatpush1.bf16.msra.mxu0 0
      %4560 = vmatprep.subr.bf16.mxu0 0
      %4561 = vmatpush1.bf16.msra.mxu0 0
      %4562 = vmatprep.subr.bf16.mxu0 0
      %4563 = vmatpush1.bf16.msra.mxu0 0
      %4564 = vmatprep.subr.bf16.mxu0 0
      %4565 = vmatpush1.bf16.msra.mxu0 0
      %4566 = vmatprep.subr.bf16.mxu0 0
      %4567 = vmatpush1.bf16.msra.mxu0 0
      %4568 = vmatprep.subr.bf16.mxu0 0
      %4569 = vmatpush1.bf16.msra.mxu0 0
      %4570 = vmatprep.subr.bf16.mxu0 0
      %4571 = vmatpush1.bf16.msra.mxu0 0
      %4572 = vmatprep.subr.bf16.mxu0 0
      %4573 = vmatpush1.bf16.msra.mxu0 0
      %4574 = vmatprep.subr.bf16.mxu0 0
      %4575 = vmatpush1.bf16.msra.mxu0 0
      %4576 = vmatprep.subr.bf16.mxu0 0
      %4577 = vmatpush1.bf16.msra.mxu0 0
      %4578 = vmatprep.mubr.bf16.mxu0 0
      %4579 = vmatmul.mubr.bf16.gmra.mrb[0].mxu0 %v4544
      %v4580 = vpop.f32.mrb[0].mxu0
      %v4581 = vadd.f32 0.0, %v4580
      %v4582 = vpop.f32.mrb[0].mxu0
      %v4583 = vpop.f32.mrb[0].mxu0
      %v4584 = vadd.f32 0.0, %v4583
      %v4585 = vpop.f32.mrb[0].mxu0
      %4586 = vdwg.mxu0
      %v4587 = vadd.f32 %v4507, %v4581
      %v4588 = vadd.f32 %v4508, %v4584
      %v4589 = vpack.c.bf16 %v3740, %v3737
      %s4590 = scalar_lea.vmem %s5, 320
      %v4591 = vld [vmem:[%s4590] sm:$0xf]
      %v4592 = vld [vmem:[%s4590 + $0x4] sm:$0xf]
      %v4593 = vld [vmem:[%s4590 + $0x8] sm:$0xf]
      %v4594 = vld [vmem:[%s4590 + $0xc] sm:$0xf]
      %v4595 = vld [vmem:[%s4590 + $0x10] sm:$0xf]
      %v4596 = vld [vmem:[%s4590 + $0x14] sm:$0xf]
      %v4597 = vld [vmem:[%s4590 + $0x18] sm:$0xf]
      %v4598 = vld [vmem:[%s4590 + $0x1c] sm:$0xf]
      %v4607 = vunpack.c.l.b16 %v4591
      %v4608 = vunpack.c.l.b16 %v4592
      %v4609 = vunpack.c.l.b16 %v4593
      %v4610 = vunpack.c.l.b16 %v4594
      %v4611 = vunpack.c.l.b16 %v4595
      %v4612 = vunpack.c.l.b16 %v4596
      %v4613 = vunpack.c.l.b16 %v4597
      %v4614 = vunpack.c.l.b16 %v4598
      %v4615 = vpack.c.b16 %v4608, %v4607
      %v4616 = vpack.c.b16 %v4610, %v4609
      %v4617 = vpack.c.b16 %v4612, %v4611
      %v4618 = vpack.c.b16 %v4614, %v4613
      %v4624 = vsel %vm3573, %v4589, 0
      %4626 = vmatprep.subr.bf16.mxu0 0
      %4627 = vmatpush1.bf16.msra.mxu0 %v4615
      %4628 = vmatprep.subr.bf16.mxu0 0
      %4629 = vmatpush1.bf16.msra.mxu0 %v4616
      %4630 = vmatprep.subr.bf16.mxu0 0
      %4631 = vmatpush1.bf16.msra.mxu0 %v4617
      %4632 = vmatprep.subr.bf16.mxu0 0
      %4633 = vmatpush1.bf16.msra.mxu0 %v4618
      %4634 = vmatprep.subr.bf16.mxu0 0
      %4635 = vmatpush1.bf16.msra.mxu0 0
      %4636 = vmatprep.subr.bf16.mxu0 0
      %4637 = vmatpush1.bf16.msra.mxu0 0
      %4638 = vmatprep.subr.bf16.mxu0 0
      %4639 = vmatpush1.bf16.msra.mxu0 0
      %4640 = vmatprep.subr.bf16.mxu0 0
      %4641 = vmatpush1.bf16.msra.mxu0 0
      %4642 = vmatprep.subr.bf16.mxu0 0
      %4643 = vmatpush1.bf16.msra.mxu0 0
      %4644 = vmatprep.subr.bf16.mxu0 0
      %4645 = vmatpush1.bf16.msra.mxu0 0
      %4646 = vmatprep.subr.bf16.mxu0 0
      %4647 = vmatpush1.bf16.msra.mxu0 0
      %4648 = vmatprep.subr.bf16.mxu0 0
      %4649 = vmatpush1.bf16.msra.mxu0 0
      %4650 = vmatprep.subr.bf16.mxu0 0
      %4651 = vmatpush1.bf16.msra.mxu0 0
      %4652 = vmatprep.subr.bf16.mxu0 0
      %4653 = vmatpush1.bf16.msra.mxu0 0
      %4654 = vmatprep.subr.bf16.mxu0 0
      %4655 = vmatpush1.bf16.msra.mxu0 0
      %4656 = vmatprep.subr.bf16.mxu0 0
      %4657 = vmatpush1.bf16.msra.mxu0 0
      %4658 = vmatprep.mubr.bf16.mxu0 0
      %4659 = vmatmul.mubr.bf16.gmra.mrb[0].mxu0 %v4624
      %v4660 = vpop.f32.mrb[0].mxu0
      %v4661 = vadd.f32 0.0, %v4660
      %v4662 = vpop.f32.mrb[0].mxu0
      %v4663 = vpop.f32.mrb[0].mxu0
      %v4664 = vadd.f32 0.0, %v4663
      %v4665 = vpop.f32.mrb[0].mxu0
      %4666 = vdwg.mxu0
      %v4667 = vadd.f32 %v4587, %v4661
      %v4668 = vadd.f32 %v4588, %v4664
      %v4669 = vpack.c.bf16 %v3748, %v3745
      %s4670 = scalar_lea.vmem %s5, 352
      %v4671 = vld [vmem:[%s4670] sm:$0xf]
      %v4672 = vld [vmem:[%s4670 + $0x4] sm:$0xf]
      %v4673 = vld [vmem:[%s4670 + $0x8] sm:$0xf]
      %v4674 = vld [vmem:[%s4670 + $0xc] sm:$0xf]
      %v4675 = vld [vmem:[%s4670 + $0x10] sm:$0xf]
      %v4676 = vld [vmem:[%s4670 + $0x14] sm:$0xf]
      %v4677 = vld [vmem:[%s4670 + $0x18] sm:$0xf]
      %v4678 = vld [vmem:[%s4670 + $0x1c] sm:$0xf]
      %v4687 = vunpack.c.l.b16 %v4671
      %v4688 = vunpack.c.l.b16 %v4672
      %v4689 = vunpack.c.l.b16 %v4673
      %v4690 = vunpack.c.l.b16 %v4674
      %v4691 = vunpack.c.l.b16 %v4675
      %v4692 = vunpack.c.l.b16 %v4676
      %v4693 = vunpack.c.l.b16 %v4677
      %v4694 = vunpack.c.l.b16 %v4678
      %v4695 = vpack.c.b16 %v4688, %v4687
      %v4696 = vpack.c.b16 %v4690, %v4689
      %v4697 = vpack.c.b16 %v4692, %v4691
      %v4698 = vpack.c.b16 %v4694, %v4693
      %v4704 = vsel %vm3573, %v4669, 0
      %4706 = vmatprep.subr.bf16.mxu0 0
      %4707 = vmatpush1.bf16.msra.mxu0 %v4695
      %4708 = vmatprep.subr.bf16.mxu0 0
      %4709 = vmatpush1.bf16.msra.mxu0 %v4696
      %4710 = vmatprep.subr.bf16.mxu0 0
      %4711 = vmatpush1.bf16.msra.mxu0 %v4697
      %4712 = vmatprep.subr.bf16.mxu0 0
      %4713 = vmatpush1.bf16.msra.mxu0 %v4698
      %4714 = vmatprep.subr.bf16.mxu0 0
      %4715 = vmatpush1.bf16.msra.mxu0 0
      %4716 = vmatprep.subr.bf16.mxu0 0
      %4717 = vmatpush1.bf16.msra.mxu0 0
      %4718 = vmatprep.subr.bf16.mxu0 0
      %4719 = vmatpush1.bf16.msra.mxu0 0
      %4720 = vmatprep.subr.bf16.mxu0 0
      %4721 = vmatpush1.bf16.msra.mxu0 0
      %4722 = vmatprep.subr.bf16.mxu0 0
      %4723 = vmatpush1.bf16.msra.mxu0 0
      %4724 = vmatprep.subr.bf16.mxu0 0
      %4725 = vmatpush1.bf16.msra.mxu0 0
      %4726 = vmatprep.subr.bf16.mxu0 0
      %4727 = vmatpush1.bf16.msra.mxu0 0
      %4728 = vmatprep.subr.bf16.mxu0 0
      %4729 = vmatpush1.bf16.msra.mxu0 0
      %4730 = vmatprep.subr.bf16.mxu0 0
      %4731 = vmatpush1.bf16.msra.mxu0 0
      %4732 = vmatprep.subr.bf16.mxu0 0
      %4733 = vmatpush1.bf16.msra.mxu0 0
      %4734 = vmatprep.subr.bf16.mxu0 0
      %4735 = vmatpush1.bf16.msra.mxu0 0
      %4736 = vmatprep.subr.bf16.mxu0 0
      %4737 = vmatpush1.bf16.msra.mxu0 0
      %4738 = vmatprep.mubr.bf16.mxu0 0
      %4739 = vmatmul.mubr.bf16.gmra.mrb[0].mxu0 %v4704
      %v4740 = vpop.f32.mrb[0].mxu0
      %v4741 = vadd.f32 0.0, %v4740
      %v4742 = vpop.f32.mrb[0].mxu0
      %v4743 = vpop.f32.mrb[0].mxu0
      %v4744 = vadd.f32 0.0, %v4743
      %v4745 = vpop.f32.mrb[0].mxu0
      %4746 = vdwg.mxu0
      %v4747 = vadd.f32 %v4667, %v4741
      %v4748 = vadd.f32 %v4668, %v4744
      %v4749 = vpack.c.bf16 %v3756, %v3753
      %s4750 = scalar_lea.vmem %s5, 384
      %v4751 = vld [vmem:[%s4750] sm:$0xf]
      %v4752 = vld [vmem:[%s4750 + $0x4] sm:$0xf]
      %v4753 = vld [vmem:[%s4750 + $0x8] sm:$0xf]
      %v4754 = vld [vmem:[%s4750 + $0xc] sm:$0xf]
      %v4755 = vld [vmem:[%s4750 + $0x10] sm:$0xf]
      %v4756 = vld [vmem:[%s4750 + $0x14] sm:$0xf]
      %v4757 = vld [vmem:[%s4750 + $0x18] sm:$0xf]
      %v4758 = vld [vmem:[%s4750 + $0x1c] sm:$0xf]
      %v4767 = vunpack.c.l.b16 %v4751
      %v4768 = vunpack.c.l.b16 %v4752
      %v4769 = vunpack.c.l.b16 %v4753
      %v4770 = vunpack.c.l.b16 %v4754
      %v4771 = vunpack.c.l.b16 %v4755
      %v4772 = vunpack.c.l.b16 %v4756
      %v4773 = vunpack.c.l.b16 %v4757
      %v4774 = vunpack.c.l.b16 %v4758
      %v4775 = vpack.c.b16 %v4768, %v4767
      %v4776 = vpack.c.b16 %v4770, %v4769
      %v4777 = vpack.c.b16 %v4772, %v4771
      %v4778 = vpack.c.b16 %v4774, %v4773
      %v4784 = vsel %vm3573, %v4749, 0
      %4786 = vmatprep.subr.bf16.mxu0 0
      %4787 = vmatpush1.bf16.msra.mxu0 %v4775
      %4788 = vmatprep.subr.bf16.mxu0 0
      %4789 = vmatpush1.bf16.msra.mxu0 %v4776
      %4790 = vmatprep.subr.bf16.mxu0 0
      %4791 = vmatpush1.bf16.msra.mxu0 %v4777
      %4792 = vmatprep.subr.bf16.mxu0 0
      %4793 = vmatpush1.bf16.msra.mxu0 %v4778
      %4794 = vmatprep.subr.bf16.mxu0 0
      %4795 = vmatpush1.bf16.msra.mxu0 0
      %4796 = vmatprep.subr.bf16.mxu0 0
      %4797 = vmatpush1.bf16.msra.mxu0 0
      %4798 = vmatprep.subr.bf16.mxu0 0
      %4799 = vmatpush1.bf16.msra.mxu0 0
      %4800 = vmatprep.subr.bf16.mxu0 0
      %4801 = vmatpush1.bf16.msra.mxu0 0
      %4802 = vmatprep.subr.bf16.mxu0 0
      %4803 = vmatpush1.bf16.msra.mxu0 0
      %4804 = vmatprep.subr.bf16.mxu0 0
      %4805 = vmatpush1.bf16.msra.mxu0 0
      %4806 = vmatprep.subr.bf16.mxu0 0
      %4807 = vmatpush1.bf16.msra.mxu0 0
      %4808 = vmatprep.subr.bf16.mxu0 0
      %4809 = vmatpush1.bf16.msra.mxu0 0
      %4810 = vmatprep.subr.bf16.mxu0 0
      %4811 = vmatpush1.bf16.msra.mxu0 0
      %4812 = vmatprep.subr.bf16.mxu0 0
      %4813 = vmatpush1.bf16.msra.mxu0 0
      %4814 = vmatprep.subr.bf16.mxu0 0
      %4815 = vmatpush1.bf16.msra.mxu0 0
      %4816 = vmatprep.subr.bf16.mxu0 0
      %4817 = vmatpush1.bf16.msra.mxu0 0
      %4818 = vmatprep.mubr.bf16.mxu0 0
      %4819 = vmatmul.mubr.bf16.gmra.mrb[0].mxu0 %v4784
      %v4820 = vpop.f32.mrb[0].mxu0
      %v4821 = vadd.f32 0.0, %v4820
      %v4822 = vpop.f32.mrb[0].mxu0
      %v4823 = vpop.f32.mrb[0].mxu0
      %v4824 = vadd.f32 0.0, %v4823
      %v4825 = vpop.f32.mrb[0].mxu0
      %4826 = vdwg.mxu0
      %v4827 = vadd.f32 %v4747, %v4821
      %v4828 = vadd.f32 %v4748, %v4824
      %v4829 = vpack.c.bf16 %v3764, %v3761
      %s4830 = scalar_lea.vmem %s5, 416
      %v4831 = vld [vmem:[%s4830] sm:$0xf]
      %v4832 = vld [vmem:[%s4830 + $0x4] sm:$0xf]
      %v4833 = vld [vmem:[%s4830 + $0x8] sm:$0xf]
      %v4834 = vld [vmem:[%s4830 + $0xc] sm:$0xf]
      %v4835 = vld [vmem:[%s4830 + $0x10] sm:$0xf]
      %v4836 = vld [vmem:[%s4830 + $0x14] sm:$0xf]
      %v4837 = vld [vmem:[%s4830 + $0x18] sm:$0xf]
      %v4838 = vld [vmem:[%s4830 + $0x1c] sm:$0xf]
      %v4847 = vunpack.c.l.b16 %v4831
      %v4848 = vunpack.c.l.b16 %v4832
      %v4849 = vunpack.c.l.b16 %v4833
      %v4850 = vunpack.c.l.b16 %v4834
      %v4851 = vunpack.c.l.b16 %v4835
      %v4852 = vunpack.c.l.b16 %v4836
      %v4853 = vunpack.c.l.b16 %v4837
      %v4854 = vunpack.c.l.b16 %v4838
      %v4855 = vpack.c.b16 %v4848, %v4847
      %v4856 = vpack.c.b16 %v4850, %v4849
      %v4857 = vpack.c.b16 %v4852, %v4851
      %v4858 = vpack.c.b16 %v4854, %v4853
      %v4864 = vsel %vm3573, %v4829, 0
      %4866 = vmatprep.subr.bf16.mxu0 0
      %4867 = vmatpush1.bf16.msra.mxu0 %v4855
      %4868 = vmatprep.subr.bf16.mxu0 0
      %4869 = vmatpush1.bf16.msra.mxu0 %v4856
      %4870 = vmatprep.subr.bf16.mxu0 0
      %4871 = vmatpush1.bf16.msra.mxu0 %v4857
      %4872 = vmatprep.subr.bf16.mxu0 0
      %4873 = vmatpush1.bf16.msra.mxu0 %v4858
      %4874 = vmatprep.subr.bf16.mxu0 0
      %4875 = vmatpush1.bf16.msra.mxu0 0
      %4876 = vmatprep.subr.bf16.mxu0 0
      %4877 = vmatpush1.bf16.msra.mxu0 0
      %4878 = vmatprep.subr.bf16.mxu0 0
      %4879 = vmatpush1.bf16.msra.mxu0 0
      %4880 = vmatprep.subr.bf16.mxu0 0
      %4881 = vmatpush1.bf16.msra.mxu0 0
      %4882 = vmatprep.subr.bf16.mxu0 0
      %4883 = vmatpush1.bf16.msra.mxu0 0
      %4884 = vmatprep.subr.bf16.mxu0 0
      %4885 = vmatpush1.bf16.msra.mxu0 0
      %4886 = vmatprep.subr.bf16.mxu0 0
      %4887 = vmatpush1.bf16.msra.mxu0 0
      %4888 = vmatprep.subr.bf16.mxu0 0
      %4889 = vmatpush1.bf16.msra.mxu0 0
      %4890 = vmatprep.subr.bf16.mxu0 0
      %4891 = vmatpush1.bf16.msra.mxu0 0
      %4892 = vmatprep.subr.bf16.mxu0 0
      %4893 = vmatpush1.bf16.msra.mxu0 0
      %4894 = vmatprep.subr.bf16.mxu0 0
      %4895 = vmatpush1.bf16.msra.mxu0 0
      %4896 = vmatprep.subr.bf16.mxu0 0
      %4897 = vmatpush1.bf16.msra.mxu0 0
      %4898 = vmatprep.mubr.bf16.mxu0 0
      %4899 = vmatmul.mubr.bf16.gmra.mrb[0].mxu0 %v4864
      %v4900 = vpop.f32.mrb[0].mxu0
      %v4901 = vadd.f32 0.0, %v4900
      %v4902 = vpop.f32.mrb[0].mxu0
      %v4903 = vpop.f32.mrb[0].mxu0
      %v4904 = vadd.f32 0.0, %v4903
      %v4905 = vpop.f32.mrb[0].mxu0
      %4906 = vdwg.mxu0
      %v4907 = vadd.f32 %v4827, %v4901
      %v4908 = vadd.f32 %v4828, %v4904
      %v4909 = vpack.c.bf16 %v3772, %v3769
      %s4910 = scalar_lea.vmem %s5, 448
      %v4911 = vld [vmem:[%s4910] sm:$0xf]
      %v4912 = vld [vmem:[%s4910 + $0x4] sm:$0xf]
      %v4913 = vld [vmem:[%s4910 + $0x8] sm:$0xf]
      %v4914 = vld [vmem:[%s4910 + $0xc] sm:$0xf]
      %v4915 = vld [vmem:[%s4910 + $0x10] sm:$0xf]
      %v4916 = vld [vmem:[%s4910 + $0x14] sm:$0xf]
      %v4917 = vld [vmem:[%s4910 + $0x18] sm:$0xf]
      %v4918 = vld [vmem:[%s4910 + $0x1c] sm:$0xf]
      %v4927 = vunpack.c.l.b16 %v4911
      %v4928 = vunpack.c.l.b16 %v4912
      %v4929 = vunpack.c.l.b16 %v4913
      %v4930 = vunpack.c.l.b16 %v4914
      %v4931 = vunpack.c.l.b16 %v4915
      %v4932 = vunpack.c.l.b16 %v4916
      %v4933 = vunpack.c.l.b16 %v4917
      %v4934 = vunpack.c.l.b16 %v4918
      %v4935 = vpack.c.b16 %v4928, %v4927
      %v4936 = vpack.c.b16 %v4930, %v4929
      %v4937 = vpack.c.b16 %v4932, %v4931
      %v4938 = vpack.c.b16 %v4934, %v4933
      %v4944 = vsel %vm3573, %v4909, 0
      %4946 = vmatprep.subr.bf16.mxu0 0
      %4947 = vmatpush1.bf16.msra.mxu0 %v4935
      %4948 = vmatprep.subr.bf16.mxu0 0
      %4949 = vmatpush1.bf16.msra.mxu0 %v4936
      %4950 = vmatprep.subr.bf16.mxu0 0
      %4951 = vmatpush1.bf16.msra.mxu0 %v4937
      %4952 = vmatprep.subr.bf16.mxu0 0
      %4953 = vmatpush1.bf16.msra.mxu0 %v4938
      %4954 = vmatprep.subr.bf16.mxu0 0
      %4955 = vmatpush1.bf16.msra.mxu0 0
      %4956 = vmatprep.subr.bf16.mxu0 0
      %4957 = vmatpush1.bf16.msra.mxu0 0
      %4958 = vmatprep.subr.bf16.mxu0 0
      %4959 = vmatpush1.bf16.msra.mxu0 0
      %4960 = vmatprep.subr.bf16.mxu0 0
      %4961 = vmatpush1.bf16.msra.mxu0 0
      %4962 = vmatprep.subr.bf16.mxu0 0
      %4963 = vmatpush1.bf16.msra.mxu0 0
      %4964 = vmatprep.subr.bf16.mxu0 0
      %4965 = vmatpush1.bf16.msra.mxu0 0
      %4966 = vmatprep.subr.bf16.mxu0 0
      %4967 = vmatpush1.bf16.msra.mxu0 0
      %4968 = vmatprep.subr.bf16.mxu0 0
      %4969 = vmatpush1.bf16.msra.mxu0 0
      %4970 = vmatprep.subr.bf16.mxu0 0
      %4971 = vmatpush1.bf16.msra.mxu0 0
      %4972 = vmatprep.subr.bf16.mxu0 0
      %4973 = vmatpush1.bf16.msra.mxu0 0
      %4974 = vmatprep.subr.bf16.mxu0 0
      %4975 = vmatpush1.bf16.msra.mxu0 0
      %4976 = vmatprep.subr.bf16.mxu0 0
      %4977 = vmatpush1.bf16.msra.mxu0 0
      %4978 = vmatprep.mubr.bf16.mxu0 0
      %4979 = vmatmul.mubr.bf16.gmra.mrb[0].mxu0 %v4944
      %v4980 = vpop.f32.mrb[0].mxu0
      %v4981 = vadd.f32 0.0, %v4980
      %v4982 = vpop.f32.mrb[0].mxu0
      %v4983 = vpop.f32.mrb[0].mxu0
      %v4984 = vadd.f32 0.0, %v4983
      %v4985 = vpop.f32.mrb[0].mxu0
      %4986 = vdwg.mxu0
      %v4987 = vadd.f32 %v4907, %v4981
      %v4988 = vadd.f32 %v4908, %v4984
      %v4989 = vpack.c.bf16 %v3780, %v3777
      %s4990 = scalar_lea.vmem %s5, 480
      %v4991 = vld [vmem:[%s4990] sm:$0xf]
      %v4992 = vld [vmem:[%s4990 + $0x4] sm:$0xf]
      %v4993 = vld [vmem:[%s4990 + $0x8] sm:$0xf]
      %v4994 = vld [vmem:[%s4990 + $0xc] sm:$0xf]
      %v4995 = vld [vmem:[%s4990 + $0x10] sm:$0xf]
      %v4996 = vld [vmem:[%s4990 + $0x14] sm:$0xf]
      %v4997 = vld [vmem:[%s4990 + $0x18] sm:$0xf]
      %v4998 = vld [vmem:[%s4990 + $0x1c] sm:$0xf]
      %v5007 = vunpack.c.l.b16 %v4991
      %v5008 = vunpack.c.l.b16 %v4992
      %v5009 = vunpack.c.l.b16 %v4993
      %v5010 = vunpack.c.l.b16 %v4994
      %v5011 = vunpack.c.l.b16 %v4995
      %v5012 = vunpack.c.l.b16 %v4996
      %v5013 = vunpack.c.l.b16 %v4997
      %v5014 = vunpack.c.l.b16 %v4998
      %v5015 = vpack.c.b16 %v5008, %v5007
      %v5016 = vpack.c.b16 %v5010, %v5009
      %v5017 = vpack.c.b16 %v5012, %v5011
      %v5018 = vpack.c.b16 %v5014, %v5013
      %v5024 = vsel %vm3573, %v4989, 0
      %5026 = vmatprep.subr.bf16.mxu0 0
      %5027 = vmatpush1.bf16.msra.mxu0 %v5015
      %5028 = vmatprep.subr.bf16.mxu0 0
      %5029 = vmatpush1.bf16.msra.mxu0 %v5016
      %5030 = vmatprep.subr.bf16.mxu0 0
      %5031 = vmatpush1.bf16.msra.mxu0 %v5017
      %5032 = vmatprep.subr.bf16.mxu0 0
      %5033 = vmatpush1.bf16.msra.mxu0 %v5018
      %5034 = vmatprep.subr.bf16.mxu0 0
      %5035 = vmatpush1.bf16.msra.mxu0 0
      %5036 = vmatprep.subr.bf16.mxu0 0
      %5037 = vmatpush1.bf16.msra.mxu0 0
      %5038 = vmatprep.subr.bf16.mxu0 0
      %5039 = vmatpush1.bf16.msra.mxu0 0
      %5040 = vmatprep.subr.bf16.mxu0 0
      %5041 = vmatpush1.bf16.msra.mxu0 0
      %5042 = vmatprep.subr.bf16.mxu0 0
      %5043 = vmatpush1.bf16.msra.mxu0 0
      %5044 = vmatprep.subr.bf16.mxu0 0
      %5045 = vmatpush1.bf16.msra.mxu0 0
      %5046 = vmatprep.subr.bf16.mxu0 0
      %5047 = vmatpush1.bf16.msra.mxu0 0
      %5048 = vmatprep.subr.bf16.mxu0 0
      %5049 = vmatpush1.bf16.msra.mxu0 0
      %5050 = vmatprep.subr.bf16.mxu0 0
      %5051 = vmatpush1.bf16.msra.mxu0 0
      %5052 = vmatprep.subr.bf16.mxu0 0
      %5053 = vmatpush1.bf16.msra.mxu0 0
      %5054 = vmatprep.subr.bf16.mxu0 0
      %5055 = vmatpush1.bf16.msra.mxu0 0
      %5056 = vmatprep.subr.bf16.mxu0 0
      %5057 = vmatpush1.bf16.msra.mxu0 0
      %5058 = vmatprep.mubr.bf16.mxu0 0
      %5059 = vmatmul.mubr.bf16.gmra.mrb[0].mxu0 %v5024
      %v5060 = vpop.f32.mrb[0].mxu0
      %v5061 = vadd.f32 0.0, %v5060
      %v5062 = vpop.f32.mrb[0].mxu0
      %v5063 = vpop.f32.mrb[0].mxu0
      %v5064 = vadd.f32 0.0, %v5063
      %v5065 = vpop.f32.mrb[0].mxu0
      %5066 = vdwg.mxu0
      %v5067 = vadd.f32 %v4987, %v5061
      %v5068 = vadd.f32 %v4988, %v5064
      %v5069 = vmax.f32 %v5067, 0.0
      %v5070 = vmax.f32 %v5068, 0.0
      %v5071 = vpack.c.bf16 %v5070, %v5069
      %v5072 = vld [vmem:[%s7] sm:$0xf]
      %v5073 = vld [vmem:[%s7 + $0x4] sm:$0xf]
      %v5074 = vld [vmem:[%s7 + $0x8] sm:$0xf]
      %v5075 = vld [vmem:[%s7 + $0xc] sm:$0xf]
      %v5076 = vld [vmem:[%s7 + $0x10] sm:$0xf]
      %v5077 = vld [vmem:[%s7 + $0x14] sm:$0xf]
      %v5078 = vld [vmem:[%s7 + $0x18] sm:$0xf]
      %v5079 = vld [vmem:[%s7 + $0x1c] sm:$0xf]
      %v5080 = vld [vmem:[%s7 + $0x20] sm:$0xf]
      %v5081 = vld [vmem:[%s7 + $0x24] sm:$0xf]
      %v5082 = vld [vmem:[%s7 + $0x28] sm:$0xf]
      %v5083 = vld [vmem:[%s7 + $0x2c] sm:$0xf]
      %v5084 = vld [vmem:[%s7 + $0x30] sm:$0xf]
      %v5085 = vld [vmem:[%s7 + $0x34] sm:$0xf]
      %v5086 = vld [vmem:[%s7 + $0x38] sm:$0xf]
      %v5087 = vld [vmem:[%s7 + $0x3c] sm:$0xf]
      %v5104 = vunpack.c.l.b16 %v5072
      %v5105 = vunpack.c.l.b16 %v5073
      %v5106 = vunpack.c.l.b16 %v5074
      %v5107 = vunpack.c.l.b16 %v5075
      %v5108 = vunpack.c.l.b16 %v5076
      %v5109 = vunpack.c.l.b16 %v5077
      %v5110 = vunpack.c.l.b16 %v5078
      %v5111 = vunpack.c.l.b16 %v5079
      %v5112 = vunpack.c.l.b16 %v5080
      %v5113 = vunpack.c.l.b16 %v5081
      %v5114 = vunpack.c.l.b16 %v5082
      %v5115 = vunpack.c.l.b16 %v5083
      %v5116 = vunpack.c.l.b16 %v5084
      %v5117 = vunpack.c.l.b16 %v5085
      %v5118 = vunpack.c.l.b16 %v5086
      %v5119 = vunpack.c.l.b16 %v5087
      %v5120 = vpack.c.b16 %v5105, %v5104
      %v5121 = vpack.c.b16 %v5107, %v5106
      %v5122 = vpack.c.b16 %v5109, %v5108
      %v5123 = vpack.c.b16 %v5111, %v5110
      %v5124 = vpack.c.b16 %v5113, %v5112
      %v5125 = vpack.c.b16 %v5115, %v5114
      %v5126 = vpack.c.b16 %v5117, %v5116
      %v5127 = vpack.c.b16 %v5119, %v5118
      %vm5128 = vcmask 130048
      %v5130 = vsel %vm5128, %v5120, 0
      %v5133 = vsel %vm5128, %v5121, 0
      %v5136 = vsel %vm5128, %v5122, 0
      %v5139 = vsel %vm5128, %v5123, 0
      %v5142 = vsel %vm5128, %v5124, 0
      %v5145 = vsel %vm5128, %v5125, 0
      %v5148 = vsel %vm5128, %v5126, 0
      %v5151 = vsel %vm5128, %v5127, 0
      %5153 = vmatprep.subr.bf16.mxu0 0
      %5154 = vmatpush1.bf16.msra.mxu0 %v5071
      %5155 = vmatprep.subr.bf16.mxu0 0
      %5156 = vmatpush1.bf16.msra.mxu0 0
      %5157 = vmatprep.subr.bf16.mxu0 0
      %5158 = vmatpush1.bf16.msra.mxu0 0
      %5159 = vmatprep.subr.bf16.mxu0 0
      %5160 = vmatpush1.bf16.msra.mxu0 0
      %5161 = vmatprep.subr.bf16.mxu0 0
      %5162 = vmatpush1.bf16.msra.mxu0 0
      %5163 = vmatprep.subr.bf16.mxu0 0
      %5164 = vmatpush1.bf16.msra.mxu0 0
      %5165 = vmatprep.subr.bf16.mxu0 0
      %5166 = vmatpush1.bf16.msra.mxu0 0
      %5167 = vmatprep.subr.bf16.mxu0 0
      %5168 = vmatpush1.bf16.msra.mxu0 0
      %5169 = vmatprep.subr.bf16.mxu0 0
      %5170 = vmatpush1.bf16.msra.mxu0 0
      %5171 = vmatprep.subr.bf16.mxu0 0
      %5172 = vmatpush1.bf16.msra.mxu0 0
      %5173 = vmatprep.subr.bf16.mxu0 0
      %5174 = vmatpush1.bf16.msra.mxu0 0
      %5175 = vmatprep.subr.bf16.mxu0 0
      %5176 = vmatpush1.bf16.msra.mxu0 0
      %5177 = vmatprep.subr.bf16.mxu0 0
      %5178 = vmatpush1.bf16.msra.mxu0 0
      %5179 = vmatprep.subr.bf16.mxu0 0
      %5180 = vmatpush1.bf16.msra.mxu0 0
      %5181 = vmatprep.subr.bf16.mxu0 0
      %5182 = vmatpush1.bf16.msra.mxu0 0
      %5183 = vmatprep.subr.bf16.mxu0 0
      %5184 = vmatpush1.bf16.msra.mxu0 0
      %5185 = vmatprep.mubr.bf16.mxu0 0
      %5186 = vmatmul.mubr.bf16.gmra.mrb[0].mxu0 %v5130
      %v5187 = vpop.f32.mrb[0].mxu0
      %v5188 = vadd.f32 0.0, %v5187
      %v5189 = vpop.f32.mrb[0].mxu0
      %v5190 = vpop.f32.mrb[0].mxu0
      %v5191 = vadd.f32 0.0, %v5190
      %v5192 = vpop.f32.mrb[0].mxu0
      %5193 = vmatprep.mubr.bf16.mxu0 0
      %5194 = vmatmul.mubr.bf16.gmra.mrb[0].mxu0 %v5133
      %v5195 = vpop.f32.mrb[0].mxu0
      %v5196 = vadd.f32 0.0, %v5195
      %v5197 = vpop.f32.mrb[0].mxu0
      %v5198 = vpop.f32.mrb[0].mxu0
      %v5199 = vadd.f32 0.0, %v5198
      %v5200 = vpop.f32.mrb[0].mxu0
      %5201 = vmatprep.mubr.bf16.mxu0 0
      %5202 = vmatmul.mubr.bf16.gmra.mrb[0].mxu0 %v5136
      %v5203 = vpop.f32.mrb[0].mxu0
      %v5204 = vadd.f32 0.0, %v5203
      %v5205 = vpop.f32.mrb[0].mxu0
      %v5206 = vpop.f32.mrb[0].mxu0
      %v5207 = vadd.f32 0.0, %v5206
      %v5208 = vpop.f32.mrb[0].mxu0
      %5209 = vmatprep.mubr.bf16.mxu0 0
      %5210 = vmatmul.mubr.bf16.gmra.mrb[0].mxu0 %v5139
      %v5211 = vpop.f32.mrb[0].mxu0
      %v5212 = vadd.f32 0.0, %v5211
      %v5213 = vpop.f32.mrb[0].mxu0
      %v5214 = vpop.f32.mrb[0].mxu0
      %v5215 = vadd.f32 0.0, %v5214
      %v5216 = vpop.f32.mrb[0].mxu0
      %5217 = vmatprep.mubr.bf16.mxu0 0
      %5218 = vmatmul.mubr.bf16.gmra.mrb[0].mxu0 %v5142
      %v5219 = vpop.f32.mrb[0].mxu0
      %v5220 = vadd.f32 0.0, %v5219
      %v5221 = vpop.f32.mrb[0].mxu0
      %v5222 = vpop.f32.mrb[0].mxu0
      %v5223 = vadd.f32 0.0, %v5222
      %v5224 = vpop.f32.mrb[0].mxu0
      %5225 = vmatprep.mubr.bf16.mxu0 0
      %5226 = vmatmul.mubr.bf16.gmra.mrb[0].mxu0 %v5145
      %v5227 = vpop.f32.mrb[0].mxu0
      %v5228 = vadd.f32 0.0, %v5227
      %v5229 = vpop.f32.mrb[0].mxu0
      %v5230 = vpop.f32.mrb[0].mxu0
      %v5231 = vadd.f32 0.0, %v5230
      %v5232 = vpop.f32.mrb[0].mxu0
      %5233 = vmatprep.mubr.bf16.mxu0 0
      %5234 = vmatmul.mubr.bf16.gmra.mrb[0].mxu0 %v5148
      %v5235 = vpop.f32.mrb[0].mxu0
      %v5236 = vadd.f32 0.0, %v5235
      %v5237 = vpop.f32.mrb[0].mxu0
      %v5238 = vpop.f32.mrb[0].mxu0
      %v5239 = vadd.f32 0.0, %v5238
      %v5240 = vpop.f32.mrb[0].mxu0
      %5241 = vmatprep.mubr.bf16.mxu0 0
      %5242 = vmatmul.mubr.bf16.gmra.mrb[0].mxu0 %v5151
      %v5243 = vpop.f32.mrb[0].mxu0
      %v5244 = vadd.f32 0.0, %v5243
      %v5245 = vpop.f32.mrb[0].mxu0
      %v5246 = vpop.f32.mrb[0].mxu0
      %v5247 = vadd.f32 0.0, %v5246
      %v5248 = vpop.f32.mrb[0].mxu0
      %5249 = vdwg.mxu0
      %v5250 = vld [vmem:[%s9] sm:$0x1]
      %v5251 = vpack.c.bf16 %v5191, %v5188
      %v5252 = vpack.c.bf16 %v5199, %v5196
      %v5253 = vld [vmem:[%s8] sm:$0xf]
      %v5254 = vld [vmem:[%s8 + $0x4] sm:$0xf]
      %v5255 = vld [vmem:[%s8 + $0x8] sm:$0xf]
      %v5256 = vld [vmem:[%s8 + $0xc] sm:$0xf]
      %v5257 = vld [vmem:[%s8 + $0x10] sm:$0xf]
      %v5258 = vld [vmem:[%s8 + $0x14] sm:$0xf]
      %v5259 = vld [vmem:[%s8 + $0x18] sm:$0xf]
      %v5260 = vld [vmem:[%s8 + $0x1c] sm:$0xf]
      %v5261 = vld [vmem:[%s8 + $0x20] sm:$0xf]
      %v5262 = vld [vmem:[%s8 + $0x24] sm:$0xf]
      %v5263 = vld [vmem:[%s8 + $0x28] sm:$0xf]
      %v5264 = vld [vmem:[%s8 + $0x2c] sm:$0xf]
      %v5265 = vld [vmem:[%s8 + $0x30] sm:$0xf]
      %v5266 = vld [vmem:[%s8 + $0x34] sm:$0xf]
      %v5267 = vld [vmem:[%s8 + $0x38] sm:$0xf]
      %v5268 = vld [vmem:[%s8 + $0x3c] sm:$0xf]
      %v5285 = vunpack.c.l.b16 %v5253
      %v5286 = vunpack.c.l.b16 %v5254
      %v5287 = vunpack.c.l.b16 %v5255
      %v5288 = vunpack.c.l.b16 %v5256
      %v5289 = vunpack.c.l.b16 %v5257
      %v5290 = vunpack.c.l.b16 %v5258
      %v5291 = vunpack.c.l.b16 %v5259
      %v5292 = vunpack.c.l.b16 %v5260
      %v5293 = vunpack.c.l.b16 %v5261
      %v5294 = vunpack.c.l.b16 %v5262
      %v5295 = vunpack.c.l.b16 %v5263
      %v5296 = vunpack.c.l.b16 %v5264
      %v5297 = vunpack.c.l.b16 %v5265
      %v5298 = vunpack.c.l.b16 %v5266
      %v5299 = vunpack.c.l.b16 %v5267
      %v5300 = vunpack.c.l.b16 %v5268
      %v5301 = vpack.c.b16 %v5286, %v5285
      %v5302 = vpack.c.b16 %v5288, %v5287
      %v5303 = vpack.c.b16 %v5290, %v5289
      %v5304 = vpack.c.b16 %v5292, %v5291
      %v5305 = vpack.c.b16 %v5294, %v5293
      %v5306 = vpack.c.b16 %v5296, %v5295
      %v5307 = vpack.c.b16 %v5298, %v5297
      %v5308 = vpack.c.b16 %v5300, %v5299
      %5317 = vmatprep.subr.bf16.mxu0 0
      %5318 = vmatpush1.bf16.msra.mxu0 %v5301
      %5319 = vmatprep.subr.bf16.mxu0 0
      %5320 = vmatpush1.bf16.msra.mxu0 %v5302
      %5321 = vmatprep.subr.bf16.mxu0 0
      %5322 = vmatpush1.bf16.msra.mxu0 %v5303
      %5323 = vmatprep.subr.bf16.mxu0 0
      %5324 = vmatpush1.bf16.msra.mxu0 %v5304
      %5325 = vmatprep.subr.bf16.mxu0 0
      %5326 = vmatpush1.bf16.msra.mxu0 %v5305
      %5327 = vmatprep.subr.bf16.mxu0 0
      %5328 = vmatpush1.bf16.msra.mxu0 %v5306
      %5329 = vmatprep.subr.bf16.mxu0 0
      %5330 = vmatpush1.bf16.msra.mxu0 %v5307
      %5331 = vmatprep.subr.bf16.mxu0 0
      %5332 = vmatpush1.bf16.msra.mxu0 %v5308
      %5333 = vmatprep.subr.bf16.mxu0 0
      %5334 = vmatpush1.bf16.msra.mxu0 0
      %5335 = vmatprep.subr.bf16.mxu0 0
      %5336 = vmatpush1.bf16.msra.mxu0 0
      %5337 = vmatprep.subr.bf16.mxu0 0
      %5338 = vmatpush1.bf16.msra.mxu0 0
      %5339 = vmatprep.subr.bf16.mxu0 0
      %5340 = vmatpush1.bf16.msra.mxu0 0
      %5341 = vmatprep.subr.bf16.mxu0 0
      %5342 = vmatpush1.bf16.msra.mxu0 0
      %5343 = vmatprep.subr.bf16.mxu0 0
      %5344 = vmatpush1.bf16.msra.mxu0 0
      %5345 = vmatprep.subr.bf16.mxu0 0
      %5346 = vmatpush1.bf16.msra.mxu0 0
      %5347 = vmatprep.subr.bf16.mxu0 0
      %5348 = vmatpush1.bf16.msra.mxu0 0
      %5349 = vmatprep.mubr.bf16.mxu0 0
      %5350 = vmatmul.mubr.bf16.gmra.mrb[0].mxu0 %v5251
      %v5351 = vpop.f32.mrb[0].mxu0
      %v5352 = vadd.f32 0.0, %v5351
      %v5353 = vpop.f32.mrb[0].mxu0
      %v5354 = vpop.f32.mrb[0].mxu0
      %v5355 = vadd.f32 0.0, %v5354
      %v5356 = vpop.f32.mrb[0].mxu0
      %5357 = vmatprep.mubr.bf16.mxu0 0
      %5358 = vmatmul.mubr.bf16.gmra.mrb[0].mxu0 %v5252
      %v5359 = vpop.f32.mrb[0].mxu0
      %v5360 = vadd.f32 0.0, %v5359
      %v5361 = vpop.f32.mrb[0].mxu0
      %v5362 = vpop.f32.mrb[0].mxu0
      %v5363 = vadd.f32 0.0, %v5362
      %v5364 = vpop.f32.mrb[0].mxu0
      %5365 = vdwg.mxu0
      %v5367 = vlaneseq
      %v5368 = vshrl.u32 %v5367, 7
      %v5369 = vsub.s32 0, %v5368
      %v5370 = vrot.slane %v5250, %v5369
      %v5372 = vadd.f32 %v5370, %v5352
      %v5373 = vadd.f32 %v5370, %v5355
      %v5374 = vadd.f32 %v5370, %v5360
      %v5375 = vadd.f32 %v5370, %v5363
      %v5376 = vpack.c.bf16 %v5207, %v5204
      %v5377 = vpack.c.bf16 %v5215, %v5212
      %s5378 = scalar_lea.vmem %s8, 64
      %v5379 = vld [vmem:[%s5378] sm:$0xf]
      %v5380 = vld [vmem:[%s5378 + $0x4] sm:$0xf]
      %v5381 = vld [vmem:[%s5378 + $0x8] sm:$0xf]
      %v5382 = vld [vmem:[%s5378 + $0xc] sm:$0xf]
      %v5383 = vld [vmem:[%s5378 + $0x10] sm:$0xf]
      %v5384 = vld [vmem:[%s5378 + $0x14] sm:$0xf]
      %v5385 = vld [vmem:[%s5378 + $0x18] sm:$0xf]
      %v5386 = vld [vmem:[%s5378 + $0x1c] sm:$0xf]
      %v5387 = vld [vmem:[%s5378 + $0x20] sm:$0xf]
      %v5388 = vld [vmem:[%s5378 + $0x24] sm:$0xf]
      %v5389 = vld [vmem:[%s5378 + $0x28] sm:$0xf]
      %v5390 = vld [vmem:[%s5378 + $0x2c] sm:$0xf]
      %v5391 = vld [vmem:[%s5378 + $0x30] sm:$0xf]
      %v5392 = vld [vmem:[%s5378 + $0x34] sm:$0xf]
      %v5393 = vld [vmem:[%s5378 + $0x38] sm:$0xf]
      %v5394 = vld [vmem:[%s5378 + $0x3c] sm:$0xf]
      %v5411 = vunpack.c.l.b16 %v5379
      %v5412 = vunpack.c.l.b16 %v5380
      %v5413 = vunpack.c.l.b16 %v5381
      %v5414 = vunpack.c.l.b16 %v5382
      %v5415 = vunpack.c.l.b16 %v5383
      %v5416 = vunpack.c.l.b16 %v5384
      %v5417 = vunpack.c.l.b16 %v5385
      %v5418 = vunpack.c.l.b16 %v5386
      %v5419 = vunpack.c.l.b16 %v5387
      %v5420 = vunpack.c.l.b16 %v5388
      %v5421 = vunpack.c.l.b16 %v5389
      %v5422 = vunpack.c.l.b16 %v5390
      %v5423 = vunpack.c.l.b16 %v5391
      %v5424 = vunpack.c.l.b16 %v5392
      %v5425 = vunpack.c.l.b16 %v5393
      %v5426 = vunpack.c.l.b16 %v5394
      %v5427 = vpack.c.b16 %v5412, %v5411
      %v5428 = vpack.c.b16 %v5414, %v5413
      %v5429 = vpack.c.b16 %v5416, %v5415
      %v5430 = vpack.c.b16 %v5418, %v5417
      %v5431 = vpack.c.b16 %v5420, %v5419
      %v5432 = vpack.c.b16 %v5422, %v5421
      %v5433 = vpack.c.b16 %v5424, %v5423
      %v5434 = vpack.c.b16 %v5426, %v5425
      %5443 = vmatprep.subr.bf16.mxu0 0
      %5444 = vmatpush1.bf16.msra.mxu0 %v5427
      %5445 = vmatprep.subr.bf16.mxu0 0
      %5446 = vmatpush1.bf16.msra.mxu0 %v5428
      %5447 = vmatprep.subr.bf16.mxu0 0
      %5448 = vmatpush1.bf16.msra.mxu0 %v5429
      %5449 = vmatprep.subr.bf16.mxu0 0
      %5450 = vmatpush1.bf16.msra.mxu0 %v5430
      %5451 = vmatprep.subr.bf16.mxu0 0
      %5452 = vmatpush1.bf16.msra.mxu0 %v5431
      %5453 = vmatprep.subr.bf16.mxu0 0
      %5454 = vmatpush1.bf16.msra.mxu0 %v5432
      %5455 = vmatprep.subr.bf16.mxu0 0
      %5456 = vmatpush1.bf16.msra.mxu0 %v5433
      %5457 = vmatprep.subr.bf16.mxu0 0
      %5458 = vmatpush1.bf16.msra.mxu0 %v5434
      %5459 = vmatprep.subr.bf16.mxu0 0
      %5460 = vmatpush1.bf16.msra.mxu0 0
      %5461 = vmatprep.subr.bf16.mxu0 0
      %5462 = vmatpush1.bf16.msra.mxu0 0
      %5463 = vmatprep.subr.bf16.mxu0 0
      %5464 = vmatpush1.bf16.msra.mxu0 0
      %5465 = vmatprep.subr.bf16.mxu0 0
      %5466 = vmatpush1.bf16.msra.mxu0 0
      %5467 = vmatprep.subr.bf16.mxu0 0
      %5468 = vmatpush1.bf16.msra.mxu0 0
      %5469 = vmatprep.subr.bf16.mxu0 0
      %5470 = vmatpush1.bf16.msra.mxu0 0
      %5471 = vmatprep.subr.bf16.mxu0 0
      %5472 = vmatpush1.bf16.msra.mxu0 0
      %5473 = vmatprep.subr.bf16.mxu0 0
      %5474 = vmatpush1.bf16.msra.mxu0 0
      %5475 = vmatprep.mubr.bf16.mxu0 0
      %5476 = vmatmul.mubr.bf16.gmra.mrb[0].mxu0 %v5376
      %v5477 = vpop.f32.mrb[0].mxu0
      %v5478 = vadd.f32 0.0, %v5477
      %v5479 = vpop.f32.mrb[0].mxu0
      %v5480 = vpop.f32.mrb[0].mxu0
      %v5481 = vadd.f32 0.0, %v5480
      %v5482 = vpop.f32.mrb[0].mxu0
      %5483 = vmatprep.mubr.bf16.mxu0 0
      %5484 = vmatmul.mubr.bf16.gmra.mrb[0].mxu0 %v5377
      %v5485 = vpop.f32.mrb[0].mxu0
      %v5486 = vadd.f32 0.0, %v5485
      %v5487 = vpop.f32.mrb[0].mxu0
      %v5488 = vpop.f32.mrb[0].mxu0
      %v5489 = vadd.f32 0.0, %v5488
      %v5490 = vpop.f32.mrb[0].mxu0
      %5491 = vdwg.mxu0
      %v5492 = vadd.f32 %v5372, %v5478
      %v5493 = vadd.f32 %v5373, %v5481
      %v5494 = vadd.f32 %v5374, %v5486
      %v5495 = vadd.f32 %v5375, %v5489
      %v5496 = vpack.c.bf16 %v5223, %v5220
      %v5497 = vpack.c.bf16 %v5231, %v5228
      %s5498 = scalar_lea.vmem %s8, 128
      %v5499 = vld [vmem:[%s5498] sm:$0xf]
      %v5500 = vld [vmem:[%s5498 + $0x4] sm:$0xf]
      %v5501 = vld [vmem:[%s5498 + $0x8] sm:$0xf]
      %v5502 = vld [vmem:[%s5498 + $0xc] sm:$0xf]
      %v5503 = vld [vmem:[%s5498 + $0x10] sm:$0xf]
      %v5504 = vld [vmem:[%s5498 + $0x14] sm:$0xf]
      %v5505 = vld [vmem:[%s5498 + $0x18] sm:$0xf]
      %v5506 = vld [vmem:[%s5498 + $0x1c] sm:$0xf]
      %v5507 = vld [vmem:[%s5498 + $0x20] sm:$0xf]
      %v5508 = vld [vmem:[%s5498 + $0x24] sm:$0xf]
      %v5509 = vld [vmem:[%s5498 + $0x28] sm:$0xf]
      %v5510 = vld [vmem:[%s5498 + $0x2c] sm:$0xf]
      %v5511 = vld [vmem:[%s5498 + $0x30] sm:$0xf]
      %v5512 = vld [vmem:[%s5498 + $0x34] sm:$0xf]
      %v5513 = vld [vmem:[%s5498 + $0x38] sm:$0xf]
      %v5514 = vld [vmem:[%s5498 + $0x3c] sm:$0xf]
      %v5531 = vunpack.c.l.b16 %v5499
      %v5532 = vunpack.c.l.b16 %v5500
      %v5533 = vunpack.c.l.b16 %v5501
      %v5534 = vunpack.c.l.b16 %v5502
      %v5535 = vunpack.c.l.b16 %v5503
      %v5536 = vunpack.c.l.b16 %v5504
      %v5537 = vunpack.c.l.b16 %v5505
      %v5538 = vunpack.c.l.b16 %v5506
      %v5539 = vunpack.c.l.b16 %v5507
      %v5540 = vunpack.c.l.b16 %v5508
      %v5541 = vunpack.c.l.b16 %v5509
      %v5542 = vunpack.c.l.b16 %v5510
      %v5543 = vunpack.c.l.b16 %v5511
      %v5544 = vunpack.c.l.b16 %v5512
      %v5545 = vunpack.c.l.b16 %v5513
      %v5546 = vunpack.c.l.b16 %v5514
      %v5547 = vpack.c.b16 %v5532, %v5531
      %v5548 = vpack.c.b16 %v5534, %v5533
      %v5549 = vpack.c.b16 %v5536, %v5535
      %v5550 = vpack.c.b16 %v5538, %v5537
      %v5551 = vpack.c.b16 %v5540, %v5539
      %v5552 = vpack.c.b16 %v5542, %v5541
      %v5553 = vpack.c.b16 %v5544, %v5543
      %v5554 = vpack.c.b16 %v5546, %v5545
      %5563 = vmatprep.subr.bf16.mxu0 0
      %5564 = vmatpush1.bf16.msra.mxu0 %v5547
      %5565 = vmatprep.subr.bf16.mxu0 0
      %5566 = vmatpush1.bf16.msra.mxu0 %v5548
      %5567 = vmatprep.subr.bf16.mxu0 0
      %5568 = vmatpush1.bf16.msra.mxu0 %v5549
      %5569 = vmatprep.subr.bf16.mxu0 0
      %5570 = vmatpush1.bf16.msra.mxu0 %v5550
      %5571 = vmatprep.subr.bf16.mxu0 0
      %5572 = vmatpush1.bf16.msra.mxu0 %v5551
      %5573 = vmatprep.subr.bf16.mxu0 0
      %5574 = vmatpush1.bf16.msra.mxu0 %v5552
      %5575 = vmatprep.subr.bf16.mxu0 0
      %5576 = vmatpush1.bf16.msra.mxu0 %v5553
      %5577 = vmatprep.subr.bf16.mxu0 0
      %5578 = vmatpush1.bf16.msra.mxu0 %v5554
      %5579 = vmatprep.subr.bf16.mxu0 0
      %5580 = vmatpush1.bf16.msra.mxu0 0
      %5581 = vmatprep.subr.bf16.mxu0 0
      %5582 = vmatpush1.bf16.msra.mxu0 0
      %5583 = vmatprep.subr.bf16.mxu0 0
      %5584 = vmatpush1.bf16.msra.mxu0 0
      %5585 = vmatprep.subr.bf16.mxu0 0
      %5586 = vmatpush1.bf16.msra.mxu0 0
      %5587 = vmatprep.subr.bf16.mxu0 0
      %5588 = vmatpush1.bf16.msra.mxu0 0
      %5589 = vmatprep.subr.bf16.mxu0 0
      %5590 = vmatpush1.bf16.msra.mxu0 0
      %5591 = vmatprep.subr.bf16.mxu0 0
      %5592 = vmatpush1.bf16.msra.mxu0 0
      %5593 = vmatprep.subr.bf16.mxu0 0
      %5594 = vmatpush1.bf16.msra.mxu0 0
      %5595 = vmatprep.mubr.bf16.mxu0 0
      %5596 = vmatmul.mubr.bf16.gmra.mrb[0].mxu0 %v5496
      %v5597 = vpop.f32.mrb[0].mxu0
      %v5598 = vadd.f32 0.0, %v5597
      %v5599 = vpop.f32.mrb[0].mxu0
      %v5600 = vpop.f32.mrb[0].mxu0
      %v5601 = vadd.f32 0.0, %v5600
      %v5602 = vpop.f32.mrb[0].mxu0
      %5603 = vmatprep.mubr.bf16.mxu0 0
      %5604 = vmatmul.mubr.bf16.gmra.mrb[0].mxu0 %v5497
      %v5605 = vpop.f32.mrb[0].mxu0
      %v5606 = vadd.f32 0.0, %v5605
      %v5607 = vpop.f32.mrb[0].mxu0
      %v5608 = vpop.f32.mrb[0].mxu0
      %v5609 = vadd.f32 0.0, %v5608
      %v5610 = vpop.f32.mrb[0].mxu0
      %5611 = vdwg.mxu0
      %v5612 = vadd.f32 %v5492, %v5598
      %v5613 = vadd.f32 %v5493, %v5601
      %v5614 = vadd.f32 %v5494, %v5606
      %v5615 = vadd.f32 %v5495, %v5609
      %v5616 = vpack.c.bf16 %v5239, %v5236
      %v5617 = vpack.c.bf16 %v5247, %v5244
      %s5618 = scalar_lea.vmem %s8, 192
      %v5619 = vld [vmem:[%s5618] sm:$0xf]
      %v5620 = vld [vmem:[%s5618 + $0x4] sm:$0xf]
      %v5621 = vld [vmem:[%s5618 + $0x8] sm:$0xf]
      %v5622 = vld [vmem:[%s5618 + $0xc] sm:$0xf]
      %v5623 = vld [vmem:[%s5618 + $0x10] sm:$0xf]
      %v5624 = vld [vmem:[%s5618 + $0x14] sm:$0xf]
      %v5625 = vld [vmem:[%s5618 + $0x18] sm:$0xf]
      %v5626 = vld [vmem:[%s5618 + $0x1c] sm:$0xf]
      %v5627 = vld [vmem:[%s5618 + $0x20] sm:$0xf]
      %v5628 = vld [vmem:[%s5618 + $0x24] sm:$0xf]
      %v5629 = vld [vmem:[%s5618 + $0x28] sm:$0xf]
      %v5630 = vld [vmem:[%s5618 + $0x2c] sm:$0xf]
      %v5631 = vld [vmem:[%s5618 + $0x30] sm:$0xf]
      %v5632 = vld [vmem:[%s5618 + $0x34] sm:$0xf]
      %v5633 = vld [vmem:[%s5618 + $0x38] sm:$0xf]
      %v5634 = vld [vmem:[%s5618 + $0x3c] sm:$0xf]
      %v5651 = vunpack.c.l.b16 %v5619
      %v5652 = vunpack.c.l.b16 %v5620
      %v5653 = vunpack.c.l.b16 %v5621
      %v5654 = vunpack.c.l.b16 %v5622
      %v5655 = vunpack.c.l.b16 %v5623
      %v5656 = vunpack.c.l.b16 %v5624
      %v5657 = vunpack.c.l.b16 %v5625
      %v5658 = vunpack.c.l.b16 %v5626
      %v5659 = vunpack.c.l.b16 %v5627
      %v5660 = vunpack.c.l.b16 %v5628
      %v5661 = vunpack.c.l.b16 %v5629
      %v5662 = vunpack.c.l.b16 %v5630
      %v5663 = vunpack.c.l.b16 %v5631
      %v5664 = vunpack.c.l.b16 %v5632
      %v5665 = vunpack.c.l.b16 %v5633
      %v5666 = vunpack.c.l.b16 %v5634
      %v5667 = vpack.c.b16 %v5652, %v5651
      %v5668 = vpack.c.b16 %v5654, %v5653
      %v5669 = vpack.c.b16 %v5656, %v5655
      %v5670 = vpack.c.b16 %v5658, %v5657
      %v5671 = vpack.c.b16 %v5660, %v5659
      %v5672 = vpack.c.b16 %v5662, %v5661
      %v5673 = vpack.c.b16 %v5664, %v5663
      %v5674 = vpack.c.b16 %v5666, %v5665
      %5683 = vmatprep.subr.bf16.mxu0 0
      %5684 = vmatpush1.bf16.msra.mxu0 %v5667
      %5685 = vmatprep.subr.bf16.mxu0 0
      %5686 = vmatpush1.bf16.msra.mxu0 %v5668
      %5687 = vmatprep.subr.bf16.mxu0 0
      %5688 = vmatpush1.bf16.msra.mxu0 %v5669
      %5689 = vmatprep.subr.bf16.mxu0 0
      %5690 = vmatpush1.bf16.msra.mxu0 %v5670
      %5691 = vmatprep.subr.bf16.mxu0 0
      %5692 = vmatpush1.bf16.msra.mxu0 %v5671
      %5693 = vmatprep.subr.bf16.mxu0 0
      %5694 = vmatpush1.bf16.msra.mxu0 %v5672
      %5695 = vmatprep.subr.bf16.mxu0 0
      %5696 = vmatpush1.bf16.msra.mxu0 %v5673
      %5697 = vmatprep.subr.bf16.mxu0 0
      %5698 = vmatpush1.bf16.msra.mxu0 %v5674
      %5699 = vmatprep.subr.bf16.mxu0 0
      %5700 = vmatpush1.bf16.msra.mxu0 0
      %5701 = vmatprep.subr.bf16.mxu0 0
      %5702 = vmatpush1.bf16.msra.mxu0 0
      %5703 = vmatprep.subr.bf16.mxu0 0
      %5704 = vmatpush1.bf16.msra.mxu0 0
      %5705 = vmatprep.subr.bf16.mxu0 0
      %5706 = vmatpush1.bf16.msra.mxu0 0
      %5707 = vmatprep.subr.bf16.mxu0 0
      %5708 = vmatpush1.bf16.msra.mxu0 0
      %5709 = vmatprep.subr.bf16.mxu0 0
      %5710 = vmatpush1.bf16.msra.mxu0 0
      %5711 = vmatprep.subr.bf16.mxu0 0
      %5712 = vmatpush1.bf16.msra.mxu0 0
      %5713 = vmatprep.subr.bf16.mxu0 0
      %5714 = vmatpush1.bf16.msra.mxu0 0
      %5715 = vmatprep.mubr.bf16.mxu0 0
      %5716 = vmatmul.mubr.bf16.gmra.mrb[0].mxu0 %v5616
      %v5717 = vpop.f32.mrb[0].mxu0
      %v5718 = vadd.f32 0.0, %v5717
      %v5719 = vpop.f32.mrb[0].mxu0
      %v5720 = vpop.f32.mrb[0].mxu0
      %v5721 = vadd.f32 0.0, %v5720
      %v5722 = vpop.f32.mrb[0].mxu0
      %5723 = vmatprep.mubr.bf16.mxu0 0
      %5724 = vmatmul.mubr.bf16.gmra.mrb[0].mxu0 %v5617
      %v5725 = vpop.f32.mrb[0].mxu0
      %v5726 = vadd.f32 0.0, %v5725
      %v5727 = vpop.f32.mrb[0].mxu0
      %v5728 = vpop.f32.mrb[0].mxu0
      %v5729 = vadd.f32 0.0, %v5728
      %v5730 = vpop.f32.mrb[0].mxu0
      %5731 = vdwg.mxu0
      %v5732 = vadd.f32 %v5612, %v5718
      %v5733 = vadd.f32 %v5613, %v5721
      %v5734 = vadd.f32 %v5614, %v5726
      %v5735 = vadd.f32 %v5615, %v5729
      %v5736 = vmax.f32 %v5732, 0.0
      %v5737 = vmax.f32 %v5733, 0.0
      %v5738 = vmax.f32 %v5734, 0.0
      %v5739 = vmax.f32 %v5735, 0.0
      %v5740 = vpack.c.bf16 %v5737, %v5736
      %v5741 = vpack.c.bf16 %v5739, %v5738
      %v5742 = vld [vmem:[%s10] sm:$0xf]
      %v5743 = vld [vmem:[%s10 + $0x4] sm:$0xf]
      %v5744 = vld [vmem:[%s10 + $0x8] sm:$0xf]
      %v5745 = vld [vmem:[%s10 + $0xc] sm:$0xf]
      %v5746 = vld [vmem:[%s10 + $0x10] sm:$0xf]
      %v5747 = vld [vmem:[%s10 + $0x14] sm:$0xf]
      %v5748 = vld [vmem:[%s10 + $0x18] sm:$0xf]
      %v5749 = vld [vmem:[%s10 + $0x1c] sm:$0xf]
      %s5750 = scalar_lea.vmem %s8, 256
      %v5751 = vld [vmem:[%s5750] sm:$0xf]
      %v5752 = vld [vmem:[%s5750 + $0x4] sm:$0xf]
      %v5753 = vld [vmem:[%s5750 + $0x8] sm:$0xf]
      %v5754 = vld [vmem:[%s5750 + $0xc] sm:$0xf]
      %v5755 = vld [vmem:[%s5750 + $0x10] sm:$0xf]
      %v5756 = vld [vmem:[%s5750 + $0x14] sm:$0xf]
      %v5757 = vld [vmem:[%s5750 + $0x18] sm:$0xf]
      %v5758 = vld [vmem:[%s5750 + $0x1c] sm:$0xf]
      %v5759 = vld [vmem:[%s5750 + $0x20] sm:$0xf]
      %v5760 = vld [vmem:[%s5750 + $0x24] sm:$0xf]
      %v5761 = vld [vmem:[%s5750 + $0x28] sm:$0xf]
      %v5762 = vld [vmem:[%s5750 + $0x2c] sm:$0xf]
      %v5763 = vld [vmem:[%s5750 + $0x30] sm:$0xf]
      %v5764 = vld [vmem:[%s5750 + $0x34] sm:$0xf]
      %v5765 = vld [vmem:[%s5750 + $0x38] sm:$0xf]
      %v5766 = vld [vmem:[%s5750 + $0x3c] sm:$0xf]
      %v5783 = vunpack.c.l.b16 %v5751
      %v5784 = vunpack.c.l.b16 %v5752
      %v5785 = vunpack.c.l.b16 %v5753
      %v5786 = vunpack.c.l.b16 %v5754
      %v5787 = vunpack.c.l.b16 %v5755
      %v5788 = vunpack.c.l.b16 %v5756
      %v5789 = vunpack.c.l.b16 %v5757
      %v5790 = vunpack.c.l.b16 %v5758
      %v5791 = vunpack.c.l.b16 %v5759
      %v5792 = vunpack.c.l.b16 %v5760
      %v5793 = vunpack.c.l.b16 %v5761
      %v5794 = vunpack.c.l.b16 %v5762
      %v5795 = vunpack.c.l.b16 %v5763
      %v5796 = vunpack.c.l.b16 %v5764
      %v5797 = vunpack.c.l.b16 %v5765
      %v5798 = vunpack.c.l.b16 %v5766
      %v5799 = vpack.c.b16 %v5784, %v5783
      %v5800 = vpack.c.b16 %v5786, %v5785
      %v5801 = vpack.c.b16 %v5788, %v5787
      %v5802 = vpack.c.b16 %v5790, %v5789
      %v5803 = vpack.c.b16 %v5792, %v5791
      %v5804 = vpack.c.b16 %v5794, %v5793
      %v5805 = vpack.c.b16 %v5796, %v5795
      %v5806 = vpack.c.b16 %v5798, %v5797
      %5815 = vmatprep.subr.bf16.mxu0 0
      %5816 = vmatpush1.bf16.msra.mxu0 %v5799
      %5817 = vmatprep.subr.bf16.mxu0 0
      %5818 = vmatpush1.bf16.msra.mxu0 %v5800
      %5819 = vmatprep.subr.bf16.mxu0 0
      %5820 = vmatpush1.bf16.msra.mxu0 %v5801
      %5821 = vmatprep.subr.bf16.mxu0 0
      %5822 = vmatpush1.bf16.msra.mxu0 %v5802
      %5823 = vmatprep.subr.bf16.mxu0 0
      %5824 = vmatpush1.bf16.msra.mxu0 %v5803
      %5825 = vmatprep.subr.bf16.mxu0 0
      %5826 = vmatpush1.bf16.msra.mxu0 %v5804
      %5827 = vmatprep.subr.bf16.mxu0 0
      %5828 = vmatpush1.bf16.msra.mxu0 %v5805
      %5829 = vmatprep.subr.bf16.mxu0 0
      %5830 = vmatpush1.bf16.msra.mxu0 %v5806
      %5831 = vmatprep.subr.bf16.mxu0 0
      %5832 = vmatpush1.bf16.msra.mxu0 0
      %5833 = vmatprep.subr.bf16.mxu0 0
      %5834 = vmatpush1.bf16.msra.mxu0 0
      %5835 = vmatprep.subr.bf16.mxu0 0
      %5836 = vmatpush1.bf16.msra.mxu0 0
      %5837 = vmatprep.subr.bf16.mxu0 0
      %5838 = vmatpush1.bf16.msra.mxu0 0
      %5839 = vmatprep.subr.bf16.mxu0 0
      %5840 = vmatpush1.bf16.msra.mxu0 0
      %5841 = vmatprep.subr.bf16.mxu0 0
      %5842 = vmatpush1.bf16.msra.mxu0 0
      %5843 = vmatprep.subr.bf16.mxu0 0
      %5844 = vmatpush1.bf16.msra.mxu0 0
      %5845 = vmatprep.subr.bf16.mxu0 0
      %5846 = vmatpush1.bf16.msra.mxu0 0
      %5847 = vmatprep.mubr.bf16.mxu0 0
      %5848 = vmatmul.mubr.bf16.gmra.mrb[0].mxu0 %v5251
      %v5849 = vpop.f32.mrb[0].mxu0
      %v5850 = vadd.f32 0.0, %v5849
      %v5851 = vpop.f32.mrb[0].mxu0
      %v5852 = vpop.f32.mrb[0].mxu0
      %v5853 = vadd.f32 0.0, %v5852
      %v5854 = vpop.f32.mrb[0].mxu0
      %5855 = vmatprep.mubr.bf16.mxu0 0
      %5856 = vmatmul.mubr.bf16.gmra.mrb[0].mxu0 %v5252
      %v5857 = vpop.f32.mrb[0].mxu0
      %v5858 = vadd.f32 0.0, %v5857
      %v5859 = vpop.f32.mrb[0].mxu0
      %v5860 = vpop.f32.mrb[0].mxu0
      %v5861 = vadd.f32 0.0, %v5860
      %v5862 = vpop.f32.mrb[0].mxu0
      %5863 = vdwg.mxu0
      %v5864 = vadd.f32 %v5370, %v5850
      %v5865 = vadd.f32 %v5370, %v5853
      %v5866 = vadd.f32 %v5370, %v5858
      %v5867 = vadd.f32 %v5370, %v5861
      %s5868 = scalar_lea.vmem %s8, 320
      %v5869 = vld [vmem:[%s5868] sm:$0xf]
      %v5870 = vld [vmem:[%s5868 + $0x4] sm:$0xf]
      %v5871 = vld [vmem:[%s5868 + $0x8] sm:$0xf]
      %v5872 = vld [vmem:[%s5868 + $0xc] sm:$0xf]
      %v5873 = vld [vmem:[%s5868 + $0x10] sm:$0xf]
      %v5874 = vld [vmem:[%s5868 + $0x14] sm:$0xf]
      %v5875 = vld [vmem:[%s5868 + $0x18] sm:$0xf]
      %v5876 = vld [vmem:[%s5868 + $0x1c] sm:$0xf]
      %v5877 = vld [vmem:[%s5868 + $0x20] sm:$0xf]
      %v5878 = vld [vmem:[%s5868 + $0x24] sm:$0xf]
      %v5879 = vld [vmem:[%s5868 + $0x28] sm:$0xf]
      %v5880 = vld [vmem:[%s5868 + $0x2c] sm:$0xf]
      %v5881 = vld [vmem:[%s5868 + $0x30] sm:$0xf]
      %v5882 = vld [vmem:[%s5868 + $0x34] sm:$0xf]
      %v5883 = vld [vmem:[%s5868 + $0x38] sm:$0xf]
      %v5884 = vld [vmem:[%s5868 + $0x3c] sm:$0xf]
      %v5901 = vunpack.c.l.b16 %v5869
      %v5902 = vunpack.c.l.b16 %v5870
      %v5903 = vunpack.c.l.b16 %v5871
      %v5904 = vunpack.c.l.b16 %v5872
      %v5905 = vunpack.c.l.b16 %v5873
      %v5906 = vunpack.c.l.b16 %v5874
      %v5907 = vunpack.c.l.b16 %v5875
      %v5908 = vunpack.c.l.b16 %v5876
      %v5909 = vunpack.c.l.b16 %v5877
      %v5910 = vunpack.c.l.b16 %v5878
      %v5911 = vunpack.c.l.b16 %v5879
      %v5912 = vunpack.c.l.b16 %v5880
      %v5913 = vunpack.c.l.b16 %v5881
      %v5914 = vunpack.c.l.b16 %v5882
      %v5915 = vunpack.c.l.b16 %v5883
      %v5916 = vunpack.c.l.b16 %v5884
      %v5917 = vpack.c.b16 %v5902, %v5901
      %v5918 = vpack.c.b16 %v5904, %v5903
      %v5919 = vpack.c.b16 %v5906, %v5905
      %v5920 = vpack.c.b16 %v5908, %v5907
      %v5921 = vpack.c.b16 %v5910, %v5909
      %v5922 = vpack.c.b16 %v5912, %v5911
      %v5923 = vpack.c.b16 %v5914, %v5913
      %v5924 = vpack.c.b16 %v5916, %v5915
      %5933 = vmatprep.subr.bf16.mxu0 0
      %5934 = vmatpush1.bf16.msra.mxu0 %v5917
      %5935 = vmatprep.subr.bf16.mxu0 0
      %5936 = vmatpush1.bf16.msra.mxu0 %v5918
      %5937 = vmatprep.subr.bf16.mxu0 0
      %5938 = vmatpush1.bf16.msra.mxu0 %v5919
      %5939 = vmatprep.subr.bf16.mxu0 0
      %5940 = vmatpush1.bf16.msra.mxu0 %v5920
      %5941 = vmatprep.subr.bf16.mxu0 0
      %5942 = vmatpush1.bf16.msra.mxu0 %v5921
      %5943 = vmatprep.subr.bf16.mxu0 0
      %5944 = vmatpush1.bf16.msra.mxu0 %v5922
      %5945 = vmatprep.subr.bf16.mxu0 0
      %5946 = vmatpush1.bf16.msra.mxu0 %v5923
      %5947 = vmatprep.subr.bf16.mxu0 0
      %5948 = vmatpush1.bf16.msra.mxu0 %v5924
      %5949 = vmatprep.subr.bf16.mxu0 0
      %5950 = vmatpush1.bf16.msra.mxu0 0
      %5951 = vmatprep.subr.bf16.mxu0 0
      %5952 = vmatpush1.bf16.msra.mxu0 0
      %5953 = vmatprep.subr.bf16.mxu0 0
      %5954 = vmatpush1.bf16.msra.mxu0 0
      %5955 = vmatprep.subr.bf16.mxu0 0
      %5956 = vmatpush1.bf16.msra.mxu0 0
      %5957 = vmatprep.subr.bf16.mxu0 0
      %5958 = vmatpush1.bf16.msra.mxu0 0
      %5959 = vmatprep.subr.bf16.mxu0 0
      %5960 = vmatpush1.bf16.msra.mxu0 0
      %5961 = vmatprep.subr.bf16.mxu0 0
      %5962 = vmatpush1.bf16.msra.mxu0 0
      %5963 = vmatprep.subr.bf16.mxu0 0
      %5964 = vmatpush1.bf16.msra.mxu0 0
      %5965 = vmatprep.mubr.bf16.mxu0 0
      %5966 = vmatmul.mubr.bf16.gmra.mrb[0].mxu0 %v5376
      %v5967 = vpop.f32.mrb[0].mxu0
      %v5968 = vadd.f32 0.0, %v5967
      %v5969 = vpop.f32.mrb[0].mxu0
      %v5970 = vpop.f32.mrb[0].mxu0
      %v5971 = vadd.f32 0.0, %v5970
      %v5972 = vpop.f32.mrb[0].mxu0
      %5973 = vmatprep.mubr.bf16.mxu0 0
      %5974 = vmatmul.mubr.bf16.gmra.mrb[0].mxu0 %v5377
      %v5975 = vpop.f32.mrb[0].mxu0
      %v5976 = vadd.f32 0.0, %v5975
      %v5977 = vpop.f32.mrb[0].mxu0
      %v5978 = vpop.f32.mrb[0].mxu0
      %v5979 = vadd.f32 0.0, %v5978
      %v5980 = vpop.f32.mrb[0].mxu0
      %5981 = vdwg.mxu0
      %v5982 = vadd.f32 %v5864, %v5968
      %v5983 = vadd.f32 %v5865, %v5971
      %v5984 = vadd.f32 %v5866, %v5976
      %v5985 = vadd.f32 %v5867, %v5979
      %s5986 = scalar_lea.vmem %s8, 384
      %v5987 = vld [vmem:[%s5986] sm:$0xf]
      %v5988 = vld [vmem:[%s5986 + $0x4] sm:$0xf]
      %v5989 = vld [vmem:[%s5986 + $0x8] sm:$0xf]
      %v5990 = vld [vmem:[%s5986 + $0xc] sm:$0xf]
      %v5991 = vld [vmem:[%s5986 + $0x10] sm:$0xf]
      %v5992 = vld [vmem:[%s5986 + $0x14] sm:$0xf]
      %v5993 = vld [vmem:[%s5986 + $0x18] sm:$0xf]
      %v5994 = vld [vmem:[%s5986 + $0x1c] sm:$0xf]
      %v5995 = vld [vmem:[%s5986 + $0x20] sm:$0xf]
      %v5996 = vld [vmem:[%s5986 + $0x24] sm:$0xf]
      %v5997 = vld [vmem:[%s5986 + $0x28] sm:$0xf]
      %v5998 = vld [vmem:[%s5986 + $0x2c] sm:$0xf]
      %v5999 = vld [vmem:[%s5986 + $0x30] sm:$0xf]
      %v6000 = vld [vmem:[%s5986 + $0x34] sm:$0xf]
      %v6001 = vld [vmem:[%s5986 + $0x38] sm:$0xf]
      %v6002 = vld [vmem:[%s5986 + $0x3c] sm:$0xf]
      %v6019 = vunpack.c.l.b16 %v5987
      %v6020 = vunpack.c.l.b16 %v5988
      %v6021 = vunpack.c.l.b16 %v5989
      %v6022 = vunpack.c.l.b16 %v5990
      %v6023 = vunpack.c.l.b16 %v5991
      %v6024 = vunpack.c.l.b16 %v5992
      %v6025 = vunpack.c.l.b16 %v5993
      %v6026 = vunpack.c.l.b16 %v5994
      %v6027 = vunpack.c.l.b16 %v5995
      %v6028 = vunpack.c.l.b16 %v5996
      %v6029 = vunpack.c.l.b16 %v5997
      %v6030 = vunpack.c.l.b16 %v5998
      %v6031 = vunpack.c.l.b16 %v5999
      %v6032 = vunpack.c.l.b16 %v6000
      %v6033 = vunpack.c.l.b16 %v6001
      %v6034 = vunpack.c.l.b16 %v6002
      %v6035 = vpack.c.b16 %v6020, %v6019
      %v6036 = vpack.c.b16 %v6022, %v6021
      %v6037 = vpack.c.b16 %v6024, %v6023
      %v6038 = vpack.c.b16 %v6026, %v6025
      %v6039 = vpack.c.b16 %v6028, %v6027
      %v6040 = vpack.c.b16 %v6030, %v6029
      %v6041 = vpack.c.b16 %v6032, %v6031
      %v6042 = vpack.c.b16 %v6034, %v6033
      %6051 = vmatprep.subr.bf16.mxu0 0
      %6052 = vmatpush1.bf16.msra.mxu0 %v6035
      %6053 = vmatprep.subr.bf16.mxu0 0
      %6054 = vmatpush1.bf16.msra.mxu0 %v6036
      %6055 = vmatprep.subr.bf16.mxu0 0
      %6056 = vmatpush1.bf16.msra.mxu0 %v6037
      %6057 = vmatprep.subr.bf16.mxu0 0
      %6058 = vmatpush1.bf16.msra.mxu0 %v6038
      %6059 = vmatprep.subr.bf16.mxu0 0
      %6060 = vmatpush1.bf16.msra.mxu0 %v6039
      %6061 = vmatprep.subr.bf16.mxu0 0
      %6062 = vmatpush1.bf16.msra.mxu0 %v6040
      %6063 = vmatprep.subr.bf16.mxu0 0
      %6064 = vmatpush1.bf16.msra.mxu0 %v6041
      %6065 = vmatprep.subr.bf16.mxu0 0
      %6066 = vmatpush1.bf16.msra.mxu0 %v6042
      %6067 = vmatprep.subr.bf16.mxu0 0
      %6068 = vmatpush1.bf16.msra.mxu0 0
      %6069 = vmatprep.subr.bf16.mxu0 0
      %6070 = vmatpush1.bf16.msra.mxu0 0
      %6071 = vmatprep.subr.bf16.mxu0 0
      %6072 = vmatpush1.bf16.msra.mxu0 0
      %6073 = vmatprep.subr.bf16.mxu0 0
      %6074 = vmatpush1.bf16.msra.mxu0 0
      %6075 = vmatprep.subr.bf16.mxu0 0
      %6076 = vmatpush1.bf16.msra.mxu0 0
      %6077 = vmatprep.subr.bf16.mxu0 0
      %6078 = vmatpush1.bf16.msra.mxu0 0
      %6079 = vmatprep.subr.bf16.mxu0 0
      %6080 = vmatpush1.bf16.msra.mxu0 0
      %6081 = vmatprep.subr.bf16.mxu0 0
      %6082 = vmatpush1.bf16.msra.mxu0 0
      %6083 = vmatprep.mubr.bf16.mxu0 0
      %6084 = vmatmul.mubr.bf16.gmra.mrb[0].mxu0 %v5496
      %v6085 = vpop.f32.mrb[0].mxu0
      %v6086 = vadd.f32 0.0, %v6085
      %v6087 = vpop.f32.mrb[0].mxu0
      %v6088 = vpop.f32.mrb[0].mxu0
      %v6089 = vadd.f32 0.0, %v6088
      %v6090 = vpop.f32.mrb[0].mxu0
      %6091 = vmatprep.mubr.bf16.mxu0 0
      %6092 = vmatmul.mubr.bf16.gmra.mrb[0].mxu0 %v5497
      %v6093 = vpop.f32.mrb[0].mxu0
      %v6094 = vadd.f32 0.0, %v6093
      %v6095 = vpop.f32.mrb[0].mxu0
      %v6096 = vpop.f32.mrb[0].mxu0
      %v6097 = vadd.f32 0.0, %v6096
      %v6098 = vpop.f32.mrb[0].mxu0
      %6099 = vdwg.mxu0
      %v6100 = vadd.f32 %v5982, %v6086
      %v6101 = vadd.f32 %v5983, %v6089
      %v6102 = vadd.f32 %v5984, %v6094
      %v6103 = vadd.f32 %v5985, %v6097
      %s6104 = scalar_lea.vmem %s8, 448
      %v6105 = vld [vmem:[%s6104] sm:$0xf]
      %v6106 = vld [vmem:[%s6104 + $0x4] sm:$0xf]
      %v6107 = vld [vmem:[%s6104 + $0x8] sm:$0xf]
      %v6108 = vld [vmem:[%s6104 + $0xc] sm:$0xf]
      %v6109 = vld [vmem:[%s6104 + $0x10] sm:$0xf]
      %v6110 = vld [vmem:[%s6104 + $0x14] sm:$0xf]
      %v6111 = vld [vmem:[%s6104 + $0x18] sm:$0xf]
      %v6112 = vld [vmem:[%s6104 + $0x1c] sm:$0xf]
      %v6113 = vld [vmem:[%s6104 + $0x20] sm:$0xf]
      %v6114 = vld [vmem:[%s6104 + $0x24] sm:$0xf]
      %v6115 = vld [vmem:[%s6104 + $0x28] sm:$0xf]
      %v6116 = vld [vmem:[%s6104 + $0x2c] sm:$0xf]
      %v6117 = vld [vmem:[%s6104 + $0x30] sm:$0xf]
      %v6118 = vld [vmem:[%s6104 + $0x34] sm:$0xf]
      %v6119 = vld [vmem:[%s6104 + $0x38] sm:$0xf]
      %v6120 = vld [vmem:[%s6104 + $0x3c] sm:$0xf]
      %v6137 = vunpack.c.l.b16 %v6105
      %v6138 = vunpack.c.l.b16 %v6106
      %v6139 = vunpack.c.l.b16 %v6107
      %v6140 = vunpack.c.l.b16 %v6108
      %v6141 = vunpack.c.l.b16 %v6109
      %v6142 = vunpack.c.l.b16 %v6110
      %v6143 = vunpack.c.l.b16 %v6111
      %v6144 = vunpack.c.l.b16 %v6112
      %v6145 = vunpack.c.l.b16 %v6113
      %v6146 = vunpack.c.l.b16 %v6114
      %v6147 = vunpack.c.l.b16 %v6115
      %v6148 = vunpack.c.l.b16 %v6116
      %v6149 = vunpack.c.l.b16 %v6117
      %v6150 = vunpack.c.l.b16 %v6118
      %v6151 = vunpack.c.l.b16 %v6119
      %v6152 = vunpack.c.l.b16 %v6120
      %v6153 = vpack.c.b16 %v6138, %v6137
      %v6154 = vpack.c.b16 %v6140, %v6139
      %v6155 = vpack.c.b16 %v6142, %v6141
      %v6156 = vpack.c.b16 %v6144, %v6143
      %v6157 = vpack.c.b16 %v6146, %v6145
      %v6158 = vpack.c.b16 %v6148, %v6147
      %v6159 = vpack.c.b16 %v6150, %v6149
      %v6160 = vpack.c.b16 %v6152, %v6151
      %6169 = vmatprep.subr.bf16.mxu0 0
      %6170 = vmatpush1.bf16.msra.mxu0 %v6153
      %6171 = vmatprep.subr.bf16.mxu0 0
      %6172 = vmatpush1.bf16.msra.mxu0 %v6154
      %6173 = vmatprep.subr.bf16.mxu0 0
      %6174 = vmatpush1.bf16.msra.mxu0 %v6155
      %6175 = vmatprep.subr.bf16.mxu0 0
      %6176 = vmatpush1.bf16.msra.mxu0 %v6156
      %6177 = vmatprep.subr.bf16.mxu0 0
      %6178 = vmatpush1.bf16.msra.mxu0 %v6157
      %6179 = vmatprep.subr.bf16.mxu0 0
      %6180 = vmatpush1.bf16.msra.mxu0 %v6158
      %6181 = vmatprep.subr.bf16.mxu0 0
      %6182 = vmatpush1.bf16.msra.mxu0 %v6159
      %6183 = vmatprep.subr.bf16.mxu0 0
      %6184 = vmatpush1.bf16.msra.mxu0 %v6160
      %6185 = vmatprep.subr.bf16.mxu0 0
      %6186 = vmatpush1.bf16.msra.mxu0 0
      %6187 = vmatprep.subr.bf16.mxu0 0
      %6188 = vmatpush1.bf16.msra.mxu0 0
      %6189 = vmatprep.subr.bf16.mxu0 0
      %6190 = vmatpush1.bf16.msra.mxu0 0
      %6191 = vmatprep.subr.bf16.mxu0 0
      %6192 = vmatpush1.bf16.msra.mxu0 0
      %6193 = vmatprep.subr.bf16.mxu0 0
      %6194 = vmatpush1.bf16.msra.mxu0 0
      %6195 = vmatprep.subr.bf16.mxu0 0
      %6196 = vmatpush1.bf16.msra.mxu0 0
      %6197 = vmatprep.subr.bf16.mxu0 0
      %6198 = vmatpush1.bf16.msra.mxu0 0
      %6199 = vmatprep.subr.bf16.mxu0 0
      %6200 = vmatpush1.bf16.msra.mxu0 0
      %6201 = vmatprep.mubr.bf16.mxu0 0
      %6202 = vmatmul.mubr.bf16.gmra.mrb[0].mxu0 %v5616
      %v6203 = vpop.f32.mrb[0].mxu0
      %v6204 = vadd.f32 0.0, %v6203
      %v6205 = vpop.f32.mrb[0].mxu0
      %v6206 = vpop.f32.mrb[0].mxu0
      %v6207 = vadd.f32 0.0, %v6206
      %v6208 = vpop.f32.mrb[0].mxu0
      %6209 = vmatprep.mubr.bf16.mxu0 0
      %6210 = vmatmul.mubr.bf16.gmra.mrb[0].mxu0 %v5617
      %v6211 = vpop.f32.mrb[0].mxu0
      %v6212 = vadd.f32 0.0, %v6211
      %v6213 = vpop.f32.mrb[0].mxu0
      %v6214 = vpop.f32.mrb[0].mxu0
      %v6215 = vadd.f32 0.0, %v6214
      %v6216 = vpop.f32.mrb[0].mxu0
      %6217 = vdwg.mxu0
      %v6218 = vadd.f32 %v6100, %v6204
      %v6219 = vadd.f32 %v6101, %v6207
      %v6220 = vadd.f32 %v6102, %v6212
      %v6221 = vadd.f32 %v6103, %v6215
      %v6222 = vmax.f32 %v6218, 0.0
      %v6223 = vmax.f32 %v6219, 0.0
      %v6224 = vmax.f32 %v6220, 0.0
      %v6225 = vmax.f32 %v6221, 0.0
      %v6226 = vpack.c.bf16 %v6223, %v6222
      %v6227 = vpack.c.bf16 %v6225, %v6224
      %s6228 = scalar_lea.vmem %s10, 32
      %v6229 = vld [vmem:[%s6228] sm:$0xf]
      %v6230 = vld [vmem:[%s6228 + $0x4] sm:$0xf]
      %v6231 = vld [vmem:[%s6228 + $0x8] sm:$0xf]
      %v6232 = vld [vmem:[%s6228 + $0xc] sm:$0xf]
      %v6233 = vld [vmem:[%s6228 + $0x10] sm:$0xf]
      %v6234 = vld [vmem:[%s6228 + $0x14] sm:$0xf]
      %v6235 = vld [vmem:[%s6228 + $0x18] sm:$0xf]
      %v6236 = vld [vmem:[%s6228 + $0x1c] sm:$0xf]
      %v6245 = vunpack.c.l.b16 %v6229
      %v6246 = vunpack.c.l.b16 %v6230
      %v6247 = vunpack.c.l.b16 %v6231
      %v6248 = vunpack.c.l.b16 %v6232
      %v6249 = vunpack.c.l.b16 %v6233
      %v6250 = vunpack.c.l.b16 %v6234
      %v6251 = vunpack.c.l.b16 %v6235
      %v6252 = vunpack.c.l.b16 %v6236
      %v6253 = vpack.c.b16 %v6246, %v6245
      %v6254 = vpack.c.b16 %v6248, %v6247
      %v6255 = vpack.c.b16 %v6250, %v6249
      %v6256 = vpack.c.b16 %v6252, %v6251
      %vm6257 = vcmask 261120
      %v6259 = vsel %vm6257, %v6253, 0
      %v6262 = vsel %vm6257, %v6254, 0
      %v6265 = vsel %vm6257, %v6255, 0
      %v6268 = vsel %vm6257, %v6256, 0
      %6270 = vmatprep.subr.bf16.mxu0 0
      %6271 = vmatpush1.bf16.msra.mxu0 %v6226
      %6272 = vmatprep.subr.bf16.mxu0 0
      %6273 = vmatpush1.bf16.msra.mxu0 %v6227
      %6274 = vmatprep.subr.bf16.mxu0 0
      %6275 = vmatpush1.bf16.msra.mxu0 0
      %6276 = vmatprep.subr.bf16.mxu0 0
      %6277 = vmatpush1.bf16.msra.mxu0 0
      %6278 = vmatprep.subr.bf16.mxu0 0
      %6279 = vmatpush1.bf16.msra.mxu0 0
      %6280 = vmatprep.subr.bf16.mxu0 0
      %6281 = vmatpush1.bf16.msra.mxu0 0
      %6282 = vmatprep.subr.bf16.mxu0 0
      %6283 = vmatpush1.bf16.msra.mxu0 0
      %6284 = vmatprep.subr.bf16.mxu0 0
      %6285 = vmatpush1.bf16.msra.mxu0 0
      %6286 = vmatprep.subr.bf16.mxu0 0
      %6287 = vmatpush1.bf16.msra.mxu0 0
      %6288 = vmatprep.subr.bf16.mxu0 0
      %6289 = vmatpush1.bf16.msra.mxu0 0
      %6290 = vmatprep.subr.bf16.mxu0 0
      %6291 = vmatpush1.bf16.msra.mxu0 0
      %6292 = vmatprep.subr.bf16.mxu0 0
      %6293 = vmatpush1.bf16.msra.mxu0 0
      %6294 = vmatprep.subr.bf16.mxu0 0
      %6295 = vmatpush1.bf16.msra.mxu0 0
      %6296 = vmatprep.subr.bf16.mxu0 0
      %6297 = vmatpush1.bf16.msra.mxu0 0
      %6298 = vmatprep.subr.bf16.mxu0 0
      %6299 = vmatpush1.bf16.msra.mxu0 0
      %6300 = vmatprep.subr.bf16.mxu0 0
      %6301 = vmatpush1.bf16.msra.mxu0 0
      %6302 = vmatprep.mubr.bf16.mxu0 0
      %6303 = vmatmul.mubr.bf16.gmra.mrb[0].mxu0 %v6259
      %v6304 = vpop.f32.mrb[0].mxu0
      %v6305 = vadd.f32 0.0, %v6304
      %v6306 = vpop.f32.mrb[0].mxu0
      %v6307 = vpop.f32.mrb[0].mxu0
      %v6308 = vadd.f32 0.0, %v6307
      %v6309 = vpop.f32.mrb[0].mxu0
      %6310 = vmatprep.mubr.bf16.mxu0 0
      %6311 = vmatmul.mubr.bf16.gmra.mrb[0].mxu0 %v6262
      %v6312 = vpop.f32.mrb[0].mxu0
      %v6313 = vadd.f32 0.0, %v6312
      %v6314 = vpop.f32.mrb[0].mxu0
      %v6315 = vpop.f32.mrb[0].mxu0
      %v6316 = vadd.f32 0.0, %v6315
      %v6317 = vpop.f32.mrb[0].mxu0
      %6318 = vmatprep.mubr.bf16.mxu0 0
      %6319 = vmatmul.mubr.bf16.gmra.mrb[0].mxu0 %v6265
      %v6320 = vpop.f32.mrb[0].mxu0
      %v6321 = vadd.f32 0.0, %v6320
      %v6322 = vpop.f32.mrb[0].mxu0
      %v6323 = vpop.f32.mrb[0].mxu0
      %v6324 = vadd.f32 0.0, %v6323
      %v6325 = vpop.f32.mrb[0].mxu0
      %6326 = vmatprep.mubr.bf16.mxu0 0
      %6327 = vmatmul.mubr.bf16.gmra.mrb[0].mxu0 %v6268
      %v6328 = vpop.f32.mrb[0].mxu0
      %v6329 = vadd.f32 0.0, %v6328
      %v6330 = vpop.f32.mrb[0].mxu0
      %v6331 = vpop.f32.mrb[0].mxu0
      %v6332 = vadd.f32 0.0, %v6331
      %v6333 = vpop.f32.mrb[0].mxu0
      %6334 = vdwg.mxu0
      %v6343 = vunpack.c.l.b16 %v5742
      %v6344 = vunpack.c.l.b16 %v5743
      %v6345 = vunpack.c.l.b16 %v5744
      %v6346 = vunpack.c.l.b16 %v5745
      %v6347 = vunpack.c.l.b16 %v5746
      %v6348 = vunpack.c.l.b16 %v5747
      %v6349 = vunpack.c.l.b16 %v5748
      %v6350 = vunpack.c.l.b16 %v5749
      %v6351 = vpack.c.b16 %v6344, %v6343
      %v6352 = vpack.c.b16 %v6346, %v6345
      %v6353 = vpack.c.b16 %v6348, %v6347
      %v6354 = vpack.c.b16 %v6350, %v6349
      %v6356 = vsel %vm6257, %v6351, 0
      %v6359 = vsel %vm6257, %v6352, 0
      %v6362 = vsel %vm6257, %v6353, 0
      %v6365 = vsel %vm6257, %v6354, 0
      %6367 = vmatprep.subr.bf16.mxu0 0
      %6368 = vmatpush1.bf16.msra.mxu0 %v5740
      %6369 = vmatprep.subr.bf16.mxu0 0
      %6370 = vmatpush1.bf16.msra.mxu0 %v5741
      %6371 = vmatprep.subr.bf16.mxu0 0
      %6372 = vmatpush1.bf16.msra.mxu0 0
      %6373 = vmatprep.subr.bf16.mxu0 0
      %6374 = vmatpush1.bf16.msra.mxu0 0
      %6375 = vmatprep.subr.bf16.mxu0 0
      %6376 = vmatpush1.bf16.msra.mxu0 0
      %6377 = vmatprep.subr.bf16.mxu0 0
      %6378 = vmatpush1.bf16.msra.mxu0 0
      %6379 = vmatprep.subr.bf16.mxu0 0
      %6380 = vmatpush1.bf16.msra.mxu0 0
      %6381 = vmatprep.subr.bf16.mxu0 0
      %6382 = vmatpush1.bf16.msra.mxu0 0
      %6383 = vmatprep.subr.bf16.mxu0 0
      %6384 = vmatpush1.bf16.msra.mxu0 0
      %6385 = vmatprep.subr.bf16.mxu0 0
      %6386 = vmatpush1.bf16.msra.mxu0 0
      %6387 = vmatprep.subr.bf16.mxu0 0
      %6388 = vmatpush1.bf16.msra.mxu0 0
      %6389 = vmatprep.subr.bf16.mxu0 0
      %6390 = vmatpush1.bf16.msra.mxu0 0
      %6391 = vmatprep.subr.bf16.mxu0 0
      %6392 = vmatpush1.bf16.msra.mxu0 0
      %6393 = vmatprep.subr.bf16.mxu0 0
      %6394 = vmatpush1.bf16.msra.mxu0 0
      %6395 = vmatprep.subr.bf16.mxu0 0
      %6396 = vmatpush1.bf16.msra.mxu0 0
      %6397 = vmatprep.subr.bf16.mxu0 0
      %6398 = vmatpush1.bf16.msra.mxu0 0
      %6399 = vmatprep.mubr.bf16.mxu0 0
      %6400 = vmatmul.mubr.bf16.gmra.mrb[0].mxu0 %v6356
      %v6401 = vpop.f32.mrb[0].mxu0
      %v6402 = vadd.f32 %v6305, %v6401
      %v6403 = vpop.f32.mrb[0].mxu0
      %v6404 = vpop.f32.mrb[0].mxu0
      %v6405 = vadd.f32 %v6308, %v6404
      %v6406 = vpop.f32.mrb[0].mxu0
      %6407 = vmatprep.mubr.bf16.mxu0 0
      %6408 = vmatmul.mubr.bf16.gmra.mrb[0].mxu0 %v6359
      %v6409 = vpop.f32.mrb[0].mxu0
      %v6410 = vadd.f32 %v6313, %v6409
      %v6411 = vpop.f32.mrb[0].mxu0
      %v6412 = vpop.f32.mrb[0].mxu0
      %v6413 = vadd.f32 %v6316, %v6412
      %v6414 = vpop.f32.mrb[0].mxu0
      %6415 = vmatprep.mubr.bf16.mxu0 0
      %6416 = vmatmul.mubr.bf16.gmra.mrb[0].mxu0 %v6362
      %v6417 = vpop.f32.mrb[0].mxu0
      %v6418 = vadd.f32 %v6321, %v6417
      %v6419 = vpop.f32.mrb[0].mxu0
      %v6420 = vpop.f32.mrb[0].mxu0
      %v6421 = vadd.f32 %v6324, %v6420
      %v6422 = vpop.f32.mrb[0].mxu0
      %6423 = vmatprep.mubr.bf16.mxu0 0
      %6424 = vmatmul.mubr.bf16.gmra.mrb[0].mxu0 %v6365
      %v6425 = vpop.f32.mrb[0].mxu0
      %v6426 = vadd.f32 %v6329, %v6425
      %v6427 = vpop.f32.mrb[0].mxu0
      %v6428 = vpop.f32.mrb[0].mxu0
      %v6429 = vadd.f32 %v6332, %v6428
      %v6430 = vpop.f32.mrb[0].mxu0
      %6431 = vdwg.mxu0
      %s6432 = scalar_lea.vmem %s8, 512
      %v6433 = vld [vmem:[%s6432] sm:$0xf]
      %v6434 = vld [vmem:[%s6432 + $0x4] sm:$0xf]
      %v6435 = vld [vmem:[%s6432 + $0x8] sm:$0xf]
      %v6436 = vld [vmem:[%s6432 + $0xc] sm:$0xf]
      %v6437 = vld [vmem:[%s6432 + $0x10] sm:$0xf]
      %v6438 = vld [vmem:[%s6432 + $0x14] sm:$0xf]
      %v6439 = vld [vmem:[%s6432 + $0x18] sm:$0xf]
      %v6440 = vld [vmem:[%s6432 + $0x1c] sm:$0xf]
      %v6441 = vld [vmem:[%s6432 + $0x20] sm:$0xf]
      %v6442 = vld [vmem:[%s6432 + $0x24] sm:$0xf]
      %v6443 = vld [vmem:[%s6432 + $0x28] sm:$0xf]
      %v6444 = vld [vmem:[%s6432 + $0x2c] sm:$0xf]
      %v6445 = vld [vmem:[%s6432 + $0x30] sm:$0xf]
      %v6446 = vld [vmem:[%s6432 + $0x34] sm:$0xf]
      %v6447 = vld [vmem:[%s6432 + $0x38] sm:$0xf]
      %v6448 = vld [vmem:[%s6432 + $0x3c] sm:$0xf]
      %v6465 = vunpack.c.l.b16 %v6433
      %v6466 = vunpack.c.l.b16 %v6434
      %v6467 = vunpack.c.l.b16 %v6435
      %v6468 = vunpack.c.l.b16 %v6436
      %v6469 = vunpack.c.l.b16 %v6437
      %v6470 = vunpack.c.l.b16 %v6438
      %v6471 = vunpack.c.l.b16 %v6439
      %v6472 = vunpack.c.l.b16 %v6440
      %v6473 = vunpack.c.l.b16 %v6441
      %v6474 = vunpack.c.l.b16 %v6442
      %v6475 = vunpack.c.l.b16 %v6443
      %v6476 = vunpack.c.l.b16 %v6444
      %v6477 = vunpack.c.l.b16 %v6445
      %v6478 = vunpack.c.l.b16 %v6446
      %v6479 = vunpack.c.l.b16 %v6447
      %v6480 = vunpack.c.l.b16 %v6448
      %v6481 = vpack.c.b16 %v6466, %v6465
      %v6482 = vpack.c.b16 %v6468, %v6467
      %v6483 = vpack.c.b16 %v6470, %v6469
      %v6484 = vpack.c.b16 %v6472, %v6471
      %v6485 = vpack.c.b16 %v6474, %v6473
      %v6486 = vpack.c.b16 %v6476, %v6475
      %v6487 = vpack.c.b16 %v6478, %v6477
      %v6488 = vpack.c.b16 %v6480, %v6479
      %6497 = vmatprep.subr.bf16.mxu0 0
      %6498 = vmatpush1.bf16.msra.mxu0 %v6481
      %6499 = vmatprep.subr.bf16.mxu0 0
      %6500 = vmatpush1.bf16.msra.mxu0 %v6482
      %6501 = vmatprep.subr.bf16.mxu0 0
      %6502 = vmatpush1.bf16.msra.mxu0 %v6483
      %6503 = vmatprep.subr.bf16.mxu0 0
      %6504 = vmatpush1.bf16.msra.mxu0 %v6484
      %6505 = vmatprep.subr.bf16.mxu0 0
      %6506 = vmatpush1.bf16.msra.mxu0 %v6485
      %6507 = vmatprep.subr.bf16.mxu0 0
      %6508 = vmatpush1.bf16.msra.mxu0 %v6486
      %6509 = vmatprep.subr.bf16.mxu0 0
      %6510 = vmatpush1.bf16.msra.mxu0 %v6487
      %6511 = vmatprep.subr.bf16.mxu0 0
      %6512 = vmatpush1.bf16.msra.mxu0 %v6488
      %6513 = vmatprep.subr.bf16.mxu0 0
      %6514 = vmatpush1.bf16.msra.mxu0 0
      %6515 = vmatprep.subr.bf16.mxu0 0
      %6516 = vmatpush1.bf16.msra.mxu0 0
      %6517 = vmatprep.subr.bf16.mxu0 0
      %6518 = vmatpush1.bf16.msra.mxu0 0
      %6519 = vmatprep.subr.bf16.mxu0 0
      %6520 = vmatpush1.bf16.msra.mxu0 0
      %6521 = vmatprep.subr.bf16.mxu0 0
      %6522 = vmatpush1.bf16.msra.mxu0 0
      %6523 = vmatprep.subr.bf16.mxu0 0
      %6524 = vmatpush1.bf16.msra.mxu0 0
      %6525 = vmatprep.subr.bf16.mxu0 0
      %6526 = vmatpush1.bf16.msra.mxu0 0
      %6527 = vmatprep.subr.bf16.mxu0 0
      %6528 = vmatpush1.bf16.msra.mxu0 0
      %6529 = vmatprep.mubr.bf16.mxu0 0
      %6530 = vmatmul.mubr.bf16.gmra.mrb[0].mxu0 %v5251
      %v6531 = vpop.f32.mrb[0].mxu0
      %v6532 = vadd.f32 0.0, %v6531
      %v6533 = vpop.f32.mrb[0].mxu0
      %v6534 = vpop.f32.mrb[0].mxu0
      %v6535 = vadd.f32 0.0, %v6534
      %v6536 = vpop.f32.mrb[0].mxu0
      %6537 = vmatprep.mubr.bf16.mxu0 0
      %6538 = vmatmul.mubr.bf16.gmra.mrb[0].mxu0 %v5252
      %v6539 = vpop.f32.mrb[0].mxu0
      %v6540 = vadd.f32 0.0, %v6539
      %v6541 = vpop.f32.mrb[0].mxu0
      %v6542 = vpop.f32.mrb[0].mxu0
      %v6543 = vadd.f32 0.0, %v6542
      %v6544 = vpop.f32.mrb[0].mxu0
      %6545 = vdwg.mxu0
      %v6546 = vadd.f32 %v5370, %v6532
      %v6547 = vadd.f32 %v5370, %v6535
      %v6548 = vadd.f32 %v5370, %v6540
      %v6549 = vadd.f32 %v5370, %v6543
      %s6550 = scalar_lea.vmem %s8, 576
      %v6551 = vld [vmem:[%s6550] sm:$0xf]
      %v6552 = vld [vmem:[%s6550 + $0x4] sm:$0xf]
      %v6553 = vld [vmem:[%s6550 + $0x8] sm:$0xf]
      %v6554 = vld [vmem:[%s6550 + $0xc] sm:$0xf]
      %v6555 = vld [vmem:[%s6550 + $0x10] sm:$0xf]
      %v6556 = vld [vmem:[%s6550 + $0x14] sm:$0xf]
      %v6557 = vld [vmem:[%s6550 + $0x18] sm:$0xf]
      %v6558 = vld [vmem:[%s6550 + $0x1c] sm:$0xf]
      %v6559 = vld [vmem:[%s6550 + $0x20] sm:$0xf]
      %v6560 = vld [vmem:[%s6550 + $0x24] sm:$0xf]
      %v6561 = vld [vmem:[%s6550 + $0x28] sm:$0xf]
      %v6562 = vld [vmem:[%s6550 + $0x2c] sm:$0xf]
      %v6563 = vld [vmem:[%s6550 + $0x30] sm:$0xf]
      %v6564 = vld [vmem:[%s6550 + $0x34] sm:$0xf]
      %v6565 = vld [vmem:[%s6550 + $0x38] sm:$0xf]
      %v6566 = vld [vmem:[%s6550 + $0x3c] sm:$0xf]
      %v6583 = vunpack.c.l.b16 %v6551
      %v6584 = vunpack.c.l.b16 %v6552
      %v6585 = vunpack.c.l.b16 %v6553
      %v6586 = vunpack.c.l.b16 %v6554
      %v6587 = vunpack.c.l.b16 %v6555
      %v6588 = vunpack.c.l.b16 %v6556
      %v6589 = vunpack.c.l.b16 %v6557
      %v6590 = vunpack.c.l.b16 %v6558
      %v6591 = vunpack.c.l.b16 %v6559
      %v6592 = vunpack.c.l.b16 %v6560
      %v6593 = vunpack.c.l.b16 %v6561
      %v6594 = vunpack.c.l.b16 %v6562
      %v6595 = vunpack.c.l.b16 %v6563
      %v6596 = vunpack.c.l.b16 %v6564
      %v6597 = vunpack.c.l.b16 %v6565
      %v6598 = vunpack.c.l.b16 %v6566
      %v6599 = vpack.c.b16 %v6584, %v6583
      %v6600 = vpack.c.b16 %v6586, %v6585
      %v6601 = vpack.c.b16 %v6588, %v6587
      %v6602 = vpack.c.b16 %v6590, %v6589
      %v6603 = vpack.c.b16 %v6592, %v6591
      %v6604 = vpack.c.b16 %v6594, %v6593
      %v6605 = vpack.c.b16 %v6596, %v6595
      %v6606 = vpack.c.b16 %v6598, %v6597
      %6615 = vmatprep.subr.bf16.mxu0 0
      %6616 = vmatpush1.bf16.msra.mxu0 %v6599
      %6617 = vmatprep.subr.bf16.mxu0 0
      %6618 = vmatpush1.bf16.msra.mxu0 %v6600
      %6619 = vmatprep.subr.bf16.mxu0 0
      %6620 = vmatpush1.bf16.msra.mxu0 %v6601
      %6621 = vmatprep.subr.bf16.mxu0 0
      %6622 = vmatpush1.bf16.msra.mxu0 %v6602
      %6623 = vmatprep.subr.bf16.mxu0 0
      %6624 = vmatpush1.bf16.msra.mxu0 %v6603
      %6625 = vmatprep.subr.bf16.mxu0 0
      %6626 = vmatpush1.bf16.msra.mxu0 %v6604
      %6627 = vmatprep.subr.bf16.mxu0 0
      %6628 = vmatpush1.bf16.msra.mxu0 %v6605
      %6629 = vmatprep.subr.bf16.mxu0 0
      %6630 = vmatpush1.bf16.msra.mxu0 %v6606
      %6631 = vmatprep.subr.bf16.mxu0 0
      %6632 = vmatpush1.bf16.msra.mxu0 0
      %6633 = vmatprep.subr.bf16.mxu0 0
      %6634 = vmatpush1.bf16.msra.mxu0 0
      %6635 = vmatprep.subr.bf16.mxu0 0
      %6636 = vmatpush1.bf16.msra.mxu0 0
      %6637 = vmatprep.subr.bf16.mxu0 0
      %6638 = vmatpush1.bf16.msra.mxu0 0
      %6639 = vmatprep.subr.bf16.mxu0 0
      %6640 = vmatpush1.bf16.msra.mxu0 0
      %6641 = vmatprep.subr.bf16.mxu0 0
      %6642 = vmatpush1.bf16.msra.mxu0 0
      %6643 = vmatprep.subr.bf16.mxu0 0
      %6644 = vmatpush1.bf16.msra.mxu0 0
      %6645 = vmatprep.subr.bf16.mxu0 0
      %6646 = vmatpush1.bf16.msra.mxu0 0
      %6647 = vmatprep.mubr.bf16.mxu0 0
      %6648 = vmatmul.mubr.bf16.gmra.mrb[0].mxu0 %v5376
      %v6649 = vpop.f32.mrb[0].mxu0
      %v6650 = vadd.f32 0.0, %v6649
      %v6651 = vpop.f32.mrb[0].mxu0
      %v6652 = vpop.f32.mrb[0].mxu0
      %v6653 = vadd.f32 0.0, %v6652
      %v6654 = vpop.f32.mrb[0].mxu0
      %6655 = vmatprep.mubr.bf16.mxu0 0
      %6656 = vmatmul.mubr.bf16.gmra.mrb[0].mxu0 %v5377
      %v6657 = vpop.f32.mrb[0].mxu0
      %v6658 = vadd.f32 0.0, %v6657
      %v6659 = vpop.f32.mrb[0].mxu0
      %v6660 = vpop.f32.mrb[0].mxu0
      %v6661 = vadd.f32 0.0, %v6660
      %v6662 = vpop.f32.mrb[0].mxu0
      %6663 = vdwg.mxu0
      %v6664 = vadd.f32 %v6546, %v6650
      %v6665 = vadd.f32 %v6547, %v6653
      %v6666 = vadd.f32 %v6548, %v6658
      %v6667 = vadd.f32 %v6549, %v6661
      %s6668 = scalar_lea.vmem %s8, 640
      %v6669 = vld [vmem:[%s6668] sm:$0xf]
      %v6670 = vld [vmem:[%s6668 + $0x4] sm:$0xf]
      %v6671 = vld [vmem:[%s6668 + $0x8] sm:$0xf]
      %v6672 = vld [vmem:[%s6668 + $0xc] sm:$0xf]
      %v6673 = vld [vmem:[%s6668 + $0x10] sm:$0xf]
      %v6674 = vld [vmem:[%s6668 + $0x14] sm:$0xf]
      %v6675 = vld [vmem:[%s6668 + $0x18] sm:$0xf]
      %v6676 = vld [vmem:[%s6668 + $0x1c] sm:$0xf]
      %v6677 = vld [vmem:[%s6668 + $0x20] sm:$0xf]
      %v6678 = vld [vmem:[%s6668 + $0x24] sm:$0xf]
      %v6679 = vld [vmem:[%s6668 + $0x28] sm:$0xf]
      %v6680 = vld [vmem:[%s6668 + $0x2c] sm:$0xf]
      %v6681 = vld [vmem:[%s6668 + $0x30] sm:$0xf]
      %v6682 = vld [vmem:[%s6668 + $0x34] sm:$0xf]
      %v6683 = vld [vmem:[%s6668 + $0x38] sm:$0xf]
      %v6684 = vld [vmem:[%s6668 + $0x3c] sm:$0xf]
      %v6701 = vunpack.c.l.b16 %v6669
      %v6702 = vunpack.c.l.b16 %v6670
      %v6703 = vunpack.c.l.b16 %v6671
      %v6704 = vunpack.c.l.b16 %v6672
      %v6705 = vunpack.c.l.b16 %v6673
      %v6706 = vunpack.c.l.b16 %v6674
      %v6707 = vunpack.c.l.b16 %v6675
      %v6708 = vunpack.c.l.b16 %v6676
      %v6709 = vunpack.c.l.b16 %v6677
      %v6710 = vunpack.c.l.b16 %v6678
      %v6711 = vunpack.c.l.b16 %v6679
      %v6712 = vunpack.c.l.b16 %v6680
      %v6713 = vunpack.c.l.b16 %v6681
      %v6714 = vunpack.c.l.b16 %v6682
      %v6715 = vunpack.c.l.b16 %v6683
      %v6716 = vunpack.c.l.b16 %v6684
      %v6717 = vpack.c.b16 %v6702, %v6701
      %v6718 = vpack.c.b16 %v6704, %v6703
      %v6719 = vpack.c.b16 %v6706, %v6705
      %v6720 = vpack.c.b16 %v6708, %v6707
      %v6721 = vpack.c.b16 %v6710, %v6709
      %v6722 = vpack.c.b16 %v6712, %v6711
      %v6723 = vpack.c.b16 %v6714, %v6713
      %v6724 = vpack.c.b16 %v6716, %v6715
      %6733 = vmatprep.subr.bf16.mxu0 0
      %6734 = vmatpush1.bf16.msra.mxu0 %v6717
      %6735 = vmatprep.subr.bf16.mxu0 0
      %6736 = vmatpush1.bf16.msra.mxu0 %v6718
      %6737 = vmatprep.subr.bf16.mxu0 0
      %6738 = vmatpush1.bf16.msra.mxu0 %v6719
      %6739 = vmatprep.subr.bf16.mxu0 0
      %6740 = vmatpush1.bf16.msra.mxu0 %v6720
      %6741 = vmatprep.subr.bf16.mxu0 0
      %6742 = vmatpush1.bf16.msra.mxu0 %v6721
      %6743 = vmatprep.subr.bf16.mxu0 0
      %6744 = vmatpush1.bf16.msra.mxu0 %v6722
      %6745 = vmatprep.subr.bf16.mxu0 0
      %6746 = vmatpush1.bf16.msra.mxu0 %v6723
      %6747 = vmatprep.subr.bf16.mxu0 0
      %6748 = vmatpush1.bf16.msra.mxu0 %v6724
      %6749 = vmatprep.subr.bf16.mxu0 0
      %6750 = vmatpush1.bf16.msra.mxu0 0
      %6751 = vmatprep.subr.bf16.mxu0 0
      %6752 = vmatpush1.bf16.msra.mxu0 0
      %6753 = vmatprep.subr.bf16.mxu0 0
      %6754 = vmatpush1.bf16.msra.mxu0 0
      %6755 = vmatprep.subr.bf16.mxu0 0
      %6756 = vmatpush1.bf16.msra.mxu0 0
      %6757 = vmatprep.subr.bf16.mxu0 0
      %6758 = vmatpush1.bf16.msra.mxu0 0
      %6759 = vmatprep.subr.bf16.mxu0 0
      %6760 = vmatpush1.bf16.msra.mxu0 0
      %6761 = vmatprep.subr.bf16.mxu0 0
      %6762 = vmatpush1.bf16.msra.mxu0 0
      %6763 = vmatprep.subr.bf16.mxu0 0
      %6764 = vmatpush1.bf16.msra.mxu0 0
      %6765 = vmatprep.mubr.bf16.mxu0 0
      %6766 = vmatmul.mubr.bf16.gmra.mrb[0].mxu0 %v5496
      %v6767 = vpop.f32.mrb[0].mxu0
      %v6768 = vadd.f32 0.0, %v6767
      %v6769 = vpop.f32.mrb[0].mxu0
      %v6770 = vpop.f32.mrb[0].mxu0
      %v6771 = vadd.f32 0.0, %v6770
      %v6772 = vpop.f32.mrb[0].mxu0
      %6773 = vmatprep.mubr.bf16.mxu0 0
      %6774 = vmatmul.mubr.bf16.gmra.mrb[0].mxu0 %v5497
      %v6775 = vpop.f32.mrb[0].mxu0
      %v6776 = vadd.f32 0.0, %v6775
      %v6777 = vpop.f32.mrb[0].mxu0
      %v6778 = vpop.f32.mrb[0].mxu0
      %v6779 = vadd.f32 0.0, %v6778
      %v6780 = vpop.f32.mrb[0].mxu0
      %6781 = vdwg.mxu0
      %v6782 = vadd.f32 %v6664, %v6768
      %v6783 = vadd.f32 %v6665, %v6771
      %v6784 = vadd.f32 %v6666, %v6776
      %v6785 = vadd.f32 %v6667, %v6779
      %s6786 = scalar_lea.vmem %s8, 704
      %v6787 = vld [vmem:[%s6786] sm:$0xf]
      %v6788 = vld [vmem:[%s6786 + $0x4] sm:$0xf]
      %v6789 = vld [vmem:[%s6786 + $0x8] sm:$0xf]
      %v6790 = vld [vmem:[%s6786 + $0xc] sm:$0xf]
      %v6791 = vld [vmem:[%s6786 + $0x10] sm:$0xf]
      %v6792 = vld [vmem:[%s6786 + $0x14] sm:$0xf]
      %v6793 = vld [vmem:[%s6786 + $0x18] sm:$0xf]
      %v6794 = vld [vmem:[%s6786 + $0x1c] sm:$0xf]
      %v6795 = vld [vmem:[%s6786 + $0x20] sm:$0xf]
      %v6796 = vld [vmem:[%s6786 + $0x24] sm:$0xf]
      %v6797 = vld [vmem:[%s6786 + $0x28] sm:$0xf]
      %v6798 = vld [vmem:[%s6786 + $0x2c] sm:$0xf]
      %v6799 = vld [vmem:[%s6786 + $0x30] sm:$0xf]
      %v6800 = vld [vmem:[%s6786 + $0x34] sm:$0xf]
      %v6801 = vld [vmem:[%s6786 + $0x38] sm:$0xf]
      %v6802 = vld [vmem:[%s6786 + $0x3c] sm:$0xf]
      %v6819 = vunpack.c.l.b16 %v6787
      %v6820 = vunpack.c.l.b16 %v6788
      %v6821 = vunpack.c.l.b16 %v6789
      %v6822 = vunpack.c.l.b16 %v6790
      %v6823 = vunpack.c.l.b16 %v6791
      %v6824 = vunpack.c.l.b16 %v6792
      %v6825 = vunpack.c.l.b16 %v6793
      %v6826 = vunpack.c.l.b16 %v6794
      %v6827 = vunpack.c.l.b16 %v6795
      %v6828 = vunpack.c.l.b16 %v6796
      %v6829 = vunpack.c.l.b16 %v6797
      %v6830 = vunpack.c.l.b16 %v6798
      %v6831 = vunpack.c.l.b16 %v6799
      %v6832 = vunpack.c.l.b16 %v6800
      %v6833 = vunpack.c.l.b16 %v6801
      %v6834 = vunpack.c.l.b16 %v6802
      %v6835 = vpack.c.b16 %v6820, %v6819
      %v6836 = vpack.c.b16 %v6822, %v6821
      %v6837 = vpack.c.b16 %v6824, %v6823
      %v6838 = vpack.c.b16 %v6826, %v6825
      %v6839 = vpack.c.b16 %v6828, %v6827
      %v6840 = vpack.c.b16 %v6830, %v6829
      %v6841 = vpack.c.b16 %v6832, %v6831
      %v6842 = vpack.c.b16 %v6834, %v6833
      %6851 = vmatprep.subr.bf16.mxu0 0
      %6852 = vmatpush1.bf16.msra.mxu0 %v6835
      %6853 = vmatprep.subr.bf16.mxu0 0
      %6854 = vmatpush1.bf16.msra.mxu0 %v6836
      %6855 = vmatprep.subr.bf16.mxu0 0
      %6856 = vmatpush1.bf16.msra.mxu0 %v6837
      %6857 = vmatprep.subr.bf16.mxu0 0
      %6858 = vmatpush1.bf16.msra.mxu0 %v6838
      %6859 = vmatprep.subr.bf16.mxu0 0
      %6860 = vmatpush1.bf16.msra.mxu0 %v6839
      %6861 = vmatprep.subr.bf16.mxu0 0
      %6862 = vmatpush1.bf16.msra.mxu0 %v6840
      %6863 = vmatprep.subr.bf16.mxu0 0
      %6864 = vmatpush1.bf16.msra.mxu0 %v6841
      %6865 = vmatprep.subr.bf16.mxu0 0
      %6866 = vmatpush1.bf16.msra.mxu0 %v6842
      %6867 = vmatprep.subr.bf16.mxu0 0
      %6868 = vmatpush1.bf16.msra.mxu0 0
      %6869 = vmatprep.subr.bf16.mxu0 0
      %6870 = vmatpush1.bf16.msra.mxu0 0
      %6871 = vmatprep.subr.bf16.mxu0 0
      %6872 = vmatpush1.bf16.msra.mxu0 0
      %6873 = vmatprep.subr.bf16.mxu0 0
      %6874 = vmatpush1.bf16.msra.mxu0 0
      %6875 = vmatprep.subr.bf16.mxu0 0
      %6876 = vmatpush1.bf16.msra.mxu0 0
      %6877 = vmatprep.subr.bf16.mxu0 0
      %6878 = vmatpush1.bf16.msra.mxu0 0
      %6879 = vmatprep.subr.bf16.mxu0 0
      %6880 = vmatpush1.bf16.msra.mxu0 0
      %6881 = vmatprep.subr.bf16.mxu0 0
      %6882 = vmatpush1.bf16.msra.mxu0 0
      %6883 = vmatprep.mubr.bf16.mxu0 0
      %6884 = vmatmul.mubr.bf16.gmra.mrb[0].mxu0 %v5616
      %v6885 = vpop.f32.mrb[0].mxu0
      %v6886 = vadd.f32 0.0, %v6885
      %v6887 = vpop.f32.mrb[0].mxu0
      %v6888 = vpop.f32.mrb[0].mxu0
      %v6889 = vadd.f32 0.0, %v6888
      %v6890 = vpop.f32.mrb[0].mxu0
      %6891 = vmatprep.mubr.bf16.mxu0 0
      %6892 = vmatmul.mubr.bf16.gmra.mrb[0].mxu0 %v5617
      %v6893 = vpop.f32.mrb[0].mxu0
      %v6894 = vadd.f32 0.0, %v6893
      %v6895 = vpop.f32.mrb[0].mxu0
      %v6896 = vpop.f32.mrb[0].mxu0
      %v6897 = vadd.f32 0.0, %v6896
      %v6898 = vpop.f32.mrb[0].mxu0
      %6899 = vdwg.mxu0
      %v6900 = vadd.f32 %v6782, %v6886
      %v6901 = vadd.f32 %v6783, %v6889
      %v6902 = vadd.f32 %v6784, %v6894
      %v6903 = vadd.f32 %v6785, %v6897
      %v6904 = vmax.f32 %v6900, 0.0
      %v6905 = vmax.f32 %v6901, 0.0
      %v6906 = vmax.f32 %v6902, 0.0
      %v6907 = vmax.f32 %v6903, 0.0
      %v6908 = vpack.c.bf16 %v6905, %v6904
      %v6909 = vpack.c.bf16 %v6907, %v6906
      %s6910 = scalar_lea.vmem %s10, 64
      %v6911 = vld [vmem:[%s6910] sm:$0xf]
      %v6912 = vld [vmem:[%s6910 + $0x4] sm:$0xf]
      %v6913 = vld [vmem:[%s6910 + $0x8] sm:$0xf]
      %v6914 = vld [vmem:[%s6910 + $0xc] sm:$0xf]
      %v6915 = vld [vmem:[%s6910 + $0x10] sm:$0xf]
      %v6916 = vld [vmem:[%s6910 + $0x14] sm:$0xf]
      %v6917 = vld [vmem:[%s6910 + $0x18] sm:$0xf]
      %v6918 = vld [vmem:[%s6910 + $0x1c] sm:$0xf]
      %v6927 = vunpack.c.l.b16 %v6911
      %v6928 = vunpack.c.l.b16 %v6912
      %v6929 = vunpack.c.l.b16 %v6913
      %v6930 = vunpack.c.l.b16 %v6914
      %v6931 = vunpack.c.l.b16 %v6915
      %v6932 = vunpack.c.l.b16 %v6916
      %v6933 = vunpack.c.l.b16 %v6917
      %v6934 = vunpack.c.l.b16 %v6918
      %v6935 = vpack.c.b16 %v6928, %v6927
      %v6936 = vpack.c.b16 %v6930, %v6929
      %v6937 = vpack.c.b16 %v6932, %v6931
      %v6938 = vpack.c.b16 %v6934, %v6933
      %v6940 = vsel %vm6257, %v6935, 0
      %v6943 = vsel %vm6257, %v6936, 0
      %v6946 = vsel %vm6257, %v6937, 0
      %v6949 = vsel %vm6257, %v6938, 0
      %6951 = vmatprep.subr.bf16.mxu0 0
      %6952 = vmatpush1.bf16.msra.mxu0 %v6908
      %6953 = vmatprep.subr.bf16.mxu0 0
      %6954 = vmatpush1.bf16.msra.mxu0 %v6909
      %6955 = vmatprep.subr.bf16.mxu0 0
      %6956 = vmatpush1.bf16.msra.mxu0 0
      %6957 = vmatprep.subr.bf16.mxu0 0
      %6958 = vmatpush1.bf16.msra.mxu0 0
      %6959 = vmatprep.subr.bf16.mxu0 0
      %6960 = vmatpush1.bf16.msra.mxu0 0
      %6961 = vmatprep.subr.bf16.mxu0 0
      %6962 = vmatpush1.bf16.msra.mxu0 0
      %6963 = vmatprep.subr.bf16.mxu0 0
      %6964 = vmatpush1.bf16.msra.mxu0 0
      %6965 = vmatprep.subr.bf16.mxu0 0
      %6966 = vmatpush1.bf16.msra.mxu0 0
      %6967 = vmatprep.subr.bf16.mxu0 0
      %6968 = vmatpush1.bf16.msra.mxu0 0
      %6969 = vmatprep.subr.bf16.mxu0 0
      %6970 = vmatpush1.bf16.msra.mxu0 0
      %6971 = vmatprep.subr.bf16.mxu0 0
      %6972 = vmatpush1.bf16.msra.mxu0 0
      %6973 = vmatprep.subr.bf16.mxu0 0
      %6974 = vmatpush1.bf16.msra.mxu0 0
      %6975 = vmatprep.subr.bf16.mxu0 0
      %6976 = vmatpush1.bf16.msra.mxu0 0
      %6977 = vmatprep.subr.bf16.mxu0 0
      %6978 = vmatpush1.bf16.msra.mxu0 0
      %6979 = vmatprep.subr.bf16.mxu0 0
      %6980 = vmatpush1.bf16.msra.mxu0 0
      %6981 = vmatprep.subr.bf16.mxu0 0
      %6982 = vmatpush1.bf16.msra.mxu0 0
      %6983 = vmatprep.mubr.bf16.mxu0 0
      %6984 = vmatmul.mubr.bf16.gmra.mrb[0].mxu0 %v6940
      %v6985 = vpop.f32.mrb[0].mxu0
      %v6986 = vadd.f32 0.0, %v6985
      %v6987 = vpop.f32.mrb[0].mxu0
      %v6988 = vpop.f32.mrb[0].mxu0
      %v6989 = vadd.f32 0.0, %v6988
      %v6990 = vpop.f32.mrb[0].mxu0
      %6991 = vmatprep.mubr.bf16.mxu0 0
      %6992 = vmatmul.mubr.bf16.gmra.mrb[0].mxu0 %v6943
      %v6993 = vpop.f32.mrb[0].mxu0
      %v6994 = vadd.f32 0.0, %v6993
      %v6995 = vpop.f32.mrb[0].mxu0
      %v6996 = vpop.f32.mrb[0].mxu0
      %v6997 = vadd.f32 0.0, %v6996
      %v6998 = vpop.f32.mrb[0].mxu0
      %6999 = vmatprep.mubr.bf16.mxu0 0
      %7000 = vmatmul.mubr.bf16.gmra.mrb[0].mxu0 %v6946
      %v7001 = vpop.f32.mrb[0].mxu0
      %v7002 = vadd.f32 0.0, %v7001
      %v7003 = vpop.f32.mrb[0].mxu0
      %v7004 = vpop.f32.mrb[0].mxu0
      %v7005 = vadd.f32 0.0, %v7004
      %v7006 = vpop.f32.mrb[0].mxu0
      %7007 = vmatprep.mubr.bf16.mxu0 0
      %7008 = vmatmul.mubr.bf16.gmra.mrb[0].mxu0 %v6949
      %v7009 = vpop.f32.mrb[0].mxu0
      %v7010 = vadd.f32 0.0, %v7009
      %v7011 = vpop.f32.mrb[0].mxu0
      %v7012 = vpop.f32.mrb[0].mxu0
      %v7013 = vadd.f32 0.0, %v7012
      %v7014 = vpop.f32.mrb[0].mxu0
      %7015 = vdwg.mxu0
      %v7016 = vadd.f32 %v6402, %v6986
      %v7017 = vadd.f32 %v6405, %v6989
      %v7018 = vadd.f32 %v6410, %v6994
      %v7019 = vadd.f32 %v6413, %v6997
      %v7020 = vadd.f32 %v6418, %v7002
      %v7021 = vadd.f32 %v6421, %v7005
      %v7022 = vadd.f32 %v6426, %v7010
      %v7023 = vadd.f32 %v6429, %v7013
      %s7024 = scalar_lea.vmem %s8, 768
      %v7025 = vld [vmem:[%s7024] sm:$0xf]
      %v7026 = vld [vmem:[%s7024 + $0x4] sm:$0xf]
      %v7027 = vld [vmem:[%s7024 + $0x8] sm:$0xf]
      %v7028 = vld [vmem:[%s7024 + $0xc] sm:$0xf]
      %v7029 = vld [vmem:[%s7024 + $0x10] sm:$0xf]
      %v7030 = vld [vmem:[%s7024 + $0x14] sm:$0xf]
      %v7031 = vld [vmem:[%s7024 + $0x18] sm:$0xf]
      %v7032 = vld [vmem:[%s7024 + $0x1c] sm:$0xf]
      %v7033 = vld [vmem:[%s7024 + $0x20] sm:$0xf]
      %v7034 = vld [vmem:[%s7024 + $0x24] sm:$0xf]
      %v7035 = vld [vmem:[%s7024 + $0x28] sm:$0xf]
      %v7036 = vld [vmem:[%s7024 + $0x2c] sm:$0xf]
      %v7037 = vld [vmem:[%s7024 + $0x30] sm:$0xf]
      %v7038 = vld [vmem:[%s7024 + $0x34] sm:$0xf]
      %v7039 = vld [vmem:[%s7024 + $0x38] sm:$0xf]
      %v7040 = vld [vmem:[%s7024 + $0x3c] sm:$0xf]
      %v7057 = vunpack.c.l.b16 %v7025
      %v7058 = vunpack.c.l.b16 %v7026
      %v7059 = vunpack.c.l.b16 %v7027
      %v7060 = vunpack.c.l.b16 %v7028
      %v7061 = vunpack.c.l.b16 %v7029
      %v7062 = vunpack.c.l.b16 %v7030
      %v7063 = vunpack.c.l.b16 %v7031
      %v7064 = vunpack.c.l.b16 %v7032
      %v7065 = vunpack.c.l.b16 %v7033
      %v7066 = vunpack.c.l.b16 %v7034
      %v7067 = vunpack.c.l.b16 %v7035
      %v7068 = vunpack.c.l.b16 %v7036
      %v7069 = vunpack.c.l.b16 %v7037
      %v7070 = vunpack.c.l.b16 %v7038
      %v7071 = vunpack.c.l.b16 %v7039
      %v7072 = vunpack.c.l.b16 %v7040
      %v7073 = vpack.c.b16 %v7058, %v7057
      %v7074 = vpack.c.b16 %v7060, %v7059
      %v7075 = vpack.c.b16 %v7062, %v7061
      %v7076 = vpack.c.b16 %v7064, %v7063
      %v7077 = vpack.c.b16 %v7066, %v7065
      %v7078 = vpack.c.b16 %v7068, %v7067
      %v7079 = vpack.c.b16 %v7070, %v7069
      %v7080 = vpack.c.b16 %v7072, %v7071
      %7089 = vmatprep.subr.bf16.mxu0 0
      %7090 = vmatpush1.bf16.msra.mxu0 %v7073
      %7091 = vmatprep.subr.bf16.mxu0 0
      %7092 = vmatpush1.bf16.msra.mxu0 %v7074
      %7093 = vmatprep.subr.bf16.mxu0 0
      %7094 = vmatpush1.bf16.msra.mxu0 %v7075
      %7095 = vmatprep.subr.bf16.mxu0 0
      %7096 = vmatpush1.bf16.msra.mxu0 %v7076
      %7097 = vmatprep.subr.bf16.mxu0 0
      %7098 = vmatpush1.bf16.msra.mxu0 %v7077
      %7099 = vmatprep.subr.bf16.mxu0 0
      %7100 = vmatpush1.bf16.msra.mxu0 %v7078
      %7101 = vmatprep.subr.bf16.mxu0 0
      %7102 = vmatpush1.bf16.msra.mxu0 %v7079
      %7103 = vmatprep.subr.bf16.mxu0 0
      %7104 = vmatpush1.bf16.msra.mxu0 %v7080
      %7105 = vmatprep.subr.bf16.mxu0 0
      %7106 = vmatpush1.bf16.msra.mxu0 0
      %7107 = vmatprep.subr.bf16.mxu0 0
      %7108 = vmatpush1.bf16.msra.mxu0 0
      %7109 = vmatprep.subr.bf16.mxu0 0
      %7110 = vmatpush1.bf16.msra.mxu0 0
      %7111 = vmatprep.subr.bf16.mxu0 0
      %7112 = vmatpush1.bf16.msra.mxu0 0
      %7113 = vmatprep.subr.bf16.mxu0 0
      %7114 = vmatpush1.bf16.msra.mxu0 0
      %7115 = vmatprep.subr.bf16.mxu0 0
      %7116 = vmatpush1.bf16.msra.mxu0 0
      %7117 = vmatprep.subr.bf16.mxu0 0
      %7118 = vmatpush1.bf16.msra.mxu0 0
      %7119 = vmatprep.subr.bf16.mxu0 0
      %7120 = vmatpush1.bf16.msra.mxu0 0
      %7121 = vmatprep.mubr.bf16.mxu0 0
      %7122 = vmatmul.mubr.bf16.gmra.mrb[0].mxu0 %v5251
      %v7123 = vpop.f32.mrb[0].mxu0
      %v7124 = vadd.f32 0.0, %v7123
      %v7125 = vpop.f32.mrb[0].mxu0
      %v7126 = vpop.f32.mrb[0].mxu0
      %v7127 = vadd.f32 0.0, %v7126
      %v7128 = vpop.f32.mrb[0].mxu0
      %7129 = vmatprep.mubr.bf16.mxu0 0
      %7130 = vmatmul.mubr.bf16.gmra.mrb[0].mxu0 %v5252
      %v7131 = vpop.f32.mrb[0].mxu0
      %v7132 = vadd.f32 0.0, %v7131
      %v7133 = vpop.f32.mrb[0].mxu0
      %v7134 = vpop.f32.mrb[0].mxu0
      %v7135 = vadd.f32 0.0, %v7134
      %v7136 = vpop.f32.mrb[0].mxu0
      %7137 = vdwg.mxu0
      %v7138 = vadd.f32 %v5370, %v7124
      %v7139 = vadd.f32 %v5370, %v7127
      %v7140 = vadd.f32 %v5370, %v7132
      %v7141 = vadd.f32 %v5370, %v7135
      %s7142 = scalar_lea.vmem %s8, 832
      %v7143 = vld [vmem:[%s7142] sm:$0xf]
      %v7144 = vld [vmem:[%s7142 + $0x4] sm:$0xf]
      %v7145 = vld [vmem:[%s7142 + $0x8] sm:$0xf]
      %v7146 = vld [vmem:[%s7142 + $0xc] sm:$0xf]
      %v7147 = vld [vmem:[%s7142 + $0x10] sm:$0xf]
      %v7148 = vld [vmem:[%s7142 + $0x14] sm:$0xf]
      %v7149 = vld [vmem:[%s7142 + $0x18] sm:$0xf]
      %v7150 = vld [vmem:[%s7142 + $0x1c] sm:$0xf]
      %v7151 = vld [vmem:[%s7142 + $0x20] sm:$0xf]
      %v7152 = vld [vmem:[%s7142 + $0x24] sm:$0xf]
      %v7153 = vld [vmem:[%s7142 + $0x28] sm:$0xf]
      %v7154 = vld [vmem:[%s7142 + $0x2c] sm:$0xf]
      %v7155 = vld [vmem:[%s7142 + $0x30] sm:$0xf]
      %v7156 = vld [vmem:[%s7142 + $0x34] sm:$0xf]
      %v7157 = vld [vmem:[%s7142 + $0x38] sm:$0xf]
      %v7158 = vld [vmem:[%s7142 + $0x3c] sm:$0xf]
      %v7175 = vunpack.c.l.b16 %v7143
      %v7176 = vunpack.c.l.b16 %v7144
      %v7177 = vunpack.c.l.b16 %v7145
      %v7178 = vunpack.c.l.b16 %v7146
      %v7179 = vunpack.c.l.b16 %v7147
      %v7180 = vunpack.c.l.b16 %v7148
      %v7181 = vunpack.c.l.b16 %v7149
      %v7182 = vunpack.c.l.b16 %v7150
      %v7183 = vunpack.c.l.b16 %v7151
      %v7184 = vunpack.c.l.b16 %v7152
      %v7185 = vunpack.c.l.b16 %v7153
      %v7186 = vunpack.c.l.b16 %v7154
      %v7187 = vunpack.c.l.b16 %v7155
      %v7188 = vunpack.c.l.b16 %v7156
      %v7189 = vunpack.c.l.b16 %v7157
      %v7190 = vunpack.c.l.b16 %v7158
      %v7191 = vpack.c.b16 %v7176, %v7175
      %v7192 = vpack.c.b16 %v7178, %v7177
      %v7193 = vpack.c.b16 %v7180, %v7179
      %v7194 = vpack.c.b16 %v7182, %v7181
      %v7195 = vpack.c.b16 %v7184, %v7183
      %v7196 = vpack.c.b16 %v7186, %v7185
      %v7197 = vpack.c.b16 %v7188, %v7187
      %v7198 = vpack.c.b16 %v7190, %v7189
      %7207 = vmatprep.subr.bf16.mxu0 0
      %7208 = vmatpush1.bf16.msra.mxu0 %v7191
      %7209 = vmatprep.subr.bf16.mxu0 0
      %7210 = vmatpush1.bf16.msra.mxu0 %v7192
      %7211 = vmatprep.subr.bf16.mxu0 0
      %7212 = vmatpush1.bf16.msra.mxu0 %v7193
      %7213 = vmatprep.subr.bf16.mxu0 0
      %7214 = vmatpush1.bf16.msra.mxu0 %v7194
      %7215 = vmatprep.subr.bf16.mxu0 0
      %7216 = vmatpush1.bf16.msra.mxu0 %v7195
      %7217 = vmatprep.subr.bf16.mxu0 0
      %7218 = vmatpush1.bf16.msra.mxu0 %v7196
      %7219 = vmatprep.subr.bf16.mxu0 0
      %7220 = vmatpush1.bf16.msra.mxu0 %v7197
      %7221 = vmatprep.subr.bf16.mxu0 0
      %7222 = vmatpush1.bf16.msra.mxu0 %v7198
      %7223 = vmatprep.subr.bf16.mxu0 0
      %7224 = vmatpush1.bf16.msra.mxu0 0
      %7225 = vmatprep.subr.bf16.mxu0 0
      %7226 = vmatpush1.bf16.msra.mxu0 0
      %7227 = vmatprep.subr.bf16.mxu0 0
      %7228 = vmatpush1.bf16.msra.mxu0 0
      %7229 = vmatprep.subr.bf16.mxu0 0
      %7230 = vmatpush1.bf16.msra.mxu0 0
      %7231 = vmatprep.subr.bf16.mxu0 0
      %7232 = vmatpush1.bf16.msra.mxu0 0
      %7233 = vmatprep.subr.bf16.mxu0 0
      %7234 = vmatpush1.bf16.msra.mxu0 0
      %7235 = vmatprep.subr.bf16.mxu0 0
      %7236 = vmatpush1.bf16.msra.mxu0 0
      %7237 = vmatprep.subr.bf16.mxu0 0
      %7238 = vmatpush1.bf16.msra.mxu0 0
      %7239 = vmatprep.mubr.bf16.mxu0 0
      %7240 = vmatmul.mubr.bf16.gmra.mrb[0].mxu0 %v5376
      %v7241 = vpop.f32.mrb[0].mxu0
      %v7242 = vadd.f32 0.0, %v7241
      %v7243 = vpop.f32.mrb[0].mxu0
      %v7244 = vpop.f32.mrb[0].mxu0
      %v7245 = vadd.f32 0.0, %v7244
      %v7246 = vpop.f32.mrb[0].mxu0
      %7247 = vmatprep.mubr.bf16.mxu0 0
      %7248 = vmatmul.mubr.bf16.gmra.mrb[0].mxu0 %v5377
      %v7249 = vpop.f32.mrb[0].mxu0
      %v7250 = vadd.f32 0.0, %v7249
      %v7251 = vpop.f32.mrb[0].mxu0
      %v7252 = vpop.f32.mrb[0].mxu0
      %v7253 = vadd.f32 0.0, %v7252
      %v7254 = vpop.f32.mrb[0].mxu0
      %7255 = vdwg.mxu0
      %v7256 = vadd.f32 %v7138, %v7242
      %v7257 = vadd.f32 %v7139, %v7245
      %v7258 = vadd.f32 %v7140, %v7250
      %v7259 = vadd.f32 %v7141, %v7253
      %s7260 = scalar_lea.vmem %s8, 896
      %v7261 = vld [vmem:[%s7260] sm:$0xf]
      %v7262 = vld [vmem:[%s7260 + $0x4] sm:$0xf]
      %v7263 = vld [vmem:[%s7260 + $0x8] sm:$0xf]
      %v7264 = vld [vmem:[%s7260 + $0xc] sm:$0xf]
      %v7265 = vld [vmem:[%s7260 + $0x10] sm:$0xf]
      %v7266 = vld [vmem:[%s7260 + $0x14] sm:$0xf]
      %v7267 = vld [vmem:[%s7260 + $0x18] sm:$0xf]
      %v7268 = vld [vmem:[%s7260 + $0x1c] sm:$0xf]
      %v7269 = vld [vmem:[%s7260 + $0x20] sm:$0xf]
      %v7270 = vld [vmem:[%s7260 + $0x24] sm:$0xf]
      %v7271 = vld [vmem:[%s7260 + $0x28] sm:$0xf]
      %v7272 = vld [vmem:[%s7260 + $0x2c] sm:$0xf]
      %v7273 = vld [vmem:[%s7260 + $0x30] sm:$0xf]
      %v7274 = vld [vmem:[%s7260 + $0x34] sm:$0xf]
      %v7275 = vld [vmem:[%s7260 + $0x38] sm:$0xf]
      %v7276 = vld [vmem:[%s7260 + $0x3c] sm:$0xf]
      %v7293 = vunpack.c.l.b16 %v7261
      %v7294 = vunpack.c.l.b16 %v7262
      %v7295 = vunpack.c.l.b16 %v7263
      %v7296 = vunpack.c.l.b16 %v7264
      %v7297 = vunpack.c.l.b16 %v7265
      %v7298 = vunpack.c.l.b16 %v7266
      %v7299 = vunpack.c.l.b16 %v7267
      %v7300 = vunpack.c.l.b16 %v7268
      %v7301 = vunpack.c.l.b16 %v7269
      %v7302 = vunpack.c.l.b16 %v7270
      %v7303 = vunpack.c.l.b16 %v7271
      %v7304 = vunpack.c.l.b16 %v7272
      %v7305 = vunpack.c.l.b16 %v7273
      %v7306 = vunpack.c.l.b16 %v7274
      %v7307 = vunpack.c.l.b16 %v7275
      %v7308 = vunpack.c.l.b16 %v7276
      %v7309 = vpack.c.b16 %v7294, %v7293
      %v7310 = vpack.c.b16 %v7296, %v7295
      %v7311 = vpack.c.b16 %v7298, %v7297
      %v7312 = vpack.c.b16 %v7300, %v7299
      %v7313 = vpack.c.b16 %v7302, %v7301
      %v7314 = vpack.c.b16 %v7304, %v7303
      %v7315 = vpack.c.b16 %v7306, %v7305
      %v7316 = vpack.c.b16 %v7308, %v7307
      %7325 = vmatprep.subr.bf16.mxu0 0
      %7326 = vmatpush1.bf16.msra.mxu0 %v7309
      %7327 = vmatprep.subr.bf16.mxu0 0
      %7328 = vmatpush1.bf16.msra.mxu0 %v7310
      %7329 = vmatprep.subr.bf16.mxu0 0
      %7330 = vmatpush1.bf16.msra.mxu0 %v7311
      %7331 = vmatprep.subr.bf16.mxu0 0
      %7332 = vmatpush1.bf16.msra.mxu0 %v7312
      %7333 = vmatprep.subr.bf16.mxu0 0
      %7334 = vmatpush1.bf16.msra.mxu0 %v7313
      %7335 = vmatprep.subr.bf16.mxu0 0
      %7336 = vmatpush1.bf16.msra.mxu0 %v7314
      %7337 = vmatprep.subr.bf16.mxu0 0
      %7338 = vmatpush1.bf16.msra.mxu0 %v7315
      %7339 = vmatprep.subr.bf16.mxu0 0
      %7340 = vmatpush1.bf16.msra.mxu0 %v7316
      %7341 = vmatprep.subr.bf16.mxu0 0
      %7342 = vmatpush1.bf16.msra.mxu0 0
      %7343 = vmatprep.subr.bf16.mxu0 0
      %7344 = vmatpush1.bf16.msra.mxu0 0
      %7345 = vmatprep.subr.bf16.mxu0 0
      %7346 = vmatpush1.bf16.msra.mxu0 0
      %7347 = vmatprep.subr.bf16.mxu0 0
      %7348 = vmatpush1.bf16.msra.mxu0 0
      %7349 = vmatprep.subr.bf16.mxu0 0
      %7350 = vmatpush1.bf16.msra.mxu0 0
      %7351 = vmatprep.subr.bf16.mxu0 0
      %7352 = vmatpush1.bf16.msra.mxu0 0
      %7353 = vmatprep.subr.bf16.mxu0 0
      %7354 = vmatpush1.bf16.msra.mxu0 0
      %7355 = vmatprep.subr.bf16.mxu0 0
      %7356 = vmatpush1.bf16.msra.mxu0 0
      %7357 = vmatprep.mubr.bf16.mxu0 0
      %7358 = vmatmul.mubr.bf16.gmra.mrb[0].mxu0 %v5496
      %v7359 = vpop.f32.mrb[0].mxu0
      %v7360 = vadd.f32 0.0, %v7359
      %v7361 = vpop.f32.mrb[0].mxu0
      %v7362 = vpop.f32.mrb[0].mxu0
      %v7363 = vadd.f32 0.0, %v7362
      %v7364 = vpop.f32.mrb[0].mxu0
      %7365 = vmatprep.mubr.bf16.mxu0 0
      %7366 = vmatmul.mubr.bf16.gmra.mrb[0].mxu0 %v5497
      %v7367 = vpop.f32.mrb[0].mxu0
      %v7368 = vadd.f32 0.0, %v7367
      %v7369 = vpop.f32.mrb[0].mxu0
      %v7370 = vpop.f32.mrb[0].mxu0
      %v7371 = vadd.f32 0.0, %v7370
      %v7372 = vpop.f32.mrb[0].mxu0
      %7373 = vdwg.mxu0
      %v7374 = vadd.f32 %v7256, %v7360
      %v7375 = vadd.f32 %v7257, %v7363
      %v7376 = vadd.f32 %v7258, %v7368
      %v7377 = vadd.f32 %v7259, %v7371
      %s7378 = scalar_lea.vmem %s8, 960
      %v7379 = vld [vmem:[%s7378] sm:$0xf]
      %v7380 = vld [vmem:[%s7378 + $0x4] sm:$0xf]
      %v7381 = vld [vmem:[%s7378 + $0x8] sm:$0xf]
      %v7382 = vld [vmem:[%s7378 + $0xc] sm:$0xf]
      %v7383 = vld [vmem:[%s7378 + $0x10] sm:$0xf]
      %v7384 = vld [vmem:[%s7378 + $0x14] sm:$0xf]
      %v7385 = vld [vmem:[%s7378 + $0x18] sm:$0xf]
      %v7386 = vld [vmem:[%s7378 + $0x1c] sm:$0xf]
      %v7387 = vld [vmem:[%s7378 + $0x20] sm:$0xf]
      %v7388 = vld [vmem:[%s7378 + $0x24] sm:$0xf]
      %v7389 = vld [vmem:[%s7378 + $0x28] sm:$0xf]
      %v7390 = vld [vmem:[%s7378 + $0x2c] sm:$0xf]
      %v7391 = vld [vmem:[%s7378 + $0x30] sm:$0xf]
      %v7392 = vld [vmem:[%s7378 + $0x34] sm:$0xf]
      %v7393 = vld [vmem:[%s7378 + $0x38] sm:$0xf]
      %v7394 = vld [vmem:[%s7378 + $0x3c] sm:$0xf]
      %v7411 = vunpack.c.l.b16 %v7379
      %v7412 = vunpack.c.l.b16 %v7380
      %v7413 = vunpack.c.l.b16 %v7381
      %v7414 = vunpack.c.l.b16 %v7382
      %v7415 = vunpack.c.l.b16 %v7383
      %v7416 = vunpack.c.l.b16 %v7384
      %v7417 = vunpack.c.l.b16 %v7385
      %v7418 = vunpack.c.l.b16 %v7386
      %v7419 = vunpack.c.l.b16 %v7387
      %v7420 = vunpack.c.l.b16 %v7388
      %v7421 = vunpack.c.l.b16 %v7389
      %v7422 = vunpack.c.l.b16 %v7390
      %v7423 = vunpack.c.l.b16 %v7391
      %v7424 = vunpack.c.l.b16 %v7392
      %v7425 = vunpack.c.l.b16 %v7393
      %v7426 = vunpack.c.l.b16 %v7394
      %v7427 = vpack.c.b16 %v7412, %v7411
      %v7428 = vpack.c.b16 %v7414, %v7413
      %v7429 = vpack.c.b16 %v7416, %v7415
      %v7430 = vpack.c.b16 %v7418, %v7417
      %v7431 = vpack.c.b16 %v7420, %v7419
      %v7432 = vpack.c.b16 %v7422, %v7421
      %v7433 = vpack.c.b16 %v7424, %v7423
      %v7434 = vpack.c.b16 %v7426, %v7425
      %7443 = vmatprep.subr.bf16.mxu0 0
      %7444 = vmatpush1.bf16.msra.mxu0 %v7427
      %7445 = vmatprep.subr.bf16.mxu0 0
      %7446 = vmatpush1.bf16.msra.mxu0 %v7428
      %7447 = vmatprep.subr.bf16.mxu0 0
      %7448 = vmatpush1.bf16.msra.mxu0 %v7429
      %7449 = vmatprep.subr.bf16.mxu0 0
      %7450 = vmatpush1.bf16.msra.mxu0 %v7430
      %7451 = vmatprep.subr.bf16.mxu0 0
      %7452 = vmatpush1.bf16.msra.mxu0 %v7431
      %7453 = vmatprep.subr.bf16.mxu0 0
      %7454 = vmatpush1.bf16.msra.mxu0 %v7432
      %7455 = vmatprep.subr.bf16.mxu0 0
      %7456 = vmatpush1.bf16.msra.mxu0 %v7433
      %7457 = vmatprep.subr.bf16.mxu0 0
      %7458 = vmatpush1.bf16.msra.mxu0 %v7434
      %7459 = vmatprep.subr.bf16.mxu0 0
      %7460 = vmatpush1.bf16.msra.mxu0 0
      %7461 = vmatprep.subr.bf16.mxu0 0
      %7462 = vmatpush1.bf16.msra.mxu0 0
      %7463 = vmatprep.subr.bf16.mxu0 0
      %7464 = vmatpush1.bf16.msra.mxu0 0
      %7465 = vmatprep.subr.bf16.mxu0 0
      %7466 = vmatpush1.bf16.msra.mxu0 0
      %7467 = vmatprep.subr.bf16.mxu0 0
      %7468 = vmatpush1.bf16.msra.mxu0 0
      %7469 = vmatprep.subr.bf16.mxu0 0
      %7470 = vmatpush1.bf16.msra.mxu0 0
      %7471 = vmatprep.subr.bf16.mxu0 0
      %7472 = vmatpush1.bf16.msra.mxu0 0
      %7473 = vmatprep.subr.bf16.mxu0 0
      %7474 = vmatpush1.bf16.msra.mxu0 0
      %7475 = vmatprep.mubr.bf16.mxu0 0
      %7476 = vmatmul.mubr.bf16.gmra.mrb[0].mxu0 %v5616
      %v7477 = vpop.f32.mrb[0].mxu0
      %v7478 = vadd.f32 0.0, %v7477
      %v7479 = vpop.f32.mrb[0].mxu0
      %v7480 = vpop.f32.mrb[0].mxu0
      %v7481 = vadd.f32 0.0, %v7480
      %v7482 = vpop.f32.mrb[0].mxu0
      %7483 = vmatprep.mubr.bf16.mxu0 0
      %7484 = vmatmul.mubr.bf16.gmra.mrb[0].mxu0 %v5617
      %v7485 = vpop.f32.mrb[0].mxu0
      %v7486 = vadd.f32 0.0, %v7485
      %v7487 = vpop.f32.mrb[0].mxu0
      %v7488 = vpop.f32.mrb[0].mxu0
      %v7489 = vadd.f32 0.0, %v7488
      %v7490 = vpop.f32.mrb[0].mxu0
      %7491 = vdwg.mxu0
      %v7492 = vadd.f32 %v7374, %v7478
      %v7493 = vadd.f32 %v7375, %v7481
      %v7494 = vadd.f32 %v7376, %v7486
      %v7495 = vadd.f32 %v7377, %v7489
      %v7496 = vmax.f32 %v7492, 0.0
      %v7497 = vmax.f32 %v7493, 0.0
      %v7498 = vmax.f32 %v7494, 0.0
      %v7499 = vmax.f32 %v7495, 0.0
      %v7500 = vpack.c.bf16 %v7497, %v7496
      %v7501 = vpack.c.bf16 %v7499, %v7498
      %s7502 = scalar_lea.vmem %s10, 96
      %v7503 = vld [vmem:[%s7502] sm:$0xf]
      %v7504 = vld [vmem:[%s7502 + $0x4] sm:$0xf]
      %v7505 = vld [vmem:[%s7502 + $0x8] sm:$0xf]
      %v7506 = vld [vmem:[%s7502 + $0xc] sm:$0xf]
      %v7507 = vld [vmem:[%s7502 + $0x10] sm:$0xf]
      %v7508 = vld [vmem:[%s7502 + $0x14] sm:$0xf]
      %v7509 = vld [vmem:[%s7502 + $0x18] sm:$0xf]
      %v7510 = vld [vmem:[%s7502 + $0x1c] sm:$0xf]
      %v7519 = vunpack.c.l.b16 %v7503
      %v7520 = vunpack.c.l.b16 %v7504
      %v7521 = vunpack.c.l.b16 %v7505
      %v7522 = vunpack.c.l.b16 %v7506
      %v7523 = vunpack.c.l.b16 %v7507
      %v7524 = vunpack.c.l.b16 %v7508
      %v7525 = vunpack.c.l.b16 %v7509
      %v7526 = vunpack.c.l.b16 %v7510
      %v7527 = vpack.c.b16 %v7520, %v7519
      %v7528 = vpack.c.b16 %v7522, %v7521
      %v7529 = vpack.c.b16 %v7524, %v7523
      %v7530 = vpack.c.b16 %v7526, %v7525
      %v7532 = vsel %vm6257, %v7527, 0
      %v7535 = vsel %vm6257, %v7528, 0
      %v7538 = vsel %vm6257, %v7529, 0
      %v7541 = vsel %vm6257, %v7530, 0
      %7543 = vmatprep.subr.bf16.mxu0 0
      %7544 = vmatpush1.bf16.msra.mxu0 %v7500
      %7545 = vmatprep.subr.bf16.mxu0 0
      %7546 = vmatpush1.bf16.msra.mxu0 %v7501
      %7547 = vmatprep.subr.bf16.mxu0 0
      %7548 = vmatpush1.bf16.msra.mxu0 0
      %7549 = vmatprep.subr.bf16.mxu0 0
      %7550 = vmatpush1.bf16.msra.mxu0 0
      %7551 = vmatprep.subr.bf16.mxu0 0
      %7552 = vmatpush1.bf16.msra.mxu0 0
      %7553 = vmatprep.subr.bf16.mxu0 0
      %7554 = vmatpush1.bf16.msra.mxu0 0
      %7555 = vmatprep.subr.bf16.mxu0 0
      %7556 = vmatpush1.bf16.msra.mxu0 0
      %7557 = vmatprep.subr.bf16.mxu0 0
      %7558 = vmatpush1.bf16.msra.mxu0 0
      %7559 = vmatprep.subr.bf16.mxu0 0
      %7560 = vmatpush1.bf16.msra.mxu0 0
      %7561 = vmatprep.subr.bf16.mxu0 0
      %7562 = vmatpush1.bf16.msra.mxu0 0
      %7563 = vmatprep.subr.bf16.mxu0 0
      %7564 = vmatpush1.bf16.msra.mxu0 0
      %7565 = vmatprep.subr.bf16.mxu0 0
      %7566 = vmatpush1.bf16.msra.mxu0 0
      %7567 = vmatprep.subr.bf16.mxu0 0
      %7568 = vmatpush1.bf16.msra.mxu0 0
      %7569 = vmatprep.subr.bf16.mxu0 0
      %7570 = vmatpush1.bf16.msra.mxu0 0
      %7571 = vmatprep.subr.bf16.mxu0 0
      %7572 = vmatpush1.bf16.msra.mxu0 0
      %7573 = vmatprep.subr.bf16.mxu0 0
      %7574 = vmatpush1.bf16.msra.mxu0 0
      %7575 = vmatprep.mubr.bf16.mxu0 0
      %7576 = vmatmul.mubr.bf16.gmra.mrb[0].mxu0 %v7532
      %v7577 = vpop.f32.mrb[0].mxu0
      %v7578 = vadd.f32 0.0, %v7577
      %v7579 = vpop.f32.mrb[0].mxu0
      %v7580 = vpop.f32.mrb[0].mxu0
      %v7581 = vadd.f32 0.0, %v7580
      %v7582 = vpop.f32.mrb[0].mxu0
      %7583 = vmatprep.mubr.bf16.mxu0 0
      %7584 = vmatmul.mubr.bf16.gmra.mrb[0].mxu0 %v7535
      %v7585 = vpop.f32.mrb[0].mxu0
      %v7586 = vadd.f32 0.0, %v7585
      %v7587 = vpop.f32.mrb[0].mxu0
      %v7588 = vpop.f32.mrb[0].mxu0
      %v7589 = vadd.f32 0.0, %v7588
      %v7590 = vpop.f32.mrb[0].mxu0
      %7591 = vmatprep.mubr.bf16.mxu0 0
      %7592 = vmatmul.mubr.bf16.gmra.mrb[0].mxu0 %v7538
      %v7593 = vpop.f32.mrb[0].mxu0
      %v7594 = vadd.f32 0.0, %v7593
      %v7595 = vpop.f32.mrb[0].mxu0
      %v7596 = vpop.f32.mrb[0].mxu0
      %v7597 = vadd.f32 0.0, %v7596
      %v7598 = vpop.f32.mrb[0].mxu0
      %7599 = vmatprep.mubr.bf16.mxu0 0
      %7600 = vmatmul.mubr.bf16.gmra.mrb[0].mxu0 %v7541
      %v7601 = vpop.f32.mrb[0].mxu0
      %v7602 = vadd.f32 0.0, %v7601
      %v7603 = vpop.f32.mrb[0].mxu0
      %v7604 = vpop.f32.mrb[0].mxu0
      %v7605 = vadd.f32 0.0, %v7604
      %v7606 = vpop.f32.mrb[0].mxu0
      %7607 = vdwg.mxu0
      %v7608 = vadd.f32 %v7016, %v7578
      %v7609 = vadd.f32 %v7017, %v7581
      %v7610 = vadd.f32 %v7018, %v7586
      %v7611 = vadd.f32 %v7019, %v7589
      %v7612 = vadd.f32 %v7020, %v7594
      %v7613 = vadd.f32 %v7021, %v7597
      %v7614 = vadd.f32 %v7022, %v7602
      %v7615 = vadd.f32 %v7023, %v7605
      %v7616 = vpack.c.bf16 %v7609, %v7608
      %v7617 = vpack.c.bf16 %v7611, %v7610
      %v7618 = vpack.c.bf16 %v7613, %v7612
      %v7619 = vpack.c.bf16 %v7615, %v7614
      %v7620 = vld [vmem:[%s11] sm:$0xf]
      %v7621 = vld [vmem:[%s11 + $0x4] sm:$0xf]
      %v7622 = vld [vmem:[%s11 + $0x8] sm:$0xf]
      %v7623 = vld [vmem:[%s11 + $0xc] sm:$0xf]
      %v7624 = vld [vmem:[%s11 + $0x10] sm:$0xf]
      %v7625 = vld [vmem:[%s11 + $0x14] sm:$0xf]
      %v7626 = vld [vmem:[%s11 + $0x18] sm:$0xf]
      %v7627 = vld [vmem:[%s11 + $0x1c] sm:$0xf]
      %v7628 = vld [vmem:[%s11 + $0x20] sm:$0xf]
      %v7629 = vld [vmem:[%s11 + $0x24] sm:$0xf]
      %v7630 = vld [vmem:[%s11 + $0x28] sm:$0xf]
      %v7631 = vld [vmem:[%s11 + $0x2c] sm:$0xf]
      %v7632 = vld [vmem:[%s11 + $0x30] sm:$0xf]
      %v7633 = vld [vmem:[%s11 + $0x34] sm:$0xf]
      %v7634 = vld [vmem:[%s11 + $0x38] sm:$0xf]
      %v7635 = vld [vmem:[%s11 + $0x3c] sm:$0xf]
      %v7636 = vld [vmem:[%s11 + $0x40] sm:$0xf]
      %v7637 = vld [vmem:[%s11 + $0x44] sm:$0xf]
      %v7638 = vld [vmem:[%s11 + $0x48] sm:$0xf]
      %v7639 = vld [vmem:[%s11 + $0x4c] sm:$0xf]
      %v7640 = vld [vmem:[%s11 + $0x50] sm:$0xf]
      %v7641 = vld [vmem:[%s11 + $0x54] sm:$0xf]
      %v7642 = vld [vmem:[%s11 + $0x58] sm:$0xf]
      %v7643 = vld [vmem:[%s11 + $0x5c] sm:$0xf]
      %v7644 = vld [vmem:[%s11 + $0x60] sm:$0xf]
      %v7645 = vld [vmem:[%s11 + $0x64] sm:$0xf]
      %v7646 = vld [vmem:[%s11 + $0x68] sm:$0xf]
      %v7647 = vld [vmem:[%s11 + $0x6c] sm:$0xf]
      %v7648 = vld [vmem:[%s11 + $0x70] sm:$0xf]
      %v7649 = vld [vmem:[%s11 + $0x74] sm:$0xf]
      %v7650 = vld [vmem:[%s11 + $0x78] sm:$0xf]
      %v7651 = vld [vmem:[%s11 + $0x7c] sm:$0xf]
      %v7652 = vld [vmem:[%s11 + $0x80] sm:$0xf]
      %v7653 = vld [vmem:[%s11 + $0x84] sm:$0xf]
      %v7654 = vld [vmem:[%s11 + $0x88] sm:$0xf]
      %v7655 = vld [vmem:[%s11 + $0x8c] sm:$0xf]
      %v7656 = vld [vmem:[%s11 + $0x90] sm:$0xf]
      %v7657 = vld [vmem:[%s11 + $0x94] sm:$0xf]
      %v7658 = vld [vmem:[%s11 + $0x98] sm:$0xf]
      %v7659 = vld [vmem:[%s11 + $0x9c] sm:$0xf]
      %v7660 = vld [vmem:[%s11 + $0xa0] sm:$0xf]
      %v7661 = vld [vmem:[%s11 + $0xa4] sm:$0xf]
      %v7662 = vld [vmem:[%s11 + $0xa8] sm:$0xf]
      %v7663 = vld [vmem:[%s11 + $0xac] sm:$0xf]
      %v7708 = vunpack.c.l.b16 %v7620
      %v7709 = vunpack.c.l.b16 %v7621
      %v7710 = vunpack.c.l.b16 %v7622
      %v7711 = vunpack.c.l.b16 %v7623
      %v7712 = vunpack.c.l.b16 %v7624
      %v7713 = vunpack.c.l.b16 %v7625
      %v7714 = vunpack.c.l.b16 %v7626
      %v7715 = vunpack.c.l.b16 %v7627
      %v7716 = vunpack.c.l.b16 %v7628
      %v7717 = vunpack.c.l.b16 %v7629
      %v7718 = vunpack.c.l.b16 %v7630
      %v7719 = vunpack.c.l.b16 %v7631
      %v7720 = vunpack.c.l.b16 %v7632
      %v7721 = vunpack.c.l.b16 %v7633
      %v7722 = vunpack.c.l.b16 %v7634
      %v7723 = vunpack.c.l.b16 %v7635
      %v7724 = vunpack.c.l.b16 %v7636
      %v7725 = vunpack.c.l.b16 %v7637
      %v7726 = vunpack.c.l.b16 %v7638
      %v7727 = vunpack.c.l.b16 %v7639
      %v7728 = vunpack.c.l.b16 %v7640
      %v7729 = vunpack.c.l.b16 %v7641
      %v7730 = vunpack.c.l.b16 %v7642
      %v7731 = vunpack.c.l.b16 %v7643
      %v7732 = vunpack.c.l.b16 %v7644
      %v7733 = vunpack.c.l.b16 %v7645
      %v7734 = vunpack.c.l.b16 %v7646
      %v7735 = vunpack.c.l.b16 %v7647
      %v7736 = vunpack.c.l.b16 %v7648
      %v7737 = vunpack.c.l.b16 %v7649
      %v7738 = vunpack.c.l.b16 %v7650
      %v7739 = vunpack.c.l.b16 %v7651
      %v7740 = vunpack.c.l.b16 %v7652
      %v7741 = vunpack.c.l.b16 %v7653
      %v7742 = vunpack.c.l.b16 %v7654
      %v7743 = vunpack.c.l.b16 %v7655
      %v7744 = vunpack.c.l.b16 %v7656
      %v7745 = vunpack.c.l.b16 %v7657
      %v7746 = vunpack.c.l.b16 %v7658
      %v7747 = vunpack.c.l.b16 %v7659
      %v7748 = vunpack.c.l.b16 %v7660
      %v7749 = vunpack.c.l.b16 %v7661
      %v7750 = vunpack.c.l.b16 %v7662
      %v7751 = vunpack.c.l.b16 %v7663
      %v7752 = vpack.c.b16 %v7709, %v7708
      %v7753 = vpack.c.b16 %v7711, %v7710
      %v7754 = vpack.c.b16 %v7713, %v7712
      %v7755 = vpack.c.b16 %v7715, %v7714
      %v7756 = vpack.c.b16 %v7717, %v7716
      %v7757 = vpack.c.b16 %v7719, %v7718
      %v7758 = vpack.c.b16 %v7721, %v7720
      %v7759 = vpack.c.b16 %v7723, %v7722
      %v7760 = vpack.c.b16 %v7725, %v7724
      %v7761 = vpack.c.b16 %v7727, %v7726
      %v7762 = vpack.c.b16 %v7729, %v7728
      %v7763 = vpack.c.b16 %v7731, %v7730
      %v7764 = vpack.c.b16 %v7733, %v7732
      %v7765 = vpack.c.b16 %v7735, %v7734
      %v7766 = vpack.c.b16 %v7737, %v7736
      %v7767 = vpack.c.b16 %v7739, %v7738
      %v7768 = vpack.c.b16 %v7741, %v7740
      %v7769 = vpack.c.b16 %v7743, %v7742
      %v7770 = vpack.c.b16 %v7745, %v7744
      %v7771 = vpack.c.b16 %v7747, %v7746
      %v7772 = vpack.c.b16 %v7749, %v7748
      %v7773 = vpack.c.b16 %v7751, %v7750
      %v7775 = vsel %vm3573, %v7752, 0
      %v7778 = vsel %vm3573, %v7753, 0
      %v7781 = vsel %vm3573, %v7754, 0
      %v7784 = vsel %vm3573, %v7755, 0
      %v7787 = vsel %vm3573, %v7756, 0
      %v7790 = vsel %vm3573, %v7757, 0
      %v7793 = vsel %vm3573, %v7758, 0
      %v7796 = vsel %vm3573, %v7759, 0
      %v7799 = vsel %vm3573, %v7760, 0
      %v7802 = vsel %vm3573, %v7761, 0
      %v7805 = vsel %vm3573, %v7762, 0
      %v7808 = vsel %vm3573, %v7763, 0
      %v7811 = vsel %vm3573, %v7764, 0
      %v7814 = vsel %vm3573, %v7765, 0
      %v7817 = vsel %vm3573, %v7766, 0
      %v7820 = vsel %vm3573, %v7767, 0
      %v7823 = vsel %vm3573, %v7768, 0
      %v7826 = vsel %vm3573, %v7769, 0
      %v7829 = vsel %vm3573, %v7770, 0
      %v7832 = vsel %vm3573, %v7771, 0
      %v7835 = vsel %vm3573, %v7772, 0
      %v7838 = vsel %vm3573, %v7773, 0
      %7840 = vmatprep.subr.bf16.mxu0 0
      %7841 = vmatpush1.bf16.msra.mxu0 %v7616
      %7842 = vmatprep.subr.bf16.mxu0 0
      %7843 = vmatpush1.bf16.msra.mxu0 %v7617
      %7844 = vmatprep.subr.bf16.mxu0 0
      %7845 = vmatpush1.bf16.msra.mxu0 %v7618
      %7846 = vmatprep.subr.bf16.mxu0 0
      %7847 = vmatpush1.bf16.msra.mxu0 %v7619
      %7848 = vmatprep.subr.bf16.mxu0 0
      %7849 = vmatpush1.bf16.msra.mxu0 0
      %7850 = vmatprep.subr.bf16.mxu0 0
      %7851 = vmatpush1.bf16.msra.mxu0 0
      %7852 = vmatprep.subr.bf16.mxu0 0
      %7853 = vmatpush1.bf16.msra.mxu0 0
      %7854 = vmatprep.subr.bf16.mxu0 0
      %7855 = vmatpush1.bf16.msra.mxu0 0
      %7856 = vmatprep.subr.bf16.mxu0 0
      %7857 = vmatpush1.bf16.msra.mxu0 0
      %7858 = vmatprep.subr.bf16.mxu0 0
      %7859 = vmatpush1.bf16.msra.mxu0 0
      %7860 = vmatprep.subr.bf16.mxu0 0
      %7861 = vmatpush1.bf16.msra.mxu0 0
      %7862 = vmatprep.subr.bf16.mxu0 0
      %7863 = vmatpush1.bf16.msra.mxu0 0
      %7864 = vmatprep.subr.bf16.mxu0 0
      %7865 = vmatpush1.bf16.msra.mxu0 0
      %7866 = vmatprep.subr.bf16.mxu0 0
      %7867 = vmatpush1.bf16.msra.mxu0 0
      %7868 = vmatprep.subr.bf16.mxu0 0
      %7869 = vmatpush1.bf16.msra.mxu0 0
      %7870 = vmatprep.subr.bf16.mxu0 0
      %7871 = vmatpush1.bf16.msra.mxu0 0
      %7872 = vmatprep.mubr.bf16.mxu0 0
      %7873 = vmatmul.mubr.bf16.gmra.mrb[0].mxu0 %v7775
      %v7874 = vpop.f32.mrb[0].mxu0
      %v7875 = vadd.f32 0.0, %v7874
      %v7876 = vpop.f32.mrb[0].mxu0
      %v7877 = vpop.f32.mrb[0].mxu0
      %v7878 = vadd.f32 0.0, %v7877
      %v7879 = vpop.f32.mrb[0].mxu0
      %7880 = vmatprep.mubr.bf16.mxu0 0
      %7881 = vmatmul.mubr.bf16.gmra.mrb[0].mxu0 %v7778
      %v7882 = vpop.f32.mrb[0].mxu0
      %v7883 = vadd.f32 0.0, %v7882
      %v7884 = vpop.f32.mrb[0].mxu0
      %v7885 = vpop.f32.mrb[0].mxu0
      %v7886 = vadd.f32 0.0, %v7885
      %v7887 = vpop.f32.mrb[0].mxu0
      %7888 = vmatprep.mubr.bf16.mxu0 0
      %7889 = vmatmul.mubr.bf16.gmra.mrb[0].mxu0 %v7781
      %v7890 = vpop.f32.mrb[0].mxu0
      %v7891 = vadd.f32 0.0, %v7890
      %v7892 = vpop.f32.mrb[0].mxu0
      %v7893 = vpop.f32.mrb[0].mxu0
      %v7894 = vadd.f32 0.0, %v7893
      %v7895 = vpop.f32.mrb[0].mxu0
      %7896 = vmatprep.mubr.bf16.mxu0 0
      %7897 = vmatmul.mubr.bf16.gmra.mrb[0].mxu0 %v7784
      %v7898 = vpop.f32.mrb[0].mxu0
      %v7899 = vadd.f32 0.0, %v7898
      %v7900 = vpop.f32.mrb[0].mxu0
      %v7901 = vpop.f32.mrb[0].mxu0
      %v7902 = vadd.f32 0.0, %v7901
      %v7903 = vpop.f32.mrb[0].mxu0
      %7904 = vmatprep.mubr.bf16.mxu0 0
      %7905 = vmatmul.mubr.bf16.gmra.mrb[0].mxu0 %v7787
      %v7906 = vpop.f32.mrb[0].mxu0
      %v7907 = vadd.f32 0.0, %v7906
      %v7908 = vpop.f32.mrb[0].mxu0
      %v7909 = vpop.f32.mrb[0].mxu0
      %v7910 = vadd.f32 0.0, %v7909
      %v7911 = vpop.f32.mrb[0].mxu0
      %7912 = vmatprep.mubr.bf16.mxu0 0
      %7913 = vmatmul.mubr.bf16.gmra.mrb[0].mxu0 %v7790
      %v7914 = vpop.f32.mrb[0].mxu0
      %v7915 = vadd.f32 0.0, %v7914
      %v7916 = vpop.f32.mrb[0].mxu0
      %v7917 = vpop.f32.mrb[0].mxu0
      %v7918 = vadd.f32 0.0, %v7917
      %v7919 = vpop.f32.mrb[0].mxu0
      %7920 = vmatprep.mubr.bf16.mxu0 0
      %7921 = vmatmul.mubr.bf16.gmra.mrb[0].mxu0 %v7793
      %v7922 = vpop.f32.mrb[0].mxu0
      %v7923 = vadd.f32 0.0, %v7922
      %v7924 = vpop.f32.mrb[0].mxu0
      %v7925 = vpop.f32.mrb[0].mxu0
      %v7926 = vadd.f32 0.0, %v7925
      %v7927 = vpop.f32.mrb[0].mxu0
      %7928 = vmatprep.mubr.bf16.mxu0 0
      %7929 = vmatmul.mubr.bf16.gmra.mrb[0].mxu0 %v7796
      %v7930 = vpop.f32.mrb[0].mxu0
      %v7931 = vadd.f32 0.0, %v7930
      %v7932 = vpop.f32.mrb[0].mxu0
      %v7933 = vpop.f32.mrb[0].mxu0
      %v7934 = vadd.f32 0.0, %v7933
      %v7935 = vpop.f32.mrb[0].mxu0
      %7936 = vmatprep.mubr.bf16.mxu0 0
      %7937 = vmatmul.mubr.bf16.gmra.mrb[0].mxu0 %v7799
      %v7938 = vpop.f32.mrb[0].mxu0
      %v7939 = vadd.f32 0.0, %v7938
      %v7940 = vpop.f32.mrb[0].mxu0
      %v7941 = vpop.f32.mrb[0].mxu0
      %v7942 = vadd.f32 0.0, %v7941
      %v7943 = vpop.f32.mrb[0].mxu0
      %7944 = vmatprep.mubr.bf16.mxu0 0
      %7945 = vmatmul.mubr.bf16.gmra.mrb[0].mxu0 %v7802
      %v7946 = vpop.f32.mrb[0].mxu0
      %v7947 = vadd.f32 0.0, %v7946
      %v7948 = vpop.f32.mrb[0].mxu0
      %v7949 = vpop.f32.mrb[0].mxu0
      %v7950 = vadd.f32 0.0, %v7949
      %v7951 = vpop.f32.mrb[0].mxu0
      %7952 = vmatprep.mubr.bf16.mxu0 0
      %7953 = vmatmul.mubr.bf16.gmra.mrb[0].mxu0 %v7805
      %v7954 = vpop.f32.mrb[0].mxu0
      %v7955 = vadd.f32 0.0, %v7954
      %v7956 = vpop.f32.mrb[0].mxu0
      %v7957 = vpop.f32.mrb[0].mxu0
      %v7958 = vadd.f32 0.0, %v7957
      %v7959 = vpop.f32.mrb[0].mxu0
      %7960 = vmatprep.mubr.bf16.mxu0 0
      %7961 = vmatmul.mubr.bf16.gmra.mrb[0].mxu0 %v7808
      %v7962 = vpop.f32.mrb[0].mxu0
      %v7963 = vadd.f32 0.0, %v7962
      %v7964 = vpop.f32.mrb[0].mxu0
      %v7965 = vpop.f32.mrb[0].mxu0
      %v7966 = vadd.f32 0.0, %v7965
      %v7967 = vpop.f32.mrb[0].mxu0
      %7968 = vmatprep.mubr.bf16.mxu0 0
      %7969 = vmatmul.mubr.bf16.gmra.mrb[0].mxu0 %v7811
      %v7970 = vpop.f32.mrb[0].mxu0
      %v7971 = vadd.f32 0.0, %v7970
      %v7972 = vpop.f32.mrb[0].mxu0
      %v7973 = vpop.f32.mrb[0].mxu0
      %v7974 = vadd.f32 0.0, %v7973
      %v7975 = vpop.f32.mrb[0].mxu0
      %7976 = vmatprep.mubr.bf16.mxu0 0
      %7977 = vmatmul.mubr.bf16.gmra.mrb[0].mxu0 %v7814
      %v7978 = vpop.f32.mrb[0].mxu0
      %v7979 = vadd.f32 0.0, %v7978
      %v7980 = vpop.f32.mrb[0].mxu0
      %v7981 = vpop.f32.mrb[0].mxu0
      %v7982 = vadd.f32 0.0, %v7981
      %v7983 = vpop.f32.mrb[0].mxu0
      %7984 = vmatprep.mubr.bf16.mxu0 0
      %7985 = vmatmul.mubr.bf16.gmra.mrb[0].mxu0 %v7817
      %v7986 = vpop.f32.mrb[0].mxu0
      %v7987 = vadd.f32 0.0, %v7986
      %v7988 = vpop.f32.mrb[0].mxu0
      %v7989 = vpop.f32.mrb[0].mxu0
      %v7990 = vadd.f32 0.0, %v7989
      %v7991 = vpop.f32.mrb[0].mxu0
      %7992 = vmatprep.mubr.bf16.mxu0 0
      %7993 = vmatmul.mubr.bf16.gmra.mrb[0].mxu0 %v7820
      %v7994 = vpop.f32.mrb[0].mxu0
      %v7995 = vadd.f32 0.0, %v7994
      %v7996 = vpop.f32.mrb[0].mxu0
      %v7997 = vpop.f32.mrb[0].mxu0
      %v7998 = vadd.f32 0.0, %v7997
      %v7999 = vpop.f32.mrb[0].mxu0
      %8000 = vmatprep.mubr.bf16.mxu0 0
      %8001 = vmatmul.mubr.bf16.gmra.mrb[0].mxu0 %v7823
      %v8002 = vpop.f32.mrb[0].mxu0
      %v8003 = vadd.f32 0.0, %v8002
      %v8004 = vpop.f32.mrb[0].mxu0
      %v8005 = vpop.f32.mrb[0].mxu0
      %v8006 = vadd.f32 0.0, %v8005
      %v8007 = vpop.f32.mrb[0].mxu0
      %8008 = vmatprep.mubr.bf16.mxu0 0
      %8009 = vmatmul.mubr.bf16.gmra.mrb[0].mxu0 %v7826
      %v8010 = vpop.f32.mrb[0].mxu0
      %v8011 = vadd.f32 0.0, %v8010
      %v8012 = vpop.f32.mrb[0].mxu0
      %v8013 = vpop.f32.mrb[0].mxu0
      %v8014 = vadd.f32 0.0, %v8013
      %v8015 = vpop.f32.mrb[0].mxu0
      %8016 = vmatprep.mubr.bf16.mxu0 0
      %8017 = vmatmul.mubr.bf16.gmra.mrb[0].mxu0 %v7829
      %v8018 = vpop.f32.mrb[0].mxu0
      %v8019 = vadd.f32 0.0, %v8018
      %v8020 = vpop.f32.mrb[0].mxu0
      %v8021 = vpop.f32.mrb[0].mxu0
      %v8022 = vadd.f32 0.0, %v8021
      %v8023 = vpop.f32.mrb[0].mxu0
      %8024 = vmatprep.mubr.bf16.mxu0 0
      %8025 = vmatmul.mubr.bf16.gmra.mrb[0].mxu0 %v7832
      %v8026 = vpop.f32.mrb[0].mxu0
      %v8027 = vadd.f32 0.0, %v8026
      %v8028 = vpop.f32.mrb[0].mxu0
      %v8029 = vpop.f32.mrb[0].mxu0
      %v8030 = vadd.f32 0.0, %v8029
      %v8031 = vpop.f32.mrb[0].mxu0
      %8032 = vmatprep.mubr.bf16.mxu0 0
      %8033 = vmatmul.mubr.bf16.gmra.mrb[0].mxu0 %v7835
      %v8034 = vpop.f32.mrb[0].mxu0
      %v8035 = vadd.f32 0.0, %v8034
      %v8036 = vpop.f32.mrb[0].mxu0
      %v8037 = vpop.f32.mrb[0].mxu0
      %v8038 = vadd.f32 0.0, %v8037
      %v8039 = vpop.f32.mrb[0].mxu0
      %8040 = vmatprep.mubr.bf16.mxu0 0
      %8041 = vmatmul.mubr.bf16.gmra.mrb[0].mxu0 %v7838
      %v8042 = vpop.f32.mrb[0].mxu0
      %v8043 = vadd.f32 0.0, %v8042
      %v8044 = vpop.f32.mrb[0].mxu0
      %v8045 = vpop.f32.mrb[0].mxu0
      %v8046 = vadd.f32 0.0, %v8045
      %v8047 = vpop.f32.mrb[0].mxu0
      %8048 = vdwg.mxu0
      %v8049 = vld [vmem:[%s13] sm:$0x1]
      %v8050 = vpack.c.bf16 %v7878, %v7875
      %v8051 = vpack.c.bf16 %v7886, %v7883
      %v8052 = vpack.c.bf16 %v7894, %v7891
      %v8053 = vpack.c.bf16 %v7902, %v7899
      %v8054 = vpack.c.bf16 %v7910, %v7907
      %v8055 = vpack.c.bf16 %v7915, %v7915
      %v8056 = vld [vmem:[%s12] sm:$0xf]
      %v8057 = vld [vmem:[%s12 + $0x4] sm:$0xf]
      %v8058 = vld [vmem:[%s12 + $0x8] sm:$0xf]
      %v8059 = vld [vmem:[%s12 + $0xc] sm:$0xf]
      %v8060 = vld [vmem:[%s12 + $0x10] sm:$0xf]
      %v8061 = vld [vmem:[%s12 + $0x14] sm:$0xf]
      %v8062 = vld [vmem:[%s12 + $0x18] sm:$0xf]
      %v8063 = vld [vmem:[%s12 + $0x1c] sm:$0xf]
      %v8072 = vunpack.c.l.b16 %v8056
      %v8073 = vunpack.c.l.b16 %v8057
      %v8074 = vunpack.c.l.b16 %v8058
      %v8075 = vunpack.c.l.b16 %v8059
      %v8076 = vunpack.c.l.b16 %v8060
      %v8077 = vunpack.c.l.b16 %v8061
      %v8078 = vunpack.c.l.b16 %v8062
      %v8079 = vunpack.c.l.b16 %v8063
      %v8080 = vpack.c.b16 %v8073, %v8072
      %v8081 = vpack.c.b16 %v8075, %v8074
      %v8082 = vpack.c.b16 %v8077, %v8076
      %v8083 = vpack.c.b16 %v8079, %v8078
      %v8089 = vsel %vm3573, %v8050, 0
      %v8092 = vsel %vm3573, %v8051, 0
      %v8095 = vsel %vm3573, %v8052, 0
      %v8098 = vsel %vm3573, %v8053, 0
      %v8101 = vsel %vm3573, %v8054, 0
      %v8104 = vsel %vm3573, %v8055, 0
      %8106 = vmatprep.subr.bf16.mxu0 0
      %8107 = vmatpush1.bf16.msra.mxu0 %v8080
      %8108 = vmatprep.subr.bf16.mxu0 0
      %8109 = vmatpush1.bf16.msra.mxu0 %v8081
      %8110 = vmatprep.subr.bf16.mxu0 0
      %8111 = vmatpush1.bf16.msra.mxu0 %v8082
      %8112 = vmatprep.subr.bf16.mxu0 0
      %8113 = vmatpush1.bf16.msra.mxu0 %v8083
      %8114 = vmatprep.subr.bf16.mxu0 0
      %8115 = vmatpush1.bf16.msra.mxu0 0
      %8116 = vmatprep.subr.bf16.mxu0 0
      %8117 = vmatpush1.bf16.msra.mxu0 0
      %8118 = vmatprep.subr.bf16.mxu0 0
      %8119 = vmatpush1.bf16.msra.mxu0 0
      %8120 = vmatprep.subr.bf16.mxu0 0
      %8121 = vmatpush1.bf16.msra.mxu0 0
      %8122 = vmatprep.subr.bf16.mxu0 0
      %8123 = vmatpush1.bf16.msra.mxu0 0
      %8124 = vmatprep.subr.bf16.mxu0 0
      %8125 = vmatpush1.bf16.msra.mxu0 0
      %8126 = vmatprep.subr.bf16.mxu0 0
      %8127 = vmatpush1.bf16.msra.mxu0 0
      %8128 = vmatprep.subr.bf16.mxu0 0
      %8129 = vmatpush1.bf16.msra.mxu0 0
      %8130 = vmatprep.subr.bf16.mxu0 0
      %8131 = vmatpush1.bf16.msra.mxu0 0
      %8132 = vmatprep.subr.bf16.mxu0 0
      %8133 = vmatpush1.bf16.msra.mxu0 0
      %8134 = vmatprep.subr.bf16.mxu0 0
      %8135 = vmatpush1.bf16.msra.mxu0 0
      %8136 = vmatprep.subr.bf16.mxu0 0
      %8137 = vmatpush1.bf16.msra.mxu0 0
      %8138 = vmatprep.mubr.bf16.mxu0 0
      %8139 = vmatmul.mubr.bf16.gmra.mrb[0].mxu0 %v8089
      %v8140 = vpop.f32.mrb[0].mxu0
      %v8141 = vadd.f32 0.0, %v8140
      %v8142 = vpop.f32.mrb[0].mxu0
      %v8143 = vpop.f32.mrb[0].mxu0
      %v8144 = vadd.f32 0.0, %v8143
      %v8145 = vpop.f32.mrb[0].mxu0
      %8146 = vmatprep.mubr.bf16.mxu0 0
      %8147 = vmatmul.mubr.bf16.gmra.mrb[0].mxu0 %v8092
      %v8148 = vpop.f32.mrb[0].mxu0
      %v8149 = vadd.f32 0.0, %v8148
      %v8150 = vpop.f32.mrb[0].mxu0
      %v8151 = vpop.f32.mrb[0].mxu0
      %v8152 = vadd.f32 0.0, %v8151
      %v8153 = vpop.f32.mrb[0].mxu0
      %8154 = vmatprep.mubr.bf16.mxu0 0
      %8155 = vmatmul.mubr.bf16.gmra.mrb[0].mxu0 %v8095
      %v8156 = vpop.f32.mrb[0].mxu0
      %v8157 = vadd.f32 0.0, %v8156
      %v8158 = vpop.f32.mrb[0].mxu0
      %v8159 = vpop.f32.mrb[0].mxu0
      %v8160 = vadd.f32 0.0, %v8159
      %v8161 = vpop.f32.mrb[0].mxu0
      %8162 = vmatprep.mubr.bf16.mxu0 0
      %8163 = vmatmul.mubr.bf16.gmra.mrb[0].mxu0 %v8098
      %v8164 = vpop.f32.mrb[0].mxu0
      %v8165 = vadd.f32 0.0, %v8164
      %v8166 = vpop.f32.mrb[0].mxu0
      %v8167 = vpop.f32.mrb[0].mxu0
      %v8168 = vadd.f32 0.0, %v8167
      %v8169 = vpop.f32.mrb[0].mxu0
      %8170 = vmatprep.mubr.bf16.mxu0 0
      %8171 = vmatmul.mubr.bf16.gmra.mrb[0].mxu0 %v8101
      %v8172 = vpop.f32.mrb[0].mxu0
      %v8173 = vadd.f32 0.0, %v8172
      %v8174 = vpop.f32.mrb[0].mxu0
      %v8175 = vpop.f32.mrb[0].mxu0
      %v8176 = vadd.f32 0.0, %v8175
      %v8177 = vpop.f32.mrb[0].mxu0
      %8178 = vmatprep.mubr.bf16.mxu0 0
      %8179 = vmatmul.mubr.bf16.gmra.mrb[0].mxu0 %v8104
      %v8180 = vpop.f32.mrb[0].mxu0
      %v8181 = vadd.f32 0.0, %v8180
      %v8182 = vpop.f32.mrb[0].mxu0
      %v8183 = vpop.f32.mrb[0].mxu0
      %v8184 = vpop.f32.mrb[0].mxu0
      %8185 = vdwg.mxu0
      %v8187 = vlaneseq
      %v8188 = vshrl.u32 %v8187, 7
      %v8189 = vsub.s32 0, %v8188
      %v8190 = vrot.slane %v8049, %v8189
      %v8192 = vadd.f32 %v8190, %v8141
      %v8193 = vadd.f32 %v8190, %v8144
      %v8194 = vadd.f32 %v8190, %v8149
      %v8195 = vadd.f32 %v8190, %v8152
      %v8196 = vadd.f32 %v8190, %v8157
      %v8197 = vadd.f32 %v8190, %v8160
      %v8198 = vadd.f32 %v8190, %v8165
      %v8199 = vadd.f32 %v8190, %v8168
      %v8200 = vadd.f32 %v8190, %v8173
      %v8201 = vadd.f32 %v8190, %v8176
      %v8202 = vadd.f32 %v8190, %v8181
      %v8203 = vpack.c.bf16 %v7923, %v7918
      %v8204 = vpack.c.bf16 %v7931, %v7926
      %v8205 = vpack.c.bf16 %v7939, %v7934
      %v8206 = vpack.c.bf16 %v7947, %v7942
      %v8207 = vpack.c.bf16 %v7955, %v7950
      %v8208 = vpack.c.bf16 %v7958, %v7958
      %s8209 = scalar_lea.vmem %s12, 32
      %v8210 = vld [vmem:[%s8209] sm:$0xf]
      %v8211 = vld [vmem:[%s8209 + $0x4] sm:$0xf]
      %v8212 = vld [vmem:[%s8209 + $0x8] sm:$0xf]
      %v8213 = vld [vmem:[%s8209 + $0xc] sm:$0xf]
      %v8214 = vld [vmem:[%s8209 + $0x10] sm:$0xf]
      %v8215 = vld [vmem:[%s8209 + $0x14] sm:$0xf]
      %v8216 = vld [vmem:[%s8209 + $0x18] sm:$0xf]
      %v8217 = vld [vmem:[%s8209 + $0x1c] sm:$0xf]
      %v8226 = vunpack.c.l.b16 %v8210
      %v8227 = vunpack.c.l.b16 %v8211
      %v8228 = vunpack.c.l.b16 %v8212
      %v8229 = vunpack.c.l.b16 %v8213
      %v8230 = vunpack.c.l.b16 %v8214
      %v8231 = vunpack.c.l.b16 %v8215
      %v8232 = vunpack.c.l.b16 %v8216
      %v8233 = vunpack.c.l.b16 %v8217
      %v8234 = vpack.c.b16 %v8227, %v8226
      %v8235 = vpack.c.b16 %v8229, %v8228
      %v8236 = vpack.c.b16 %v8231, %v8230
      %v8237 = vpack.c.b16 %v8233, %v8232
      %v8243 = vsel %vm3573, %v8203, 0
      %v8246 = vsel %vm3573, %v8204, 0
      %v8249 = vsel %vm3573, %v8205, 0
      %v8252 = vsel %vm3573, %v8206, 0
      %v8255 = vsel %vm3573, %v8207, 0
      %v8258 = vsel %vm3573, %v8208, 0
      %8260 = vmatprep.subr.bf16.mxu0 0
      %8261 = vmatpush1.bf16.msra.mxu0 %v8234
      %8262 = vmatprep.subr.bf16.mxu0 0
      %8263 = vmatpush1.bf16.msra.mxu0 %v8235
      %8264 = vmatprep.subr.bf16.mxu0 0
      %8265 = vmatpush1.bf16.msra.mxu0 %v8236
      %8266 = vmatprep.subr.bf16.mxu0 0
      %8267 = vmatpush1.bf16.msra.mxu0 %v8237
      %8268 = vmatprep.subr.bf16.mxu0 0
      %8269 = vmatpush1.bf16.msra.mxu0 0
      %8270 = vmatprep.subr.bf16.mxu0 0
      %8271 = vmatpush1.bf16.msra.mxu0 0
      %8272 = vmatprep.subr.bf16.mxu0 0
      %8273 = vmatpush1.bf16.msra.mxu0 0
      %8274 = vmatprep.subr.bf16.mxu0 0
      %8275 = vmatpush1.bf16.msra.mxu0 0
      %8276 = vmatprep.subr.bf16.mxu0 0
      %8277 = vmatpush1.bf16.msra.mxu0 0
      %8278 = vmatprep.subr.bf16.mxu0 0
      %8279 = vmatpush1.bf16.msra.mxu0 0
      %8280 = vmatprep.subr.bf16.mxu0 0
      %8281 = vmatpush1.bf16.msra.mxu0 0
      %8282 = vmatprep.subr.bf16.mxu0 0
      %8283 = vmatpush1.bf16.msra.mxu0 0
      %8284 = vmatprep.subr.bf16.mxu0 0
      %8285 = vmatpush1.bf16.msra.mxu0 0
      %8286 = vmatprep.subr.bf16.mxu0 0
      %8287 = vmatpush1.bf16.msra.mxu0 0
      %8288 = vmatprep.subr.bf16.mxu0 0
      %8289 = vmatpush1.bf16.msra.mxu0 0
      %8290 = vmatprep.subr.bf16.mxu0 0
      %8291 = vmatpush1.bf16.msra.mxu0 0
      %8292 = vmatprep.mubr.bf16.mxu0 0
      %8293 = vmatmul.mubr.bf16.gmra.mrb[0].mxu0 %v8243
      %v8294 = vpop.f32.mrb[0].mxu0
      %v8295 = vadd.f32 0.0, %v8294
      %v8296 = vpop.f32.mrb[0].mxu0
      %v8297 = vpop.f32.mrb[0].mxu0
      %v8298 = vadd.f32 0.0, %v8297
      %v8299 = vpop.f32.mrb[0].mxu0
      %8300 = vmatprep.mubr.bf16.mxu0 0
      %8301 = vmatmul.mubr.bf16.gmra.mrb[0].mxu0 %v8246
      %v8302 = vpop.f32.mrb[0].mxu0
      %v8303 = vadd.f32 0.0, %v8302
      %v8304 = vpop.f32.mrb[0].mxu0
      %v8305 = vpop.f32.mrb[0].mxu0
      %v8306 = vadd.f32 0.0, %v8305
      %v8307 = vpop.f32.mrb[0].mxu0
      %8308 = vmatprep.mubr.bf16.mxu0 0
      %8309 = vmatmul.mubr.bf16.gmra.mrb[0].mxu0 %v8249
      %v8310 = vpop.f32.mrb[0].mxu0
      %v8311 = vadd.f32 0.0, %v8310
      %v8312 = vpop.f32.mrb[0].mxu0
      %v8313 = vpop.f32.mrb[0].mxu0
      %v8314 = vadd.f32 0.0, %v8313
      %v8315 = vpop.f32.mrb[0].mxu0
      %8316 = vmatprep.mubr.bf16.mxu0 0
      %8317 = vmatmul.mubr.bf16.gmra.mrb[0].mxu0 %v8252
      %v8318 = vpop.f32.mrb[0].mxu0
      %v8319 = vadd.f32 0.0, %v8318
      %v8320 = vpop.f32.mrb[0].mxu0
      %v8321 = vpop.f32.mrb[0].mxu0
      %v8322 = vadd.f32 0.0, %v8321
      %v8323 = vpop.f32.mrb[0].mxu0
      %8324 = vmatprep.mubr.bf16.mxu0 0
      %8325 = vmatmul.mubr.bf16.gmra.mrb[0].mxu0 %v8255
      %v8326 = vpop.f32.mrb[0].mxu0
      %v8327 = vadd.f32 0.0, %v8326
      %v8328 = vpop.f32.mrb[0].mxu0
      %v8329 = vpop.f32.mrb[0].mxu0
      %v8330 = vadd.f32 0.0, %v8329
      %v8331 = vpop.f32.mrb[0].mxu0
      %8332 = vmatprep.mubr.bf16.mxu0 0
      %8333 = vmatmul.mubr.bf16.gmra.mrb[0].mxu0 %v8258
      %v8334 = vpop.f32.mrb[0].mxu0
      %v8335 = vadd.f32 0.0, %v8334
      %v8336 = vpop.f32.mrb[0].mxu0
      %v8337 = vpop.f32.mrb[0].mxu0
      %v8338 = vpop.f32.mrb[0].mxu0
      %8339 = vdwg.mxu0
      %v8340 = vadd.f32 %v8192, %v8295
      %v8341 = vadd.f32 %v8193, %v8298
      %v8342 = vadd.f32 %v8194, %v8303
      %v8343 = vadd.f32 %v8195, %v8306
      %v8344 = vadd.f32 %v8196, %v8311
      %v8345 = vadd.f32 %v8197, %v8314
      %v8346 = vadd.f32 %v8198, %v8319
      %v8347 = vadd.f32 %v8199, %v8322
      %v8348 = vadd.f32 %v8200, %v8327
      %v8349 = vadd.f32 %v8201, %v8330
      %v8350 = vadd.f32 %v8202, %v8335
      %v8351 = vpack.c.bf16 %v7966, %v7963
      %v8352 = vpack.c.bf16 %v7974, %v7971
      %v8353 = vpack.c.bf16 %v7982, %v7979
      %v8354 = vpack.c.bf16 %v7990, %v7987
      %v8355 = vpack.c.bf16 %v7998, %v7995
      %v8356 = vpack.c.bf16 %v8003, %v8003
      %s8357 = scalar_lea.vmem %s12, 64
      %v8358 = vld [vmem:[%s8357] sm:$0xf]
      %v8359 = vld [vmem:[%s8357 + $0x4] sm:$0xf]
      %v8360 = vld [vmem:[%s8357 + $0x8] sm:$0xf]
      %v8361 = vld [vmem:[%s8357 + $0xc] sm:$0xf]
      %v8362 = vld [vmem:[%s8357 + $0x10] sm:$0xf]
      %v8363 = vld [vmem:[%s8357 + $0x14] sm:$0xf]
      %v8364 = vld [vmem:[%s8357 + $0x18] sm:$0xf]
      %v8365 = vld [vmem:[%s8357 + $0x1c] sm:$0xf]
      %v8374 = vunpack.c.l.b16 %v8358
      %v8375 = vunpack.c.l.b16 %v8359
      %v8376 = vunpack.c.l.b16 %v8360
      %v8377 = vunpack.c.l.b16 %v8361
      %v8378 = vunpack.c.l.b16 %v8362
      %v8379 = vunpack.c.l.b16 %v8363
      %v8380 = vunpack.c.l.b16 %v8364
      %v8381 = vunpack.c.l.b16 %v8365
      %v8382 = vpack.c.b16 %v8375, %v8374
      %v8383 = vpack.c.b16 %v8377, %v8376
      %v8384 = vpack.c.b16 %v8379, %v8378
      %v8385 = vpack.c.b16 %v8381, %v8380
      %v8391 = vsel %vm3573, %v8351, 0
      %v8394 = vsel %vm3573, %v8352, 0
      %v8397 = vsel %vm3573, %v8353, 0
      %v8400 = vsel %vm3573, %v8354, 0
      %v8403 = vsel %vm3573, %v8355, 0
      %v8406 = vsel %vm3573, %v8356, 0
      %8408 = vmatprep.subr.bf16.mxu0 0
      %8409 = vmatpush1.bf16.msra.mxu0 %v8382
      %8410 = vmatprep.subr.bf16.mxu0 0
      %8411 = vmatpush1.bf16.msra.mxu0 %v8383
      %8412 = vmatprep.subr.bf16.mxu0 0
      %8413 = vmatpush1.bf16.msra.mxu0 %v8384
      %8414 = vmatprep.subr.bf16.mxu0 0
      %8415 = vmatpush1.bf16.msra.mxu0 %v8385
      %8416 = vmatprep.subr.bf16.mxu0 0
      %8417 = vmatpush1.bf16.msra.mxu0 0
      %8418 = vmatprep.subr.bf16.mxu0 0
      %8419 = vmatpush1.bf16.msra.mxu0 0
      %8420 = vmatprep.subr.bf16.mxu0 0
      %8421 = vmatpush1.bf16.msra.mxu0 0
      %8422 = vmatprep.subr.bf16.mxu0 0
      %8423 = vmatpush1.bf16.msra.mxu0 0
      %8424 = vmatprep.subr.bf16.mxu0 0
      %8425 = vmatpush1.bf16.msra.mxu0 0
      %8426 = vmatprep.subr.bf16.mxu0 0
      %8427 = vmatpush1.bf16.msra.mxu0 0
      %8428 = vmatprep.subr.bf16.mxu0 0
      %8429 = vmatpush1.bf16.msra.mxu0 0
      %8430 = vmatprep.subr.bf16.mxu0 0
      %8431 = vmatpush1.bf16.msra.mxu0 0
      %8432 = vmatprep.subr.bf16.mxu0 0
      %8433 = vmatpush1.bf16.msra.mxu0 0
      %8434 = vmatprep.subr.bf16.mxu0 0
      %8435 = vmatpush1.bf16.msra.mxu0 0
      %8436 = vmatprep.subr.bf16.mxu0 0
      %8437 = vmatpush1.bf16.msra.mxu0 0
      %8438 = vmatprep.subr.bf16.mxu0 0
      %8439 = vmatpush1.bf16.msra.mxu0 0
      %8440 = vmatprep.mubr.bf16.mxu0 0
      %8441 = vmatmul.mubr.bf16.gmra.mrb[0].mxu0 %v8391
      %v8442 = vpop.f32.mrb[0].mxu0
      %v8443 = vadd.f32 0.0, %v8442
      %v8444 = vpop.f32.mrb[0].mxu0
      %v8445 = vpop.f32.mrb[0].mxu0
      %v8446 = vadd.f32 0.0, %v8445
      %v8447 = vpop.f32.mrb[0].mxu0
      %8448 = vmatprep.mubr.bf16.mxu0 0
      %8449 = vmatmul.mubr.bf16.gmra.mrb[0].mxu0 %v8394
      %v8450 = vpop.f32.mrb[0].mxu0
      %v8451 = vadd.f32 0.0, %v8450
      %v8452 = vpop.f32.mrb[0].mxu0
      %v8453 = vpop.f32.mrb[0].mxu0
      %v8454 = vadd.f32 0.0, %v8453
      %v8455 = vpop.f32.mrb[0].mxu0
      %8456 = vmatprep.mubr.bf16.mxu0 0
      %8457 = vmatmul.mubr.bf16.gmra.mrb[0].mxu0 %v8397
      %v8458 = vpop.f32.mrb[0].mxu0
      %v8459 = vadd.f32 0.0, %v8458
      %v8460 = vpop.f32.mrb[0].mxu0
      %v8461 = vpop.f32.mrb[0].mxu0
      %v8462 = vadd.f32 0.0, %v8461
      %v8463 = vpop.f32.mrb[0].mxu0
      %8464 = vmatprep.mubr.bf16.mxu0 0
      %8465 = vmatmul.mubr.bf16.gmra.mrb[0].mxu0 %v8400
      %v8466 = vpop.f32.mrb[0].mxu0
      %v8467 = vadd.f32 0.0, %v8466
      %v8468 = vpop.f32.mrb[0].mxu0
      %v8469 = vpop.f32.mrb[0].mxu0
      %v8470 = vadd.f32 0.0, %v8469
      %v8471 = vpop.f32.mrb[0].mxu0
      %8472 = vmatprep.mubr.bf16.mxu0 0
      %8473 = vmatmul.mubr.bf16.gmra.mrb[0].mxu0 %v8403
      %v8474 = vpop.f32.mrb[0].mxu0
      %v8475 = vadd.f32 0.0, %v8474
      %v8476 = vpop.f32.mrb[0].mxu0
      %v8477 = vpop.f32.mrb[0].mxu0
      %v8478 = vadd.f32 0.0, %v8477
      %v8479 = vpop.f32.mrb[0].mxu0
      %8480 = vmatprep.mubr.bf16.mxu0 0
      %8481 = vmatmul.mubr.bf16.gmra.mrb[0].mxu0 %v8406
      %v8482 = vpop.f32.mrb[0].mxu0
      %v8483 = vadd.f32 0.0, %v8482
      %v8484 = vpop.f32.mrb[0].mxu0
      %v8485 = vpop.f32.mrb[0].mxu0
      %v8486 = vpop.f32.mrb[0].mxu0
      %8487 = vdwg.mxu0
      %v8488 = vadd.f32 %v8340, %v8443
      %v8489 = vadd.f32 %v8341, %v8446
      %v8490 = vadd.f32 %v8342, %v8451
      %v8491 = vadd.f32 %v8343, %v8454
      %v8492 = vadd.f32 %v8344, %v8459
      %v8493 = vadd.f32 %v8345, %v8462
      %v8494 = vadd.f32 %v8346, %v8467
      %v8495 = vadd.f32 %v8347, %v8470
      %v8496 = vadd.f32 %v8348, %v8475
      %v8497 = vadd.f32 %v8349, %v8478
      %v8498 = vadd.f32 %v8350, %v8483
      %v8499 = vpack.c.bf16 %v8011, %v8006
      %v8500 = vpack.c.bf16 %v8019, %v8014
      %v8501 = vpack.c.bf16 %v8027, %v8022
      %v8502 = vpack.c.bf16 %v8035, %v8030
      %v8503 = vpack.c.bf16 %v8043, %v8038
      %v8504 = vpack.c.bf16 %v8046, %v8046
      %s8505 = scalar_lea.vmem %s12, 96
      %v8506 = vld [vmem:[%s8505] sm:$0xf]
      %v8507 = vld [vmem:[%s8505 + $0x4] sm:$0xf]
      %v8508 = vld [vmem:[%s8505 + $0x8] sm:$0xf]
      %v8509 = vld [vmem:[%s8505 + $0xc] sm:$0xf]
      %v8510 = vld [vmem:[%s8505 + $0x10] sm:$0xf]
      %v8511 = vld [vmem:[%s8505 + $0x14] sm:$0xf]
      %v8512 = vld [vmem:[%s8505 + $0x18] sm:$0xf]
      %v8513 = vld [vmem:[%s8505 + $0x1c] sm:$0xf]
      %v8522 = vunpack.c.l.b16 %v8506
      %v8523 = vunpack.c.l.b16 %v8507
      %v8524 = vunpack.c.l.b16 %v8508
      %v8525 = vunpack.c.l.b16 %v8509
      %v8526 = vunpack.c.l.b16 %v8510
      %v8527 = vunpack.c.l.b16 %v8511
      %v8528 = vunpack.c.l.b16 %v8512
      %v8529 = vunpack.c.l.b16 %v8513
      %v8530 = vpack.c.b16 %v8523, %v8522
      %v8531 = vpack.c.b16 %v8525, %v8524
      %v8532 = vpack.c.b16 %v8527, %v8526
      %v8533 = vpack.c.b16 %v8529, %v8528
      %v8539 = vsel %vm3573, %v8499, 0
      %v8542 = vsel %vm3573, %v8500, 0
      %v8545 = vsel %vm3573, %v8501, 0
      %v8548 = vsel %vm3573, %v8502, 0
      %v8551 = vsel %vm3573, %v8503, 0
      %v8554 = vsel %vm3573, %v8504, 0
      %8556 = vmatprep.subr.bf16.mxu0 0
      %8557 = vmatpush1.bf16.msra.mxu0 %v8530
      %8558 = vmatprep.subr.bf16.mxu0 0
      %8559 = vmatpush1.bf16.msra.mxu0 %v8531
      %8560 = vmatprep.subr.bf16.mxu0 0
      %8561 = vmatpush1.bf16.msra.mxu0 %v8532
      %8562 = vmatprep.subr.bf16.mxu0 0
      %8563 = vmatpush1.bf16.msra.mxu0 %v8533
      %8564 = vmatprep.subr.bf16.mxu0 0
      %8565 = vmatpush1.bf16.msra.mxu0 0
      %8566 = vmatprep.subr.bf16.mxu0 0
      %8567 = vmatpush1.bf16.msra.mxu0 0
      %8568 = vmatprep.subr.bf16.mxu0 0
      %8569 = vmatpush1.bf16.msra.mxu0 0
      %8570 = vmatprep.subr.bf16.mxu0 0
      %8571 = vmatpush1.bf16.msra.mxu0 0
      %8572 = vmatprep.subr.bf16.mxu0 0
      %8573 = vmatpush1.bf16.msra.mxu0 0
      %8574 = vmatprep.subr.bf16.mxu0 0
      %8575 = vmatpush1.bf16.msra.mxu0 0
      %8576 = vmatprep.subr.bf16.mxu0 0
      %8577 = vmatpush1.bf16.msra.mxu0 0
      %8578 = vmatprep.subr.bf16.mxu0 0
      %8579 = vmatpush1.bf16.msra.mxu0 0
      %8580 = vmatprep.subr.bf16.mxu0 0
      %8581 = vmatpush1.bf16.msra.mxu0 0
      %8582 = vmatprep.subr.bf16.mxu0 0
      %8583 = vmatpush1.bf16.msra.mxu0 0
      %8584 = vmatprep.subr.bf16.mxu0 0
      %8585 = vmatpush1.bf16.msra.mxu0 0
      %8586 = vmatprep.subr.bf16.mxu0 0
      %8587 = vmatpush1.bf16.msra.mxu0 0
      %8588 = vmatprep.mubr.bf16.mxu0 0
      %8589 = vmatmul.mubr.bf16.gmra.mrb[0].mxu0 %v8539
      %v8590 = vpop.f32.mrb[0].mxu0
      %v8591 = vadd.f32 0.0, %v8590
      %v8592 = vpop.f32.mrb[0].mxu0
      %v8593 = vpop.f32.mrb[0].mxu0
      %v8594 = vadd.f32 0.0, %v8593
      %v8595 = vpop.f32.mrb[0].mxu0
      %8596 = vmatprep.mubr.bf16.mxu0 0
      %8597 = vmatmul.mubr.bf16.gmra.mrb[0].mxu0 %v8542
      %v8598 = vpop.f32.mrb[0].mxu0
      %v8599 = vadd.f32 0.0, %v8598
      %v8600 = vpop.f32.mrb[0].mxu0
      %v8601 = vpop.f32.mrb[0].mxu0
      %v8602 = vadd.f32 0.0, %v8601
      %v8603 = vpop.f32.mrb[0].mxu0
      %8604 = vmatprep.mubr.bf16.mxu0 0
      %8605 = vmatmul.mubr.bf16.gmra.mrb[0].mxu0 %v8545
      %v8606 = vpop.f32.mrb[0].mxu0
      %v8607 = vadd.f32 0.0, %v8606
      %v8608 = vpop.f32.mrb[0].mxu0
      %v8609 = vpop.f32.mrb[0].mxu0
      %v8610 = vadd.f32 0.0, %v8609
      %v8611 = vpop.f32.mrb[0].mxu0
      %8612 = vmatprep.mubr.bf16.mxu0 0
      %8613 = vmatmul.mubr.bf16.gmra.mrb[0].mxu0 %v8548
      %v8614 = vpop.f32.mrb[0].mxu0
      %v8615 = vadd.f32 0.0, %v8614
      %v8616 = vpop.f32.mrb[0].mxu0
      %v8617 = vpop.f32.mrb[0].mxu0
      %v8618 = vadd.f32 0.0, %v8617
      %v8619 = vpop.f32.mrb[0].mxu0
      %8620 = vmatprep.mubr.bf16.mxu0 0
      %8621 = vmatmul.mubr.bf16.gmra.mrb[0].mxu0 %v8551
      %v8622 = vpop.f32.mrb[0].mxu0
      %v8623 = vadd.f32 0.0, %v8622
      %v8624 = vpop.f32.mrb[0].mxu0
      %v8625 = vpop.f32.mrb[0].mxu0
      %v8626 = vadd.f32 0.0, %v8625
      %v8627 = vpop.f32.mrb[0].mxu0
      %8628 = vmatprep.mubr.bf16.mxu0 0
      %8629 = vmatmul.mubr.bf16.gmra.mrb[0].mxu0 %v8554
      %v8630 = vpop.f32.mrb[0].mxu0
      %v8631 = vadd.f32 0.0, %v8630
      %v8632 = vpop.f32.mrb[0].mxu0
      %v8633 = vpop.f32.mrb[0].mxu0
      %v8634 = vpop.f32.mrb[0].mxu0
      %8635 = vdwg.mxu0
      %v8636 = vadd.f32 %v8488, %v8591
      %v8637 = vadd.f32 %v8489, %v8594
      %v8638 = vadd.f32 %v8490, %v8599
      %v8639 = vadd.f32 %v8491, %v8602
      %v8640 = vadd.f32 %v8492, %v8607
      %v8641 = vadd.f32 %v8493, %v8610
      %v8642 = vadd.f32 %v8494, %v8615
      %v8643 = vadd.f32 %v8495, %v8618
      %v8644 = vadd.f32 %v8496, %v8623
      %v8645 = vadd.f32 %v8497, %v8626
      %v8646 = vadd.f32 %v8498, %v8631
      %v8647 = vtanh.pop %v8636
      %v8648 = vtanh.pop %v8637
      %v8649 = vtanh.pop %v8638
      %v8650 = vtanh.pop %v8639
      %v8651 = vtanh.pop %v8640
      %v8652 = vtanh.pop %v8641
      %v8653 = vtanh.pop %v8642
      %v8654 = vtanh.pop %v8643
      %v8655 = vtanh.pop %v8644
      %v8656 = vtanh.pop %v8645
      %v8657 = vtanh.pop %v8646
      %v8658 = vpack.c.bf16 %v8648, %v8647
      %v8659 = vpack.c.bf16 %v8650, %v8649
      %v8660 = vpack.c.bf16 %v8652, %v8651
      %v8661 = vpack.c.bf16 %v8654, %v8653
      %v8662 = vpack.c.bf16 %v8656, %v8655
      %v8663 = vpack.c.bf16 %v8657, %v8657
      %v8664 = vld [vmem:[%s14] sm:$0xf]
      %v8665 = vld [vmem:[%s14 + $0x4] sm:$0xf]
      %v8666 = vld [vmem:[%s14 + $0x8] sm:$0xf]
      %v8667 = vld [vmem:[%s14 + $0xc] sm:$0xf]
      %v8668 = vld [vmem:[%s14 + $0x10] sm:$0xf]
      %v8669 = vld [vmem:[%s14 + $0x14] sm:$0xf]
      %v8670 = vld [vmem:[%s14 + $0x18] sm:$0xf]
      %v8671 = vld [vmem:[%s14 + $0x1c] sm:$0xf]
      %v8672 = vld [vmem:[%s14 + $0x20] sm:$0xf]
      %v8673 = vld [vmem:[%s14 + $0x24] sm:$0xf]
      %v8674 = vld [vmem:[%s14 + $0x28] sm:$0xf]
      %v8675 = vld [vmem:[%s14 + $0x2c] sm:$0xf]
      %v8676 = vld [vmem:[%s14 + $0x30] sm:$0xf]
      %v8677 = vld [vmem:[%s14 + $0x34] sm:$0xf]
      %v8678 = vld [vmem:[%s14 + $0x38] sm:$0xf]
      %v8679 = vld [vmem:[%s14 + $0x3c] sm:$0xf]
      %v8680 = vld [vmem:[%s14 + $0x40] sm:$0xf]
      %v8681 = vld [vmem:[%s14 + $0x44] sm:$0xf]
      %v8682 = vld [vmem:[%s14 + $0x48] sm:$0xf]
      %v8683 = vld [vmem:[%s14 + $0x4c] sm:$0xf]
      %v8684 = vld [vmem:[%s14 + $0x50] sm:$0xf]
      %v8685 = vld [vmem:[%s14 + $0x54] sm:$0xf]
      %v8686 = vld [vmem:[%s14 + $0x58] sm:$0xf]
      %v8687 = vld [vmem:[%s14 + $0x5c] sm:$0xf]
      %v8688 = vld [vmem:[%s14 + $0x60] sm:$0xf]
      %v8689 = vld [vmem:[%s14 + $0x64] sm:$0xf]
      %v8690 = vld [vmem:[%s14 + $0x68] sm:$0xf]
      %v8691 = vld [vmem:[%s14 + $0x6c] sm:$0xf]
      %v8692 = vld [vmem:[%s14 + $0x70] sm:$0xf]
      %v8693 = vld [vmem:[%s14 + $0x74] sm:$0xf]
      %v8694 = vld [vmem:[%s14 + $0x78] sm:$0xf]
      %v8695 = vld [vmem:[%s14 + $0x7c] sm:$0xf]
      %s8696 = scalar_lea.vmem %s12, 128
      %v8697 = vld [vmem:[%s8696] sm:$0xf]
      %v8698 = vld [vmem:[%s8696 + $0x4] sm:$0xf]
      %v8699 = vld [vmem:[%s8696 + $0x8] sm:$0xf]
      %v8700 = vld [vmem:[%s8696 + $0xc] sm:$0xf]
      %v8701 = vld [vmem:[%s8696 + $0x10] sm:$0xf]
      %v8702 = vld [vmem:[%s8696 + $0x14] sm:$0xf]
      %v8703 = vld [vmem:[%s8696 + $0x18] sm:$0xf]
      %v8704 = vld [vmem:[%s8696 + $0x1c] sm:$0xf]
      %v8713 = vunpack.c.l.b16 %v8697
      %v8714 = vunpack.c.l.b16 %v8698
      %v8715 = vunpack.c.l.b16 %v8699
      %v8716 = vunpack.c.l.b16 %v8700
      %v8717 = vunpack.c.l.b16 %v8701
      %v8718 = vunpack.c.l.b16 %v8702
      %v8719 = vunpack.c.l.b16 %v8703
      %v8720 = vunpack.c.l.b16 %v8704
      %v8721 = vpack.c.b16 %v8714, %v8713
      %v8722 = vpack.c.b16 %v8716, %v8715
      %v8723 = vpack.c.b16 %v8718, %v8717
      %v8724 = vpack.c.b16 %v8720, %v8719
      %8729 = vmatprep.subr.bf16.mxu0 0
      %8730 = vmatpush1.bf16.msra.mxu0 %v8721
      %8731 = vmatprep.subr.bf16.mxu0 0
      %8732 = vmatpush1.bf16.msra.mxu0 %v8722
      %8733 = vmatprep.subr.bf16.mxu0 0
      %8734 = vmatpush1.bf16.msra.mxu0 %v8723
      %8735 = vmatprep.subr.bf16.mxu0 0
      %8736 = vmatpush1.bf16.msra.mxu0 %v8724
      %8737 = vmatprep.subr.bf16.mxu0 0
      %8738 = vmatpush1.bf16.msra.mxu0 0
      %8739 = vmatprep.subr.bf16.mxu0 0
      %8740 = vmatpush1.bf16.msra.mxu0 0
      %8741 = vmatprep.subr.bf16.mxu0 0
      %8742 = vmatpush1.bf16.msra.mxu0 0
      %8743 = vmatprep.subr.bf16.mxu0 0
      %8744 = vmatpush1.bf16.msra.mxu0 0
      %8745 = vmatprep.subr.bf16.mxu0 0
      %8746 = vmatpush1.bf16.msra.mxu0 0
      %8747 = vmatprep.subr.bf16.mxu0 0
      %8748 = vmatpush1.bf16.msra.mxu0 0
      %8749 = vmatprep.subr.bf16.mxu0 0
      %8750 = vmatpush1.bf16.msra.mxu0 0
      %8751 = vmatprep.subr.bf16.mxu0 0
      %8752 = vmatpush1.bf16.msra.mxu0 0
      %8753 = vmatprep.subr.bf16.mxu0 0
      %8754 = vmatpush1.bf16.msra.mxu0 0
      %8755 = vmatprep.subr.bf16.mxu0 0
      %8756 = vmatpush1.bf16.msra.mxu0 0
      %8757 = vmatprep.subr.bf16.mxu0 0
      %8758 = vmatpush1.bf16.msra.mxu0 0
      %8759 = vmatprep.subr.bf16.mxu0 0
      %8760 = vmatpush1.bf16.msra.mxu0 0
      %8761 = vmatprep.mubr.bf16.mxu0 0
      %8762 = vmatmul.mubr.bf16.gmra.mrb[0].mxu0 %v8089
      %v8763 = vpop.f32.mrb[0].mxu0
      %v8764 = vadd.f32 0.0, %v8763
      %v8765 = vpop.f32.mrb[0].mxu0
      %v8766 = vpop.f32.mrb[0].mxu0
      %v8767 = vadd.f32 0.0, %v8766
      %v8768 = vpop.f32.mrb[0].mxu0
      %8769 = vmatprep.mubr.bf16.mxu0 0
      %8770 = vmatmul.mubr.bf16.gmra.mrb[0].mxu0 %v8092
      %v8771 = vpop.f32.mrb[0].mxu0
      %v8772 = vadd.f32 0.0, %v8771
      %v8773 = vpop.f32.mrb[0].mxu0
      %v8774 = vpop.f32.mrb[0].mxu0
      %v8775 = vadd.f32 0.0, %v8774
      %v8776 = vpop.f32.mrb[0].mxu0
      %8777 = vmatprep.mubr.bf16.mxu0 0
      %8778 = vmatmul.mubr.bf16.gmra.mrb[0].mxu0 %v8095
      %v8779 = vpop.f32.mrb[0].mxu0
      %v8780 = vadd.f32 0.0, %v8779
      %v8781 = vpop.f32.mrb[0].mxu0
      %v8782 = vpop.f32.mrb[0].mxu0
      %v8783 = vadd.f32 0.0, %v8782
      %v8784 = vpop.f32.mrb[0].mxu0
      %8785 = vmatprep.mubr.bf16.mxu0 0
      %8786 = vmatmul.mubr.bf16.gmra.mrb[0].mxu0 %v8098
      %v8787 = vpop.f32.mrb[0].mxu0
      %v8788 = vadd.f32 0.0, %v8787
      %v8789 = vpop.f32.mrb[0].mxu0
      %v8790 = vpop.f32.mrb[0].mxu0
      %v8791 = vadd.f32 0.0, %v8790
      %v8792 = vpop.f32.mrb[0].mxu0
      %8793 = vmatprep.mubr.bf16.mxu0 0
      %8794 = vmatmul.mubr.bf16.gmra.mrb[0].mxu0 %v8101
      %v8795 = vpop.f32.mrb[0].mxu0
      %v8796 = vadd.f32 0.0, %v8795
      %v8797 = vpop.f32.mrb[0].mxu0
      %v8798 = vpop.f32.mrb[0].mxu0
      %v8799 = vadd.f32 0.0, %v8798
      %v8800 = vpop.f32.mrb[0].mxu0
      %8801 = vmatprep.mubr.bf16.mxu0 0
      %8802 = vmatmul.mubr.bf16.gmra.mrb[0].mxu0 %v8104
      %v8803 = vpop.f32.mrb[0].mxu0
      %v8804 = vadd.f32 0.0, %v8803
      %v8805 = vpop.f32.mrb[0].mxu0
      %v8806 = vpop.f32.mrb[0].mxu0
      %v8807 = vpop.f32.mrb[0].mxu0
      %8808 = vdwg.mxu0
      %v8809 = vadd.f32 %v8190, %v8764
      %v8810 = vadd.f32 %v8190, %v8767
      %v8811 = vadd.f32 %v8190, %v8772
      %v8812 = vadd.f32 %v8190, %v8775
      %v8813 = vadd.f32 %v8190, %v8780
      %v8814 = vadd.f32 %v8190, %v8783
      %v8815 = vadd.f32 %v8190, %v8788
      %v8816 = vadd.f32 %v8190, %v8791
      %v8817 = vadd.f32 %v8190, %v8796
      %v8818 = vadd.f32 %v8190, %v8799
      %v8819 = vadd.f32 %v8190, %v8804
      %s8820 = scalar_lea.vmem %s12, 160
      %v8821 = vld [vmem:[%s8820] sm:$0xf]
      %v8822 = vld [vmem:[%s8820 + $0x4] sm:$0xf]
      %v8823 = vld [vmem:[%s8820 + $0x8] sm:$0xf]
      %v8824 = vld [vmem:[%s8820 + $0xc] sm:$0xf]
      %v8825 = vld [vmem:[%s8820 + $0x10] sm:$0xf]
      %v8826 = vld [vmem:[%s8820 + $0x14] sm:$0xf]
      %v8827 = vld [vmem:[%s8820 + $0x18] sm:$0xf]
      %v8828 = vld [vmem:[%s8820 + $0x1c] sm:$0xf]
      %v8837 = vunpack.c.l.b16 %v8821
      %v8838 = vunpack.c.l.b16 %v8822
      %v8839 = vunpack.c.l.b16 %v8823
      %v8840 = vunpack.c.l.b16 %v8824
      %v8841 = vunpack.c.l.b16 %v8825
      %v8842 = vunpack.c.l.b16 %v8826
      %v8843 = vunpack.c.l.b16 %v8827
      %v8844 = vunpack.c.l.b16 %v8828
      %v8845 = vpack.c.b16 %v8838, %v8837
      %v8846 = vpack.c.b16 %v8840, %v8839
      %v8847 = vpack.c.b16 %v8842, %v8841
      %v8848 = vpack.c.b16 %v8844, %v8843
      %8853 = vmatprep.subr.bf16.mxu0 0
      %8854 = vmatpush1.bf16.msra.mxu0 %v8845
      %8855 = vmatprep.subr.bf16.mxu0 0
      %8856 = vmatpush1.bf16.msra.mxu0 %v8846
      %8857 = vmatprep.subr.bf16.mxu0 0
      %8858 = vmatpush1.bf16.msra.mxu0 %v8847
      %8859 = vmatprep.subr.bf16.mxu0 0
      %8860 = vmatpush1.bf16.msra.mxu0 %v8848
      %8861 = vmatprep.subr.bf16.mxu0 0
      %8862 = vmatpush1.bf16.msra.mxu0 0
      %8863 = vmatprep.subr.bf16.mxu0 0
      %8864 = vmatpush1.bf16.msra.mxu0 0
      %8865 = vmatprep.subr.bf16.mxu0 0
      %8866 = vmatpush1.bf16.msra.mxu0 0
      %8867 = vmatprep.subr.bf16.mxu0 0
      %8868 = vmatpush1.bf16.msra.mxu0 0
      %8869 = vmatprep.subr.bf16.mxu0 0
      %8870 = vmatpush1.bf16.msra.mxu0 0
      %8871 = vmatprep.subr.bf16.mxu0 0
      %8872 = vmatpush1.bf16.msra.mxu0 0
      %8873 = vmatprep.subr.bf16.mxu0 0
      %8874 = vmatpush1.bf16.msra.mxu0 0
      %8875 = vmatprep.subr.bf16.mxu0 0
      %8876 = vmatpush1.bf16.msra.mxu0 0
      %8877 = vmatprep.subr.bf16.mxu0 0
      %8878 = vmatpush1.bf16.msra.mxu0 0
      %8879 = vmatprep.subr.bf16.mxu0 0
      %8880 = vmatpush1.bf16.msra.mxu0 0
      %8881 = vmatprep.subr.bf16.mxu0 0
      %8882 = vmatpush1.bf16.msra.mxu0 0
      %8883 = vmatprep.subr.bf16.mxu0 0
      %8884 = vmatpush1.bf16.msra.mxu0 0
      %8885 = vmatprep.mubr.bf16.mxu0 0
      %8886 = vmatmul.mubr.bf16.gmra.mrb[0].mxu0 %v8243
      %v8887 = vpop.f32.mrb[0].mxu0
      %v8888 = vadd.f32 0.0, %v8887
      %v8889 = vpop.f32.mrb[0].mxu0
      %v8890 = vpop.f32.mrb[0].mxu0
      %v8891 = vadd.f32 0.0, %v8890
      %v8892 = vpop.f32.mrb[0].mxu0
      %8893 = vmatprep.mubr.bf16.mxu0 0
      %8894 = vmatmul.mubr.bf16.gmra.mrb[0].mxu0 %v8246
      %v8895 = vpop.f32.mrb[0].mxu0
      %v8896 = vadd.f32 0.0, %v8895
      %v8897 = vpop.f32.mrb[0].mxu0
      %v8898 = vpop.f32.mrb[0].mxu0
      %v8899 = vadd.f32 0.0, %v8898
      %v8900 = vpop.f32.mrb[0].mxu0
      %8901 = vmatprep.mubr.bf16.mxu0 0
      %8902 = vmatmul.mubr.bf16.gmra.mrb[0].mxu0 %v8249
      %v8903 = vpop.f32.mrb[0].mxu0
      %v8904 = vadd.f32 0.0, %v8903
      %v8905 = vpop.f32.mrb[0].mxu0
      %v8906 = vpop.f32.mrb[0].mxu0
      %v8907 = vadd.f32 0.0, %v8906
      %v8908 = vpop.f32.mrb[0].mxu0
      %8909 = vmatprep.mubr.bf16.mxu0 0
      %8910 = vmatmul.mubr.bf16.gmra.mrb[0].mxu0 %v8252
      %v8911 = vpop.f32.mrb[0].mxu0
      %v8912 = vadd.f32 0.0, %v8911
      %v8913 = vpop.f32.mrb[0].mxu0
      %v8914 = vpop.f32.mrb[0].mxu0
      %v8915 = vadd.f32 0.0, %v8914
      %v8916 = vpop.f32.mrb[0].mxu0
      %8917 = vmatprep.mubr.bf16.mxu0 0
      %8918 = vmatmul.mubr.bf16.gmra.mrb[0].mxu0 %v8255
      %v8919 = vpop.f32.mrb[0].mxu0
      %v8920 = vadd.f32 0.0, %v8919
      %v8921 = vpop.f32.mrb[0].mxu0
      %v8922 = vpop.f32.mrb[0].mxu0
      %v8923 = vadd.f32 0.0, %v8922
      %v8924 = vpop.f32.mrb[0].mxu0
      %8925 = vmatprep.mubr.bf16.mxu0 0
      %8926 = vmatmul.mubr.bf16.gmra.mrb[0].mxu0 %v8258
      %v8927 = vpop.f32.mrb[0].mxu0
      %v8928 = vadd.f32 0.0, %v8927
      %v8929 = vpop.f32.mrb[0].mxu0
      %v8930 = vpop.f32.mrb[0].mxu0
      %v8931 = vpop.f32.mrb[0].mxu0
      %8932 = vdwg.mxu0
      %v8933 = vadd.f32 %v8809, %v8888
      %v8934 = vadd.f32 %v8810, %v8891
      %v8935 = vadd.f32 %v8811, %v8896
      %v8936 = vadd.f32 %v8812, %v8899
      %v8937 = vadd.f32 %v8813, %v8904
      %v8938 = vadd.f32 %v8814, %v8907
      %v8939 = vadd.f32 %v8815, %v8912
      %v8940 = vadd.f32 %v8816, %v8915
      %v8941 = vadd.f32 %v8817, %v8920
      %v8942 = vadd.f32 %v8818, %v8923
      %v8943 = vadd.f32 %v8819, %v8928
      %s8944 = scalar_lea.vmem %s12, 192
      %v8945 = vld [vmem:[%s8944] sm:$0xf]
      %v8946 = vld [vmem:[%s8944 + $0x4] sm:$0xf]
      %v8947 = vld [vmem:[%s8944 + $0x8] sm:$0xf]
      %v8948 = vld [vmem:[%s8944 + $0xc] sm:$0xf]
      %v8949 = vld [vmem:[%s8944 + $0x10] sm:$0xf]
      %v8950 = vld [vmem:[%s8944 + $0x14] sm:$0xf]
      %v8951 = vld [vmem:[%s8944 + $0x18] sm:$0xf]
      %v8952 = vld [vmem:[%s8944 + $0x1c] sm:$0xf]
      %v8961 = vunpack.c.l.b16 %v8945
      %v8962 = vunpack.c.l.b16 %v8946
      %v8963 = vunpack.c.l.b16 %v8947
      %v8964 = vunpack.c.l.b16 %v8948
      %v8965 = vunpack.c.l.b16 %v8949
      %v8966 = vunpack.c.l.b16 %v8950
      %v8967 = vunpack.c.l.b16 %v8951
      %v8968 = vunpack.c.l.b16 %v8952
      %v8969 = vpack.c.b16 %v8962, %v8961
      %v8970 = vpack.c.b16 %v8964, %v8963
      %v8971 = vpack.c.b16 %v8966, %v8965
      %v8972 = vpack.c.b16 %v8968, %v8967
      %8977 = vmatprep.subr.bf16.mxu0 0
      %8978 = vmatpush1.bf16.msra.mxu0 %v8969
      %8979 = vmatprep.subr.bf16.mxu0 0
      %8980 = vmatpush1.bf16.msra.mxu0 %v8970
      %8981 = vmatprep.subr.bf16.mxu0 0
      %8982 = vmatpush1.bf16.msra.mxu0 %v8971
      %8983 = vmatprep.subr.bf16.mxu0 0
      %8984 = vmatpush1.bf16.msra.mxu0 %v8972
      %8985 = vmatprep.subr.bf16.mxu0 0
      %8986 = vmatpush1.bf16.msra.mxu0 0
      %8987 = vmatprep.subr.bf16.mxu0 0
      %8988 = vmatpush1.bf16.msra.mxu0 0
      %8989 = vmatprep.subr.bf16.mxu0 0
      %8990 = vmatpush1.bf16.msra.mxu0 0
      %8991 = vmatprep.subr.bf16.mxu0 0
      %8992 = vmatpush1.bf16.msra.mxu0 0
      %8993 = vmatprep.subr.bf16.mxu0 0
      %8994 = vmatpush1.bf16.msra.mxu0 0
      %8995 = vmatprep.subr.bf16.mxu0 0
      %8996 = vmatpush1.bf16.msra.mxu0 0
      %8997 = vmatprep.subr.bf16.mxu0 0
      %8998 = vmatpush1.bf16.msra.mxu0 0
      %8999 = vmatprep.subr.bf16.mxu0 0
      %9000 = vmatpush1.bf16.msra.mxu0 0
      %9001 = vmatprep.subr.bf16.mxu0 0
      %9002 = vmatpush1.bf16.msra.mxu0 0
      %9003 = vmatprep.subr.bf16.mxu0 0
      %9004 = vmatpush1.bf16.msra.mxu0 0
      %9005 = vmatprep.subr.bf16.mxu0 0
      %9006 = vmatpush1.bf16.msra.mxu0 0
      %9007 = vmatprep.subr.bf16.mxu0 0
      %9008 = vmatpush1.bf16.msra.mxu0 0
      %9009 = vmatprep.mubr.bf16.mxu0 0
      %9010 = vmatmul.mubr.bf16.gmra.mrb[0].mxu0 %v8391
      %v9011 = vpop.f32.mrb[0].mxu0
      %v9012 = vadd.f32 0.0, %v9011
      %v9013 = vpop.f32.mrb[0].mxu0
      %v9014 = vpop.f32.mrb[0].mxu0
      %v9015 = vadd.f32 0.0, %v9014
      %v9016 = vpop.f32.mrb[0].mxu0
      %9017 = vmatprep.mubr.bf16.mxu0 0
      %9018 = vmatmul.mubr.bf16.gmra.mrb[0].mxu0 %v8394
      %v9019 = vpop.f32.mrb[0].mxu0
      %v9020 = vadd.f32 0.0, %v9019
      %v9021 = vpop.f32.mrb[0].mxu0
      %v9022 = vpop.f32.mrb[0].mxu0
      %v9023 = vadd.f32 0.0, %v9022
      %v9024 = vpop.f32.mrb[0].mxu0
      %9025 = vmatprep.mubr.bf16.mxu0 0
      %9026 = vmatmul.mubr.bf16.gmra.mrb[0].mxu0 %v8397
      %v9027 = vpop.f32.mrb[0].mxu0
      %v9028 = vadd.f32 0.0, %v9027
      %v9029 = vpop.f32.mrb[0].mxu0
      %v9030 = vpop.f32.mrb[0].mxu0
      %v9031 = vadd.f32 0.0, %v9030
      %v9032 = vpop.f32.mrb[0].mxu0
      %9033 = vmatprep.mubr.bf16.mxu0 0
      %9034 = vmatmul.mubr.bf16.gmra.mrb[0].mxu0 %v8400
      %v9035 = vpop.f32.mrb[0].mxu0
      %v9036 = vadd.f32 0.0, %v9035
      %v9037 = vpop.f32.mrb[0].mxu0
      %v9038 = vpop.f32.mrb[0].mxu0
      %v9039 = vadd.f32 0.0, %v9038
      %v9040 = vpop.f32.mrb[0].mxu0
      %9041 = vmatprep.mubr.bf16.mxu0 0
      %9042 = vmatmul.mubr.bf16.gmra.mrb[0].mxu0 %v8403
      %v9043 = vpop.f32.mrb[0].mxu0
      %v9044 = vadd.f32 0.0, %v9043
      %v9045 = vpop.f32.mrb[0].mxu0
      %v9046 = vpop.f32.mrb[0].mxu0
      %v9047 = vadd.f32 0.0, %v9046
      %v9048 = vpop.f32.mrb[0].mxu0
      %9049 = vmatprep.mubr.bf16.mxu0 0
      %9050 = vmatmul.mubr.bf16.gmra.mrb[0].mxu0 %v8406
      %v9051 = vpop.f32.mrb[0].mxu0
      %v9052 = vadd.f32 0.0, %v9051
      %v9053 = vpop.f32.mrb[0].mxu0
      %v9054 = vpop.f32.mrb[0].mxu0
      %v9055 = vpop.f32.mrb[0].mxu0
      %9056 = vdwg.mxu0
      %v9057 = vadd.f32 %v8933, %v9012
      %v9058 = vadd.f32 %v8934, %v9015
      %v9059 = vadd.f32 %v8935, %v9020
      %v9060 = vadd.f32 %v8936, %v9023
      %v9061 = vadd.f32 %v8937, %v9028
      %v9062 = vadd.f32 %v8938, %v9031
      %v9063 = vadd.f32 %v8939, %v9036
      %v9064 = vadd.f32 %v8940, %v9039
      %v9065 = vadd.f32 %v8941, %v9044
      %v9066 = vadd.f32 %v8942, %v9047
      %v9067 = vadd.f32 %v8943, %v9052
      %s9068 = scalar_lea.vmem %s12, 224
      %v9069 = vld [vmem:[%s9068] sm:$0xf]
      %v9070 = vld [vmem:[%s9068 + $0x4] sm:$0xf]
      %v9071 = vld [vmem:[%s9068 + $0x8] sm:$0xf]
      %v9072 = vld [vmem:[%s9068 + $0xc] sm:$0xf]
      %v9073 = vld [vmem:[%s9068 + $0x10] sm:$0xf]
      %v9074 = vld [vmem:[%s9068 + $0x14] sm:$0xf]
      %v9075 = vld [vmem:[%s9068 + $0x18] sm:$0xf]
      %v9076 = vld [vmem:[%s9068 + $0x1c] sm:$0xf]
      %v9085 = vunpack.c.l.b16 %v9069
      %v9086 = vunpack.c.l.b16 %v9070
      %v9087 = vunpack.c.l.b16 %v9071
      %v9088 = vunpack.c.l.b16 %v9072
      %v9089 = vunpack.c.l.b16 %v9073
      %v9090 = vunpack.c.l.b16 %v9074
      %v9091 = vunpack.c.l.b16 %v9075
      %v9092 = vunpack.c.l.b16 %v9076
      %v9093 = vpack.c.b16 %v9086, %v9085
      %v9094 = vpack.c.b16 %v9088, %v9087
      %v9095 = vpack.c.b16 %v9090, %v9089
      %v9096 = vpack.c.b16 %v9092, %v9091
      %9101 = vmatprep.subr.bf16.mxu0 0
      %9102 = vmatpush1.bf16.msra.mxu0 %v9093
      %9103 = vmatprep.subr.bf16.mxu0 0
      %9104 = vmatpush1.bf16.msra.mxu0 %v9094
      %9105 = vmatprep.subr.bf16.mxu0 0
      %9106 = vmatpush1.bf16.msra.mxu0 %v9095
      %9107 = vmatprep.subr.bf16.mxu0 0
      %9108 = vmatpush1.bf16.msra.mxu0 %v9096
      %9109 = vmatprep.subr.bf16.mxu0 0
      %9110 = vmatpush1.bf16.msra.mxu0 0
      %9111 = vmatprep.subr.bf16.mxu0 0
      %9112 = vmatpush1.bf16.msra.mxu0 0
      %9113 = vmatprep.subr.bf16.mxu0 0
      %9114 = vmatpush1.bf16.msra.mxu0 0
      %9115 = vmatprep.subr.bf16.mxu0 0
      %9116 = vmatpush1.bf16.msra.mxu0 0
      %9117 = vmatprep.subr.bf16.mxu0 0
      %9118 = vmatpush1.bf16.msra.mxu0 0
      %9119 = vmatprep.subr.bf16.mxu0 0
      %9120 = vmatpush1.bf16.msra.mxu0 0
      %9121 = vmatprep.subr.bf16.mxu0 0
      %9122 = vmatpush1.bf16.msra.mxu0 0
      %9123 = vmatprep.subr.bf16.mxu0 0
      %9124 = vmatpush1.bf16.msra.mxu0 0
      %9125 = vmatprep.subr.bf16.mxu0 0
      %9126 = vmatpush1.bf16.msra.mxu0 0
      %9127 = vmatprep.subr.bf16.mxu0 0
      %9128 = vmatpush1.bf16.msra.mxu0 0
      %9129 = vmatprep.subr.bf16.mxu0 0
      %9130 = vmatpush1.bf16.msra.mxu0 0
      %9131 = vmatprep.subr.bf16.mxu0 0
      %9132 = vmatpush1.bf16.msra.mxu0 0
      %9133 = vmatprep.mubr.bf16.mxu0 0
      %9134 = vmatmul.mubr.bf16.gmra.mrb[0].mxu0 %v8539
      %v9135 = vpop.f32.mrb[0].mxu0
      %v9136 = vadd.f32 0.0, %v9135
      %v9137 = vpop.f32.mrb[0].mxu0
      %v9138 = vpop.f32.mrb[0].mxu0
      %v9139 = vadd.f32 0.0, %v9138
      %v9140 = vpop.f32.mrb[0].mxu0
      %9141 = vmatprep.mubr.bf16.mxu0 0
      %9142 = vmatmul.mubr.bf16.gmra.mrb[0].mxu0 %v8542
      %v9143 = vpop.f32.mrb[0].mxu0
      %v9144 = vadd.f32 0.0, %v9143
      %v9145 = vpop.f32.mrb[0].mxu0
      %v9146 = vpop.f32.mrb[0].mxu0
      %v9147 = vadd.f32 0.0, %v9146
      %v9148 = vpop.f32.mrb[0].mxu0
      %9149 = vmatprep.mubr.bf16.mxu0 0
      %9150 = vmatmul.mubr.bf16.gmra.mrb[0].mxu0 %v8545
      %v9151 = vpop.f32.mrb[0].mxu0
      %v9152 = vadd.f32 0.0, %v9151
      %v9153 = vpop.f32.mrb[0].mxu0
      %v9154 = vpop.f32.mrb[0].mxu0
      %v9155 = vadd.f32 0.0, %v9154
      %v9156 = vpop.f32.mrb[0].mxu0
      %9157 = vmatprep.mubr.bf16.mxu0 0
      %9158 = vmatmul.mubr.bf16.gmra.mrb[0].mxu0 %v8548
      %v9159 = vpop.f32.mrb[0].mxu0
      %v9160 = vadd.f32 0.0, %v9159
      %v9161 = vpop.f32.mrb[0].mxu0
      %v9162 = vpop.f32.mrb[0].mxu0
      %v9163 = vadd.f32 0.0, %v9162
      %v9164 = vpop.f32.mrb[0].mxu0
      %9165 = vmatprep.mubr.bf16.mxu0 0
      %9166 = vmatmul.mubr.bf16.gmra.mrb[0].mxu0 %v8551
      %v9167 = vpop.f32.mrb[0].mxu0
      %v9168 = vadd.f32 0.0, %v9167
      %v9169 = vpop.f32.mrb[0].mxu0
      %v9170 = vpop.f32.mrb[0].mxu0
      %v9171 = vadd.f32 0.0, %v9170
      %v9172 = vpop.f32.mrb[0].mxu0
      %9173 = vmatprep.mubr.bf16.mxu0 0
      %9174 = vmatmul.mubr.bf16.gmra.mrb[0].mxu0 %v8554
      %v9175 = vpop.f32.mrb[0].mxu0
      %v9176 = vadd.f32 0.0, %v9175
      %v9177 = vpop.f32.mrb[0].mxu0
      %v9178 = vpop.f32.mrb[0].mxu0
      %v9179 = vpop.f32.mrb[0].mxu0
      %9180 = vdwg.mxu0
      %v9181 = vadd.f32 %v9057, %v9136
      %v9182 = vadd.f32 %v9058, %v9139
      %v9183 = vadd.f32 %v9059, %v9144
      %v9184 = vadd.f32 %v9060, %v9147
      %v9185 = vadd.f32 %v9061, %v9152
      %v9186 = vadd.f32 %v9062, %v9155
      %v9187 = vadd.f32 %v9063, %v9160
      %v9188 = vadd.f32 %v9064, %v9163
      %v9189 = vadd.f32 %v9065, %v9168
      %v9190 = vadd.f32 %v9066, %v9171
      %v9191 = vadd.f32 %v9067, %v9176
      %v9192 = vtanh.pop %v9181
      %v9193 = vtanh.pop %v9182
      %v9194 = vtanh.pop %v9183
      %v9195 = vtanh.pop %v9184
      %v9196 = vtanh.pop %v9185
      %v9197 = vtanh.pop %v9186
      %v9198 = vtanh.pop %v9187
      %v9199 = vtanh.pop %v9188
      %v9200 = vtanh.pop %v9189
      %v9201 = vtanh.pop %v9190
      %v9202 = vtanh.pop %v9191
      %v9203 = vpack.c.bf16 %v9193, %v9192
      %v9204 = vpack.c.bf16 %v9195, %v9194
      %v9205 = vpack.c.bf16 %v9197, %v9196
      %v9206 = vpack.c.bf16 %v9199, %v9198
      %v9207 = vpack.c.bf16 %v9201, %v9200
      %v9208 = vpack.c.bf16 %v9202, %v9202
      %s9209 = scalar_lea.vmem %s14, 128
      %v9210 = vld [vmem:[%s9209] sm:$0xf]
      %v9211 = vld [vmem:[%s9209 + $0x4] sm:$0xf]
      %v9212 = vld [vmem:[%s9209 + $0x8] sm:$0xf]
      %v9213 = vld [vmem:[%s9209 + $0xc] sm:$0xf]
      %v9214 = vld [vmem:[%s9209 + $0x10] sm:$0xf]
      %v9215 = vld [vmem:[%s9209 + $0x14] sm:$0xf]
      %v9216 = vld [vmem:[%s9209 + $0x18] sm:$0xf]
      %v9217 = vld [vmem:[%s9209 + $0x1c] sm:$0xf]
      %v9218 = vld [vmem:[%s9209 + $0x20] sm:$0xf]
      %v9219 = vld [vmem:[%s9209 + $0x24] sm:$0xf]
      %v9220 = vld [vmem:[%s9209 + $0x28] sm:$0xf]
      %v9221 = vld [vmem:[%s9209 + $0x2c] sm:$0xf]
      %v9222 = vld [vmem:[%s9209 + $0x30] sm:$0xf]
      %v9223 = vld [vmem:[%s9209 + $0x34] sm:$0xf]
      %v9224 = vld [vmem:[%s9209 + $0x38] sm:$0xf]
      %v9225 = vld [vmem:[%s9209 + $0x3c] sm:$0xf]
      %v9226 = vld [vmem:[%s9209 + $0x40] sm:$0xf]
      %v9227 = vld [vmem:[%s9209 + $0x44] sm:$0xf]
      %v9228 = vld [vmem:[%s9209 + $0x48] sm:$0xf]
      %v9229 = vld [vmem:[%s9209 + $0x4c] sm:$0xf]
      %v9230 = vld [vmem:[%s9209 + $0x50] sm:$0xf]
      %v9231 = vld [vmem:[%s9209 + $0x54] sm:$0xf]
      %v9232 = vld [vmem:[%s9209 + $0x58] sm:$0xf]
      %v9233 = vld [vmem:[%s9209 + $0x5c] sm:$0xf]
      %v9234 = vld [vmem:[%s9209 + $0x60] sm:$0xf]
      %v9235 = vld [vmem:[%s9209 + $0x64] sm:$0xf]
      %v9236 = vld [vmem:[%s9209 + $0x68] sm:$0xf]
      %v9237 = vld [vmem:[%s9209 + $0x6c] sm:$0xf]
      %v9238 = vld [vmem:[%s9209 + $0x70] sm:$0xf]
      %v9239 = vld [vmem:[%s9209 + $0x74] sm:$0xf]
      %v9240 = vld [vmem:[%s9209 + $0x78] sm:$0xf]
      %v9241 = vld [vmem:[%s9209 + $0x7c] sm:$0xf]
      %v9274 = vunpack.c.l.b16 %v9210
      %v9275 = vunpack.c.l.b16 %v9211
      %v9276 = vunpack.c.l.b16 %v9212
      %v9277 = vunpack.c.l.b16 %v9213
      %v9278 = vunpack.c.l.b16 %v9214
      %v9279 = vunpack.c.l.b16 %v9215
      %v9280 = vunpack.c.l.b16 %v9216
      %v9281 = vunpack.c.l.b16 %v9217
      %v9282 = vunpack.c.l.b16 %v9218
      %v9283 = vunpack.c.l.b16 %v9219
      %v9284 = vunpack.c.l.b16 %v9220
      %v9285 = vunpack.c.l.b16 %v9221
      %v9286 = vunpack.c.l.b16 %v9222
      %v9287 = vunpack.c.l.b16 %v9223
      %v9288 = vunpack.c.l.b16 %v9224
      %v9289 = vunpack.c.l.b16 %v9225
      %v9290 = vunpack.c.l.b16 %v9226
      %v9291 = vunpack.c.l.b16 %v9227
      %v9292 = vunpack.c.l.b16 %v9228
      %v9293 = vunpack.c.l.b16 %v9229
      %v9294 = vunpack.c.l.b16 %v9230
      %v9295 = vunpack.c.l.b16 %v9231
      %v9296 = vunpack.c.l.b16 %v9232
      %v9297 = vunpack.c.l.b16 %v9233
      %v9298 = vunpack.c.l.b16 %v9234
      %v9299 = vunpack.c.l.b16 %v9235
      %v9300 = vunpack.c.l.b16 %v9236
      %v9301 = vunpack.c.l.b16 %v9237
      %v9302 = vunpack.c.l.b16 %v9238
      %v9303 = vunpack.c.l.b16 %v9239
      %v9304 = vunpack.c.l.b16 %v9240
      %v9305 = vunpack.c.l.b16 %v9241
      %v9306 = vpack.c.b16 %v9275, %v9274
      %v9307 = vpack.c.b16 %v9277, %v9276
      %v9308 = vpack.c.b16 %v9279, %v9278
      %v9309 = vpack.c.b16 %v9281, %v9280
      %v9310 = vpack.c.b16 %v9283, %v9282
      %v9311 = vpack.c.b16 %v9285, %v9284
      %v9312 = vpack.c.b16 %v9287, %v9286
      %v9313 = vpack.c.b16 %v9289, %v9288
      %v9314 = vpack.c.b16 %v9291, %v9290
      %v9315 = vpack.c.b16 %v9293, %v9292
      %v9316 = vpack.c.b16 %v9295, %v9294
      %v9317 = vpack.c.b16 %v9297, %v9296
      %v9318 = vpack.c.b16 %v9299, %v9298
      %v9319 = vpack.c.b16 %v9301, %v9300
      %v9320 = vpack.c.b16 %v9303, %v9302
      %v9321 = vpack.c.b16 %v9305, %v9304
      %vm9322 = vcmask 719872
      %v9324 = vsel %vm9322, %v9306, 0
      %v9327 = vsel %vm9322, %v9307, 0
      %v9330 = vsel %vm9322, %v9308, 0
      %v9333 = vsel %vm9322, %v9309, 0
      %v9336 = vsel %vm9322, %v9310, 0
      %v9339 = vsel %vm9322, %v9311, 0
      %v9342 = vsel %vm9322, %v9312, 0
      %v9345 = vsel %vm9322, %v9313, 0
      %v9348 = vsel %vm9322, %v9314, 0
      %v9351 = vsel %vm9322, %v9315, 0
      %v9354 = vsel %vm9322, %v9316, 0
      %v9357 = vsel %vm9322, %v9317, 0
      %v9360 = vsel %vm9322, %v9318, 0
      %v9363 = vsel %vm9322, %v9319, 0
      %v9366 = vsel %vm9322, %v9320, 0
      %v9369 = vsel %vm9322, %v9321, 0
      %v9372 = vsel %vm1956, %v9208, 0
      %9374 = vmatprep.subr.bf16.mxu0 0
      %9375 = vmatpush1.bf16.msra.mxu0 %v9203
      %9376 = vmatprep.subr.bf16.mxu0 0
      %9377 = vmatpush1.bf16.msra.mxu0 %v9204
      %9378 = vmatprep.subr.bf16.mxu0 0
      %9379 = vmatpush1.bf16.msra.mxu0 %v9205
      %9380 = vmatprep.subr.bf16.mxu0 0
      %9381 = vmatpush1.bf16.msra.mxu0 %v9206
      %9382 = vmatprep.subr.bf16.mxu0 0
      %9383 = vmatpush1.bf16.msra.mxu0 %v9207
      %9384 = vmatprep.subr.bf16.mxu0 0
      %9385 = vmatpush1.bf16.msra.mxu0 %v9372
      %9386 = vmatprep.subr.bf16.mxu0 0
      %9387 = vmatpush1.bf16.msra.mxu0 0
      %9388 = vmatprep.subr.bf16.mxu0 0
      %9389 = vmatpush1.bf16.msra.mxu0 0
      %9390 = vmatprep.subr.bf16.mxu0 0
      %9391 = vmatpush1.bf16.msra.mxu0 0
      %9392 = vmatprep.subr.bf16.mxu0 0
      %9393 = vmatpush1.bf16.msra.mxu0 0
      %9394 = vmatprep.subr.bf16.mxu0 0
      %9395 = vmatpush1.bf16.msra.mxu0 0
      %9396 = vmatprep.subr.bf16.mxu0 0
      %9397 = vmatpush1.bf16.msra.mxu0 0
      %9398 = vmatprep.subr.bf16.mxu0 0
      %9399 = vmatpush1.bf16.msra.mxu0 0
      %9400 = vmatprep.subr.bf16.mxu0 0
      %9401 = vmatpush1.bf16.msra.mxu0 0
      %9402 = vmatprep.subr.bf16.mxu0 0
      %9403 = vmatpush1.bf16.msra.mxu0 0
      %9404 = vmatprep.subr.bf16.mxu0 0
      %9405 = vmatpush1.bf16.msra.mxu0 0
      %9406 = vmatprep.mubr.bf16.mxu0 0
      %9407 = vmatmul.mubr.bf16.gmra.mrb[0].mxu0 %v9324
      %v9408 = vpop.f32.mrb[0].mxu0
      %v9409 = vadd.f32 0.0, %v9408
      %v9410 = vpop.f32.mrb[0].mxu0
      %v9411 = vpop.f32.mrb[0].mxu0
      %v9412 = vadd.f32 0.0, %v9411
      %v9413 = vpop.f32.mrb[0].mxu0
      %9414 = vmatprep.mubr.bf16.mxu0 0
      %9415 = vmatmul.mubr.bf16.gmra.mrb[0].mxu0 %v9327
      %v9416 = vpop.f32.mrb[0].mxu0
      %v9417 = vadd.f32 0.0, %v9416
      %v9418 = vpop.f32.mrb[0].mxu0
      %v9419 = vpop.f32.mrb[0].mxu0
      %v9420 = vadd.f32 0.0, %v9419
      %v9421 = vpop.f32.mrb[0].mxu0
      %9422 = vmatprep.mubr.bf16.mxu0 0
      %9423 = vmatmul.mubr.bf16.gmra.mrb[0].mxu0 %v9330
      %v9424 = vpop.f32.mrb[0].mxu0
      %v9425 = vadd.f32 0.0, %v9424
      %v9426 = vpop.f32.mrb[0].mxu0
      %v9427 = vpop.f32.mrb[0].mxu0
      %v9428 = vadd.f32 0.0, %v9427
      %v9429 = vpop.f32.mrb[0].mxu0
      %9430 = vmatprep.mubr.bf16.mxu0 0
      %9431 = vmatmul.mubr.bf16.gmra.mrb[0].mxu0 %v9333
      %v9432 = vpop.f32.mrb[0].mxu0
      %v9433 = vadd.f32 0.0, %v9432
      %v9434 = vpop.f32.mrb[0].mxu0
      %v9435 = vpop.f32.mrb[0].mxu0
      %v9436 = vadd.f32 0.0, %v9435
      %v9437 = vpop.f32.mrb[0].mxu0
      %9438 = vmatprep.mubr.bf16.mxu0 0
      %9439 = vmatmul.mubr.bf16.gmra.mrb[0].mxu0 %v9336
      %v9440 = vpop.f32.mrb[0].mxu0
      %v9441 = vadd.f32 0.0, %v9440
      %v9442 = vpop.f32.mrb[0].mxu0
      %v9443 = vpop.f32.mrb[0].mxu0
      %v9444 = vadd.f32 0.0, %v9443
      %v9445 = vpop.f32.mrb[0].mxu0
      %9446 = vmatprep.mubr.bf16.mxu0 0
      %9447 = vmatmul.mubr.bf16.gmra.mrb[0].mxu0 %v9339
      %v9448 = vpop.f32.mrb[0].mxu0
      %v9449 = vadd.f32 0.0, %v9448
      %v9450 = vpop.f32.mrb[0].mxu0
      %v9451 = vpop.f32.mrb[0].mxu0
      %v9452 = vadd.f32 0.0, %v9451
      %v9453 = vpop.f32.mrb[0].mxu0
      %9454 = vmatprep.mubr.bf16.mxu0 0
      %9455 = vmatmul.mubr.bf16.gmra.mrb[0].mxu0 %v9342
      %v9456 = vpop.f32.mrb[0].mxu0
      %v9457 = vadd.f32 0.0, %v9456
      %v9458 = vpop.f32.mrb[0].mxu0
      %v9459 = vpop.f32.mrb[0].mxu0
      %v9460 = vadd.f32 0.0, %v9459
      %v9461 = vpop.f32.mrb[0].mxu0
      %9462 = vmatprep.mubr.bf16.mxu0 0
      %9463 = vmatmul.mubr.bf16.gmra.mrb[0].mxu0 %v9345
      %v9464 = vpop.f32.mrb[0].mxu0
      %v9465 = vadd.f32 0.0, %v9464
      %v9466 = vpop.f32.mrb[0].mxu0
      %v9467 = vpop.f32.mrb[0].mxu0
      %v9468 = vadd.f32 0.0, %v9467
      %v9469 = vpop.f32.mrb[0].mxu0
      %9470 = vmatprep.mubr.bf16.mxu0 0
      %9471 = vmatmul.mubr.bf16.gmra.mrb[0].mxu0 %v9348
      %v9472 = vpop.f32.mrb[0].mxu0
      %v9473 = vadd.f32 0.0, %v9472
      %v9474 = vpop.f32.mrb[0].mxu0
      %v9475 = vpop.f32.mrb[0].mxu0
      %v9476 = vadd.f32 0.0, %v9475
      %v9477 = vpop.f32.mrb[0].mxu0
      %9478 = vmatprep.mubr.bf16.mxu0 0
      %9479 = vmatmul.mubr.bf16.gmra.mrb[0].mxu0 %v9351
      %v9480 = vpop.f32.mrb[0].mxu0
      %v9481 = vadd.f32 0.0, %v9480
      %v9482 = vpop.f32.mrb[0].mxu0
      %v9483 = vpop.f32.mrb[0].mxu0
      %v9484 = vadd.f32 0.0, %v9483
      %v9485 = vpop.f32.mrb[0].mxu0
      %9486 = vmatprep.mubr.bf16.mxu0 0
      %9487 = vmatmul.mubr.bf16.gmra.mrb[0].mxu0 %v9354
      %v9488 = vpop.f32.mrb[0].mxu0
      %v9489 = vadd.f32 0.0, %v9488
      %v9490 = vpop.f32.mrb[0].mxu0
      %v9491 = vpop.f32.mrb[0].mxu0
      %v9492 = vadd.f32 0.0, %v9491
      %v9493 = vpop.f32.mrb[0].mxu0
      %9494 = vmatprep.mubr.bf16.mxu0 0
      %9495 = vmatmul.mubr.bf16.gmra.mrb[0].mxu0 %v9357
      %v9496 = vpop.f32.mrb[0].mxu0
      %v9497 = vadd.f32 0.0, %v9496
      %v9498 = vpop.f32.mrb[0].mxu0
      %v9499 = vpop.f32.mrb[0].mxu0
      %v9500 = vadd.f32 0.0, %v9499
      %v9501 = vpop.f32.mrb[0].mxu0
      %9502 = vmatprep.mubr.bf16.mxu0 0
      %9503 = vmatmul.mubr.bf16.gmra.mrb[0].mxu0 %v9360
      %v9504 = vpop.f32.mrb[0].mxu0
      %v9505 = vadd.f32 0.0, %v9504
      %v9506 = vpop.f32.mrb[0].mxu0
      %v9507 = vpop.f32.mrb[0].mxu0
      %v9508 = vadd.f32 0.0, %v9507
      %v9509 = vpop.f32.mrb[0].mxu0
      %9510 = vmatprep.mubr.bf16.mxu0 0
      %9511 = vmatmul.mubr.bf16.gmra.mrb[0].mxu0 %v9363
      %v9512 = vpop.f32.mrb[0].mxu0
      %v9513 = vadd.f32 0.0, %v9512
      %v9514 = vpop.f32.mrb[0].mxu0
      %v9515 = vpop.f32.mrb[0].mxu0
      %v9516 = vadd.f32 0.0, %v9515
      %v9517 = vpop.f32.mrb[0].mxu0
      %9518 = vmatprep.mubr.bf16.mxu0 0
      %9519 = vmatmul.mubr.bf16.gmra.mrb[0].mxu0 %v9366
      %v9520 = vpop.f32.mrb[0].mxu0
      %v9521 = vadd.f32 0.0, %v9520
      %v9522 = vpop.f32.mrb[0].mxu0
      %v9523 = vpop.f32.mrb[0].mxu0
      %v9524 = vadd.f32 0.0, %v9523
      %v9525 = vpop.f32.mrb[0].mxu0
      %9526 = vmatprep.mubr.bf16.mxu0 0
      %9527 = vmatmul.mubr.bf16.gmra.mrb[0].mxu0 %v9369
      %v9528 = vpop.f32.mrb[0].mxu0
      %v9529 = vadd.f32 0.0, %v9528
      %v9530 = vpop.f32.mrb[0].mxu0
      %v9531 = vpop.f32.mrb[0].mxu0
      %v9532 = vadd.f32 0.0, %v9531
      %v9533 = vpop.f32.mrb[0].mxu0
      %9534 = vdwg.mxu0
      %v9567 = vunpack.c.l.b16 %v8664
      %v9568 = vunpack.c.l.b16 %v8665
      %v9569 = vunpack.c.l.b16 %v8666
      %v9570 = vunpack.c.l.b16 %v8667
      %v9571 = vunpack.c.l.b16 %v8668
      %v9572 = vunpack.c.l.b16 %v8669
      %v9573 = vunpack.c.l.b16 %v8670
      %v9574 = vunpack.c.l.b16 %v8671
      %v9575 = vunpack.c.l.b16 %v8672
      %v9576 = vunpack.c.l.b16 %v8673
      %v9577 = vunpack.c.l.b16 %v8674
      %v9578 = vunpack.c.l.b16 %v8675
      %v9579 = vunpack.c.l.b16 %v8676
      %v9580 = vunpack.c.l.b16 %v8677
      %v9581 = vunpack.c.l.b16 %v8678
      %v9582 = vunpack.c.l.b16 %v8679
      %v9583 = vunpack.c.l.b16 %v8680
      %v9584 = vunpack.c.l.b16 %v8681
      %v9585 = vunpack.c.l.b16 %v8682
      %v9586 = vunpack.c.l.b16 %v8683
      %v9587 = vunpack.c.l.b16 %v8684
      %v9588 = vunpack.c.l.b16 %v8685
      %v9589 = vunpack.c.l.b16 %v8686
      %v9590 = vunpack.c.l.b16 %v8687
      %v9591 = vunpack.c.l.b16 %v8688
      %v9592 = vunpack.c.l.b16 %v8689
      %v9593 = vunpack.c.l.b16 %v8690
      %v9594 = vunpack.c.l.b16 %v8691
      %v9595 = vunpack.c.l.b16 %v8692
      %v9596 = vunpack.c.l.b16 %v8693
      %v9597 = vunpack.c.l.b16 %v8694
      %v9598 = vunpack.c.l.b16 %v8695
      %v9599 = vpack.c.b16 %v9568, %v9567
      %v9600 = vpack.c.b16 %v9570, %v9569
      %v9601 = vpack.c.b16 %v9572, %v9571
      %v9602 = vpack.c.b16 %v9574, %v9573
      %v9603 = vpack.c.b16 %v9576, %v9575
      %v9604 = vpack.c.b16 %v9578, %v9577
      %v9605 = vpack.c.b16 %v9580, %v9579
      %v9606 = vpack.c.b16 %v9582, %v9581
      %v9607 = vpack.c.b16 %v9584, %v9583
      %v9608 = vpack.c.b16 %v9586, %v9585
      %v9609 = vpack.c.b16 %v9588, %v9587
      %v9610 = vpack.c.b16 %v9590, %v9589
      %v9611 = vpack.c.b16 %v9592, %v9591
      %v9612 = vpack.c.b16 %v9594, %v9593
      %v9613 = vpack.c.b16 %v9596, %v9595
      %v9614 = vpack.c.b16 %v9598, %v9597
      %v9616 = vsel %vm9322, %v9599, 0
      %v9619 = vsel %vm9322, %v9600, 0
      %v9622 = vsel %vm9322, %v9601, 0
      %v9625 = vsel %vm9322, %v9602, 0
      %v9628 = vsel %vm9322, %v9603, 0
      %v9631 = vsel %vm9322, %v9604, 0
      %v9634 = vsel %vm9322, %v9605, 0
      %v9637 = vsel %vm9322, %v9606, 0
      %v9640 = vsel %vm9322, %v9607, 0
      %v9643 = vsel %vm9322, %v9608, 0
      %v9646 = vsel %vm9322, %v9609, 0
      %v9649 = vsel %vm9322, %v9610, 0
      %v9652 = vsel %vm9322, %v9611, 0
      %v9655 = vsel %vm9322, %v9612, 0
      %v9658 = vsel %vm9322, %v9613, 0
      %v9661 = vsel %vm9322, %v9614, 0
      %v9664 = vsel %vm1956, %v8663, 0
      %9666 = vmatprep.subr.bf16.mxu0 0
      %9667 = vmatpush1.bf16.msra.mxu0 %v8658
      %9668 = vmatprep.subr.bf16.mxu0 0
      %9669 = vmatpush1.bf16.msra.mxu0 %v8659
      %9670 = vmatprep.subr.bf16.mxu0 0
      %9671 = vmatpush1.bf16.msra.mxu0 %v8660
      %9672 = vmatprep.subr.bf16.mxu0 0
      %9673 = vmatpush1.bf16.msra.mxu0 %v8661
      %9674 = vmatprep.subr.bf16.mxu0 0
      %9675 = vmatpush1.bf16.msra.mxu0 %v8662
      %9676 = vmatprep.subr.bf16.mxu0 0
      %9677 = vmatpush1.bf16.msra.mxu0 %v9664
      %9678 = vmatprep.subr.bf16.mxu0 0
      %9679 = vmatpush1.bf16.msra.mxu0 0
      %9680 = vmatprep.subr.bf16.mxu0 0
      %9681 = vmatpush1.bf16.msra.mxu0 0
      %9682 = vmatprep.subr.bf16.mxu0 0
      %9683 = vmatpush1.bf16.msra.mxu0 0
      %9684 = vmatprep.subr.bf16.mxu0 0
      %9685 = vmatpush1.bf16.msra.mxu0 0
      %9686 = vmatprep.subr.bf16.mxu0 0
      %9687 = vmatpush1.bf16.msra.mxu0 0
      %9688 = vmatprep.subr.bf16.mxu0 0
      %9689 = vmatpush1.bf16.msra.mxu0 0
      %9690 = vmatprep.subr.bf16.mxu0 0
      %9691 = vmatpush1.bf16.msra.mxu0 0
      %9692 = vmatprep.subr.bf16.mxu0 0
      %9693 = vmatpush1.bf16.msra.mxu0 0
      %9694 = vmatprep.subr.bf16.mxu0 0
      %9695 = vmatpush1.bf16.msra.mxu0 0
      %9696 = vmatprep.subr.bf16.mxu0 0
      %9697 = vmatpush1.bf16.msra.mxu0 0
      %9698 = vmatprep.mubr.bf16.mxu0 0
      %9699 = vmatmul.mubr.bf16.gmra.mrb[0].mxu0 %v9616
      %v9700 = vpop.f32.mrb[0].mxu0
      %v9701 = vadd.f32 %v9409, %v9700
      %v9702 = vpop.f32.mrb[0].mxu0
      %v9703 = vpop.f32.mrb[0].mxu0
      %v9704 = vadd.f32 %v9412, %v9703
      %v9705 = vpop.f32.mrb[0].mxu0
      %9706 = vmatprep.mubr.bf16.mxu0 0
      %9707 = vmatmul.mubr.bf16.gmra.mrb[0].mxu0 %v9619
      %v9708 = vpop.f32.mrb[0].mxu0
      %v9709 = vadd.f32 %v9417, %v9708
      %v9710 = vpop.f32.mrb[0].mxu0
      %v9711 = vpop.f32.mrb[0].mxu0
      %v9712 = vadd.f32 %v9420, %v9711
      %v9713 = vpop.f32.mrb[0].mxu0
      %9714 = vmatprep.mubr.bf16.mxu0 0
      %9715 = vmatmul.mubr.bf16.gmra.mrb[0].mxu0 %v9622
      %v9716 = vpop.f32.mrb[0].mxu0
      %v9717 = vadd.f32 %v9425, %v9716
      %v9718 = vpop.f32.mrb[0].mxu0
      %v9719 = vpop.f32.mrb[0].mxu0
      %v9720 = vadd.f32 %v9428, %v9719
      %v9721 = vpop.f32.mrb[0].mxu0
      %9722 = vmatprep.mubr.bf16.mxu0 0
      %9723 = vmatmul.mubr.bf16.gmra.mrb[0].mxu0 %v9625
      %v9724 = vpop.f32.mrb[0].mxu0
      %v9725 = vadd.f32 %v9433, %v9724
      %v9726 = vpop.f32.mrb[0].mxu0
      %v9727 = vpop.f32.mrb[0].mxu0
      %v9728 = vadd.f32 %v9436, %v9727
      %v9729 = vpop.f32.mrb[0].mxu0
      %9730 = vmatprep.mubr.bf16.mxu0 0
      %9731 = vmatmul.mubr.bf16.gmra.mrb[0].mxu0 %v9628
      %v9732 = vpop.f32.mrb[0].mxu0
      %v9733 = vadd.f32 %v9441, %v9732
      %v9734 = vpop.f32.mrb[0].mxu0
      %v9735 = vpop.f32.mrb[0].mxu0
      %v9736 = vadd.f32 %v9444, %v9735
      %v9737 = vpop.f32.mrb[0].mxu0
      %9738 = vmatprep.mubr.bf16.mxu0 0
      %9739 = vmatmul.mubr.bf16.gmra.mrb[0].mxu0 %v9631
      %v9740 = vpop.f32.mrb[0].mxu0
      %v9741 = vadd.f32 %v9449, %v9740
      %v9742 = vpop.f32.mrb[0].mxu0
      %v9743 = vpop.f32.mrb[0].mxu0
      %v9744 = vadd.f32 %v9452, %v9743
      %v9745 = vpop.f32.mrb[0].mxu0
      %9746 = vmatprep.mubr.bf16.mxu0 0
      %9747 = vmatmul.mubr.bf16.gmra.mrb[0].mxu0 %v9634
      %v9748 = vpop.f32.mrb[0].mxu0
      %v9749 = vadd.f32 %v9457, %v9748
      %v9750 = vpop.f32.mrb[0].mxu0
      %v9751 = vpop.f32.mrb[0].mxu0
      %v9752 = vadd.f32 %v9460, %v9751
      %v9753 = vpop.f32.mrb[0].mxu0
      %9754 = vmatprep.mubr.bf16.mxu0 0
      %9755 = vmatmul.mubr.bf16.gmra.mrb[0].mxu0 %v9637
      %v9756 = vpop.f32.mrb[0].mxu0
      %v9757 = vadd.f32 %v9465, %v9756
      %v9758 = vpop.f32.mrb[0].mxu0
      %v9759 = vpop.f32.mrb[0].mxu0
      %v9760 = vadd.f32 %v9468, %v9759
      %v9761 = vpop.f32.mrb[0].mxu0
      %9762 = vmatprep.mubr.bf16.mxu0 0
      %9763 = vmatmul.mubr.bf16.gmra.mrb[0].mxu0 %v9640
      %v9764 = vpop.f32.mrb[0].mxu0
      %v9765 = vadd.f32 %v9473, %v9764
      %v9766 = vpop.f32.mrb[0].mxu0
      %v9767 = vpop.f32.mrb[0].mxu0
      %v9768 = vadd.f32 %v9476, %v9767
      %v9769 = vpop.f32.mrb[0].mxu0
      %9770 = vmatprep.mubr.bf16.mxu0 0
      %9771 = vmatmul.mubr.bf16.gmra.mrb[0].mxu0 %v9643
      %v9772 = vpop.f32.mrb[0].mxu0
      %v9773 = vadd.f32 %v9481, %v9772
      %v9774 = vpop.f32.mrb[0].mxu0
      %v9775 = vpop.f32.mrb[0].mxu0
      %v9776 = vadd.f32 %v9484, %v9775
      %v9777 = vpop.f32.mrb[0].mxu0
      %9778 = vmatprep.mubr.bf16.mxu0 0
      %9779 = vmatmul.mubr.bf16.gmra.mrb[0].mxu0 %v9646
      %v9780 = vpop.f32.mrb[0].mxu0
      %v9781 = vadd.f32 %v9489, %v9780
      %v9782 = vpop.f32.mrb[0].mxu0
      %v9783 = vpop.f32.mrb[0].mxu0
      %v9784 = vadd.f32 %v9492, %v9783
      %v9785 = vpop.f32.mrb[0].mxu0
      %9786 = vmatprep.mubr.bf16.mxu0 0
      %9787 = vmatmul.mubr.bf16.gmra.mrb[0].mxu0 %v9649
      %v9788 = vpop.f32.mrb[0].mxu0
      %v9789 = vadd.f32 %v9497, %v9788
      %v9790 = vpop.f32.mrb[0].mxu0
      %v9791 = vpop.f32.mrb[0].mxu0
      %v9792 = vadd.f32 %v9500, %v9791
      %v9793 = vpop.f32.mrb[0].mxu0
      %9794 = vmatprep.mubr.bf16.mxu0 0
      %9795 = vmatmul.mubr.bf16.gmra.mrb[0].mxu0 %v9652
      %v9796 = vpop.f32.mrb[0].mxu0
      %v9797 = vadd.f32 %v9505, %v9796
      %v9798 = vpop.f32.mrb[0].mxu0
      %v9799 = vpop.f32.mrb[0].mxu0
      %v9800 = vadd.f32 %v9508, %v9799
      %v9801 = vpop.f32.mrb[0].mxu0
      %9802 = vmatprep.mubr.bf16.mxu0 0
      %9803 = vmatmul.mubr.bf16.gmra.mrb[0].mxu0 %v9655
      %v9804 = vpop.f32.mrb[0].mxu0
      %v9805 = vadd.f32 %v9513, %v9804
      %v9806 = vpop.f32.mrb[0].mxu0
      %v9807 = vpop.f32.mrb[0].mxu0
      %v9808 = vadd.f32 %v9516, %v9807
      %v9809 = vpop.f32.mrb[0].mxu0
      %9810 = vmatprep.mubr.bf16.mxu0 0
      %9811 = vmatmul.mubr.bf16.gmra.mrb[0].mxu0 %v9658
      %v9812 = vpop.f32.mrb[0].mxu0
      %v9813 = vadd.f32 %v9521, %v9812
      %v9814 = vpop.f32.mrb[0].mxu0
      %v9815 = vpop.f32.mrb[0].mxu0
      %v9816 = vadd.f32 %v9524, %v9815
      %v9817 = vpop.f32.mrb[0].mxu0
      %9818 = vmatprep.mubr.bf16.mxu0 0
      %9819 = vmatmul.mubr.bf16.gmra.mrb[0].mxu0 %v9661
      %v9820 = vpop.f32.mrb[0].mxu0
      %v9821 = vadd.f32 %v9529, %v9820
      %v9822 = vpop.f32.mrb[0].mxu0
      %v9823 = vpop.f32.mrb[0].mxu0
      %v9824 = vadd.f32 %v9532, %v9823
      %v9825 = vpop.f32.mrb[0].mxu0
      %9826 = vdwg.mxu0
      %s9827 = scalar_lea.vmem %s12, 256
      %v9828 = vld [vmem:[%s9827] sm:$0xf]
      %v9829 = vld [vmem:[%s9827 + $0x4] sm:$0xf]
      %v9830 = vld [vmem:[%s9827 + $0x8] sm:$0xf]
      %v9831 = vld [vmem:[%s9827 + $0xc] sm:$0xf]
      %v9832 = vld [vmem:[%s9827 + $0x10] sm:$0xf]
      %v9833 = vld [vmem:[%s9827 + $0x14] sm:$0xf]
      %v9834 = vld [vmem:[%s9827 + $0x18] sm:$0xf]
      %v9835 = vld [vmem:[%s9827 + $0x1c] sm:$0xf]
      %v9844 = vunpack.c.l.b16 %v9828
      %v9845 = vunpack.c.l.b16 %v9829
      %v9846 = vunpack.c.l.b16 %v9830
      %v9847 = vunpack.c.l.b16 %v9831
      %v9848 = vunpack.c.l.b16 %v9832
      %v9849 = vunpack.c.l.b16 %v9833
      %v9850 = vunpack.c.l.b16 %v9834
      %v9851 = vunpack.c.l.b16 %v9835
      %v9852 = vpack.c.b16 %v9845, %v9844
      %v9853 = vpack.c.b16 %v9847, %v9846
      %v9854 = vpack.c.b16 %v9849, %v9848
      %v9855 = vpack.c.b16 %v9851, %v9850
      %9860 = vmatprep.subr.bf16.mxu0 0
      %9861 = vmatpush1.bf16.msra.mxu0 %v9852
      %9862 = vmatprep.subr.bf16.mxu0 0
      %9863 = vmatpush1.bf16.msra.mxu0 %v9853
      %9864 = vmatprep.subr.bf16.mxu0 0
      %9865 = vmatpush1.bf16.msra.mxu0 %v9854
      %9866 = vmatprep.subr.bf16.mxu0 0
      %9867 = vmatpush1.bf16.msra.mxu0 %v9855
      %9868 = vmatprep.subr.bf16.mxu0 0
      %9869 = vmatpush1.bf16.msra.mxu0 0
      %9870 = vmatprep.subr.bf16.mxu0 0
      %9871 = vmatpush1.bf16.msra.mxu0 0
      %9872 = vmatprep.subr.bf16.mxu0 0
      %9873 = vmatpush1.bf16.msra.mxu0 0
      %9874 = vmatprep.subr.bf16.mxu0 0
      %9875 = vmatpush1.bf16.msra.mxu0 0
      %9876 = vmatprep.subr.bf16.mxu0 0
      %9877 = vmatpush1.bf16.msra.mxu0 0
      %9878 = vmatprep.subr.bf16.mxu0 0
      %9879 = vmatpush1.bf16.msra.mxu0 0
      %9880 = vmatprep.subr.bf16.mxu0 0
      %9881 = vmatpush1.bf16.msra.mxu0 0
      %9882 = vmatprep.subr.bf16.mxu0 0
      %9883 = vmatpush1.bf16.msra.mxu0 0
      %9884 = vmatprep.subr.bf16.mxu0 0
      %9885 = vmatpush1.bf16.msra.mxu0 0
      %9886 = vmatprep.subr.bf16.mxu0 0
      %9887 = vmatpush1.bf16.msra.mxu0 0
      %9888 = vmatprep.subr.bf16.mxu0 0
      %9889 = vmatpush1.bf16.msra.mxu0 0
      %9890 = vmatprep.subr.bf16.mxu0 0
      %9891 = vmatpush1.bf16.msra.mxu0 0
      %9892 = vmatprep.mubr.bf16.mxu0 0
      %9893 = vmatmul.mubr.bf16.gmra.mrb[0].mxu0 %v8089
      %v9894 = vpop.f32.mrb[0].mxu0
      %v9895 = vadd.f32 0.0, %v9894
      %v9896 = vpop.f32.mrb[0].mxu0
      %v9897 = vpop.f32.mrb[0].mxu0
      %v9898 = vadd.f32 0.0, %v9897
      %v9899 = vpop.f32.mrb[0].mxu0
      %9900 = vmatprep.mubr.bf16.mxu0 0
      %9901 = vmatmul.mubr.bf16.gmra.mrb[0].mxu0 %v8092
      %v9902 = vpop.f32.mrb[0].mxu0
      %v9903 = vadd.f32 0.0, %v9902
      %v9904 = vpop.f32.mrb[0].mxu0
      %v9905 = vpop.f32.mrb[0].mxu0
      %v9906 = vadd.f32 0.0, %v9905
      %v9907 = vpop.f32.mrb[0].mxu0
      %9908 = vmatprep.mubr.bf16.mxu0 0
      %9909 = vmatmul.mubr.bf16.gmra.mrb[0].mxu0 %v8095
      %v9910 = vpop.f32.mrb[0].mxu0
      %v9911 = vadd.f32 0.0, %v9910
      %v9912 = vpop.f32.mrb[0].mxu0
      %v9913 = vpop.f32.mrb[0].mxu0
      %v9914 = vadd.f32 0.0, %v9913
      %v9915 = vpop.f32.mrb[0].mxu0
      %9916 = vmatprep.mubr.bf16.mxu0 0
      %9917 = vmatmul.mubr.bf16.gmra.mrb[0].mxu0 %v8098
      %v9918 = vpop.f32.mrb[0].mxu0
      %v9919 = vadd.f32 0.0, %v9918
      %v9920 = vpop.f32.mrb[0].mxu0
      %v9921 = vpop.f32.mrb[0].mxu0
      %v9922 = vadd.f32 0.0, %v9921
      %v9923 = vpop.f32.mrb[0].mxu0
      %9924 = vmatprep.mubr.bf16.mxu0 0
      %9925 = vmatmul.mubr.bf16.gmra.mrb[0].mxu0 %v8101
      %v9926 = vpop.f32.mrb[0].mxu0
      %v9927 = vadd.f32 0.0, %v9926
      %v9928 = vpop.f32.mrb[0].mxu0
      %v9929 = vpop.f32.mrb[0].mxu0
      %v9930 = vadd.f32 0.0, %v9929
      %v9931 = vpop.f32.mrb[0].mxu0
      %9932 = vmatprep.mubr.bf16.mxu0 0
      %9933 = vmatmul.mubr.bf16.gmra.mrb[0].mxu0 %v8104
      %v9934 = vpop.f32.mrb[0].mxu0
      %v9935 = vadd.f32 0.0, %v9934
      %v9936 = vpop.f32.mrb[0].mxu0
      %v9937 = vpop.f32.mrb[0].mxu0
      %v9938 = vpop.f32.mrb[0].mxu0
      %9939 = vdwg.mxu0
      %v9940 = vadd.f32 %v8190, %v9895
      %v9941 = vadd.f32 %v8190, %v9898
      %v9942 = vadd.f32 %v8190, %v9903
      %v9943 = vadd.f32 %v8190, %v9906
      %v9944 = vadd.f32 %v8190, %v9911
      %v9945 = vadd.f32 %v8190, %v9914
      %v9946 = vadd.f32 %v8190, %v9919
      %v9947 = vadd.f32 %v8190, %v9922
      %v9948 = vadd.f32 %v8190, %v9927
      %v9949 = vadd.f32 %v8190, %v9930
      %v9950 = vadd.f32 %v8190, %v9935
      %s9951 = scalar_lea.vmem %s12, 288
      %v9952 = vld [vmem:[%s9951] sm:$0xf]
      %v9953 = vld [vmem:[%s9951 + $0x4] sm:$0xf]
      %v9954 = vld [vmem:[%s9951 + $0x8] sm:$0xf]
      %v9955 = vld [vmem:[%s9951 + $0xc] sm:$0xf]
      %v9956 = vld [vmem:[%s9951 + $0x10] sm:$0xf]
      %v9957 = vld [vmem:[%s9951 + $0x14] sm:$0xf]
      %v9958 = vld [vmem:[%s9951 + $0x18] sm:$0xf]
      %v9959 = vld [vmem:[%s9951 + $0x1c] sm:$0xf]
      %v9968 = vunpack.c.l.b16 %v9952
      %v9969 = vunpack.c.l.b16 %v9953
      %v9970 = vunpack.c.l.b16 %v9954
      %v9971 = vunpack.c.l.b16 %v9955
      %v9972 = vunpack.c.l.b16 %v9956
      %v9973 = vunpack.c.l.b16 %v9957
      %v9974 = vunpack.c.l.b16 %v9958
      %v9975 = vunpack.c.l.b16 %v9959
      %v9976 = vpack.c.b16 %v9969, %v9968
      %v9977 = vpack.c.b16 %v9971, %v9970
      %v9978 = vpack.c.b16 %v9973, %v9972
      %v9979 = vpack.c.b16 %v9975, %v9974
      %9984 = vmatprep.subr.bf16.mxu0 0
      %9985 = vmatpush1.bf16.msra.mxu0 %v9976
      %9986 = vmatprep.subr.bf16.mxu0 0
      %9987 = vmatpush1.bf16.msra.mxu0 %v9977
      %9988 = vmatprep.subr.bf16.mxu0 0
      %9989 = vmatpush1.bf16.msra.mxu0 %v9978
      %9990 = vmatprep.subr.bf16.mxu0 0
      %9991 = vmatpush1.bf16.msra.mxu0 %v9979
      %9992 = vmatprep.subr.bf16.mxu0 0
      %9993 = vmatpush1.bf16.msra.mxu0 0
      %9994 = vmatprep.subr.bf16.mxu0 0
      %9995 = vmatpush1.bf16.msra.mxu0 0
      %9996 = vmatprep.subr.bf16.mxu0 0
      %9997 = vmatpush1.bf16.msra.mxu0 0
      %9998 = vmatprep.subr.bf16.mxu0 0
      %9999 = vmatpush1.bf16.msra.mxu0 0
      %10000 = vmatprep.subr.bf16.mxu0 0
      %10001 = vmatpush1.bf16.msra.mxu0 0
      %10002 = vmatprep.subr.bf16.mxu0 0
      %10003 = vmatpush1.bf16.msra.mxu0 0
      %10004 = vmatprep.subr.bf16.mxu0 0
      %10005 = vmatpush1.bf16.msra.mxu0 0
      %10006 = vmatprep.subr.bf16.mxu0 0
      %10007 = vmatpush1.bf16.msra.mxu0 0
      %10008 = vmatprep.subr.bf16.mxu0 0
      %10009 = vmatpush1.bf16.msra.mxu0 0
      %10010 = vmatprep.subr.bf16.mxu0 0
      %10011 = vmatpush1.bf16.msra.mxu0 0
      %10012 = vmatprep.subr.bf16.mxu0 0
      %10013 = vmatpush1.bf16.msra.mxu0 0
      %10014 = vmatprep.subr.bf16.mxu0 0
      %10015 = vmatpush1.bf16.msra.mxu0 0
      %10016 = vmatprep.mubr.bf16.mxu0 0
      %10017 = vmatmul.mubr.bf16.gmra.mrb[0].mxu0 %v8243
      %v10018 = vpop.f32.mrb[0].mxu0
      %v10019 = vadd.f32 0.0, %v10018
      %v10020 = vpop.f32.mrb[0].mxu0
      %v10021 = vpop.f32.mrb[0].mxu0
      %v10022 = vadd.f32 0.0, %v10021
      %v10023 = vpop.f32.mrb[0].mxu0
      %10024 = vmatprep.mubr.bf16.mxu0 0
      %10025 = vmatmul.mubr.bf16.gmra.mrb[0].mxu0 %v8246
      %v10026 = vpop.f32.mrb[0].mxu0
      %v10027 = vadd.f32 0.0, %v10026
      %v10028 = vpop.f32.mrb[0].mxu0
      %v10029 = vpop.f32.mrb[0].mxu0
      %v10030 = vadd.f32 0.0, %v10029
      %v10031 = vpop.f32.mrb[0].mxu0
      %10032 = vmatprep.mubr.bf16.mxu0 0
      %10033 = vmatmul.mubr.bf16.gmra.mrb[0].mxu0 %v8249
      %v10034 = vpop.f32.mrb[0].mxu0
      %v10035 = vadd.f32 0.0, %v10034
      %v10036 = vpop.f32.mrb[0].mxu0
      %v10037 = vpop.f32.mrb[0].mxu0
      %v10038 = vadd.f32 0.0, %v10037
      %v10039 = vpop.f32.mrb[0].mxu0
      %10040 = vmatprep.mubr.bf16.mxu0 0
      %10041 = vmatmul.mubr.bf16.gmra.mrb[0].mxu0 %v8252
      %v10042 = vpop.f32.mrb[0].mxu0
      %v10043 = vadd.f32 0.0, %v10042
      %v10044 = vpop.f32.mrb[0].mxu0
      %v10045 = vpop.f32.mrb[0].mxu0
      %v10046 = vadd.f32 0.0, %v10045
      %v10047 = vpop.f32.mrb[0].mxu0
      %10048 = vmatprep.mubr.bf16.mxu0 0
      %10049 = vmatmul.mubr.bf16.gmra.mrb[0].mxu0 %v8255
      %v10050 = vpop.f32.mrb[0].mxu0
      %v10051 = vadd.f32 0.0, %v10050
      %v10052 = vpop.f32.mrb[0].mxu0
      %v10053 = vpop.f32.mrb[0].mxu0
      %v10054 = vadd.f32 0.0, %v10053
      %v10055 = vpop.f32.mrb[0].mxu0
      %10056 = vmatprep.mubr.bf16.mxu0 0
      %10057 = vmatmul.mubr.bf16.gmra.mrb[0].mxu0 %v8258
      %v10058 = vpop.f32.mrb[0].mxu0
      %v10059 = vadd.f32 0.0, %v10058
      %v10060 = vpop.f32.mrb[0].mxu0
      %v10061 = vpop.f32.mrb[0].mxu0
      %v10062 = vpop.f32.mrb[0].mxu0
      %10063 = vdwg.mxu0
      %v10064 = vadd.f32 %v9940, %v10019
      %v10065 = vadd.f32 %v9941, %v10022
      %v10066 = vadd.f32 %v9942, %v10027
      %v10067 = vadd.f32 %v9943, %v10030
      %v10068 = vadd.f32 %v9944, %v10035
      %v10069 = vadd.f32 %v9945, %v10038
      %v10070 = vadd.f32 %v9946, %v10043
      %v10071 = vadd.f32 %v9947, %v10046
      %v10072 = vadd.f32 %v9948, %v10051
      %v10073 = vadd.f32 %v9949, %v10054
      %v10074 = vadd.f32 %v9950, %v10059
      %s10075 = scalar_lea.vmem %s12, 320
      %v10076 = vld [vmem:[%s10075] sm:$0xf]
      %v10077 = vld [vmem:[%s10075 + $0x4] sm:$0xf]
      %v10078 = vld [vmem:[%s10075 + $0x8] sm:$0xf]
      %v10079 = vld [vmem:[%s10075 + $0xc] sm:$0xf]
      %v10080 = vld [vmem:[%s10075 + $0x10] sm:$0xf]
      %v10081 = vld [vmem:[%s10075 + $0x14] sm:$0xf]
      %v10082 = vld [vmem:[%s10075 + $0x18] sm:$0xf]
      %v10083 = vld [vmem:[%s10075 + $0x1c] sm:$0xf]
      %v10092 = vunpack.c.l.b16 %v10076
      %v10093 = vunpack.c.l.b16 %v10077
      %v10094 = vunpack.c.l.b16 %v10078
      %v10095 = vunpack.c.l.b16 %v10079
      %v10096 = vunpack.c.l.b16 %v10080
      %v10097 = vunpack.c.l.b16 %v10081
      %v10098 = vunpack.c.l.b16 %v10082
      %v10099 = vunpack.c.l.b16 %v10083
      %v10100 = vpack.c.b16 %v10093, %v10092
      %v10101 = vpack.c.b16 %v10095, %v10094
      %v10102 = vpack.c.b16 %v10097, %v10096
      %v10103 = vpack.c.b16 %v10099, %v10098
      %10108 = vmatprep.subr.bf16.mxu0 0
      %10109 = vmatpush1.bf16.msra.mxu0 %v10100
      %10110 = vmatprep.subr.bf16.mxu0 0
      %10111 = vmatpush1.bf16.msra.mxu0 %v10101
      %10112 = vmatprep.subr.bf16.mxu0 0
      %10113 = vmatpush1.bf16.msra.mxu0 %v10102
      %10114 = vmatprep.subr.bf16.mxu0 0
      %10115 = vmatpush1.bf16.msra.mxu0 %v10103
      %10116 = vmatprep.subr.bf16.mxu0 0
      %10117 = vmatpush1.bf16.msra.mxu0 0
      %10118 = vmatprep.subr.bf16.mxu0 0
      %10119 = vmatpush1.bf16.msra.mxu0 0
      %10120 = vmatprep.subr.bf16.mxu0 0
      %10121 = vmatpush1.bf16.msra.mxu0 0
      %10122 = vmatprep.subr.bf16.mxu0 0
      %10123 = vmatpush1.bf16.msra.mxu0 0
      %10124 = vmatprep.subr.bf16.mxu0 0
      %10125 = vmatpush1.bf16.msra.mxu0 0
      %10126 = vmatprep.subr.bf16.mxu0 0
      %10127 = vmatpush1.bf16.msra.mxu0 0
      %10128 = vmatprep.subr.bf16.mxu0 0
      %10129 = vmatpush1.bf16.msra.mxu0 0
      %10130 = vmatprep.subr.bf16.mxu0 0
      %10131 = vmatpush1.bf16.msra.mxu0 0
      %10132 = vmatprep.subr.bf16.mxu0 0
      %10133 = vmatpush1.bf16.msra.mxu0 0
      %10134 = vmatprep.subr.bf16.mxu0 0
      %10135 = vmatpush1.bf16.msra.mxu0 0
      %10136 = vmatprep.subr.bf16.mxu0 0
      %10137 = vmatpush1.bf16.msra.mxu0 0
      %10138 = vmatprep.subr.bf16.mxu0 0
      %10139 = vmatpush1.bf16.msra.mxu0 0
      %10140 = vmatprep.mubr.bf16.mxu0 0
      %10141 = vmatmul.mubr.bf16.gmra.mrb[0].mxu0 %v8391
      %v10142 = vpop.f32.mrb[0].mxu0
      %v10143 = vadd.f32 0.0, %v10142
      %v10144 = vpop.f32.mrb[0].mxu0
      %v10145 = vpop.f32.mrb[0].mxu0
      %v10146 = vadd.f32 0.0, %v10145
      %v10147 = vpop.f32.mrb[0].mxu0
      %10148 = vmatprep.mubr.bf16.mxu0 0
      %10149 = vmatmul.mubr.bf16.gmra.mrb[0].mxu0 %v8394
      %v10150 = vpop.f32.mrb[0].mxu0
      %v10151 = vadd.f32 0.0, %v10150
      %v10152 = vpop.f32.mrb[0].mxu0
      %v10153 = vpop.f32.mrb[0].mxu0
      %v10154 = vadd.f32 0.0, %v10153
      %v10155 = vpop.f32.mrb[0].mxu0
      %10156 = vmatprep.mubr.bf16.mxu0 0
      %10157 = vmatmul.mubr.bf16.gmra.mrb[0].mxu0 %v8397
      %v10158 = vpop.f32.mrb[0].mxu0
      %v10159 = vadd.f32 0.0, %v10158
      %v10160 = vpop.f32.mrb[0].mxu0
      %v10161 = vpop.f32.mrb[0].mxu0
      %v10162 = vadd.f32 0.0, %v10161
      %v10163 = vpop.f32.mrb[0].mxu0
      %10164 = vmatprep.mubr.bf16.mxu0 0
      %10165 = vmatmul.mubr.bf16.gmra.mrb[0].mxu0 %v8400
      %v10166 = vpop.f32.mrb[0].mxu0
      %v10167 = vadd.f32 0.0, %v10166
      %v10168 = vpop.f32.mrb[0].mxu0
      %v10169 = vpop.f32.mrb[0].mxu0
      %v10170 = vadd.f32 0.0, %v10169
      %v10171 = vpop.f32.mrb[0].mxu0
      %10172 = vmatprep.mubr.bf16.mxu0 0
      %10173 = vmatmul.mubr.bf16.gmra.mrb[0].mxu0 %v8403
      %v10174 = vpop.f32.mrb[0].mxu0
      %v10175 = vadd.f32 0.0, %v10174
      %v10176 = vpop.f32.mrb[0].mxu0
      %v10177 = vpop.f32.mrb[0].mxu0
      %v10178 = vadd.f32 0.0, %v10177
      %v10179 = vpop.f32.mrb[0].mxu0
      %10180 = vmatprep.mubr.bf16.mxu0 0
      %10181 = vmatmul.mubr.bf16.gmra.mrb[0].mxu0 %v8406
      %v10182 = vpop.f32.mrb[0].mxu0
      %v10183 = vadd.f32 0.0, %v10182
      %v10184 = vpop.f32.mrb[0].mxu0
      %v10185 = vpop.f32.mrb[0].mxu0
      %v10186 = vpop.f32.mrb[0].mxu0
      %10187 = vdwg.mxu0
      %v10188 = vadd.f32 %v10064, %v10143
      %v10189 = vadd.f32 %v10065, %v10146
      %v10190 = vadd.f32 %v10066, %v10151
      %v10191 = vadd.f32 %v10067, %v10154
      %v10192 = vadd.f32 %v10068, %v10159
      %v10193 = vadd.f32 %v10069, %v10162
      %v10194 = vadd.f32 %v10070, %v10167
      %v10195 = vadd.f32 %v10071, %v10170
      %v10196 = vadd.f32 %v10072, %v10175
      %v10197 = vadd.f32 %v10073, %v10178
      %v10198 = vadd.f32 %v10074, %v10183
      %s10199 = scalar_lea.vmem %s12, 352
      %v10200 = vld [vmem:[%s10199] sm:$0xf]
      %v10201 = vld [vmem:[%s10199 + $0x4] sm:$0xf]
      %v10202 = vld [vmem:[%s10199 + $0x8] sm:$0xf]
      %v10203 = vld [vmem:[%s10199 + $0xc] sm:$0xf]
      %v10204 = vld [vmem:[%s10199 + $0x10] sm:$0xf]
      %v10205 = vld [vmem:[%s10199 + $0x14] sm:$0xf]
      %v10206 = vld [vmem:[%s10199 + $0x18] sm:$0xf]
      %v10207 = vld [vmem:[%s10199 + $0x1c] sm:$0xf]
      %v10216 = vunpack.c.l.b16 %v10200
      %v10217 = vunpack.c.l.b16 %v10201
      %v10218 = vunpack.c.l.b16 %v10202
      %v10219 = vunpack.c.l.b16 %v10203
      %v10220 = vunpack.c.l.b16 %v10204
      %v10221 = vunpack.c.l.b16 %v10205
      %v10222 = vunpack.c.l.b16 %v10206
      %v10223 = vunpack.c.l.b16 %v10207
      %v10224 = vpack.c.b16 %v10217, %v10216
      %v10225 = vpack.c.b16 %v10219, %v10218
      %v10226 = vpack.c.b16 %v10221, %v10220
      %v10227 = vpack.c.b16 %v10223, %v10222
      %10232 = vmatprep.subr.bf16.mxu0 0
      %10233 = vmatpush1.bf16.msra.mxu0 %v10224
      %10234 = vmatprep.subr.bf16.mxu0 0
      %10235 = vmatpush1.bf16.msra.mxu0 %v10225
      %10236 = vmatprep.subr.bf16.mxu0 0
      %10237 = vmatpush1.bf16.msra.mxu0 %v10226
      %10238 = vmatprep.subr.bf16.mxu0 0
      %10239 = vmatpush1.bf16.msra.mxu0 %v10227
      %10240 = vmatprep.subr.bf16.mxu0 0
      %10241 = vmatpush1.bf16.msra.mxu0 0
      %10242 = vmatprep.subr.bf16.mxu0 0
      %10243 = vmatpush1.bf16.msra.mxu0 0
      %10244 = vmatprep.subr.bf16.mxu0 0
      %10245 = vmatpush1.bf16.msra.mxu0 0
      %10246 = vmatprep.subr.bf16.mxu0 0
      %10247 = vmatpush1.bf16.msra.mxu0 0
      %10248 = vmatprep.subr.bf16.mxu0 0
      %10249 = vmatpush1.bf16.msra.mxu0 0
      %10250 = vmatprep.subr.bf16.mxu0 0
      %10251 = vmatpush1.bf16.msra.mxu0 0
      %10252 = vmatprep.subr.bf16.mxu0 0
      %10253 = vmatpush1.bf16.msra.mxu0 0
      %10254 = vmatprep.subr.bf16.mxu0 0
      %10255 = vmatpush1.bf16.msra.mxu0 0
      %10256 = vmatprep.subr.bf16.mxu0 0
      %10257 = vmatpush1.bf16.msra.mxu0 0
      %10258 = vmatprep.subr.bf16.mxu0 0
      %10259 = vmatpush1.bf16.msra.mxu0 0
      %10260 = vmatprep.subr.bf16.mxu0 0
      %10261 = vmatpush1.bf16.msra.mxu0 0
      %10262 = vmatprep.subr.bf16.mxu0 0
      %10263 = vmatpush1.bf16.msra.mxu0 0
      %10264 = vmatprep.mubr.bf16.mxu0 0
      %10265 = vmatmul.mubr.bf16.gmra.mrb[0].mxu0 %v8539
      %v10266 = vpop.f32.mrb[0].mxu0
      %v10267 = vadd.f32 0.0, %v10266
      %v10268 = vpop.f32.mrb[0].mxu0
      %v10269 = vpop.f32.mrb[0].mxu0
      %v10270 = vadd.f32 0.0, %v10269
      %v10271 = vpop.f32.mrb[0].mxu0
      %10272 = vmatprep.mubr.bf16.mxu0 0
      %10273 = vmatmul.mubr.bf16.gmra.mrb[0].mxu0 %v8542
      %v10274 = vpop.f32.mrb[0].mxu0
      %v10275 = vadd.f32 0.0, %v10274
      %v10276 = vpop.f32.mrb[0].mxu0
      %v10277 = vpop.f32.mrb[0].mxu0
      %v10278 = vadd.f32 0.0, %v10277
      %v10279 = vpop.f32.mrb[0].mxu0
      %10280 = vmatprep.mubr.bf16.mxu0 0
      %10281 = vmatmul.mubr.bf16.gmra.mrb[0].mxu0 %v8545
      %v10282 = vpop.f32.mrb[0].mxu0
      %v10283 = vadd.f32 0.0, %v10282
      %v10284 = vpop.f32.mrb[0].mxu0
      %v10285 = vpop.f32.mrb[0].mxu0
      %v10286 = vadd.f32 0.0, %v10285
      %v10287 = vpop.f32.mrb[0].mxu0
      %10288 = vmatprep.mubr.bf16.mxu0 0
      %10289 = vmatmul.mubr.bf16.gmra.mrb[0].mxu0 %v8548
      %v10290 = vpop.f32.mrb[0].mxu0
      %v10291 = vadd.f32 0.0, %v10290
      %v10292 = vpop.f32.mrb[0].mxu0
      %v10293 = vpop.f32.mrb[0].mxu0
      %v10294 = vadd.f32 0.0, %v10293
      %v10295 = vpop.f32.mrb[0].mxu0
      %10296 = vmatprep.mubr.bf16.mxu0 0
      %10297 = vmatmul.mubr.bf16.gmra.mrb[0].mxu0 %v8551
      %v10298 = vpop.f32.mrb[0].mxu0
      %v10299 = vadd.f32 0.0, %v10298
      %v10300 = vpop.f32.mrb[0].mxu0
      %v10301 = vpop.f32.mrb[0].mxu0
      %v10302 = vadd.f32 0.0, %v10301
      %v10303 = vpop.f32.mrb[0].mxu0
      %10304 = vmatprep.mubr.bf16.mxu0 0
      %10305 = vmatmul.mubr.bf16.gmra.mrb[0].mxu0 %v8554
      %v10306 = vpop.f32.mrb[0].mxu0
      %v10307 = vadd.f32 0.0, %v10306
      %v10308 = vpop.f32.mrb[0].mxu0
      %v10309 = vpop.f32.mrb[0].mxu0
      %v10310 = vpop.f32.mrb[0].mxu0
      %10311 = vdwg.mxu0
      %v10312 = vadd.f32 %v10188, %v10267
      %v10313 = vadd.f32 %v10189, %v10270
      %v10314 = vadd.f32 %v10190, %v10275
      %v10315 = vadd.f32 %v10191, %v10278
      %v10316 = vadd.f32 %v10192, %v10283
      %v10317 = vadd.f32 %v10193, %v10286
      %v10318 = vadd.f32 %v10194, %v10291
      %v10319 = vadd.f32 %v10195, %v10294
      %v10320 = vadd.f32 %v10196, %v10299
      %v10321 = vadd.f32 %v10197, %v10302
      %v10322 = vadd.f32 %v10198, %v10307
      %v10323 = vtanh.pop %v10312
      %v10324 = vtanh.pop %v10313
      %v10325 = vtanh.pop %v10314
      %v10326 = vtanh.pop %v10315
      %v10327 = vtanh.pop %v10316
      %v10328 = vtanh.pop %v10317
      %v10329 = vtanh.pop %v10318
      %v10330 = vtanh.pop %v10319
      %v10331 = vtanh.pop %v10320
      %v10332 = vtanh.pop %v10321
      %v10333 = vtanh.pop %v10322
      %v10334 = vpack.c.bf16 %v10324, %v10323
      %v10335 = vpack.c.bf16 %v10326, %v10325
      %v10336 = vpack.c.bf16 %v10328, %v10327
      %v10337 = vpack.c.bf16 %v10330, %v10329
      %v10338 = vpack.c.bf16 %v10332, %v10331
      %v10339 = vpack.c.bf16 %v10333, %v10333
      %s10340 = scalar_lea.vmem %s14, 256
      %v10341 = vld [vmem:[%s10340] sm:$0xf]
      %v10342 = vld [vmem:[%s10340 + $0x4] sm:$0xf]
      %v10343 = vld [vmem:[%s10340 + $0x8] sm:$0xf]
      %v10344 = vld [vmem:[%s10340 + $0xc] sm:$0xf]
      %v10345 = vld [vmem:[%s10340 + $0x10] sm:$0xf]
      %v10346 = vld [vmem:[%s10340 + $0x14] sm:$0xf]
      %v10347 = vld [vmem:[%s10340 + $0x18] sm:$0xf]
      %v10348 = vld [vmem:[%s10340 + $0x1c] sm:$0xf]
      %v10349 = vld [vmem:[%s10340 + $0x20] sm:$0xf]
      %v10350 = vld [vmem:[%s10340 + $0x24] sm:$0xf]
      %v10351 = vld [vmem:[%s10340 + $0x28] sm:$0xf]
      %v10352 = vld [vmem:[%s10340 + $0x2c] sm:$0xf]
      %v10353 = vld [vmem:[%s10340 + $0x30] sm:$0xf]
      %v10354 = vld [vmem:[%s10340 + $0x34] sm:$0xf]
      %v10355 = vld [vmem:[%s10340 + $0x38] sm:$0xf]
      %v10356 = vld [vmem:[%s10340 + $0x3c] sm:$0xf]
      %v10357 = vld [vmem:[%s10340 + $0x40] sm:$0xf]
      %v10358 = vld [vmem:[%s10340 + $0x44] sm:$0xf]
      %v10359 = vld [vmem:[%s10340 + $0x48] sm:$0xf]
      %v10360 = vld [vmem:[%s10340 + $0x4c] sm:$0xf]
      %v10361 = vld [vmem:[%s10340 + $0x50] sm:$0xf]
      %v10362 = vld [vmem:[%s10340 + $0x54] sm:$0xf]
      %v10363 = vld [vmem:[%s10340 + $0x58] sm:$0xf]
      %v10364 = vld [vmem:[%s10340 + $0x5c] sm:$0xf]
      %v10365 = vld [vmem:[%s10340 + $0x60] sm:$0xf]
      %v10366 = vld [vmem:[%s10340 + $0x64] sm:$0xf]
      %v10367 = vld [vmem:[%s10340 + $0x68] sm:$0xf]
      %v10368 = vld [vmem:[%s10340 + $0x6c] sm:$0xf]
      %v10369 = vld [vmem:[%s10340 + $0x70] sm:$0xf]
      %v10370 = vld [vmem:[%s10340 + $0x74] sm:$0xf]
      %v10371 = vld [vmem:[%s10340 + $0x78] sm:$0xf]
      %v10372 = vld [vmem:[%s10340 + $0x7c] sm:$0xf]
      %v10405 = vunpack.c.l.b16 %v10341
      %v10406 = vunpack.c.l.b16 %v10342
      %v10407 = vunpack.c.l.b16 %v10343
      %v10408 = vunpack.c.l.b16 %v10344
      %v10409 = vunpack.c.l.b16 %v10345
      %v10410 = vunpack.c.l.b16 %v10346
      %v10411 = vunpack.c.l.b16 %v10347
      %v10412 = vunpack.c.l.b16 %v10348
      %v10413 = vunpack.c.l.b16 %v10349
      %v10414 = vunpack.c.l.b16 %v10350
      %v10415 = vunpack.c.l.b16 %v10351
      %v10416 = vunpack.c.l.b16 %v10352
      %v10417 = vunpack.c.l.b16 %v10353
      %v10418 = vunpack.c.l.b16 %v10354
      %v10419 = vunpack.c.l.b16 %v10355
      %v10420 = vunpack.c.l.b16 %v10356
      %v10421 = vunpack.c.l.b16 %v10357
      %v10422 = vunpack.c.l.b16 %v10358
      %v10423 = vunpack.c.l.b16 %v10359
      %v10424 = vunpack.c.l.b16 %v10360
      %v10425 = vunpack.c.l.b16 %v10361
      %v10426 = vunpack.c.l.b16 %v10362
      %v10427 = vunpack.c.l.b16 %v10363
      %v10428 = vunpack.c.l.b16 %v10364
      %v10429 = vunpack.c.l.b16 %v10365
      %v10430 = vunpack.c.l.b16 %v10366
      %v10431 = vunpack.c.l.b16 %v10367
      %v10432 = vunpack.c.l.b16 %v10368
      %v10433 = vunpack.c.l.b16 %v10369
      %v10434 = vunpack.c.l.b16 %v10370
      %v10435 = vunpack.c.l.b16 %v10371
      %v10436 = vunpack.c.l.b16 %v10372
      %v10437 = vpack.c.b16 %v10406, %v10405
      %v10438 = vpack.c.b16 %v10408, %v10407
      %v10439 = vpack.c.b16 %v10410, %v10409
      %v10440 = vpack.c.b16 %v10412, %v10411
      %v10441 = vpack.c.b16 %v10414, %v10413
      %v10442 = vpack.c.b16 %v10416, %v10415
      %v10443 = vpack.c.b16 %v10418, %v10417
      %v10444 = vpack.c.b16 %v10420, %v10419
      %v10445 = vpack.c.b16 %v10422, %v10421
      %v10446 = vpack.c.b16 %v10424, %v10423
      %v10447 = vpack.c.b16 %v10426, %v10425
      %v10448 = vpack.c.b16 %v10428, %v10427
      %v10449 = vpack.c.b16 %v10430, %v10429
      %v10450 = vpack.c.b16 %v10432, %v10431
      %v10451 = vpack.c.b16 %v10434, %v10433
      %v10452 = vpack.c.b16 %v10436, %v10435
      %v10454 = vsel %vm9322, %v10437, 0
      %v10457 = vsel %vm9322, %v10438, 0
      %v10460 = vsel %vm9322, %v10439, 0
      %v10463 = vsel %vm9322, %v10440, 0
      %v10466 = vsel %vm9322, %v10441, 0
      %v10469 = vsel %vm9322, %v10442, 0
      %v10472 = vsel %vm9322, %v10443, 0
      %v10475 = vsel %vm9322, %v10444, 0
      %v10478 = vsel %vm9322, %v10445, 0
      %v10481 = vsel %vm9322, %v10446, 0
      %v10484 = vsel %vm9322, %v10447, 0
      %v10487 = vsel %vm9322, %v10448, 0
      %v10490 = vsel %vm9322, %v10449, 0
      %v10493 = vsel %vm9322, %v10450, 0
      %v10496 = vsel %vm9322, %v10451, 0
      %v10499 = vsel %vm9322, %v10452, 0
      %v10502 = vsel %vm1956, %v10339, 0
      %10504 = vmatprep.subr.bf16.mxu0 0
      %10505 = vmatpush1.bf16.msra.mxu0 %v10334
      %10506 = vmatprep.subr.bf16.mxu0 0
      %10507 = vmatpush1.bf16.msra.mxu0 %v10335
      %10508 = vmatprep.subr.bf16.mxu0 0
      %10509 = vmatpush1.bf16.msra.mxu0 %v10336
      %10510 = vmatprep.subr.bf16.mxu0 0
      %10511 = vmatpush1.bf16.msra.mxu0 %v10337
      %10512 = vmatprep.subr.bf16.mxu0 0
      %10513 = vmatpush1.bf16.msra.mxu0 %v10338
      %10514 = vmatprep.subr.bf16.mxu0 0
      %10515 = vmatpush1.bf16.msra.mxu0 %v10502
      %10516 = vmatprep.subr.bf16.mxu0 0
      %10517 = vmatpush1.bf16.msra.mxu0 0
      %10518 = vmatprep.subr.bf16.mxu0 0
      %10519 = vmatpush1.bf16.msra.mxu0 0
      %10520 = vmatprep.subr.bf16.mxu0 0
      %10521 = vmatpush1.bf16.msra.mxu0 0
      %10522 = vmatprep.subr.bf16.mxu0 0
      %10523 = vmatpush1.bf16.msra.mxu0 0
      %10524 = vmatprep.subr.bf16.mxu0 0
      %10525 = vmatpush1.bf16.msra.mxu0 0
      %10526 = vmatprep.subr.bf16.mxu0 0
      %10527 = vmatpush1.bf16.msra.mxu0 0
      %10528 = vmatprep.subr.bf16.mxu0 0
      %10529 = vmatpush1.bf16.msra.mxu0 0
      %10530 = vmatprep.subr.bf16.mxu0 0
      %10531 = vmatpush1.bf16.msra.mxu0 0
      %10532 = vmatprep.subr.bf16.mxu0 0
      %10533 = vmatpush1.bf16.msra.mxu0 0
      %10534 = vmatprep.subr.bf16.mxu0 0
      %10535 = vmatpush1.bf16.msra.mxu0 0
      %10536 = vmatprep.mubr.bf16.mxu0 0
      %10537 = vmatmul.mubr.bf16.gmra.mrb[0].mxu0 %v10454
      %v10538 = vpop.f32.mrb[0].mxu0
      %v10539 = vadd.f32 0.0, %v10538
      %v10540 = vpop.f32.mrb[0].mxu0
      %v10541 = vpop.f32.mrb[0].mxu0
      %v10542 = vadd.f32 0.0, %v10541
      %v10543 = vpop.f32.mrb[0].mxu0
      %10544 = vmatprep.mubr.bf16.mxu0 0
      %10545 = vmatmul.mubr.bf16.gmra.mrb[0].mxu0 %v10457
      %v10546 = vpop.f32.mrb[0].mxu0
      %v10547 = vadd.f32 0.0, %v10546
      %v10548 = vpop.f32.mrb[0].mxu0
      %v10549 = vpop.f32.mrb[0].mxu0
      %v10550 = vadd.f32 0.0, %v10549
      %v10551 = vpop.f32.mrb[0].mxu0
      %10552 = vmatprep.mubr.bf16.mxu0 0
      %10553 = vmatmul.mubr.bf16.gmra.mrb[0].mxu0 %v10460
      %v10554 = vpop.f32.mrb[0].mxu0
      %v10555 = vadd.f32 0.0, %v10554
      %v10556 = vpop.f32.mrb[0].mxu0
      %v10557 = vpop.f32.mrb[0].mxu0
      %v10558 = vadd.f32 0.0, %v10557
      %v10559 = vpop.f32.mrb[0].mxu0
      %10560 = vmatprep.mubr.bf16.mxu0 0
      %10561 = vmatmul.mubr.bf16.gmra.mrb[0].mxu0 %v10463
      %v10562 = vpop.f32.mrb[0].mxu0
      %v10563 = vadd.f32 0.0, %v10562
      %v10564 = vpop.f32.mrb[0].mxu0
      %v10565 = vpop.f32.mrb[0].mxu0
      %v10566 = vadd.f32 0.0, %v10565
      %v10567 = vpop.f32.mrb[0].mxu0
      %10568 = vmatprep.mubr.bf16.mxu0 0
      %10569 = vmatmul.mubr.bf16.gmra.mrb[0].mxu0 %v10466
      %v10570 = vpop.f32.mrb[0].mxu0
      %v10571 = vadd.f32 0.0, %v10570
      %v10572 = vpop.f32.mrb[0].mxu0
      %v10573 = vpop.f32.mrb[0].mxu0
      %v10574 = vadd.f32 0.0, %v10573
      %v10575 = vpop.f32.mrb[0].mxu0
      %10576 = vmatprep.mubr.bf16.mxu0 0
      %10577 = vmatmul.mubr.bf16.gmra.mrb[0].mxu0 %v10469
      %v10578 = vpop.f32.mrb[0].mxu0
      %v10579 = vadd.f32 0.0, %v10578
      %v10580 = vpop.f32.mrb[0].mxu0
      %v10581 = vpop.f32.mrb[0].mxu0
      %v10582 = vadd.f32 0.0, %v10581
      %v10583 = vpop.f32.mrb[0].mxu0
      %10584 = vmatprep.mubr.bf16.mxu0 0
      %10585 = vmatmul.mubr.bf16.gmra.mrb[0].mxu0 %v10472
      %v10586 = vpop.f32.mrb[0].mxu0
      %v10587 = vadd.f32 0.0, %v10586
      %v10588 = vpop.f32.mrb[0].mxu0
      %v10589 = vpop.f32.mrb[0].mxu0
      %v10590 = vadd.f32 0.0, %v10589
      %v10591 = vpop.f32.mrb[0].mxu0
      %10592 = vmatprep.mubr.bf16.mxu0 0
      %10593 = vmatmul.mubr.bf16.gmra.mrb[0].mxu0 %v10475
      %v10594 = vpop.f32.mrb[0].mxu0
      %v10595 = vadd.f32 0.0, %v10594
      %v10596 = vpop.f32.mrb[0].mxu0
      %v10597 = vpop.f32.mrb[0].mxu0
      %v10598 = vadd.f32 0.0, %v10597
      %v10599 = vpop.f32.mrb[0].mxu0
      %10600 = vmatprep.mubr.bf16.mxu0 0
      %10601 = vmatmul.mubr.bf16.gmra.mrb[0].mxu0 %v10478
      %v10602 = vpop.f32.mrb[0].mxu0
      %v10603 = vadd.f32 0.0, %v10602
      %v10604 = vpop.f32.mrb[0].mxu0
      %v10605 = vpop.f32.mrb[0].mxu0
      %v10606 = vadd.f32 0.0, %v10605
      %v10607 = vpop.f32.mrb[0].mxu0
      %10608 = vmatprep.mubr.bf16.mxu0 0
      %10609 = vmatmul.mubr.bf16.gmra.mrb[0].mxu0 %v10481
      %v10610 = vpop.f32.mrb[0].mxu0
      %v10611 = vadd.f32 0.0, %v10610
      %v10612 = vpop.f32.mrb[0].mxu0
      %v10613 = vpop.f32.mrb[0].mxu0
      %v10614 = vadd.f32 0.0, %v10613
      %v10615 = vpop.f32.mrb[0].mxu0
      %10616 = vmatprep.mubr.bf16.mxu0 0
      %10617 = vmatmul.mubr.bf16.gmra.mrb[0].mxu0 %v10484
      %v10618 = vpop.f32.mrb[0].mxu0
      %v10619 = vadd.f32 0.0, %v10618
      %v10620 = vpop.f32.mrb[0].mxu0
      %v10621 = vpop.f32.mrb[0].mxu0
      %v10622 = vadd.f32 0.0, %v10621
      %v10623 = vpop.f32.mrb[0].mxu0
      %10624 = vmatprep.mubr.bf16.mxu0 0
      %10625 = vmatmul.mubr.bf16.gmra.mrb[0].mxu0 %v10487
      %v10626 = vpop.f32.mrb[0].mxu0
      %v10627 = vadd.f32 0.0, %v10626
      %v10628 = vpop.f32.mrb[0].mxu0
      %v10629 = vpop.f32.mrb[0].mxu0
      %v10630 = vadd.f32 0.0, %v10629
      %v10631 = vpop.f32.mrb[0].mxu0
      %10632 = vmatprep.mubr.bf16.mxu0 0
      %10633 = vmatmul.mubr.bf16.gmra.mrb[0].mxu0 %v10490
      %v10634 = vpop.f32.mrb[0].mxu0
      %v10635 = vadd.f32 0.0, %v10634
      %v10636 = vpop.f32.mrb[0].mxu0
      %v10637 = vpop.f32.mrb[0].mxu0
      %v10638 = vadd.f32 0.0, %v10637
      %v10639 = vpop.f32.mrb[0].mxu0
      %10640 = vmatprep.mubr.bf16.mxu0 0
      %10641 = vmatmul.mubr.bf16.gmra.mrb[0].mxu0 %v10493
      %v10642 = vpop.f32.mrb[0].mxu0
      %v10643 = vadd.f32 0.0, %v10642
      %v10644 = vpop.f32.mrb[0].mxu0
      %v10645 = vpop.f32.mrb[0].mxu0
      %v10646 = vadd.f32 0.0, %v10645
      %v10647 = vpop.f32.mrb[0].mxu0
      %10648 = vmatprep.mubr.bf16.mxu0 0
      %10649 = vmatmul.mubr.bf16.gmra.mrb[0].mxu0 %v10496
      %v10650 = vpop.f32.mrb[0].mxu0
      %v10651 = vadd.f32 0.0, %v10650
      %v10652 = vpop.f32.mrb[0].mxu0
      %v10653 = vpop.f32.mrb[0].mxu0
      %v10654 = vadd.f32 0.0, %v10653
      %v10655 = vpop.f32.mrb[0].mxu0
      %10656 = vmatprep.mubr.bf16.mxu0 0
      %10657 = vmatmul.mubr.bf16.gmra.mrb[0].mxu0 %v10499
      %v10658 = vpop.f32.mrb[0].mxu0
      %v10659 = vadd.f32 0.0, %v10658
      %v10660 = vpop.f32.mrb[0].mxu0
      %v10661 = vpop.f32.mrb[0].mxu0
      %v10662 = vadd.f32 0.0, %v10661
      %v10663 = vpop.f32.mrb[0].mxu0
      %10664 = vdwg.mxu0
      %v10665 = vadd.f32 %v9701, %v10539
      %v10666 = vadd.f32 %v9704, %v10542
      %v10667 = vadd.f32 %v9709, %v10547
      %v10668 = vadd.f32 %v9712, %v10550
      %v10669 = vadd.f32 %v9717, %v10555
      %v10670 = vadd.f32 %v9720, %v10558
      %v10671 = vadd.f32 %v9725, %v10563
      %v10672 = vadd.f32 %v9728, %v10566
      %v10673 = vadd.f32 %v9733, %v10571
      %v10674 = vadd.f32 %v9736, %v10574
      %v10675 = vadd.f32 %v9741, %v10579
      %v10676 = vadd.f32 %v9744, %v10582
      %v10677 = vadd.f32 %v9749, %v10587
      %v10678 = vadd.f32 %v9752, %v10590
      %v10679 = vadd.f32 %v9757, %v10595
      %v10680 = vadd.f32 %v9760, %v10598
      %v10681 = vadd.f32 %v9765, %v10603
      %v10682 = vadd.f32 %v9768, %v10606
      %v10683 = vadd.f32 %v9773, %v10611
      %v10684 = vadd.f32 %v9776, %v10614
      %v10685 = vadd.f32 %v9781, %v10619
      %v10686 = vadd.f32 %v9784, %v10622
      %v10687 = vadd.f32 %v9789, %v10627
      %v10688 = vadd.f32 %v9792, %v10630
      %v10689 = vadd.f32 %v9797, %v10635
      %v10690 = vadd.f32 %v9800, %v10638
      %v10691 = vadd.f32 %v9805, %v10643
      %v10692 = vadd.f32 %v9808, %v10646
      %v10693 = vadd.f32 %v9813, %v10651
      %v10694 = vadd.f32 %v9816, %v10654
      %v10695 = vadd.f32 %v9821, %v10659
      %v10696 = vadd.f32 %v9824, %v10662
      %s10697 = scalar_lea.vmem %s12, 384
      %v10698 = vld [vmem:[%s10697] sm:$0xf]
      %v10699 = vld [vmem:[%s10697 + $0x4] sm:$0xf]
      %v10700 = vld [vmem:[%s10697 + $0x8] sm:$0xf]
      %v10701 = vld [vmem:[%s10697 + $0xc] sm:$0xf]
      %v10702 = vld [vmem:[%s10697 + $0x10] sm:$0xf]
      %v10703 = vld [vmem:[%s10697 + $0x14] sm:$0xf]
      %v10704 = vld [vmem:[%s10697 + $0x18] sm:$0xf]
      %v10705 = vld [vmem:[%s10697 + $0x1c] sm:$0xf]
      %v10714 = vunpack.c.l.b16 %v10698
      %v10715 = vunpack.c.l.b16 %v10699
      %v10716 = vunpack.c.l.b16 %v10700
      %v10717 = vunpack.c.l.b16 %v10701
      %v10718 = vunpack.c.l.b16 %v10702
      %v10719 = vunpack.c.l.b16 %v10703
      %v10720 = vunpack.c.l.b16 %v10704
      %v10721 = vunpack.c.l.b16 %v10705
      %v10722 = vpack.c.b16 %v10715, %v10714
      %v10723 = vpack.c.b16 %v10717, %v10716
      %v10724 = vpack.c.b16 %v10719, %v10718
      %v10725 = vpack.c.b16 %v10721, %v10720
      %10730 = vmatprep.subr.bf16.mxu0 0
      %10731 = vmatpush1.bf16.msra.mxu0 %v10722
      %10732 = vmatprep.subr.bf16.mxu0 0
      %10733 = vmatpush1.bf16.msra.mxu0 %v10723
      %10734 = vmatprep.subr.bf16.mxu0 0
      %10735 = vmatpush1.bf16.msra.mxu0 %v10724
      %10736 = vmatprep.subr.bf16.mxu0 0
      %10737 = vmatpush1.bf16.msra.mxu0 %v10725
      %10738 = vmatprep.subr.bf16.mxu0 0
      %10739 = vmatpush1.bf16.msra.mxu0 0
      %10740 = vmatprep.subr.bf16.mxu0 0
      %10741 = vmatpush1.bf16.msra.mxu0 0
      %10742 = vmatprep.subr.bf16.mxu0 0
      %10743 = vmatpush1.bf16.msra.mxu0 0
      %10744 = vmatprep.subr.bf16.mxu0 0
      %10745 = vmatpush1.bf16.msra.mxu0 0
      %10746 = vmatprep.subr.bf16.mxu0 0
      %10747 = vmatpush1.bf16.msra.mxu0 0
      %10748 = vmatprep.subr.bf16.mxu0 0
      %10749 = vmatpush1.bf16.msra.mxu0 0
      %10750 = vmatprep.subr.bf16.mxu0 0
      %10751 = vmatpush1.bf16.msra.mxu0 0
      %10752 = vmatprep.subr.bf16.mxu0 0
      %10753 = vmatpush1.bf16.msra.mxu0 0
      %10754 = vmatprep.subr.bf16.mxu0 0
      %10755 = vmatpush1.bf16.msra.mxu0 0
      %10756 = vmatprep.subr.bf16.mxu0 0
      %10757 = vmatpush1.bf16.msra.mxu0 0
      %10758 = vmatprep.subr.bf16.mxu0 0
      %10759 = vmatpush1.bf16.msra.mxu0 0
      %10760 = vmatprep.subr.bf16.mxu0 0
      %10761 = vmatpush1.bf16.msra.mxu0 0
      %10762 = vmatprep.mubr.bf16.mxu0 0
      %10763 = vmatmul.mubr.bf16.gmra.mrb[0].mxu0 %v8089
      %v10764 = vpop.f32.mrb[0].mxu0
      %v10765 = vadd.f32 0.0, %v10764
      %v10766 = vpop.f32.mrb[0].mxu0
      %v10767 = vpop.f32.mrb[0].mxu0
      %v10768 = vadd.f32 0.0, %v10767
      %v10769 = vpop.f32.mrb[0].mxu0
      %10770 = vmatprep.mubr.bf16.mxu0 0
      %10771 = vmatmul.mubr.bf16.gmra.mrb[0].mxu0 %v8092
      %v10772 = vpop.f32.mrb[0].mxu0
      %v10773 = vadd.f32 0.0, %v10772
      %v10774 = vpop.f32.mrb[0].mxu0
      %v10775 = vpop.f32.mrb[0].mxu0
      %v10776 = vadd.f32 0.0, %v10775
      %v10777 = vpop.f32.mrb[0].mxu0
      %10778 = vmatprep.mubr.bf16.mxu0 0
      %10779 = vmatmul.mubr.bf16.gmra.mrb[0].mxu0 %v8095
      %v10780 = vpop.f32.mrb[0].mxu0
      %v10781 = vadd.f32 0.0, %v10780
      %v10782 = vpop.f32.mrb[0].mxu0
      %v10783 = vpop.f32.mrb[0].mxu0
      %v10784 = vadd.f32 0.0, %v10783
      %v10785 = vpop.f32.mrb[0].mxu0
      %10786 = vmatprep.mubr.bf16.mxu0 0
      %10787 = vmatmul.mubr.bf16.gmra.mrb[0].mxu0 %v8098
      %v10788 = vpop.f32.mrb[0].mxu0
      %v10789 = vadd.f32 0.0, %v10788
      %v10790 = vpop.f32.mrb[0].mxu0
      %v10791 = vpop.f32.mrb[0].mxu0
      %v10792 = vadd.f32 0.0, %v10791
      %v10793 = vpop.f32.mrb[0].mxu0
      %10794 = vmatprep.mubr.bf16.mxu0 0
      %10795 = vmatmul.mubr.bf16.gmra.mrb[0].mxu0 %v8101
      %v10796 = vpop.f32.mrb[0].mxu0
      %v10797 = vadd.f32 0.0, %v10796
      %v10798 = vpop.f32.mrb[0].mxu0
      %v10799 = vpop.f32.mrb[0].mxu0
      %v10800 = vadd.f32 0.0, %v10799
      %v10801 = vpop.f32.mrb[0].mxu0
      %10802 = vmatprep.mubr.bf16.mxu0 0
      %10803 = vmatmul.mubr.bf16.gmra.mrb[0].mxu0 %v8104
      %v10804 = vpop.f32.mrb[0].mxu0
      %v10805 = vadd.f32 0.0, %v10804
      %v10806 = vpop.f32.mrb[0].mxu0
      %v10807 = vpop.f32.mrb[0].mxu0
      %v10808 = vpop.f32.mrb[0].mxu0
      %10809 = vdwg.mxu0
      %v10810 = vadd.f32 %v8190, %v10765
      %v10811 = vadd.f32 %v8190, %v10768
      %v10812 = vadd.f32 %v8190, %v10773
      %v10813 = vadd.f32 %v8190, %v10776
      %v10814 = vadd.f32 %v8190, %v10781
      %v10815 = vadd.f32 %v8190, %v10784
      %v10816 = vadd.f32 %v8190, %v10789
      %v10817 = vadd.f32 %v8190, %v10792
      %v10818 = vadd.f32 %v8190, %v10797
      %v10819 = vadd.f32 %v8190, %v10800
      %v10820 = vadd.f32 %v8190, %v10805
      %s10821 = scalar_lea.vmem %s12, 416
      %v10822 = vld [vmem:[%s10821] sm:$0xf]
      %v10823 = vld [vmem:[%s10821 + $0x4] sm:$0xf]
      %v10824 = vld [vmem:[%s10821 + $0x8] sm:$0xf]
      %v10825 = vld [vmem:[%s10821 + $0xc] sm:$0xf]
      %v10826 = vld [vmem:[%s10821 + $0x10] sm:$0xf]
      %v10827 = vld [vmem:[%s10821 + $0x14] sm:$0xf]
      %v10828 = vld [vmem:[%s10821 + $0x18] sm:$0xf]
      %v10829 = vld [vmem:[%s10821 + $0x1c] sm:$0xf]
      %v10838 = vunpack.c.l.b16 %v10822
      %v10839 = vunpack.c.l.b16 %v10823
      %v10840 = vunpack.c.l.b16 %v10824
      %v10841 = vunpack.c.l.b16 %v10825
      %v10842 = vunpack.c.l.b16 %v10826
      %v10843 = vunpack.c.l.b16 %v10827
      %v10844 = vunpack.c.l.b16 %v10828
      %v10845 = vunpack.c.l.b16 %v10829
      %v10846 = vpack.c.b16 %v10839, %v10838
      %v10847 = vpack.c.b16 %v10841, %v10840
      %v10848 = vpack.c.b16 %v10843, %v10842
      %v10849 = vpack.c.b16 %v10845, %v10844
      %10854 = vmatprep.subr.bf16.mxu0 0
      %10855 = vmatpush1.bf16.msra.mxu0 %v10846
      %10856 = vmatprep.subr.bf16.mxu0 0
      %10857 = vmatpush1.bf16.msra.mxu0 %v10847
      %10858 = vmatprep.subr.bf16.mxu0 0
      %10859 = vmatpush1.bf16.msra.mxu0 %v10848
      %10860 = vmatprep.subr.bf16.mxu0 0
      %10861 = vmatpush1.bf16.msra.mxu0 %v10849
      %10862 = vmatprep.subr.bf16.mxu0 0
      %10863 = vmatpush1.bf16.msra.mxu0 0
      %10864 = vmatprep.subr.bf16.mxu0 0
      %10865 = vmatpush1.bf16.msra.mxu0 0
      %10866 = vmatprep.subr.bf16.mxu0 0
      %10867 = vmatpush1.bf16.msra.mxu0 0
      %10868 = vmatprep.subr.bf16.mxu0 0
      %10869 = vmatpush1.bf16.msra.mxu0 0
      %10870 = vmatprep.subr.bf16.mxu0 0
      %10871 = vmatpush1.bf16.msra.mxu0 0
      %10872 = vmatprep.subr.bf16.mxu0 0
      %10873 = vmatpush1.bf16.msra.mxu0 0
      %10874 = vmatprep.subr.bf16.mxu0 0
      %10875 = vmatpush1.bf16.msra.mxu0 0
      %10876 = vmatprep.subr.bf16.mxu0 0
      %10877 = vmatpush1.bf16.msra.mxu0 0
      %10878 = vmatprep.subr.bf16.mxu0 0
      %10879 = vmatpush1.bf16.msra.mxu0 0
      %10880 = vmatprep.subr.bf16.mxu0 0
      %10881 = vmatpush1.bf16.msra.mxu0 0
      %10882 = vmatprep.subr.bf16.mxu0 0
      %10883 = vmatpush1.bf16.msra.mxu0 0
      %10884 = vmatprep.subr.bf16.mxu0 0
      %10885 = vmatpush1.bf16.msra.mxu0 0
      %10886 = vmatprep.mubr.bf16.mxu0 0
      %10887 = vmatmul.mubr.bf16.gmra.mrb[0].mxu0 %v8243
      %v10888 = vpop.f32.mrb[0].mxu0
      %v10889 = vadd.f32 0.0, %v10888
      %v10890 = vpop.f32.mrb[0].mxu0
      %v10891 = vpop.f32.mrb[0].mxu0
      %v10892 = vadd.f32 0.0, %v10891
      %v10893 = vpop.f32.mrb[0].mxu0
      %10894 = vmatprep.mubr.bf16.mxu0 0
      %10895 = vmatmul.mubr.bf16.gmra.mrb[0].mxu0 %v8246
      %v10896 = vpop.f32.mrb[0].mxu0
      %v10897 = vadd.f32 0.0, %v10896
      %v10898 = vpop.f32.mrb[0].mxu0
      %v10899 = vpop.f32.mrb[0].mxu0
      %v10900 = vadd.f32 0.0, %v10899
      %v10901 = vpop.f32.mrb[0].mxu0
      %10902 = vmatprep.mubr.bf16.mxu0 0
      %10903 = vmatmul.mubr.bf16.gmra.mrb[0].mxu0 %v8249
      %v10904 = vpop.f32.mrb[0].mxu0
      %v10905 = vadd.f32 0.0, %v10904
      %v10906 = vpop.f32.mrb[0].mxu0
      %v10907 = vpop.f32.mrb[0].mxu0
      %v10908 = vadd.f32 0.0, %v10907
      %v10909 = vpop.f32.mrb[0].mxu0
      %10910 = vmatprep.mubr.bf16.mxu0 0
      %10911 = vmatmul.mubr.bf16.gmra.mrb[0].mxu0 %v8252
      %v10912 = vpop.f32.mrb[0].mxu0
      %v10913 = vadd.f32 0.0, %v10912
      %v10914 = vpop.f32.mrb[0].mxu0
      %v10915 = vpop.f32.mrb[0].mxu0
      %v10916 = vadd.f32 0.0, %v10915
      %v10917 = vpop.f32.mrb[0].mxu0
      %10918 = vmatprep.mubr.bf16.mxu0 0
      %10919 = vmatmul.mubr.bf16.gmra.mrb[0].mxu0 %v8255
      %v10920 = vpop.f32.mrb[0].mxu0
      %v10921 = vadd.f32 0.0, %v10920
      %v10922 = vpop.f32.mrb[0].mxu0
      %v10923 = vpop.f32.mrb[0].mxu0
      %v10924 = vadd.f32 0.0, %v10923
      %v10925 = vpop.f32.mrb[0].mxu0
      %10926 = vmatprep.mubr.bf16.mxu0 0
      %10927 = vmatmul.mubr.bf16.gmra.mrb[0].mxu0 %v8258
      %v10928 = vpop.f32.mrb[0].mxu0
      %v10929 = vadd.f32 0.0, %v10928
      %v10930 = vpop.f32.mrb[0].mxu0
      %v10931 = vpop.f32.mrb[0].mxu0
      %v10932 = vpop.f32.mrb[0].mxu0
      %10933 = vdwg.mxu0
      %v10934 = vadd.f32 %v10810, %v10889
      %v10935 = vadd.f32 %v10811, %v10892
      %v10936 = vadd.f32 %v10812, %v10897
      %v10937 = vadd.f32 %v10813, %v10900
      %v10938 = vadd.f32 %v10814, %v10905
      %v10939 = vadd.f32 %v10815, %v10908
      %v10940 = vadd.f32 %v10816, %v10913
      %v10941 = vadd.f32 %v10817, %v10916
      %v10942 = vadd.f32 %v10818, %v10921
      %v10943 = vadd.f32 %v10819, %v10924
      %v10944 = vadd.f32 %v10820, %v10929
      %s10945 = scalar_lea.vmem %s12, 448
      %v10946 = vld [vmem:[%s10945] sm:$0xf]
      %v10947 = vld [vmem:[%s10945 + $0x4] sm:$0xf]
      %v10948 = vld [vmem:[%s10945 + $0x8] sm:$0xf]
      %v10949 = vld [vmem:[%s10945 + $0xc] sm:$0xf]
      %v10950 = vld [vmem:[%s10945 + $0x10] sm:$0xf]
      %v10951 = vld [vmem:[%s10945 + $0x14] sm:$0xf]
      %v10952 = vld [vmem:[%s10945 + $0x18] sm:$0xf]
      %v10953 = vld [vmem:[%s10945 + $0x1c] sm:$0xf]
      %v10962 = vunpack.c.l.b16 %v10946
      %v10963 = vunpack.c.l.b16 %v10947
      %v10964 = vunpack.c.l.b16 %v10948
      %v10965 = vunpack.c.l.b16 %v10949
      %v10966 = vunpack.c.l.b16 %v10950
      %v10967 = vunpack.c.l.b16 %v10951
      %v10968 = vunpack.c.l.b16 %v10952
      %v10969 = vunpack.c.l.b16 %v10953
      %v10970 = vpack.c.b16 %v10963, %v10962
      %v10971 = vpack.c.b16 %v10965, %v10964
      %v10972 = vpack.c.b16 %v10967, %v10966
      %v10973 = vpack.c.b16 %v10969, %v10968
      %10978 = vmatprep.subr.bf16.mxu0 0
      %10979 = vmatpush1.bf16.msra.mxu0 %v10970
      %10980 = vmatprep.subr.bf16.mxu0 0
      %10981 = vmatpush1.bf16.msra.mxu0 %v10971
      %10982 = vmatprep.subr.bf16.mxu0 0
      %10983 = vmatpush1.bf16.msra.mxu0 %v10972
      %10984 = vmatprep.subr.bf16.mxu0 0
      %10985 = vmatpush1.bf16.msra.mxu0 %v10973
      %10986 = vmatprep.subr.bf16.mxu0 0
      %10987 = vmatpush1.bf16.msra.mxu0 0
      %10988 = vmatprep.subr.bf16.mxu0 0
      %10989 = vmatpush1.bf16.msra.mxu0 0
      %10990 = vmatprep.subr.bf16.mxu0 0
      %10991 = vmatpush1.bf16.msra.mxu0 0
      %10992 = vmatprep.subr.bf16.mxu0 0
      %10993 = vmatpush1.bf16.msra.mxu0 0
      %10994 = vmatprep.subr.bf16.mxu0 0
      %10995 = vmatpush1.bf16.msra.mxu0 0
      %10996 = vmatprep.subr.bf16.mxu0 0
      %10997 = vmatpush1.bf16.msra.mxu0 0
      %10998 = vmatprep.subr.bf16.mxu0 0
      %10999 = vmatpush1.bf16.msra.mxu0 0
      %11000 = vmatprep.subr.bf16.mxu0 0
      %11001 = vmatpush1.bf16.msra.mxu0 0
      %11002 = vmatprep.subr.bf16.mxu0 0
      %11003 = vmatpush1.bf16.msra.mxu0 0
      %11004 = vmatprep.subr.bf16.mxu0 0
      %11005 = vmatpush1.bf16.msra.mxu0 0
      %11006 = vmatprep.subr.bf16.mxu0 0
      %11007 = vmatpush1.bf16.msra.mxu0 0
      %11008 = vmatprep.subr.bf16.mxu0 0
      %11009 = vmatpush1.bf16.msra.mxu0 0
      %11010 = vmatprep.mubr.bf16.mxu0 0
      %11011 = vmatmul.mubr.bf16.gmra.mrb[0].mxu0 %v8391
      %v11012 = vpop.f32.mrb[0].mxu0
      %v11013 = vadd.f32 0.0, %v11012
      %v11014 = vpop.f32.mrb[0].mxu0
      %v11015 = vpop.f32.mrb[0].mxu0
      %v11016 = vadd.f32 0.0, %v11015
      %v11017 = vpop.f32.mrb[0].mxu0
      %11018 = vmatprep.mubr.bf16.mxu0 0
      %11019 = vmatmul.mubr.bf16.gmra.mrb[0].mxu0 %v8394
      %v11020 = vpop.f32.mrb[0].mxu0
      %v11021 = vadd.f32 0.0, %v11020
      %v11022 = vpop.f32.mrb[0].mxu0
      %v11023 = vpop.f32.mrb[0].mxu0
      %v11024 = vadd.f32 0.0, %v11023
      %v11025 = vpop.f32.mrb[0].mxu0
      %11026 = vmatprep.mubr.bf16.mxu0 0
      %11027 = vmatmul.mubr.bf16.gmra.mrb[0].mxu0 %v8397
      %v11028 = vpop.f32.mrb[0].mxu0
      %v11029 = vadd.f32 0.0, %v11028
      %v11030 = vpop.f32.mrb[0].mxu0
      %v11031 = vpop.f32.mrb[0].mxu0
      %v11032 = vadd.f32 0.0, %v11031
      %v11033 = vpop.f32.mrb[0].mxu0
      %11034 = vmatprep.mubr.bf16.mxu0 0
      %11035 = vmatmul.mubr.bf16.gmra.mrb[0].mxu0 %v8400
      %v11036 = vpop.f32.mrb[0].mxu0
      %v11037 = vadd.f32 0.0, %v11036
      %v11038 = vpop.f32.mrb[0].mxu0
      %v11039 = vpop.f32.mrb[0].mxu0
      %v11040 = vadd.f32 0.0, %v11039
      %v11041 = vpop.f32.mrb[0].mxu0
      %11042 = vmatprep.mubr.bf16.mxu0 0
      %11043 = vmatmul.mubr.bf16.gmra.mrb[0].mxu0 %v8403
      %v11044 = vpop.f32.mrb[0].mxu0
      %v11045 = vadd.f32 0.0, %v11044
      %v11046 = vpop.f32.mrb[0].mxu0
      %v11047 = vpop.f32.mrb[0].mxu0
      %v11048 = vadd.f32 0.0, %v11047
      %v11049 = vpop.f32.mrb[0].mxu0
      %11050 = vmatprep.mubr.bf16.mxu0 0
      %11051 = vmatmul.mubr.bf16.gmra.mrb[0].mxu0 %v8406
      %v11052 = vpop.f32.mrb[0].mxu0
      %v11053 = vadd.f32 0.0, %v11052
      %v11054 = vpop.f32.mrb[0].mxu0
      %v11055 = vpop.f32.mrb[0].mxu0
      %v11056 = vpop.f32.mrb[0].mxu0
      %11057 = vdwg.mxu0
      %v11058 = vadd.f32 %v10934, %v11013
      %v11059 = vadd.f32 %v10935, %v11016
      %v11060 = vadd.f32 %v10936, %v11021
      %v11061 = vadd.f32 %v10937, %v11024
      %v11062 = vadd.f32 %v10938, %v11029
      %v11063 = vadd.f32 %v10939, %v11032
      %v11064 = vadd.f32 %v10940, %v11037
      %v11065 = vadd.f32 %v10941, %v11040
      %v11066 = vadd.f32 %v10942, %v11045
      %v11067 = vadd.f32 %v10943, %v11048
      %v11068 = vadd.f32 %v10944, %v11053
      %s11069 = scalar_lea.vmem %s12, 480
      %v11070 = vld [vmem:[%s11069] sm:$0xf]
      %v11071 = vld [vmem:[%s11069 + $0x4] sm:$0xf]
      %v11072 = vld [vmem:[%s11069 + $0x8] sm:$0xf]
      %v11073 = vld [vmem:[%s11069 + $0xc] sm:$0xf]
      %v11074 = vld [vmem:[%s11069 + $0x10] sm:$0xf]
      %v11075 = vld [vmem:[%s11069 + $0x14] sm:$0xf]
      %v11076 = vld [vmem:[%s11069 + $0x18] sm:$0xf]
      %v11077 = vld [vmem:[%s11069 + $0x1c] sm:$0xf]
      %v11086 = vunpack.c.l.b16 %v11070
      %v11087 = vunpack.c.l.b16 %v11071
      %v11088 = vunpack.c.l.b16 %v11072
      %v11089 = vunpack.c.l.b16 %v11073
      %v11090 = vunpack.c.l.b16 %v11074
      %v11091 = vunpack.c.l.b16 %v11075
      %v11092 = vunpack.c.l.b16 %v11076
      %v11093 = vunpack.c.l.b16 %v11077
      %v11094 = vpack.c.b16 %v11087, %v11086
      %v11095 = vpack.c.b16 %v11089, %v11088
      %v11096 = vpack.c.b16 %v11091, %v11090
      %v11097 = vpack.c.b16 %v11093, %v11092
      %11102 = vmatprep.subr.bf16.mxu0 0
      %11103 = vmatpush1.bf16.msra.mxu0 %v11094
      %11104 = vmatprep.subr.bf16.mxu0 0
      %11105 = vmatpush1.bf16.msra.mxu0 %v11095
      %11106 = vmatprep.subr.bf16.mxu0 0
      %11107 = vmatpush1.bf16.msra.mxu0 %v11096
      %11108 = vmatprep.subr.bf16.mxu0 0
      %11109 = vmatpush1.bf16.msra.mxu0 %v11097
      %11110 = vmatprep.subr.bf16.mxu0 0
      %11111 = vmatpush1.bf16.msra.mxu0 0
      %11112 = vmatprep.subr.bf16.mxu0 0
      %11113 = vmatpush1.bf16.msra.mxu0 0
      %11114 = vmatprep.subr.bf16.mxu0 0
      %11115 = vmatpush1.bf16.msra.mxu0 0
      %11116 = vmatprep.subr.bf16.mxu0 0
      %11117 = vmatpush1.bf16.msra.mxu0 0
      %11118 = vmatprep.subr.bf16.mxu0 0
      %11119 = vmatpush1.bf16.msra.mxu0 0
      %11120 = vmatprep.subr.bf16.mxu0 0
      %11121 = vmatpush1.bf16.msra.mxu0 0
      %11122 = vmatprep.subr.bf16.mxu0 0
      %11123 = vmatpush1.bf16.msra.mxu0 0
      %11124 = vmatprep.subr.bf16.mxu0 0
      %11125 = vmatpush1.bf16.msra.mxu0 0
      %11126 = vmatprep.subr.bf16.mxu0 0
      %11127 = vmatpush1.bf16.msra.mxu0 0
      %11128 = vmatprep.subr.bf16.mxu0 0
      %11129 = vmatpush1.bf16.msra.mxu0 0
      %11130 = vmatprep.subr.bf16.mxu0 0
      %11131 = vmatpush1.bf16.msra.mxu0 0
      %11132 = vmatprep.subr.bf16.mxu0 0
      %11133 = vmatpush1.bf16.msra.mxu0 0
      %11134 = vmatprep.mubr.bf16.mxu0 0
      %11135 = vmatmul.mubr.bf16.gmra.mrb[0].mxu0 %v8539
      %v11136 = vpop.f32.mrb[0].mxu0
      %v11137 = vadd.f32 0.0, %v11136
      %v11138 = vpop.f32.mrb[0].mxu0
      %v11139 = vpop.f32.mrb[0].mxu0
      %v11140 = vadd.f32 0.0, %v11139
      %v11141 = vpop.f32.mrb[0].mxu0
      %11142 = vmatprep.mubr.bf16.mxu0 0
      %11143 = vmatmul.mubr.bf16.gmra.mrb[0].mxu0 %v8542
      %v11144 = vpop.f32.mrb[0].mxu0
      %v11145 = vadd.f32 0.0, %v11144
      %v11146 = vpop.f32.mrb[0].mxu0
      %v11147 = vpop.f32.mrb[0].mxu0
      %v11148 = vadd.f32 0.0, %v11147
      %v11149 = vpop.f32.mrb[0].mxu0
      %11150 = vmatprep.mubr.bf16.mxu0 0
      %11151 = vmatmul.mubr.bf16.gmra.mrb[0].mxu0 %v8545
      %v11152 = vpop.f32.mrb[0].mxu0
      %v11153 = vadd.f32 0.0, %v11152
      %v11154 = vpop.f32.mrb[0].mxu0
      %v11155 = vpop.f32.mrb[0].mxu0
      %v11156 = vadd.f32 0.0, %v11155
      %v11157 = vpop.f32.mrb[0].mxu0
      %11158 = vmatprep.mubr.bf16.mxu0 0
      %11159 = vmatmul.mubr.bf16.gmra.mrb[0].mxu0 %v8548
      %v11160 = vpop.f32.mrb[0].mxu0
      %v11161 = vadd.f32 0.0, %v11160
      %v11162 = vpop.f32.mrb[0].mxu0
      %v11163 = vpop.f32.mrb[0].mxu0
      %v11164 = vadd.f32 0.0, %v11163
      %v11165 = vpop.f32.mrb[0].mxu0
      %11166 = vmatprep.mubr.bf16.mxu0 0
      %11167 = vmatmul.mubr.bf16.gmra.mrb[0].mxu0 %v8551
      %v11168 = vpop.f32.mrb[0].mxu0
      %v11169 = vadd.f32 0.0, %v11168
      %v11170 = vpop.f32.mrb[0].mxu0
      %v11171 = vpop.f32.mrb[0].mxu0
      %v11172 = vadd.f32 0.0, %v11171
      %v11173 = vpop.f32.mrb[0].mxu0
      %11174 = vmatprep.mubr.bf16.mxu0 0
      %11175 = vmatmul.mubr.bf16.gmra.mrb[0].mxu0 %v8554
      %v11176 = vpop.f32.mrb[0].mxu0
      %v11177 = vadd.f32 0.0, %v11176
      %v11178 = vpop.f32.mrb[0].mxu0
      %v11179 = vpop.f32.mrb[0].mxu0
      %v11180 = vpop.f32.mrb[0].mxu0
      %11181 = vdwg.mxu0
      %v11182 = vadd.f32 %v11058, %v11137
      %v11183 = vadd.f32 %v11059, %v11140
      %v11184 = vadd.f32 %v11060, %v11145
      %v11185 = vadd.f32 %v11061, %v11148
      %v11186 = vadd.f32 %v11062, %v11153
      %v11187 = vadd.f32 %v11063, %v11156
      %v11188 = vadd.f32 %v11064, %v11161
      %v11189 = vadd.f32 %v11065, %v11164
      %v11190 = vadd.f32 %v11066, %v11169
      %v11191 = vadd.f32 %v11067, %v11172
      %v11192 = vadd.f32 %v11068, %v11177
      %v11193 = vtanh.pop %v11182
      %v11194 = vtanh.pop %v11183
      %v11195 = vtanh.pop %v11184
      %v11196 = vtanh.pop %v11185
      %v11197 = vtanh.pop %v11186
      %v11198 = vtanh.pop %v11187
      %v11199 = vtanh.pop %v11188
      %v11200 = vtanh.pop %v11189
      %v11201 = vtanh.pop %v11190
      %v11202 = vtanh.pop %v11191
      %v11203 = vtanh.pop %v11192
      %v11204 = vpack.c.bf16 %v11194, %v11193
      %v11205 = vpack.c.bf16 %v11196, %v11195
      %v11206 = vpack.c.bf16 %v11198, %v11197
      %v11207 = vpack.c.bf16 %v11200, %v11199
      %v11208 = vpack.c.bf16 %v11202, %v11201
      %v11209 = vpack.c.bf16 %v11203, %v11203
      %s11210 = scalar_lea.vmem %s14, 384
      %v11211 = vld [vmem:[%s11210] sm:$0xf]
      %v11212 = vld [vmem:[%s11210 + $0x4] sm:$0xf]
      %v11213 = vld [vmem:[%s11210 + $0x8] sm:$0xf]
      %v11214 = vld [vmem:[%s11210 + $0xc] sm:$0xf]
      %v11215 = vld [vmem:[%s11210 + $0x10] sm:$0xf]
      %v11216 = vld [vmem:[%s11210 + $0x14] sm:$0xf]
      %v11217 = vld [vmem:[%s11210 + $0x18] sm:$0xf]
      %v11218 = vld [vmem:[%s11210 + $0x1c] sm:$0xf]
      %v11219 = vld [vmem:[%s11210 + $0x20] sm:$0xf]
      %v11220 = vld [vmem:[%s11210 + $0x24] sm:$0xf]
      %v11221 = vld [vmem:[%s11210 + $0x28] sm:$0xf]
      %v11222 = vld [vmem:[%s11210 + $0x2c] sm:$0xf]
      %v11223 = vld [vmem:[%s11210 + $0x30] sm:$0xf]
      %v11224 = vld [vmem:[%s11210 + $0x34] sm:$0xf]
      %v11225 = vld [vmem:[%s11210 + $0x38] sm:$0xf]
      %v11226 = vld [vmem:[%s11210 + $0x3c] sm:$0xf]
      %v11227 = vld [vmem:[%s11210 + $0x40] sm:$0xf]
      %v11228 = vld [vmem:[%s11210 + $0x44] sm:$0xf]
      %v11229 = vld [vmem:[%s11210 + $0x48] sm:$0xf]
      %v11230 = vld [vmem:[%s11210 + $0x4c] sm:$0xf]
      %v11231 = vld [vmem:[%s11210 + $0x50] sm:$0xf]
      %v11232 = vld [vmem:[%s11210 + $0x54] sm:$0xf]
      %v11233 = vld [vmem:[%s11210 + $0x58] sm:$0xf]
      %v11234 = vld [vmem:[%s11210 + $0x5c] sm:$0xf]
      %v11235 = vld [vmem:[%s11210 + $0x60] sm:$0xf]
      %v11236 = vld [vmem:[%s11210 + $0x64] sm:$0xf]
      %v11237 = vld [vmem:[%s11210 + $0x68] sm:$0xf]
      %v11238 = vld [vmem:[%s11210 + $0x6c] sm:$0xf]
      %v11239 = vld [vmem:[%s11210 + $0x70] sm:$0xf]
      %v11240 = vld [vmem:[%s11210 + $0x74] sm:$0xf]
      %v11241 = vld [vmem:[%s11210 + $0x78] sm:$0xf]
      %v11242 = vld [vmem:[%s11210 + $0x7c] sm:$0xf]
      %v11275 = vunpack.c.l.b16 %v11211
      %v11276 = vunpack.c.l.b16 %v11212
      %v11277 = vunpack.c.l.b16 %v11213
      %v11278 = vunpack.c.l.b16 %v11214
      %v11279 = vunpack.c.l.b16 %v11215
      %v11280 = vunpack.c.l.b16 %v11216
      %v11281 = vunpack.c.l.b16 %v11217
      %v11282 = vunpack.c.l.b16 %v11218
      %v11283 = vunpack.c.l.b16 %v11219
      %v11284 = vunpack.c.l.b16 %v11220
      %v11285 = vunpack.c.l.b16 %v11221
      %v11286 = vunpack.c.l.b16 %v11222
      %v11287 = vunpack.c.l.b16 %v11223
      %v11288 = vunpack.c.l.b16 %v11224
      %v11289 = vunpack.c.l.b16 %v11225
      %v11290 = vunpack.c.l.b16 %v11226
      %v11291 = vunpack.c.l.b16 %v11227
      %v11292 = vunpack.c.l.b16 %v11228
      %v11293 = vunpack.c.l.b16 %v11229
      %v11294 = vunpack.c.l.b16 %v11230
      %v11295 = vunpack.c.l.b16 %v11231
      %v11296 = vunpack.c.l.b16 %v11232
      %v11297 = vunpack.c.l.b16 %v11233
      %v11298 = vunpack.c.l.b16 %v11234
      %v11299 = vunpack.c.l.b16 %v11235
      %v11300 = vunpack.c.l.b16 %v11236
      %v11301 = vunpack.c.l.b16 %v11237
      %v11302 = vunpack.c.l.b16 %v11238
      %v11303 = vunpack.c.l.b16 %v11239
      %v11304 = vunpack.c.l.b16 %v11240
      %v11305 = vunpack.c.l.b16 %v11241
      %v11306 = vunpack.c.l.b16 %v11242
      %v11307 = vpack.c.b16 %v11276, %v11275
      %v11308 = vpack.c.b16 %v11278, %v11277
      %v11309 = vpack.c.b16 %v11280, %v11279
      %v11310 = vpack.c.b16 %v11282, %v11281
      %v11311 = vpack.c.b16 %v11284, %v11283
      %v11312 = vpack.c.b16 %v11286, %v11285
      %v11313 = vpack.c.b16 %v11288, %v11287
      %v11314 = vpack.c.b16 %v11290, %v11289
      %v11315 = vpack.c.b16 %v11292, %v11291
      %v11316 = vpack.c.b16 %v11294, %v11293
      %v11317 = vpack.c.b16 %v11296, %v11295
      %v11318 = vpack.c.b16 %v11298, %v11297
      %v11319 = vpack.c.b16 %v11300, %v11299
      %v11320 = vpack.c.b16 %v11302, %v11301
      %v11321 = vpack.c.b16 %v11304, %v11303
      %v11322 = vpack.c.b16 %v11306, %v11305
      %v11324 = vsel %vm9322, %v11307, 0
      %v11327 = vsel %vm9322, %v11308, 0
      %v11330 = vsel %vm9322, %v11309, 0
      %v11333 = vsel %vm9322, %v11310, 0
      %v11336 = vsel %vm9322, %v11311, 0
      %v11339 = vsel %vm9322, %v11312, 0
      %v11342 = vsel %vm9322, %v11313, 0
      %v11345 = vsel %vm9322, %v11314, 0
      %v11348 = vsel %vm9322, %v11315, 0
      %v11351 = vsel %vm9322, %v11316, 0
      %v11354 = vsel %vm9322, %v11317, 0
      %v11357 = vsel %vm9322, %v11318, 0
      %v11360 = vsel %vm9322, %v11319, 0
      %v11363 = vsel %vm9322, %v11320, 0
      %v11366 = vsel %vm9322, %v11321, 0
      %v11369 = vsel %vm9322, %v11322, 0
      %v11372 = vsel %vm1956, %v11209, 0
      %11374 = vmatprep.subr.bf16.mxu0 0
      %11375 = vmatpush1.bf16.msra.mxu0 %v11204
      %11376 = vmatprep.subr.bf16.mxu0 0
      %11377 = vmatpush1.bf16.msra.mxu0 %v11205
      %11378 = vmatprep.subr.bf16.mxu0 0
      %11379 = vmatpush1.bf16.msra.mxu0 %v11206
      %11380 = vmatprep.subr.bf16.mxu0 0
      %11381 = vmatpush1.bf16.msra.mxu0 %v11207
      %11382 = vmatprep.subr.bf16.mxu0 0
      %11383 = vmatpush1.bf16.msra.mxu0 %v11208
      %11384 = vmatprep.subr.bf16.mxu0 0
      %11385 = vmatpush1.bf16.msra.mxu0 %v11372
      %11386 = vmatprep.subr.bf16.mxu0 0
      %11387 = vmatpush1.bf16.msra.mxu0 0
      %11388 = vmatprep.subr.bf16.mxu0 0
      %11389 = vmatpush1.bf16.msra.mxu0 0
      %11390 = vmatprep.subr.bf16.mxu0 0
      %11391 = vmatpush1.bf16.msra.mxu0 0
      %11392 = vmatprep.subr.bf16.mxu0 0
      %11393 = vmatpush1.bf16.msra.mxu0 0
      %11394 = vmatprep.subr.bf16.mxu0 0
      %11395 = vmatpush1.bf16.msra.mxu0 0
      %11396 = vmatprep.subr.bf16.mxu0 0
      %11397 = vmatpush1.bf16.msra.mxu0 0
      %11398 = vmatprep.subr.bf16.mxu0 0
      %11399 = vmatpush1.bf16.msra.mxu0 0
      %11400 = vmatprep.subr.bf16.mxu0 0
      %11401 = vmatpush1.bf16.msra.mxu0 0
      %11402 = vmatprep.subr.bf16.mxu0 0
      %11403 = vmatpush1.bf16.msra.mxu0 0
      %11404 = vmatprep.subr.bf16.mxu0 0
      %11405 = vmatpush1.bf16.msra.mxu0 0
      %11406 = vmatprep.mubr.bf16.mxu0 0
      %11407 = vmatmul.mubr.bf16.gmra.mrb[0].mxu0 %v11324
      %v11408 = vpop.f32.mrb[0].mxu0
      %v11409 = vadd.f32 0.0, %v11408
      %v11410 = vpop.f32.mrb[0].mxu0
      %v11411 = vpop.f32.mrb[0].mxu0
      %v11412 = vadd.f32 0.0, %v11411
      %v11413 = vpop.f32.mrb[0].mxu0
      %11414 = vmatprep.mubr.bf16.mxu0 0
      %11415 = vmatmul.mubr.bf16.gmra.mrb[0].mxu0 %v11327
      %v11416 = vpop.f32.mrb[0].mxu0
      %v11417 = vadd.f32 0.0, %v11416
      %v11418 = vpop.f32.mrb[0].mxu0
      %v11419 = vpop.f32.mrb[0].mxu0
      %v11420 = vadd.f32 0.0, %v11419
      %v11421 = vpop.f32.mrb[0].mxu0
      %11422 = vmatprep.mubr.bf16.mxu0 0
      %11423 = vmatmul.mubr.bf16.gmra.mrb[0].mxu0 %v11330
      %v11424 = vpop.f32.mrb[0].mxu0
      %v11425 = vadd.f32 0.0, %v11424
      %v11426 = vpop.f32.mrb[0].mxu0
      %v11427 = vpop.f32.mrb[0].mxu0
      %v11428 = vadd.f32 0.0, %v11427
      %v11429 = vpop.f32.mrb[0].mxu0
      %11430 = vmatprep.mubr.bf16.mxu0 0
      %11431 = vmatmul.mubr.bf16.gmra.mrb[0].mxu0 %v11333
      %v11432 = vpop.f32.mrb[0].mxu0
      %v11433 = vadd.f32 0.0, %v11432
      %v11434 = vpop.f32.mrb[0].mxu0
      %v11435 = vpop.f32.mrb[0].mxu0
      %v11436 = vadd.f32 0.0, %v11435
      %v11437 = vpop.f32.mrb[0].mxu0
      %11438 = vmatprep.mubr.bf16.mxu0 0
      %11439 = vmatmul.mubr.bf16.gmra.mrb[0].mxu0 %v11336
      %v11440 = vpop.f32.mrb[0].mxu0
      %v11441 = vadd.f32 0.0, %v11440
      %v11442 = vpop.f32.mrb[0].mxu0
      %v11443 = vpop.f32.mrb[0].mxu0
      %v11444 = vadd.f32 0.0, %v11443
      %v11445 = vpop.f32.mrb[0].mxu0
      %11446 = vmatprep.mubr.bf16.mxu0 0
      %11447 = vmatmul.mubr.bf16.gmra.mrb[0].mxu0 %v11339
      %v11448 = vpop.f32.mrb[0].mxu0
      %v11449 = vadd.f32 0.0, %v11448
      %v11450 = vpop.f32.mrb[0].mxu0
      %v11451 = vpop.f32.mrb[0].mxu0
      %v11452 = vadd.f32 0.0, %v11451
      %v11453 = vpop.f32.mrb[0].mxu0
      %11454 = vmatprep.mubr.bf16.mxu0 0
      %11455 = vmatmul.mubr.bf16.gmra.mrb[0].mxu0 %v11342
      %v11456 = vpop.f32.mrb[0].mxu0
      %v11457 = vadd.f32 0.0, %v11456
      %v11458 = vpop.f32.mrb[0].mxu0
      %v11459 = vpop.f32.mrb[0].mxu0
      %v11460 = vadd.f32 0.0, %v11459
      %v11461 = vpop.f32.mrb[0].mxu0
      %11462 = vmatprep.mubr.bf16.mxu0 0
      %11463 = vmatmul.mubr.bf16.gmra.mrb[0].mxu0 %v11345
      %v11464 = vpop.f32.mrb[0].mxu0
      %v11465 = vadd.f32 0.0, %v11464
      %v11466 = vpop.f32.mrb[0].mxu0
      %v11467 = vpop.f32.mrb[0].mxu0
      %v11468 = vadd.f32 0.0, %v11467
      %v11469 = vpop.f32.mrb[0].mxu0
      %11470 = vmatprep.mubr.bf16.mxu0 0
      %11471 = vmatmul.mubr.bf16.gmra.mrb[0].mxu0 %v11348
      %v11472 = vpop.f32.mrb[0].mxu0
      %v11473 = vadd.f32 0.0, %v11472
      %v11474 = vpop.f32.mrb[0].mxu0
      %v11475 = vpop.f32.mrb[0].mxu0
      %v11476 = vadd.f32 0.0, %v11475
      %v11477 = vpop.f32.mrb[0].mxu0
      %11478 = vmatprep.mubr.bf16.mxu0 0
      %11479 = vmatmul.mubr.bf16.gmra.mrb[0].mxu0 %v11351
      %v11480 = vpop.f32.mrb[0].mxu0
      %v11481 = vadd.f32 0.0, %v11480
      %v11482 = vpop.f32.mrb[0].mxu0
      %v11483 = vpop.f32.mrb[0].mxu0
      %v11484 = vadd.f32 0.0, %v11483
      %v11485 = vpop.f32.mrb[0].mxu0
      %11486 = vmatprep.mubr.bf16.mxu0 0
      %11487 = vmatmul.mubr.bf16.gmra.mrb[0].mxu0 %v11354
      %v11488 = vpop.f32.mrb[0].mxu0
      %v11489 = vadd.f32 0.0, %v11488
      %v11490 = vpop.f32.mrb[0].mxu0
      %v11491 = vpop.f32.mrb[0].mxu0
      %v11492 = vadd.f32 0.0, %v11491
      %v11493 = vpop.f32.mrb[0].mxu0
      %11494 = vmatprep.mubr.bf16.mxu0 0
      %11495 = vmatmul.mubr.bf16.gmra.mrb[0].mxu0 %v11357
      %v11496 = vpop.f32.mrb[0].mxu0
      %v11497 = vadd.f32 0.0, %v11496
      %v11498 = vpop.f32.mrb[0].mxu0
      %v11499 = vpop.f32.mrb[0].mxu0
      %v11500 = vadd.f32 0.0, %v11499
      %v11501 = vpop.f32.mrb[0].mxu0
      %11502 = vmatprep.mubr.bf16.mxu0 0
      %11503 = vmatmul.mubr.bf16.gmra.mrb[0].mxu0 %v11360
      %v11504 = vpop.f32.mrb[0].mxu0
      %v11505 = vadd.f32 0.0, %v11504
      %v11506 = vpop.f32.mrb[0].mxu0
      %v11507 = vpop.f32.mrb[0].mxu0
      %v11508 = vadd.f32 0.0, %v11507
      %v11509 = vpop.f32.mrb[0].mxu0
      %11510 = vmatprep.mubr.bf16.mxu0 0
      %11511 = vmatmul.mubr.bf16.gmra.mrb[0].mxu0 %v11363
      %v11512 = vpop.f32.mrb[0].mxu0
      %v11513 = vadd.f32 0.0, %v11512
      %v11514 = vpop.f32.mrb[0].mxu0
      %v11515 = vpop.f32.mrb[0].mxu0
      %v11516 = vadd.f32 0.0, %v11515
      %v11517 = vpop.f32.mrb[0].mxu0
      %11518 = vmatprep.mubr.bf16.mxu0 0
      %11519 = vmatmul.mubr.bf16.gmra.mrb[0].mxu0 %v11366
      %v11520 = vpop.f32.mrb[0].mxu0
      %v11521 = vadd.f32 0.0, %v11520
      %v11522 = vpop.f32.mrb[0].mxu0
      %v11523 = vpop.f32.mrb[0].mxu0
      %v11524 = vadd.f32 0.0, %v11523
      %v11525 = vpop.f32.mrb[0].mxu0
      %11526 = vmatprep.mubr.bf16.mxu0 0
      %11527 = vmatmul.mubr.bf16.gmra.mrb[0].mxu0 %v11369
      %v11528 = vpop.f32.mrb[0].mxu0
      %v11529 = vadd.f32 0.0, %v11528
      %v11530 = vpop.f32.mrb[0].mxu0
      %v11531 = vpop.f32.mrb[0].mxu0
      %v11532 = vadd.f32 0.0, %v11531
      %v11533 = vpop.f32.mrb[0].mxu0
      %11534 = vdwg.mxu0
      %v11535 = vadd.f32 %v10665, %v11409
      %v11536 = vadd.f32 %v10666, %v11412
      %v11537 = vadd.f32 %v10667, %v11417
      %v11538 = vadd.f32 %v10668, %v11420
      %v11539 = vadd.f32 %v10669, %v11425
      %v11540 = vadd.f32 %v10670, %v11428
      %v11541 = vadd.f32 %v10671, %v11433
      %v11542 = vadd.f32 %v10672, %v11436
      %v11543 = vadd.f32 %v10673, %v11441
      %v11544 = vadd.f32 %v10674, %v11444
      %v11545 = vadd.f32 %v10675, %v11449
      %v11546 = vadd.f32 %v10676, %v11452
      %v11547 = vadd.f32 %v10677, %v11457
      %v11548 = vadd.f32 %v10678, %v11460
      %v11549 = vadd.f32 %v10679, %v11465
      %v11550 = vadd.f32 %v10680, %v11468
      %v11551 = vadd.f32 %v10681, %v11473
      %v11552 = vadd.f32 %v10682, %v11476
      %v11553 = vadd.f32 %v10683, %v11481
      %v11554 = vadd.f32 %v10684, %v11484
      %v11555 = vadd.f32 %v10685, %v11489
      %v11556 = vadd.f32 %v10686, %v11492
      %v11557 = vadd.f32 %v10687, %v11497
      %v11558 = vadd.f32 %v10688, %v11500
      %v11559 = vadd.f32 %v10689, %v11505
      %v11560 = vadd.f32 %v10690, %v11508
      %v11561 = vadd.f32 %v10691, %v11513
      %v11562 = vadd.f32 %v10692, %v11516
      %v11563 = vadd.f32 %v10693, %v11521
      %v11564 = vadd.f32 %v10694, %v11524
      %v11565 = vadd.f32 %v10695, %v11529
      %v11566 = vadd.f32 %v10696, %v11532
      %vm11567 = vcmask 23552
      %11568 = vst.msk [vmem:[%s494] sm:$0xff] %vm11567, %v11535
      %11569 = vst.msk [vmem:[%s494 + $0x8] sm:$0xff] %vm11567, %v11536
      %11570 = vst.msk [vmem:[%s494 + $0x10] sm:$0xff] %vm11567, %v11537
      %11571 = vst.msk [vmem:[%s494 + $0x18] sm:$0xff] %vm11567, %v11538
      %11572 = vst.msk [vmem:[%s494 + $0x20] sm:$0xff] %vm11567, %v11539
      %11573 = vst.msk [vmem:[%s494 + $0x28] sm:$0xff] %vm11567, %v11540
      %11574 = vst.msk [vmem:[%s494 + $0x30] sm:$0xff] %vm11567, %v11541
      %11575 = vst.msk [vmem:[%s494 + $0x38] sm:$0xff] %vm11567, %v11542
      %11576 = vst.msk [vmem:[%s494 + $0x40] sm:$0xff] %vm11567, %v11543
      %11577 = vst.msk [vmem:[%s494 + $0x48] sm:$0xff] %vm11567, %v11544
      %11578 = vst.msk [vmem:[%s494 + $0x50] sm:$0xff] %vm11567, %v11545
      %11579 = vst.msk [vmem:[%s494 + $0x58] sm:$0xff] %vm11567, %v11546
      %11580 = vst.msk [vmem:[%s494 + $0x60] sm:$0xff] %vm11567, %v11547
      %11581 = vst.msk [vmem:[%s494 + $0x68] sm:$0xff] %vm11567, %v11548
      %11582 = vst.msk [vmem:[%s494 + $0x70] sm:$0xff] %vm11567, %v11549
      %11583 = vst.msk [vmem:[%s494 + $0x78] sm:$0xff] %vm11567, %v11550
      %11584 = vst.msk [vmem:[%s494 + $0x80] sm:$0xff] %vm11567, %v11551
      %11585 = vst.msk [vmem:[%s494 + $0x88] sm:$0xff] %vm11567, %v11552
      %11586 = vst.msk [vmem:[%s494 + $0x90] sm:$0xff] %vm11567, %v11553
      %11587 = vst.msk [vmem:[%s494 + $0x98] sm:$0xff] %vm11567, %v11554
      %11588 = vst.msk [vmem:[%s494 + $0xa0] sm:$0xff] %vm11567, %v11555
      %11589 = vst.msk [vmem:[%s494 + $0xa8] sm:$0xff] %vm11567, %v11556
      %11590 = vst.msk [vmem:[%s494 + $0xb0] sm:$0xff] %vm11567, %v11557
      %11591 = vst.msk [vmem:[%s494 + $0xb8] sm:$0xff] %vm11567, %v11558
      %11592 = vst.msk [vmem:[%s494 + $0xc0] sm:$0xff] %vm11567, %v11559
      %11593 = vst.msk [vmem:[%s494 + $0xc8] sm:$0xff] %vm11567, %v11560
      %11594 = vst.msk [vmem:[%s494 + $0xd0] sm:$0xff] %vm11567, %v11561
      %11595 = vst.msk [vmem:[%s494 + $0xd8] sm:$0xff] %vm11567, %v11562
      %11596 = vst.msk [vmem:[%s494 + $0xe0] sm:$0xff] %vm11567, %v11563
      %11597 = vst.msk [vmem:[%s494 + $0xe8] sm:$0xff] %vm11567, %v11564
      %11598 = vst.msk [vmem:[%s494 + $0xf0] sm:$0xff] %vm11567, %v11565
      %11599 = vst.msk [vmem:[%s494 + $0xf8] sm:$0xff] %vm11567, %v11566
      %p11600 = scmp.lt.s32.totalorder %s26, 1
      %s11601 = scalar_select %p11600, %s26, 1
      %s11602 = smul.addr %s11601, 32
      %s11603 = smul.addr %s11602, 8
      %s11604 = scalar_lea.vmem %s15, %s11603
      // Predicated region
      $region81: #{generator_forward.1} parent=79 // pred_check
        %p11605 = pneg %p364
      $region82: #{generator_forward.1} parent=79 // pred_check_branch
        %11607 = sbr.rel (%p11605) target = $region84
      $region83: #{generator_forward.1} parent=79 // pred_region
        _
      $region84: #{generator_forward.1} parent=79 // pred_fallthru
        _
    $region80: #{generator_forward.1} parent=5 // pred_fallthru
      _
    %p11608 = scmp.le.s32.totalorder 2, %s21
    // Predicated region
    $region85: #{generator_forward.1} parent=5 // pred_check
      %p11609 = pneg %p11608
    $region86: #{generator_forward.1} parent=5 // pred_check_branch
      %11611 = sbr.rel (%p11609) target = $region88
    $region87: #{generator_forward.1} parent=5 // pred_region
      %s11612 = ssub.s32 %s21, 2
      // Predicated region
      $region89: #{generator_forward.1} parent=87 // pred_check
        %p11613 = pneg %p370
      $region90: #{generator_forward.1} parent=87 // pred_check_branch
        %11615 = sbr.rel (%p11613) target = $region92
      $region91: #{generator_forward.1} parent=87 // pred_region
        %p11616 = scmp.lt.s32.totalorder %s27, 1
        %s11617 = scalar_select %p11616, %s27, 1
        %s11618 = smul.addr %s11617, 32
        %s11619 = smul.addr %s11618, 8
        %s11620 = scalar_lea.vmem %s15, %s11619
      $region92: #{generator_forward.1} parent=87 // pred_fallthru
        _
    $region88: #{generator_forward.1} parent=5 // pred_fallthru
      _
  $region6: #{generator_forward.1} parent=0 // loop_footer
    %s25 = sadd.s32 1, %s21
  $region7: #{generator_forward.1} parent=0 // loop_footer_branch
    %20 = sbr.rel target = $region3
  $region8: #{generator_forward.1} parent=0 // loop_exit
    _

</llo_original>
